<compile_context>
chip_gen: v7x
topology: tpu7x:2x2x1
jax: 0.10.0
libtpu: 0.0.40
codegen_flags: <defaults>
</compile_context>

<pallas_src>
import functools
import math

import jax
import jax.numpy as jnp
from jax.experimental import pallas as pl
from jax.experimental.pallas import tpu as pltpu

_BN_EPS = 1e-5
_VMEM_LIMIT = 48 * 1024 * 1024  # <= v7x 64 MiB physical VMEM; fine on v5e/v6e too.


def _round_up(x, m):
    return (x + m - 1) // m * m


# ---------------------------------------------------------------------------
# Pallas kernels
# ---------------------------------------------------------------------------
def _conv_bn_kernel(lhs_ref, w_ref, shift_ref, o_ref, acc_ref, *, relu, kt):
    k = pl.program_id(2)

    @pl.when(k == 0)
    def _():
        acc_ref[...] = jnp.zeros_like(acc_ref)

    acc_ref[...] += jnp.dot(lhs_ref[0], w_ref[0],
                            preferred_element_type=jnp.float32)

    @pl.when(k == kt - 1)
    def _():
        r = acc_ref[...] + shift_ref[...]
        if relu:
            r = jnp.maximum(r, 0.0)
        o_ref[...] = r.astype(o_ref.dtype)


def _conv_bn_res_kernel(lhs_ref, w_ref, shift_ref, res_ref, o_ref, acc_ref, *,
                        relu, kt):
    k = pl.program_id(2)

    @pl.when(k == 0)
    def _():
        acc_ref[...] = jnp.zeros_like(acc_ref)

    acc_ref[...] += jnp.dot(lhs_ref[0], w_ref[0],
                            preferred_element_type=jnp.float32)

    @pl.when(k == kt - 1)
    def _():
        r = acc_ref[...] + shift_ref[...] + res_ref[...]
        if relu:
            r = jnp.maximum(r, 0.0)
        o_ref[...] = r.astype(o_ref.dtype)


def _maxpool_kernel(*refs):
    o_ref = refs[-1]
    m = refs[0][...]
    for r in refs[1:-1]:
        m = jnp.maximum(m, r[...])
    o_ref[...] = m


# ---------------------------------------------------------------------------
# Glue: shifted/strided window views (plain JAX; pure layout plumbing)
# ---------------------------------------------------------------------------
def _extract_patches(x, kh, kw, stride, dilation, padding, pad_value=0.0):
    """x: NHWC. Returns list of kh*kw strided views, each (N, OH, OW, C)."""
    N, H, W, C = x.shape
    OH = (H + 2 * padding - dilation * (kh - 1) - 1) // stride + 1
    OW = (W + 2 * padding - dilation * (kw - 1) - 1) // stride + 1
    xp = jnp.pad(x, ((0, 0), (padding, padding), (padding, padding), (0, 0)),
                 constant_values=pad_value)
    cols = []
    for i in range(kh):
        for j in range(kw):
            h0, w0 = i * dilation, j * dilation
            sl = jax.lax.slice(
                xp,
                (0, h0, w0, 0),
                (N, h0 + (OH - 1) * stride + 1, w0 + (OW - 1) * stride + 1, C),
                (1, stride, stride, 1))
            cols.append(sl)
    return cols, (N, OH, OW)


# ---------------------------------------------------------------------------
# Fused conv + BN (+ReLU) (+residual) -- tiled Pallas matmul
# ---------------------------------------------------------------------------
def conv_bn(x, w, bn, *, stride, dilation, padding, relu, residual=None):
    kh, kw, cin, cout = w.shape
    T = kh * kw
    cols, (N, OH, OW) = _extract_patches(x, kh, kw, stride, dilation, padding)
    M = N * OH * OW

    # Fold BN scale into weights (f32) before the bf16 cast; shift stays f32.
    scale = bn['gamma'] / jnp.sqrt(bn['var'] + _BN_EPS)
    shift = (bn['beta'] - bn['mean'] * scale).reshape(1, cout).astype(jnp.float32)
    w_f = w * scale.reshape(1, 1, 1, cout)

    if T == 1:
        # 1x1 conv: no patch extraction at all, just the (possibly strided) view.
        lhs = cols[0].reshape(1, M, cin)
        w_k = w_f.reshape(1, cin, cout)
        kt, ck = 1, cin
    elif cin < 128:
        # Small channel count: concat taps channel-wise -> one healthy MXU dot.
        lhs = jnp.concatenate([c.reshape(M, cin) for c in cols], axis=1)[None]
        w_k = w_f.reshape(1, T * cin, cout)
        kt, ck = 1, T * cin
    else:
        # Tap index becomes the K grid axis; per-tap dot accumulated in VMEM.
        lhs = jnp.stack([c.reshape(M, cin) for c in cols], axis=0)
        w_k = w_f.reshape(T, cin, cout)
        kt, ck = T, cin

    lhs = lhs.astype(jnp.bfloat16)
    w_k = w_k.astype(jnp.bfloat16)

    tm = min(256, _round_up(M, 8))
    m_pad = _round_up(M, tm)
    tn = 256 if (cout > 256 and cout % 256 == 0) else cout
    gm, gn = m_pad // tm, cout // tn

    if m_pad != M:
        lhs = jnp.pad(lhs, ((0, 0), (0, m_pad - M), (0, 0)))

    ins = [lhs, w_k, shift]
    in_specs = [
        pl.BlockSpec((1, tm, ck), lambda i, j, k: (k, i, 0)),
        pl.BlockSpec((1, ck, tn), lambda i, j, k: (k, 0, j)),
        pl.BlockSpec((1, tn), lambda i, j, k: (0, j)),
    ]
    if residual is None:
        kern = functools.partial(_conv_bn_kernel, relu=relu, kt=kt)
        res_bytes = 0
    else:
        res = residual.reshape(M, cout).astype(jnp.float32)
        if m_pad != M:
            res = jnp.pad(res, ((0, m_pad - M), (0, 0)))
        ins.append(res)
        in_specs.append(pl.BlockSpec((tm, tn), lambda i, j, k: (i, j)))
        kern = functools.partial(_conv_bn_res_kernel, relu=relu, kt=kt)
        res_bytes = m_pad * cout * 4

    flops = 2 * m_pad * kt * ck * cout
    bytes_accessed = (m_pad * kt * ck * 2 + kt * ck * cout * 2 +
                      m_pad * cout * 4 + res_bytes + cout * 4)

    out = pl.pallas_call(
        kern,
        grid=(gm, gn, kt),
        in_specs=in_specs,
        out_specs=pl.BlockSpec((tm, tn), lambda i, j, k: (i, j)),
        out_shape=jax.ShapeDtypeStruct((m_pad, cout), jnp.float32),
        scratch_shapes=[pltpu.VMEM((tm, tn), jnp.float32)],
        compiler_params=pltpu.CompilerParams(
            dimension_semantics=("parallel", "parallel", "arbitrary"),
            vmem_limit_bytes=_VMEM_LIMIT),
        cost_estimate=pl.CostEstimate(flops=flops, transcendentals=0,
                                      bytes_accessed=bytes_accessed),
    )(*ins)
    return out[:M].reshape(N, OH, OW, cout)


# ---------------------------------------------------------------------------
# MaxPool: 9 strided views as separate tiled inputs, in-kernel maximum tree
# ---------------------------------------------------------------------------
def maxpool_nhwc(x, *, kernel=3, stride=2, padding=1):
    C = x.shape[-1]
    cols, (N, OH, OW) = _extract_patches(
        x, kernel, kernel, stride, 1, padding, pad_value=-jnp.inf)
    M = N * OH * OW
    tm = min(512, _round_up(M, 8))
    m_pad = _round_up(M, tm)

    taps = []
    for c in cols:
        t = c.reshape(M, C)
        if m_pad != M:
            t = jnp.pad(t, ((0, m_pad - M), (0, 0)))
        taps.append(t)

    out = pl.pallas_call(
        _maxpool_kernel,
        grid=(m_pad // tm,),
        in_specs=[pl.BlockSpec((tm, C), lambda i: (i, 0)) for _ in taps],
        out_specs=pl.BlockSpec((tm, C), lambda i: (i, 0)),
        out_shape=jax.ShapeDtypeStruct((m_pad, C), x.dtype),
        compiler_params=pltpu.CompilerParams(
            dimension_semantics=("parallel",),
            vmem_limit_bytes=_VMEM_LIMIT),
    )(*taps)
    return out[:M].reshape(N, OH, OW, C)


# ---------------------------------------------------------------------------
# Model structure (BasicBlock / ResNet-18, output_stride=16)
# ---------------------------------------------------------------------------
def basic_block(x, p, cfg):
    # Block-entry F.relu(x) is already fused into the epilogue of the kernel that
    # produced x (stem / previous block), and the raw pre-ReLU block output is
    # never consumed anywhere in forward(), so no standalone ReLU is needed.
    residual = x
    if cfg['has_ds']:
        residual = conv_bn(x, p['ds_conv'], p['ds_bn'],
                           stride=cfg['stride'], dilation=1, padding=0, relu=False)
    out = conv_bn(x, p['conv1'], p['bn1'],
                  stride=cfg['stride'], dilation=cfg['dilation'],
                  padding=cfg['dilation'], relu=True)
    out = conv_bn(out, p['conv2'], p['bn2'],
                  stride=1, dilation=cfg['dilation'], padding=cfg['dilation'],
                  relu=True, residual=residual)   # relu fused: next consumer relus anyway
    return out


def resnet_forward(params, x_nchw, config):
    x = jnp.transpose(x_nchw, (0, 2, 3, 1)).astype(jnp.float32)   # NCHW -> NHWC
    x = conv_bn(x, params['conv1'], params['bn1'],
                stride=2, dilation=1, padding=3, relu=True)
    x = maxpool_nhwc(x, kernel=3, stride=2, padding=1)
    for p, c in zip(params['layer1'], config['layer1']):
        x = basic_block(x, p, c)
    low_level_feat = x            # == F.relu(layer1 output): ReLU already fused
    for lname in ('layer2', 'layer3', 'layer4'):
        for p, c in zip(params[lname], config[lname]):
            x = basic_block(x, p, c)
    # Final F.relu(x) is already fused into layer4's last block epilogue.
    return (jnp.transpose(x, (0, 3, 1, 2)),
            jnp.transpose(low_level_feat, (0, 3, 1, 2)))


def init_params(key):
    keys = iter(jax.random.split(key, 64))

    def conv_w(kh, kw, cin, cout):
        std = math.sqrt(2.0 / (kh * kw * cout))         # matches _init_weight()
        return jax.random.normal(next(keys), (kh, kw, cin, cout), jnp.float32) * std

    def bn(c):
        return dict(gamma=jnp.ones((c,), jnp.float32),
                    beta=jnp.zeros((c,), jnp.float32),
                    mean=jnp.zeros((c,), jnp.float32),
                    var=jnp.ones((c,), jnp.float32))

    params = dict(conv1=conv_w(7, 7, 3, 64), bn1=bn(64))
    config = {}
    inplanes = 64
    # ResNet-18, output_stride=16: strides=[1,2,2,1], dilations=[1,1,1,2]
    layer_cfg = [(64, 2, 1, 1), (128, 2, 2, 1), (256, 2, 2, 1), (512, 2, 1, 2)]
    for li, (planes, nblocks, stride, dilation) in enumerate(layer_cfg, start=1):
        blocks, cfgs = [], []
        for bi in range(nblocks):
            s = stride if bi == 0 else 1
            need_ds = (bi == 0) and (stride != 1 or inplanes != planes)
            blk = dict(conv1=conv_w(3, 3, inplanes, planes), bn1=bn(planes),
                       conv2=conv_w(3, 3, planes, planes), bn2=bn(planes))
            if need_ds:
                blk['ds_conv'] = conv_w(1, 1, inplanes, planes)
                blk['ds_bn'] = bn(planes)
            blocks.append(blk)
            cfgs.append(dict(stride=s, dilation=dilation, has_ds=need_ds))
            inplanes = planes
        params[f'layer{li}'] = blocks
        config[f'layer{li}'] = cfgs
    return params, config


if __name__ == "__main__":
    key = jax.random.PRNGKey(0)
    pkey, xkey = jax.random.split(key)
    params, config = init_params(pkey)
    x = jax.random.normal(xkey, (2, 3, 16, 16), jnp.float32)   # NCHW, like PyTorch

    fwd = jax.jit(lambda p, inp: resnet_forward(p, inp, config))
    out, low_level_feat = fwd(params, x)
    jax.block_until_ready((out, low_level_feat))

    assert out.shape == (2, 512, 1, 1), out.shape
    assert low_level_feat.shape == (2, 64, 4, 4), low_level_feat.shape
    print("KERNEL_OK")
</pallas_src>

<mosaic_0001>
module attributes {stable_mosaic.version = 11 : i64} {
  func.func @_conv_bn_kernel(%arg0: i32, %arg1: i32, %arg2: i32, %arg3: memref<1x128x147xbf16, #tpu.memory_space<vmem>>, %arg4: memref<1x147x64xbf16, #tpu.memory_space<vmem>>, %arg5: memref<1x64xf32, #tpu.memory_space<vmem>>, %arg6: memref<128x64xf32, #tpu.memory_space<vmem>>, %arg7: memref<128x64xf32, #tpu.memory_space<vmem>>) attributes {dimension_semantics = [#tpu.dimension_semantics<parallel>, #tpu.dimension_semantics<parallel>, #tpu.dimension_semantics<arbitrary>], iteration_bounds = array<i64: 1, 1, 1>, scalar_prefetch = 0 : i64, scratch_operands = 1 : i64, tpu.core_type = #tpu.core_type<tc>, window_params = [{transform_indices = @transform_0, window_bounds = array<i64: 1, 128, 147>}, {transform_indices = @transform_1, window_bounds = array<i64: 1, 147, 64>}, {transform_indices = @transform_2, window_bounds = array<i64: 1, 64>}, {transform_indices = @transform_3, window_bounds = array<i64: 128, 64>}]} {
    %c0_i32 = arith.constant 0 : i32
    %0 = arith.cmpi eq, %arg2, %c0_i32 : i32
    %1 = arith.extui %0 : i1 to i32
    %c0_i32_0 = arith.constant 0 : i32
    %2 = arith.cmpi ne, %1, %c0_i32_0 : i32
    scf.if %2 {
      %cst_12 = arith.constant 0.000000e+00 : f32
      %14 = vector.broadcast %cst_12 : f32 to vector<128x64xf32>
      %c0_13 = arith.constant 0 : index
      %c0_14 = arith.constant 0 : index
      %15 = vector.load %arg7[%c0_13, %c0_14] : memref<128x64xf32, #tpu.memory_space<vmem>>, vector<128x64xf32>
      tpu.vector_store %arg7[%c0_13, %c0_14], %14 {strides = array<i32>} : memref<128x64xf32, #tpu.memory_space<vmem>>, vector<128x64xf32>,
    } else {
    }
    %c0 = arith.constant 0 : index
    %c0_1 = arith.constant 0 : index
    %3 = vector.load %arg7[%c0, %c0_1] : memref<128x64xf32, #tpu.memory_space<vmem>>, vector<128x64xf32>
    %c0_2 = arith.constant 0 : index
    %c0_3 = arith.constant 0 : index
    %c0_4 = arith.constant 0 : index
    %4 = vector.load %arg3[%c0_2, %c0_3, %c0_4] : memref<1x128x147xbf16, #tpu.memory_space<vmem>>, vector<1x128x147xbf16>
    %5 = vector.shape_cast %4 : vector<1x128x147xbf16> to vector<128x147xbf16>
    %c0_5 = arith.constant 0 : index
    %c0_6 = arith.constant 0 : index
    %c0_7 = arith.constant 0 : index
    %6 = vector.load %arg4[%c0_5, %c0_6, %c0_7] : memref<1x147x64xbf16, #tpu.memory_space<vmem>>, vector<1x147x64xbf16>
    %7 = vector.shape_cast %6 : vector<1x147x64xbf16> to vector<147x64xbf16>
    %cst = arith.constant dense<0.000000e+00> : vector<128x64xf32>
    %8 = tpu.matmul %5, %7, %cst {dimension_numbers = #tpu.dot_dimension_numbers<[1], [0], [0], [1], [0, 0, 1, 1], [], []>} : vector<128x147xbf16>, vector<147x64xbf16>, vector<128x64xf32> -> vector<128x64xf32>
    %9 = arith.addf %3, %8 : vector<128x64xf32>
    %c0_8 = arith.constant 0 : index
    %c0_9 = arith.constant 0 : index
    %10 = vector.load %arg7[%c0_8, %c0_9] : memref<128x64xf32, #tpu.memory_space<vmem>>, vector<128x64xf32>
    tpu.vector_store %arg7[%c0_8, %c0_9], %9 {strides = array<i32>} : memref<128x64xf32, #tpu.memory_space<vmem>>, vector<128x64xf32>,
    %c0_i32_10 = arith.constant 0 : i32
    %11 = arith.cmpi eq, %arg2, %c0_i32_10 : i32
    %12 = arith.extui %11 : i1 to i32
    %c0_i32_11 = arith.constant 0 : i32
    %13 = arith.cmpi ne, %12, %c0_i32_11 : i32
    scf.if %13 {
      %c0_12 = arith.constant 0 : index
      %c0_13 = arith.constant 0 : index
      %14 = vector.load %arg7[%c0_12, %c0_13] : memref<128x64xf32, #tpu.memory_space<vmem>>, vector<128x64xf32>
      %c0_14 = arith.constant 0 : index
      %c0_15 = arith.constant 0 : index
      %15 = vector.load %arg5[%c0_14, %c0_15] : memref<1x64xf32, #tpu.memory_space<vmem>>, vector<1x64xf32>
      %16 = vector.broadcast %15 : vector<1x64xf32> to vector<128x64xf32>
      %17 = arith.addf %14, %16 : vector<128x64xf32>
      %cst_16 = arith.constant 0.000000e+00 : f32
      %18 = vector.broadcast %cst_16 : f32 to vector<128x64xf32>
      %19 = arith.maximumf %17, %18 : vector<128x64xf32>
      %c0_17 = arith.constant 0 : index
      %c0_18 = arith.constant 0 : index
      %20 = vector.load %arg6[%c0_17, %c0_18] : memref<128x64xf32, #tpu.memory_space<vmem>>, vector<128x64xf32>
      tpu.vector_store %arg6[%c0_17, %c0_18], %19 {strides = array<i32>} : memref<128x64xf32, #tpu.memory_space<vmem>>, vector<128x64xf32>,
    } else {
    }
    return
  }
  func.func @transform_0(%arg0: i32, %arg1: i32, %arg2: i32) -> (i32, i32, i32) {
    %c0_i32 = arith.constant 0 : i32
    %c0_i32_0 = arith.constant 0 : i32
    return %arg2, %arg0, %c0_i32 : i32, i32, i32
  }
  func.func @transform_1(%arg0: i32, %arg1: i32, %arg2: i32) -> (i32, i32, i32) {
    %c0_i32 = arith.constant 0 : i32
    %c0_i32_0 = arith.constant 0 : i32
    return %arg2, %c0_i32, %arg1 : i32, i32, i32
  }
  func.func @transform_2(%arg0: i32, %arg1: i32, %arg2: i32) -> (i32, i32) {
    %c0_i32 = arith.constant 0 : i32
    %c0_i32_0 = arith.constant 0 : i32
    return %c0_i32, %arg1 : i32, i32
  }
  func.func @transform_3(%arg0: i32, %arg1: i32, %arg2: i32) -> (i32, i32) {
    %c0_i32 = arith.constant 0 : i32
    return %arg0, %arg1 : i32, i32
  }
}

module attributes {stable_mosaic.version = 11 : i64} {
  func.func @_maxpool_kernel(%arg0: i32, %arg1: memref<32x64xf32, #tpu.memory_space<vmem>>, %arg2: memref<32x64xf32, #tpu.memory_space<vmem>>, %arg3: memref<32x64xf32, #tpu.memory_space<vmem>>, %arg4: memref<32x64xf32, #tpu.memory_space<vmem>>, %arg5: memref<32x64xf32, #tpu.memory_space<vmem>>, %arg6: memref<32x64xf32, #tpu.memory_space<vmem>>, %arg7: memref<32x64xf32, #tpu.memory_space<vmem>>, %arg8: memref<32x64xf32, #tpu.memory_space<vmem>>, %arg9: memref<32x64xf32, #tpu.memory_space<vmem>>, %arg10: memref<32x64xf32, #tpu.memory_space<vmem>>) attributes {dimension_semantics = [#tpu.dimension_semantics<parallel>], iteration_bounds = array<i64: 1>, scalar_prefetch = 0 : i64, scratch_operands = 0 : i64, tpu.core_type = #tpu.core_type<tc>, window_params = [{transform_indices = @transform_0, window_bounds = array<i64: 32, 64>}, {transform_indices = @transform_1, window_bounds = array<i64: 32, 64>}, {transform_indices = @transform_2, window_bounds = array<i64: 32, 64>}, {transform_indices = @transform_3, window_bounds = array<i64: 32, 64>}, {transform_indices = @transform_4, window_bounds = array<i64: 32, 64>}, {transform_indices = @transform_5, window_bounds = array<i64: 32, 64>}, {transform_indices = @transform_6, window_bounds = array<i64: 32, 64>}, {transform_indices = @transform_7, window_bounds = array<i64: 32, 64>}, {transform_indices = @transform_8, window_bounds = array<i64: 32, 64>}, {transform_indices = @transform_9, window_bounds = array<i64: 32, 64>}]} {
    %c0 = arith.constant 0 : index
    %c0_0 = arith.constant 0 : index
    %0 = vector.load %arg1[%c0, %c0_0] : memref<32x64xf32, #tpu.memory_space<vmem>>, vector<32x64xf32>
    %c0_1 = arith.constant 0 : index
    %c0_2 = arith.constant 0 : index
    %1 = vector.load %arg2[%c0_1, %c0_2] : memref<32x64xf32, #tpu.memory_space<vmem>>, vector<32x64xf32>
    %2 = arith.maximumf %0, %1 : vector<32x64xf32>
    %c0_3 = arith.constant 0 : index
    %c0_4 = arith.constant 0 : index
    %3 = vector.load %arg3[%c0_3, %c0_4] : memref<32x64xf32, #tpu.memory_space<vmem>>, vector<32x64xf32>
    %4 = arith.maximumf %2, %3 : vector<32x64xf32>
    %c0_5 = arith.constant 0 : index
    %c0_6 = arith.constant 0 : index
    %5 = vector.load %arg4[%c0_5, %c0_6] : memref<32x64xf32, #tpu.memory_space<vmem>>, vector<32x64xf32>
    %6 = arith.maximumf %4, %5 : vector<32x64xf32>
    %c0_7 = arith.constant 0 : index
    %c0_8 = arith.constant 0 : index
    %7 = vector.load %arg5[%c0_7, %c0_8] : memref<32x64xf32, #tpu.memory_space<vmem>>, vector<32x64xf32>
    %8 = arith.maximumf %6, %7 : vector<32x64xf32>
    %c0_9 = arith.constant 0 : index
    %c0_10 = arith.constant 0 : index
    %9 = vector.load %arg6[%c0_9, %c0_10] : memref<32x64xf32, #tpu.memory_space<vmem>>, vector<32x64xf32>
    %10 = arith.maximumf %8, %9 : vector<32x64xf32>
    %c0_11 = arith.constant 0 : index
    %c0_12 = arith.constant 0 : index
    %11 = vector.load %arg7[%c0_11, %c0_12] : memref<32x64xf32, #tpu.memory_space<vmem>>, vector<32x64xf32>
    %12 = arith.maximumf %10, %11 : vector<32x64xf32>
    %c0_13 = arith.constant 0 : index
    %c0_14 = arith.constant 0 : index
    %13 = vector.load %arg8[%c0_13, %c0_14] : memref<32x64xf32, #tpu.memory_space<vmem>>, vector<32x64xf32>
    %14 = arith.maximumf %12, %13 : vector<32x64xf32>
    %c0_15 = arith.constant 0 : index
    %c0_16 = arith.constant 0 : index
    %15 = vector.load %arg9[%c0_15, %c0_16] : memref<32x64xf32, #tpu.memory_space<vmem>>, vector<32x64xf32>
    %16 = arith.maximumf %14, %15 : vector<32x64xf32>
    %c0_17 = arith.constant 0 : index
    %c0_18 = arith.constant 0 : index
    %17 = vector.load %arg10[%c0_17, %c0_18] : memref<32x64xf32, #tpu.memory_space<vmem>>, vector<32x64xf32>
    tpu.vector_store %arg10[%c0_17, %c0_18], %16 {strides = array<i32>} : memref<32x64xf32, #tpu.memory_space<vmem>>, vector<32x64xf32>,
    return
  }
  func.func @transform_0(%arg0: i32) -> (i32, i32) {
    %c0_i32 = arith.constant 0 : i32
    %c0_i32_0 = arith.constant 0 : i32
    return %arg0, %c0_i32 : i32, i32
  }
  func.func @transform_1(%arg0: i32) -> (i32, i32) {
    %c0_i32 = arith.constant 0 : i32
    %c0_i32_0 = arith.constant 0 : i32
    return %arg0, %c0_i32 : i32, i32
  }
  func.func @transform_2(%arg0: i32) -> (i32, i32) {
    %c0_i32 = arith.constant 0 : i32
    %c0_i32_0 = arith.constant 0 : i32
    return %arg0, %c0_i32 : i32, i32
  }
  func.func @transform_3(%arg0: i32) -> (i32, i32) {
    %c0_i32 = arith.constant 0 : i32
    %c0_i32_0 = arith.constant 0 : i32
    return %arg0, %c0_i32 : i32, i32
  }
  func.func @transform_4(%arg0: i32) -> (i32, i32) {
    %c0_i32 = arith.constant 0 : i32
    %c0_i32_0 = arith.constant 0 : i32
    return %arg0, %c0_i32 : i32, i32
  }
  func.func @transform_5(%arg0: i32) -> (i32, i32) {
    %c0_i32 = arith.constant 0 : i32
    %c0_i32_0 = arith.constant 0 : i32
    return %arg0, %c0_i32 : i32, i32
  }
  func.func @transform_6(%arg0: i32) -> (i32, i32) {
    %c0_i32 = arith.constant 0 : i32
    %c0_i32_0 = arith.constant 0 : i32
    return %arg0, %c0_i32 : i32, i32
  }
  func.func @transform_7(%arg0: i32) -> (i32, i32) {
    %c0_i32 = arith.constant 0 : i32
    %c0_i32_0 = arith.constant 0 : i32
    return %arg0, %c0_i32 : i32, i32
  }
  func.func @transform_8(%arg0: i32) -> (i32, i32) {
    %c0_i32 = arith.constant 0 : i32
    %c0_i32_0 = arith.constant 0 : i32
    return %arg0, %c0_i32 : i32, i32
  }
  func.func @transform_9(%arg0: i32) -> (i32, i32) {
    %c0_i32 = arith.constant 0 : i32
    %c0_i32_0 = arith.constant 0 : i32
    return %arg0, %c0_i32 : i32, i32
  }
}

module attributes {stable_mosaic.version = 11 : i64} {
  func.func @_conv_bn_kernel(%arg0: i32, %arg1: i32, %arg2: i32, %arg3: memref<1x32x576xbf16, #tpu.memory_space<vmem>>, %arg4: memref<1x576x64xbf16, #tpu.memory_space<vmem>>, %arg5: memref<1x64xf32, #tpu.memory_space<vmem>>, %arg6: memref<32x64xf32, #tpu.memory_space<vmem>>, %arg7: memref<32x64xf32, #tpu.memory_space<vmem>>) attributes {dimension_semantics = [#tpu.dimension_semantics<parallel>, #tpu.dimension_semantics<parallel>, #tpu.dimension_semantics<arbitrary>], iteration_bounds = array<i64: 1, 1, 1>, scalar_prefetch = 0 : i64, scratch_operands = 1 : i64, tpu.core_type = #tpu.core_type<tc>, window_params = [{transform_indices = @transform_0, window_bounds = array<i64: 1, 32, 576>}, {transform_indices = @transform_1, window_bounds = array<i64: 1, 576, 64>}, {transform_indices = @transform_2, window_bounds = array<i64: 1, 64>}, {transform_indices = @transform_3, window_bounds = array<i64: 32, 64>}]} {
    %c0_i32 = arith.constant 0 : i32
    %0 = arith.cmpi eq, %arg2, %c0_i32 : i32
    %1 = arith.extui %0 : i1 to i32
    %c0_i32_0 = arith.constant 0 : i32
    %2 = arith.cmpi ne, %1, %c0_i32_0 : i32
    scf.if %2 {
      %cst_12 = arith.constant 0.000000e+00 : f32
      %14 = vector.broadcast %cst_12 : f32 to vector<32x64xf32>
      %c0_13 = arith.constant 0 : index
      %c0_14 = arith.constant 0 : index
      %15 = vector.load %arg7[%c0_13, %c0_14] : memref<32x64xf32, #tpu.memory_space<vmem>>, vector<32x64xf32>
      tpu.vector_store %arg7[%c0_13, %c0_14], %14 {strides = array<i32>} : memref<32x64xf32, #tpu.memory_space<vmem>>, vector<32x64xf32>,
    } else {
    }
    %c0 = arith.constant 0 : index
    %c0_1 = arith.constant 0 : index
    %3 = vector.load %arg7[%c0, %c0_1] : memref<32x64xf32, #tpu.memory_space<vmem>>, vector<32x64xf32>
    %c0_2 = arith.constant 0 : index
    %c0_3 = arith.constant 0 : index
    %c0_4 = arith.constant 0 : index
    %4 = vector.load %arg3[%c0_2, %c0_3, %c0_4] : memref<1x32x576xbf16, #tpu.memory_space<vmem>>, vector<1x32x576xbf16>
    %5 = vector.shape_cast %4 : vector<1x32x576xbf16> to vector<32x576xbf16>
    %c0_5 = arith.constant 0 : index
    %c0_6 = arith.constant 0 : index
    %c0_7 = arith.constant 0 : index
    %6 = vector.load %arg4[%c0_5, %c0_6, %c0_7] : memref<1x576x64xbf16, #tpu.memory_space<vmem>>, vector<1x576x64xbf16>
    %7 = vector.shape_cast %6 : vector<1x576x64xbf16> to vector<576x64xbf16>
    %cst = arith.constant dense<0.000000e+00> : vector<32x64xf32>
    %8 = tpu.matmul %5, %7, %cst {dimension_numbers = #tpu.dot_dimension_numbers<[1], [0], [0], [1], [0, 0, 1, 1], [], []>} : vector<32x576xbf16>, vector<576x64xbf16>, vector<32x64xf32> -> vector<32x64xf32>
    %9 = arith.addf %3, %8 : vector<32x64xf32>
    %c0_8 = arith.constant 0 : index
    %c0_9 = arith.constant 0 : index
    %10 = vector.load %arg7[%c0_8, %c0_9] : memref<32x64xf32, #tpu.memory_space<vmem>>, vector<32x64xf32>
    tpu.vector_store %arg7[%c0_8, %c0_9], %9 {strides = array<i32>} : memref<32x64xf32, #tpu.memory_space<vmem>>, vector<32x64xf32>,
    %c0_i32_10 = arith.constant 0 : i32
    %11 = arith.cmpi eq, %arg2, %c0_i32_10 : i32
    %12 = arith.extui %11 : i1 to i32
    %c0_i32_11 = arith.constant 0 : i32
    %13 = arith.cmpi ne, %12, %c0_i32_11 : i32
    scf.if %13 {
      %c0_12 = arith.constant 0 : index
      %c0_13 = arith.constant 0 : index
      %14 = vector.load %arg7[%c0_12, %c0_13] : memref<32x64xf32, #tpu.memory_space<vmem>>, vector<32x64xf32>
      %c0_14 = arith.constant 0 : index
      %c0_15 = arith.constant 0 : index
      %15 = vector.load %arg5[%c0_14, %c0_15] : memref<1x64xf32, #tpu.memory_space<vmem>>, vector<1x64xf32>
      %16 = vector.broadcast %15 : vector<1x64xf32> to vector<32x64xf32>
      %17 = arith.addf %14, %16 : vector<32x64xf32>
      %cst_16 = arith.constant 0.000000e+00 : f32
      %18 = vector.broadcast %cst_16 : f32 to vector<32x64xf32>
      %19 = arith.maximumf %17, %18 : vector<32x64xf32>
      %c0_17 = arith.constant 0 : index
      %c0_18 = arith.constant 0 : index
      %20 = vector.load %arg6[%c0_17, %c0_18] : memref<32x64xf32, #tpu.memory_space<vmem>>, vector<32x64xf32>
      tpu.vector_store %arg6[%c0_17, %c0_18], %19 {strides = array<i32>} : memref<32x64xf32, #tpu.memory_space<vmem>>, vector<32x64xf32>,
    } else {
    }
    return
  }
  func.func @transform_0(%arg0: i32, %arg1: i32, %arg2: i32) -> (i32, i32, i32) {
    %c0_i32 = arith.constant 0 : i32
    %c0_i32_0 = arith.constant 0 : i32
    return %arg2, %arg0, %c0_i32 : i32, i32, i32
  }
  func.func @transform_1(%arg0: i32, %arg1: i32, %arg2: i32) -> (i32, i32, i32) {
    %c0_i32 = arith.constant 0 : i32
    %c0_i32_0 = arith.constant 0 : i32
    return %arg2, %c0_i32, %arg1 : i32, i32, i32
  }
  func.func @transform_2(%arg0: i32, %arg1: i32, %arg2: i32) -> (i32, i32) {
    %c0_i32 = arith.constant 0 : i32
    %c0_i32_0 = arith.constant 0 : i32
    return %c0_i32, %arg1 : i32, i32
  }
  func.func @transform_3(%arg0: i32, %arg1: i32, %arg2: i32) -> (i32, i32) {
    %c0_i32 = arith.constant 0 : i32
    return %arg0, %arg1 : i32, i32
  }
}

module attributes {stable_mosaic.version = 11 : i64} {
  func.func @_conv_bn_res_kernel(%arg0: i32, %arg1: i32, %arg2: i32, %arg3: memref<1x32x576xbf16, #tpu.memory_space<vmem>>, %arg4: memref<1x576x64xbf16, #tpu.memory_space<vmem>>, %arg5: memref<1x64xf32, #tpu.memory_space<vmem>>, %arg6: memref<32x64xf32, #tpu.memory_space<vmem>>, %arg7: memref<32x64xf32, #tpu.memory_space<vmem>>, %arg8: memref<32x64xf32, #tpu.memory_space<vmem>>) attributes {dimension_semantics = [#tpu.dimension_semantics<parallel>, #tpu.dimension_semantics<parallel>, #tpu.dimension_semantics<arbitrary>], iteration_bounds = array<i64: 1, 1, 1>, scalar_prefetch = 0 : i64, scratch_operands = 1 : i64, tpu.core_type = #tpu.core_type<tc>, window_params = [{transform_indices = @transform_0, window_bounds = array<i64: 1, 32, 576>}, {transform_indices = @transform_1, window_bounds = array<i64: 1, 576, 64>}, {transform_indices = @transform_2, window_bounds = array<i64: 1, 64>}, {transform_indices = @transform_3, window_bounds = array<i64: 32, 64>}, {transform_indices = @transform_4, window_bounds = array<i64: 32, 64>}]} {
    %c0_i32 = arith.constant 0 : i32
    %0 = arith.cmpi eq, %arg2, %c0_i32 : i32
    %1 = arith.extui %0 : i1 to i32
    %c0_i32_0 = arith.constant 0 : i32
    %2 = arith.cmpi ne, %1, %c0_i32_0 : i32
    scf.if %2 {
      %cst_12 = arith.constant 0.000000e+00 : f32
      %14 = vector.broadcast %cst_12 : f32 to vector<32x64xf32>
      %c0_13 = arith.constant 0 : index
      %c0_14 = arith.constant 0 : index
      %15 = vector.load %arg8[%c0_13, %c0_14] : memref<32x64xf32, #tpu.memory_space<vmem>>, vector<32x64xf32>
      tpu.vector_store %arg8[%c0_13, %c0_14], %14 {strides = array<i32>} : memref<32x64xf32, #tpu.memory_space<vmem>>, vector<32x64xf32>,
    } else {
    }
    %c0 = arith.constant 0 : index
    %c0_1 = arith.constant 0 : index
    %3 = vector.load %arg8[%c0, %c0_1] : memref<32x64xf32, #tpu.memory_space<vmem>>, vector<32x64xf32>
    %c0_2 = arith.constant 0 : index
    %c0_3 = arith.constant 0 : index
    %c0_4 = arith.constant 0 : index
    %4 = vector.load %arg3[%c0_2, %c0_3, %c0_4] : memref<1x32x576xbf16, #tpu.memory_space<vmem>>, vector<1x32x576xbf16>
    %5 = vector.shape_cast %4 : vector<1x32x576xbf16> to vector<32x576xbf16>
    %c0_5 = arith.constant 0 : index
    %c0_6 = arith.constant 0 : index
    %c0_7 = arith.constant 0 : index
    %6 = vector.load %arg4[%c0_5, %c0_6, %c0_7] : memref<1x576x64xbf16, #tpu.memory_space<vmem>>, vector<1x576x64xbf16>
    %7 = vector.shape_cast %6 : vector<1x576x64xbf16> to vector<576x64xbf16>
    %cst = arith.constant dense<0.000000e+00> : vector<32x64xf32>
    %8 = tpu.matmul %5, %7, %cst {dimension_numbers = #tpu.dot_dimension_numbers<[1], [0], [0], [1], [0, 0, 1, 1], [], []>} : vector<32x576xbf16>, vector<576x64xbf16>, vector<32x64xf32> -> vector<32x64xf32>
    %9 = arith.addf %3, %8 : vector<32x64xf32>
    %c0_8 = arith.constant 0 : index
    %c0_9 = arith.constant 0 : index
    %10 = vector.load %arg8[%c0_8, %c0_9] : memref<32x64xf32, #tpu.memory_space<vmem>>, vector<32x64xf32>
    tpu.vector_store %arg8[%c0_8, %c0_9], %9 {strides = array<i32>} : memref<32x64xf32, #tpu.memory_space<vmem>>, vector<32x64xf32>,
    %c0_i32_10 = arith.constant 0 : i32
    %11 = arith.cmpi eq, %arg2, %c0_i32_10 : i32
    %12 = arith.extui %11 : i1 to i32
    %c0_i32_11 = arith.constant 0 : i32
    %13 = arith.cmpi ne, %12, %c0_i32_11 : i32
    scf.if %13 {
      %c0_12 = arith.constant 0 : index
      %c0_13 = arith.constant 0 : index
      %14 = vector.load %arg8[%c0_12, %c0_13] : memref<32x64xf32, #tpu.memory_space<vmem>>, vector<32x64xf32>
      %c0_14 = arith.constant 0 : index
      %c0_15 = arith.constant 0 : index
      %15 = vector.load %arg5[%c0_14, %c0_15] : memref<1x64xf32, #tpu.memory_space<vmem>>, vector<1x64xf32>
      %16 = vector.broadcast %15 : vector<1x64xf32> to vector<32x64xf32>
      %17 = arith.addf %14, %16 : vector<32x64xf32>
      %c0_16 = arith.constant 0 : index
      %c0_17 = arith.constant 0 : index
      %18 = vector.load %arg6[%c0_16, %c0_17] : memref<32x64xf32, #tpu.memory_space<vmem>>, vector<32x64xf32>
      %19 = arith.addf %17, %18 : vector<32x64xf32>
      %cst_18 = arith.constant 0.000000e+00 : f32
      %20 = vector.broadcast %cst_18 : f32 to vector<32x64xf32>
      %21 = arith.maximumf %19, %20 : vector<32x64xf32>
      %c0_19 = arith.constant 0 : index
      %c0_20 = arith.constant 0 : index
      %22 = vector.load %arg7[%c0_19, %c0_20] : memref<32x64xf32, #tpu.memory_space<vmem>>, vector<32x64xf32>
      tpu.vector_store %arg7[%c0_19, %c0_20], %21 {strides = array<i32>} : memref<32x64xf32, #tpu.memory_space<vmem>>, vector<32x64xf32>,
    } else {
    }
    return
  }
  func.func @transform_0(%arg0: i32, %arg1: i32, %arg2: i32) -> (i32, i32, i32) {
    %c0_i32 = arith.constant 0 : i32
    %c0_i32_0 = arith.constant 0 : i32
    return %arg2, %arg0, %c0_i32 : i32, i32, i32
  }
  func.func @transform_1(%arg0: i32, %arg1: i32, %arg2: i32) -> (i32, i32, i32) {
    %c0_i32 = arith.constant 0 : i32
    %c0_i32_0 = arith.constant 0 : i32
    return %arg2, %c0_i32, %arg1 : i32, i32, i32
  }
  func.func @transform_2(%arg0: i32, %arg1: i32, %arg2: i32) -> (i32, i32) {
    %c0_i32 = arith.constant 0 : i32
    %c0_i32_0 = arith.constant 0 : i32
    return %c0_i32, %arg1 : i32, i32
  }
  func.func @transform_3(%arg0: i32, %arg1: i32, %arg2: i32) -> (i32, i32) {
    %c0_i32 = arith.constant 0 : i32
    return %arg0, %arg1 : i32, i32
  }
  func.func @transform_4(%arg0: i32, %arg1: i32, %arg2: i32) -> (i32, i32) {
    %c0_i32 = arith.constant 0 : i32
    return %arg0, %arg1 : i32, i32
  }
}

module attributes {stable_mosaic.version = 11 : i64} {
  func.func @_conv_bn_kernel(%arg0: i32, %arg1: i32, %arg2: i32, %arg3: memref<1x8x576xbf16, #tpu.memory_space<vmem>>, %arg4: memref<1x576x128xbf16, #tpu.memory_space<vmem>>, %arg5: memref<1x128xf32, #tpu.memory_space<vmem>>, %arg6: memref<8x128xf32, #tpu.memory_space<vmem>>, %arg7: memref<8x128xf32, #tpu.memory_space<vmem>>) attributes {dimension_semantics = [#tpu.dimension_semantics<parallel>, #tpu.dimension_semantics<parallel>, #tpu.dimension_semantics<arbitrary>], iteration_bounds = array<i64: 1, 1, 1>, scalar_prefetch = 0 : i64, scratch_operands = 1 : i64, tpu.core_type = #tpu.core_type<tc>, window_params = [{transform_indices = @transform_0, window_bounds = array<i64: 1, 8, 576>}, {transform_indices = @transform_1, window_bounds = array<i64: 1, 576, 128>}, {transform_indices = @transform_2, window_bounds = array<i64: 1, 128>}, {transform_indices = @transform_3, window_bounds = array<i64: 8, 128>}]} {
    %c0_i32 = arith.constant 0 : i32
    %0 = arith.cmpi eq, %arg2, %c0_i32 : i32
    %1 = arith.extui %0 : i1 to i32
    %c0_i32_0 = arith.constant 0 : i32
    %2 = arith.cmpi ne, %1, %c0_i32_0 : i32
    scf.if %2 {
      %cst_12 = arith.constant 0.000000e+00 : f32
      %14 = vector.broadcast %cst_12 : f32 to vector<8x128xf32>
      %c0_13 = arith.constant 0 : index
      %c0_14 = arith.constant 0 : index
      %15 = vector.load %arg7[%c0_13, %c0_14] : memref<8x128xf32, #tpu.memory_space<vmem>>, vector<8x128xf32>
      tpu.vector_store %arg7[%c0_13, %c0_14], %14 {strides = array<i32>} : memref<8x128xf32, #tpu.memory_space<vmem>>, vector<8x128xf32>,
    } else {
    }
    %c0 = arith.constant 0 : index
    %c0_1 = arith.constant 0 : index
    %3 = vector.load %arg7[%c0, %c0_1] : memref<8x128xf32, #tpu.memory_space<vmem>>, vector<8x128xf32>
    %c0_2 = arith.constant 0 : index
    %c0_3 = arith.constant 0 : index
    %c0_4 = arith.constant 0 : index
    %4 = vector.load %arg3[%c0_2, %c0_3, %c0_4] : memref<1x8x576xbf16, #tpu.memory_space<vmem>>, vector<1x8x576xbf16>
    %5 = vector.shape_cast %4 : vector<1x8x576xbf16> to vector<8x576xbf16>
    %c0_5 = arith.constant 0 : index
    %c0_6 = arith.constant 0 : index
    %c0_7 = arith.constant 0 : index
    %6 = vector.load %arg4[%c0_5, %c0_6, %c0_7] : memref<1x576x128xbf16, #tpu.memory_space<vmem>>, vector<1x576x128xbf16>
    %7 = vector.shape_cast %6 : vector<1x576x128xbf16> to vector<576x128xbf16>
    %cst = arith.constant dense<0.000000e+00> : vector<8x128xf32>
    %8 = tpu.matmul %5, %7, %cst {dimension_numbers = #tpu.dot_dimension_numbers<[1], [0], [0], [1], [0, 0, 1, 1], [], []>} : vector<8x576xbf16>, vector<576x128xbf16>, vector<8x128xf32> -> vector<8x128xf32>
    %9 = arith.addf %3, %8 : vector<8x128xf32>
    %c0_8 = arith.constant 0 : index
    %c0_9 = arith.constant 0 : index
    %10 = vector.load %arg7[%c0_8, %c0_9] : memref<8x128xf32, #tpu.memory_space<vmem>>, vector<8x128xf32>
    tpu.vector_store %arg7[%c0_8, %c0_9], %9 {strides = array<i32>} : memref<8x128xf32, #tpu.memory_space<vmem>>, vector<8x128xf32>,
    %c0_i32_10 = arith.constant 0 : i32
    %11 = arith.cmpi eq, %arg2, %c0_i32_10 : i32
    %12 = arith.extui %11 : i1 to i32
    %c0_i32_11 = arith.constant 0 : i32
    %13 = arith.cmpi ne, %12, %c0_i32_11 : i32
    scf.if %13 {
      %c0_12 = arith.constant 0 : index
      %c0_13 = arith.constant 0 : index
      %14 = vector.load %arg7[%c0_12, %c0_13] : memref<8x128xf32, #tpu.memory_space<vmem>>, vector<8x128xf32>
      %c0_14 = arith.constant 0 : index
      %c0_15 = arith.constant 0 : index
      %15 = vector.load %arg5[%c0_14, %c0_15] : memref<1x128xf32, #tpu.memory_space<vmem>>, vector<1x128xf32>
      %16 = vector.broadcast %15 : vector<1x128xf32> to vector<8x128xf32>
      %17 = arith.addf %14, %16 : vector<8x128xf32>
      %cst_16 = arith.constant 0.000000e+00 : f32
      %18 = vector.broadcast %cst_16 : f32 to vector<8x128xf32>
      %19 = arith.maximumf %17, %18 : vector<8x128xf32>
      %c0_17 = arith.constant 0 : index
      %c0_18 = arith.constant 0 : index
      %20 = vector.load %arg6[%c0_17, %c0_18] : memref<8x128xf32, #tpu.memory_space<vmem>>, vector<8x128xf32>
      tpu.vector_store %arg6[%c0_17, %c0_18], %19 {strides = array<i32>} : memref<8x128xf32, #tpu.memory_space<vmem>>, vector<8x128xf32>,
    } else {
    }
    return
  }
  func.func @transform_0(%arg0: i32, %arg1: i32, %arg2: i32) -> (i32, i32, i32) {
    %c0_i32 = arith.constant 0 : i32
    %c0_i32_0 = arith.constant 0 : i32
    return %arg2, %arg0, %c0_i32 : i32, i32, i32
  }
  func.func @transform_1(%arg0: i32, %arg1: i32, %arg2: i32) -> (i32, i32, i32) {
    %c0_i32 = arith.constant 0 : i32
    %c0_i32_0 = arith.constant 0 : i32
    return %arg2, %c0_i32, %arg1 : i32, i32, i32
  }
  func.func @transform_2(%arg0: i32, %arg1: i32, %arg2: i32) -> (i32, i32) {
    %c0_i32 = arith.constant 0 : i32
    %c0_i32_0 = arith.constant 0 : i32
    return %c0_i32, %arg1 : i32, i32
  }
  func.func @transform_3(%arg0: i32, %arg1: i32, %arg2: i32) -> (i32, i32) {
    %c0_i32 = arith.constant 0 : i32
    return %arg0, %arg1 : i32, i32
  }
}

module attributes {stable_mosaic.version = 11 : i64} {
  func.func @_conv_bn_res_kernel(%arg0: i32, %arg1: i32, %arg2: i32, %arg3: memref<1x8x128xbf16, #tpu.memory_space<vmem>>, %arg4: memref<1x128x128xbf16, #tpu.memory_space<vmem>>, %arg5: memref<1x128xf32, #tpu.memory_space<vmem>>, %arg6: memref<8x128xf32, #tpu.memory_space<vmem>>, %arg7: memref<8x128xf32, #tpu.memory_space<vmem>>, %arg8: memref<8x128xf32, #tpu.memory_space<vmem>>) attributes {dimension_semantics = [#tpu.dimension_semantics<parallel>, #tpu.dimension_semantics<parallel>, #tpu.dimension_semantics<arbitrary>], iteration_bounds = array<i64: 1, 1, 9>, scalar_prefetch = 0 : i64, scratch_operands = 1 : i64, tpu.core_type = #tpu.core_type<tc>, window_params = [{transform_indices = @transform_0, window_bounds = array<i64: 1, 8, 128>}, {transform_indices = @transform_1, window_bounds = array<i64: 1, 128, 128>}, {transform_indices = @transform_2, window_bounds = array<i64: 1, 128>}, {transform_indices = @transform_3, window_bounds = array<i64: 8, 128>}, {transform_indices = @transform_4, window_bounds = array<i64: 8, 128>}]} {
    %c0_i32 = arith.constant 0 : i32
    %0 = arith.cmpi eq, %arg2, %c0_i32 : i32
    %1 = arith.extui %0 : i1 to i32
    %c0_i32_0 = arith.constant 0 : i32
    %2 = arith.cmpi ne, %1, %c0_i32_0 : i32
    scf.if %2 {
      %cst_11 = arith.constant 0.000000e+00 : f32
      %14 = vector.broadcast %cst_11 : f32 to vector<8x128xf32>
      %c0_12 = arith.constant 0 : index
      %c0_13 = arith.constant 0 : index
      %15 = vector.load %arg8[%c0_12, %c0_13] : memref<8x128xf32, #tpu.memory_space<vmem>>, vector<8x128xf32>
      tpu.vector_store %arg8[%c0_12, %c0_13], %14 {strides = array<i32>} : memref<8x128xf32, #tpu.memory_space<vmem>>, vector<8x128xf32>,
    } else {
    }
    %c0 = arith.constant 0 : index
    %c0_1 = arith.constant 0 : index
    %3 = vector.load %arg8[%c0, %c0_1] : memref<8x128xf32, #tpu.memory_space<vmem>>, vector<8x128xf32>
    %c0_2 = arith.constant 0 : index
    %c0_3 = arith.constant 0 : index
    %c0_4 = arith.constant 0 : index
    %4 = vector.load %arg3[%c0_2, %c0_3, %c0_4] : memref<1x8x128xbf16, #tpu.memory_space<vmem>>, vector<1x8x128xbf16>
    %5 = vector.shape_cast %4 : vector<1x8x128xbf16> to vector<8x128xbf16>
    %c0_5 = arith.constant 0 : index
    %c0_6 = arith.constant 0 : index
    %c0_7 = arith.constant 0 : index
    %6 = vector.load %arg4[%c0_5, %c0_6, %c0_7] : memref<1x128x128xbf16, #tpu.memory_space<vmem>>, vector<1x128x128xbf16>
    %7 = vector.shape_cast %6 : vector<1x128x128xbf16> to vector<128x128xbf16>
    %cst = arith.constant dense<0.000000e+00> : vector<8x128xf32>
    %8 = tpu.matmul %5, %7, %cst {dimension_numbers = #tpu.dot_dimension_numbers<[1], [0], [0], [1], [0, 0, 1, 1], [], []>} : vector<8x128xbf16>, vector<128x128xbf16>, vector<8x128xf32> -> vector<8x128xf32>
    %9 = arith.addf %3, %8 : vector<8x128xf32>
    %c0_8 = arith.constant 0 : index
    %c0_9 = arith.constant 0 : index
    %10 = vector.load %arg8[%c0_8, %c0_9] : memref<8x128xf32, #tpu.memory_space<vmem>>, vector<8x128xf32>
    tpu.vector_store %arg8[%c0_8, %c0_9], %9 {strides = array<i32>} : memref<8x128xf32, #tpu.memory_space<vmem>>, vector<8x128xf32>,
    %c8_i32 = arith.constant 8 : i32
    %11 = arith.cmpi eq, %arg2, %c8_i32 : i32
    %12 = arith.extui %11 : i1 to i32
    %c0_i32_10 = arith.constant 0 : i32
    %13 = arith.cmpi ne, %12, %c0_i32_10 : i32
    scf.if %13 {
      %c0_11 = arith.constant 0 : index
      %c0_12 = arith.constant 0 : index
      %14 = vector.load %arg8[%c0_11, %c0_12] : memref<8x128xf32, #tpu.memory_space<vmem>>, vector<8x128xf32>
      %c0_13 = arith.constant 0 : index
      %c0_14 = arith.constant 0 : index
      %15 = vector.load %arg5[%c0_13, %c0_14] : memref<1x128xf32, #tpu.memory_space<vmem>>, vector<1x128xf32>
      %16 = vector.broadcast %15 : vector<1x128xf32> to vector<8x128xf32>
      %17 = arith.addf %14, %16 : vector<8x128xf32>
      %c0_15 = arith.constant 0 : index
      %c0_16 = arith.constant 0 : index
      %18 = vector.load %arg6[%c0_15, %c0_16] : memref<8x128xf32, #tpu.memory_space<vmem>>, vector<8x128xf32>
      %19 = arith.addf %17, %18 : vector<8x128xf32>
      %cst_17 = arith.constant 0.000000e+00 : f32
      %20 = vector.broadcast %cst_17 : f32 to vector<8x128xf32>
      %21 = arith.maximumf %19, %20 : vector<8x128xf32>
      %c0_18 = arith.constant 0 : index
      %c0_19 = arith.constant 0 : index
      %22 = vector.load %arg7[%c0_18, %c0_19] : memref<8x128xf32, #tpu.memory_space<vmem>>, vector<8x128xf32>
      tpu.vector_store %arg7[%c0_18, %c0_19], %21 {strides = array<i32>} : memref<8x128xf32, #tpu.memory_space<vmem>>, vector<8x128xf32>,
    } else {
    }
    return
  }
  func.func @transform_0(%arg0: i32, %arg1: i32, %arg2: i32) -> (i32, i32, i32) {
    %c0_i32 = arith.constant 0 : i32
    %c0_i32_0 = arith.constant 0 : i32
    return %arg2, %arg0, %c0_i32 : i32, i32, i32
  }
  func.func @transform_1(%arg0: i32, %arg1: i32, %arg2: i32) -> (i32, i32, i32) {
    %c0_i32 = arith.constant 0 : i32
    %c0_i32_0 = arith.constant 0 : i32
    return %arg2, %c0_i32, %arg1 : i32, i32, i32
  }
  func.func @transform_2(%arg0: i32, %arg1: i32, %arg2: i32) -> (i32, i32) {
    %c0_i32 = arith.constant 0 : i32
    %c0_i32_0 = arith.constant 0 : i32
    return %c0_i32, %arg1 : i32, i32
  }
  func.func @transform_3(%arg0: i32, %arg1: i32, %arg2: i32) -> (i32, i32) {
    %c0_i32 = arith.constant 0 : i32
    return %arg0, %arg1 : i32, i32
  }
  func.func @transform_4(%arg0: i32, %arg1: i32, %arg2: i32) -> (i32, i32) {
    %c0_i32 = arith.constant 0 : i32
    return %arg0, %arg1 : i32, i32
  }
}

module attributes {stable_mosaic.version = 11 : i64} {
  func.func @_conv_bn_kernel(%arg0: i32, %arg1: i32, %arg2: i32, %arg3: memref<1x8x64xbf16, #tpu.memory_space<vmem>>, %arg4: memref<1x64x128xbf16, #tpu.memory_space<vmem>>, %arg5: memref<1x128xf32, #tpu.memory_space<vmem>>, %arg6: memref<8x128xf32, #tpu.memory_space<vmem>>, %arg7: memref<8x128xf32, #tpu.memory_space<vmem>>) attributes {dimension_semantics = [#tpu.dimension_semantics<parallel>, #tpu.dimension_semantics<parallel>, #tpu.dimension_semantics<arbitrary>], iteration_bounds = array<i64: 1, 1, 1>, scalar_prefetch = 0 : i64, scratch_operands = 1 : i64, tpu.core_type = #tpu.core_type<tc>, window_params = [{transform_indices = @transform_0, window_bounds = array<i64: 1, 8, 64>}, {transform_indices = @transform_1, window_bounds = array<i64: 1, 64, 128>}, {transform_indices = @transform_2, window_bounds = array<i64: 1, 128>}, {transform_indices = @transform_3, window_bounds = array<i64: 8, 128>}]} {
    %c0_i32 = arith.constant 0 : i32
    %0 = arith.cmpi eq, %arg2, %c0_i32 : i32
    %1 = arith.extui %0 : i1 to i32
    %c0_i32_0 = arith.constant 0 : i32
    %2 = arith.cmpi ne, %1, %c0_i32_0 : i32
    scf.if %2 {
      %cst_12 = arith.constant 0.000000e+00 : f32
      %14 = vector.broadcast %cst_12 : f32 to vector<8x128xf32>
      %c0_13 = arith.constant 0 : index
      %c0_14 = arith.constant 0 : index
      %15 = vector.load %arg7[%c0_13, %c0_14] : memref<8x128xf32, #tpu.memory_space<vmem>>, vector<8x128xf32>
      tpu.vector_store %arg7[%c0_13, %c0_14], %14 {strides = array<i32>} : memref<8x128xf32, #tpu.memory_space<vmem>>, vector<8x128xf32>,
    } else {
    }
    %c0 = arith.constant 0 : index
    %c0_1 = arith.constant 0 : index
    %3 = vector.load %arg7[%c0, %c0_1] : memref<8x128xf32, #tpu.memory_space<vmem>>, vector<8x128xf32>
    %c0_2 = arith.constant 0 : index
    %c0_3 = arith.constant 0 : index
    %c0_4 = arith.constant 0 : index
    %4 = vector.load %arg3[%c0_2, %c0_3, %c0_4] : memref<1x8x64xbf16, #tpu.memory_space<vmem>>, vector<1x8x64xbf16>
    %5 = vector.shape_cast %4 : vector<1x8x64xbf16> to vector<8x64xbf16>
    %c0_5 = arith.constant 0 : index
    %c0_6 = arith.constant 0 : index
    %c0_7 = arith.constant 0 : index
    %6 = vector.load %arg4[%c0_5, %c0_6, %c0_7] : memref<1x64x128xbf16, #tpu.memory_space<vmem>>, vector<1x64x128xbf16>
    %7 = vector.shape_cast %6 : vector<1x64x128xbf16> to vector<64x128xbf16>
    %cst = arith.constant dense<0.000000e+00> : vector<8x128xf32>
    %8 = tpu.matmul %5, %7, %cst {dimension_numbers = #tpu.dot_dimension_numbers<[1], [0], [0], [1], [0, 0, 1, 1], [], []>} : vector<8x64xbf16>, vector<64x128xbf16>, vector<8x128xf32> -> vector<8x128xf32>
    %9 = arith.addf %3, %8 : vector<8x128xf32>
    %c0_8 = arith.constant 0 : index
    %c0_9 = arith.constant 0 : index
    %10 = vector.load %arg7[%c0_8, %c0_9] : memref<8x128xf32, #tpu.memory_space<vmem>>, vector<8x128xf32>
    tpu.vector_store %arg7[%c0_8, %c0_9], %9 {strides = array<i32>} : memref<8x128xf32, #tpu.memory_space<vmem>>, vector<8x128xf32>,
    %c0_i32_10 = arith.constant 0 : i32
    %11 = arith.cmpi eq, %arg2, %c0_i32_10 : i32
    %12 = arith.extui %11 : i1 to i32
    %c0_i32_11 = arith.constant 0 : i32
    %13 = arith.cmpi ne, %12, %c0_i32_11 : i32
    scf.if %13 {
      %c0_12 = arith.constant 0 : index
      %c0_13 = arith.constant 0 : index
      %14 = vector.load %arg7[%c0_12, %c0_13] : memref<8x128xf32, #tpu.memory_space<vmem>>, vector<8x128xf32>
      %c0_14 = arith.constant 0 : index
      %c0_15 = arith.constant 0 : index
      %15 = vector.load %arg5[%c0_14, %c0_15] : memref<1x128xf32, #tpu.memory_space<vmem>>, vector<1x128xf32>
      %16 = vector.broadcast %15 : vector<1x128xf32> to vector<8x128xf32>
      %17 = arith.addf %14, %16 : vector<8x128xf32>
      %c0_16 = arith.constant 0 : index
      %c0_17 = arith.constant 0 : index
      %18 = vector.load %arg6[%c0_16, %c0_17] : memref<8x128xf32, #tpu.memory_space<vmem>>, vector<8x128xf32>
      tpu.vector_store %arg6[%c0_16, %c0_17], %17 {strides = array<i32>} : memref<8x128xf32, #tpu.memory_space<vmem>>, vector<8x128xf32>,
    } else {
    }
    return
  }
  func.func @transform_0(%arg0: i32, %arg1: i32, %arg2: i32) -> (i32, i32, i32) {
    %c0_i32 = arith.constant 0 : i32
    %c0_i32_0 = arith.constant 0 : i32
    return %arg2, %arg0, %c0_i32 : i32, i32, i32
  }
  func.func @transform_1(%arg0: i32, %arg1: i32, %arg2: i32) -> (i32, i32, i32) {
    %c0_i32 = arith.constant 0 : i32
    %c0_i32_0 = arith.constant 0 : i32
    return %arg2, %c0_i32, %arg1 : i32, i32, i32
  }
  func.func @transform_2(%arg0: i32, %arg1: i32, %arg2: i32) -> (i32, i32) {
    %c0_i32 = arith.constant 0 : i32
    %c0_i32_0 = arith.constant 0 : i32
    return %c0_i32, %arg1 : i32, i32
  }
  func.func @transform_3(%arg0: i32, %arg1: i32, %arg2: i32) -> (i32, i32) {
    %c0_i32 = arith.constant 0 : i32
    return %arg0, %arg1 : i32, i32
  }
}

module attributes {stable_mosaic.version = 11 : i64} {
  func.func @_conv_bn_kernel(%arg0: i32, %arg1: i32, %arg2: i32, %arg3: memref<1x8x128xbf16, #tpu.memory_space<vmem>>, %arg4: memref<1x128x128xbf16, #tpu.memory_space<vmem>>, %arg5: memref<1x128xf32, #tpu.memory_space<vmem>>, %arg6: memref<8x128xf32, #tpu.memory_space<vmem>>, %arg7: memref<8x128xf32, #tpu.memory_space<vmem>>) attributes {dimension_semantics = [#tpu.dimension_semantics<parallel>, #tpu.dimension_semantics<parallel>, #tpu.dimension_semantics<arbitrary>], iteration_bounds = array<i64: 1, 1, 9>, scalar_prefetch = 0 : i64, scratch_operands = 1 : i64, tpu.core_type = #tpu.core_type<tc>, window_params = [{transform_indices = @transform_0, window_bounds = array<i64: 1, 8, 128>}, {transform_indices = @transform_1, window_bounds = array<i64: 1, 128, 128>}, {transform_indices = @transform_2, window_bounds = array<i64: 1, 128>}, {transform_indices = @transform_3, window_bounds = array<i64: 8, 128>}]} {
    %c0_i32 = arith.constant 0 : i32
    %0 = arith.cmpi eq, %arg2, %c0_i32 : i32
    %1 = arith.extui %0 : i1 to i32
    %c0_i32_0 = arith.constant 0 : i32
    %2 = arith.cmpi ne, %1, %c0_i32_0 : i32
    scf.if %2 {
      %cst_11 = arith.constant 0.000000e+00 : f32
      %14 = vector.broadcast %cst_11 : f32 to vector<8x128xf32>
      %c0_12 = arith.constant 0 : index
      %c0_13 = arith.constant 0 : index
      %15 = vector.load %arg7[%c0_12, %c0_13] : memref<8x128xf32, #tpu.memory_space<vmem>>, vector<8x128xf32>
      tpu.vector_store %arg7[%c0_12, %c0_13], %14 {strides = array<i32>} : memref<8x128xf32, #tpu.memory_space<vmem>>, vector<8x128xf32>,
    } else {
    }
    %c0 = arith.constant 0 : index
    %c0_1 = arith.constant 0 : index
    %3 = vector.load %arg7[%c0, %c0_1] : memref<8x128xf32, #tpu.memory_space<vmem>>, vector<8x128xf32>
    %c0_2 = arith.constant 0 : index
    %c0_3 = arith.constant 0 : index
    %c0_4 = arith.constant 0 : index
    %4 = vector.load %arg3[%c0_2, %c0_3, %c0_4] : memref<1x8x128xbf16, #tpu.memory_space<vmem>>, vector<1x8x128xbf16>
    %5 = vector.shape_cast %4 : vector<1x8x128xbf16> to vector<8x128xbf16>
    %c0_5 = arith.constant 0 : index
    %c0_6 = arith.constant 0 : index
    %c0_7 = arith.constant 0 : index
    %6 = vector.load %arg4[%c0_5, %c0_6, %c0_7] : memref<1x128x128xbf16, #tpu.memory_space<vmem>>, vector<1x128x128xbf16>
    %7 = vector.shape_cast %6 : vector<1x128x128xbf16> to vector<128x128xbf16>
    %cst = arith.constant dense<0.000000e+00> : vector<8x128xf32>
    %8 = tpu.matmul %5, %7, %cst {dimension_numbers = #tpu.dot_dimension_numbers<[1], [0], [0], [1], [0, 0, 1, 1], [], []>} : vector<8x128xbf16>, vector<128x128xbf16>, vector<8x128xf32> -> vector<8x128xf32>
    %9 = arith.addf %3, %8 : vector<8x128xf32>
    %c0_8 = arith.constant 0 : index
    %c0_9 = arith.constant 0 : index
    %10 = vector.load %arg7[%c0_8, %c0_9] : memref<8x128xf32, #tpu.memory_space<vmem>>, vector<8x128xf32>
    tpu.vector_store %arg7[%c0_8, %c0_9], %9 {strides = array<i32>} : memref<8x128xf32, #tpu.memory_space<vmem>>, vector<8x128xf32>,
    %c8_i32 = arith.constant 8 : i32
    %11 = arith.cmpi eq, %arg2, %c8_i32 : i32
    %12 = arith.extui %11 : i1 to i32
    %c0_i32_10 = arith.constant 0 : i32
    %13 = arith.cmpi ne, %12, %c0_i32_10 : i32
    scf.if %13 {
      %c0_11 = arith.constant 0 : index
      %c0_12 = arith.constant 0 : index
      %14 = vector.load %arg7[%c0_11, %c0_12] : memref<8x128xf32, #tpu.memory_space<vmem>>, vector<8x128xf32>
      %c0_13 = arith.constant 0 : index
      %c0_14 = arith.constant 0 : index
      %15 = vector.load %arg5[%c0_13, %c0_14] : memref<1x128xf32, #tpu.memory_space<vmem>>, vector<1x128xf32>
      %16 = vector.broadcast %15 : vector<1x128xf32> to vector<8x128xf32>
      %17 = arith.addf %14, %16 : vector<8x128xf32>
      %cst_15 = arith.constant 0.000000e+00 : f32
      %18 = vector.broadcast %cst_15 : f32 to vector<8x128xf32>
      %19 = arith.maximumf %17, %18 : vector<8x128xf32>
      %c0_16 = arith.constant 0 : index
      %c0_17 = arith.constant 0 : index
      %20 = vector.load %arg6[%c0_16, %c0_17] : memref<8x128xf32, #tpu.memory_space<vmem>>, vector<8x128xf32>
      tpu.vector_store %arg6[%c0_16, %c0_17], %19 {strides = array<i32>} : memref<8x128xf32, #tpu.memory_space<vmem>>, vector<8x128xf32>,
    } else {
    }
    return
  }
  func.func @transform_0(%arg0: i32, %arg1: i32, %arg2: i32) -> (i32, i32, i32) {
    %c0_i32 = arith.constant 0 : i32
    %c0_i32_0 = arith.constant 0 : i32
    return %arg2, %arg0, %c0_i32 : i32, i32, i32
  }
  func.func @transform_1(%arg0: i32, %arg1: i32, %arg2: i32) -> (i32, i32, i32) {
    %c0_i32 = arith.constant 0 : i32
    %c0_i32_0 = arith.constant 0 : i32
    return %arg2, %c0_i32, %arg1 : i32, i32, i32
  }
  func.func @transform_2(%arg0: i32, %arg1: i32, %arg2: i32) -> (i32, i32) {
    %c0_i32 = arith.constant 0 : i32
    %c0_i32_0 = arith.constant 0 : i32
    return %c0_i32, %arg1 : i32, i32
  }
  func.func @transform_3(%arg0: i32, %arg1: i32, %arg2: i32) -> (i32, i32) {
    %c0_i32 = arith.constant 0 : i32
    return %arg0, %arg1 : i32, i32
  }
}

module attributes {stable_mosaic.version = 11 : i64} {
  func.func @_conv_bn_kernel(%arg0: i32, %arg1: i32, %arg2: i32, %arg3: memref<1x8x128xbf16, #tpu.memory_space<vmem>>, %arg4: memref<1x128x256xbf16, #tpu.memory_space<vmem>>, %arg5: memref<1x256xf32, #tpu.memory_space<vmem>>, %arg6: memref<8x256xf32, #tpu.memory_space<vmem>>, %arg7: memref<8x256xf32, #tpu.memory_space<vmem>>) attributes {dimension_semantics = [#tpu.dimension_semantics<parallel>, #tpu.dimension_semantics<parallel>, #tpu.dimension_semantics<arbitrary>], iteration_bounds = array<i64: 1, 1, 9>, scalar_prefetch = 0 : i64, scratch_operands = 1 : i64, tpu.core_type = #tpu.core_type<tc>, window_params = [{transform_indices = @transform_0, window_bounds = array<i64: 1, 8, 128>}, {transform_indices = @transform_1, window_bounds = array<i64: 1, 128, 256>}, {transform_indices = @transform_2, window_bounds = array<i64: 1, 256>}, {transform_indices = @transform_3, window_bounds = array<i64: 8, 256>}]} {
    %c0_i32 = arith.constant 0 : i32
    %0 = arith.cmpi eq, %arg2, %c0_i32 : i32
    %1 = arith.extui %0 : i1 to i32
    %c0_i32_0 = arith.constant 0 : i32
    %2 = arith.cmpi ne, %1, %c0_i32_0 : i32
    scf.if %2 {
      %cst_11 = arith.constant 0.000000e+00 : f32
      %14 = vector.broadcast %cst_11 : f32 to vector<8x256xf32>
      %c0_12 = arith.constant 0 : index
      %c0_13 = arith.constant 0 : index
      %15 = vector.load %arg7[%c0_12, %c0_13] : memref<8x256xf32, #tpu.memory_space<vmem>>, vector<8x256xf32>
      tpu.vector_store %arg7[%c0_12, %c0_13], %14 {strides = array<i32>} : memref<8x256xf32, #tpu.memory_space<vmem>>, vector<8x256xf32>,
    } else {
    }
    %c0 = arith.constant 0 : index
    %c0_1 = arith.constant 0 : index
    %3 = vector.load %arg7[%c0, %c0_1] : memref<8x256xf32, #tpu.memory_space<vmem>>, vector<8x256xf32>
    %c0_2 = arith.constant 0 : index
    %c0_3 = arith.constant 0 : index
    %c0_4 = arith.constant 0 : index
    %4 = vector.load %arg3[%c0_2, %c0_3, %c0_4] : memref<1x8x128xbf16, #tpu.memory_space<vmem>>, vector<1x8x128xbf16>
    %5 = vector.shape_cast %4 : vector<1x8x128xbf16> to vector<8x128xbf16>
    %c0_5 = arith.constant 0 : index
    %c0_6 = arith.constant 0 : index
    %c0_7 = arith.constant 0 : index
    %6 = vector.load %arg4[%c0_5, %c0_6, %c0_7] : memref<1x128x256xbf16, #tpu.memory_space<vmem>>, vector<1x128x256xbf16>
    %7 = vector.shape_cast %6 : vector<1x128x256xbf16> to vector<128x256xbf16>
    %cst = arith.constant dense<0.000000e+00> : vector<8x256xf32>
    %8 = tpu.matmul %5, %7, %cst {dimension_numbers = #tpu.dot_dimension_numbers<[1], [0], [0], [1], [0, 0, 1, 1], [], []>} : vector<8x128xbf16>, vector<128x256xbf16>, vector<8x256xf32> -> vector<8x256xf32>
    %9 = arith.addf %3, %8 : vector<8x256xf32>
    %c0_8 = arith.constant 0 : index
    %c0_9 = arith.constant 0 : index
    %10 = vector.load %arg7[%c0_8, %c0_9] : memref<8x256xf32, #tpu.memory_space<vmem>>, vector<8x256xf32>
    tpu.vector_store %arg7[%c0_8, %c0_9], %9 {strides = array<i32>} : memref<8x256xf32, #tpu.memory_space<vmem>>, vector<8x256xf32>,
    %c8_i32 = arith.constant 8 : i32
    %11 = arith.cmpi eq, %arg2, %c8_i32 : i32
    %12 = arith.extui %11 : i1 to i32
    %c0_i32_10 = arith.constant 0 : i32
    %13 = arith.cmpi ne, %12, %c0_i32_10 : i32
    scf.if %13 {
      %c0_11 = arith.constant 0 : index
      %c0_12 = arith.constant 0 : index
      %14 = vector.load %arg7[%c0_11, %c0_12] : memref<8x256xf32, #tpu.memory_space<vmem>>, vector<8x256xf32>
      %c0_13 = arith.constant 0 : index
      %c0_14 = arith.constant 0 : index
      %15 = vector.load %arg5[%c0_13, %c0_14] : memref<1x256xf32, #tpu.memory_space<vmem>>, vector<1x256xf32>
      %16 = vector.broadcast %15 : vector<1x256xf32> to vector<8x256xf32>
      %17 = arith.addf %14, %16 : vector<8x256xf32>
      %cst_15 = arith.constant 0.000000e+00 : f32
      %18 = vector.broadcast %cst_15 : f32 to vector<8x256xf32>
      %19 = arith.maximumf %17, %18 : vector<8x256xf32>
      %c0_16 = arith.constant 0 : index
      %c0_17 = arith.constant 0 : index
      %20 = vector.load %arg6[%c0_16, %c0_17] : memref<8x256xf32, #tpu.memory_space<vmem>>, vector<8x256xf32>
      tpu.vector_store %arg6[%c0_16, %c0_17], %19 {strides = array<i32>} : memref<8x256xf32, #tpu.memory_space<vmem>>, vector<8x256xf32>,
    } else {
    }
    return
  }
  func.func @transform_0(%arg0: i32, %arg1: i32, %arg2: i32) -> (i32, i32, i32) {
    %c0_i32 = arith.constant 0 : i32
    %c0_i32_0 = arith.constant 0 : i32
    return %arg2, %arg0, %c0_i32 : i32, i32, i32
  }
  func.func @transform_1(%arg0: i32, %arg1: i32, %arg2: i32) -> (i32, i32, i32) {
    %c0_i32 = arith.constant 0 : i32
    %c0_i32_0 = arith.constant 0 : i32
    return %arg2, %c0_i32, %arg1 : i32, i32, i32
  }
  func.func @transform_2(%arg0: i32, %arg1: i32, %arg2: i32) -> (i32, i32) {
    %c0_i32 = arith.constant 0 : i32
    %c0_i32_0 = arith.constant 0 : i32
    return %c0_i32, %arg1 : i32, i32
  }
  func.func @transform_3(%arg0: i32, %arg1: i32, %arg2: i32) -> (i32, i32) {
    %c0_i32 = arith.constant 0 : i32
    return %arg0, %arg1 : i32, i32
  }
}

module attributes {stable_mosaic.version = 11 : i64} {
  func.func @_conv_bn_kernel(%arg0: i32, %arg1: i32, %arg2: i32, %arg3: memref<1x8x128xbf16, #tpu.memory_space<vmem>>, %arg4: memref<1x128x256xbf16, #tpu.memory_space<vmem>>, %arg5: memref<1x256xf32, #tpu.memory_space<vmem>>, %arg6: memref<8x256xf32, #tpu.memory_space<vmem>>, %arg7: memref<8x256xf32, #tpu.memory_space<vmem>>) attributes {dimension_semantics = [#tpu.dimension_semantics<parallel>, #tpu.dimension_semantics<parallel>, #tpu.dimension_semantics<arbitrary>], iteration_bounds = array<i64: 1, 1, 1>, scalar_prefetch = 0 : i64, scratch_operands = 1 : i64, tpu.core_type = #tpu.core_type<tc>, window_params = [{transform_indices = @transform_0, window_bounds = array<i64: 1, 8, 128>}, {transform_indices = @transform_1, window_bounds = array<i64: 1, 128, 256>}, {transform_indices = @transform_2, window_bounds = array<i64: 1, 256>}, {transform_indices = @transform_3, window_bounds = array<i64: 8, 256>}]} {
    %c0_i32 = arith.constant 0 : i32
    %0 = arith.cmpi eq, %arg2, %c0_i32 : i32
    %1 = arith.extui %0 : i1 to i32
    %c0_i32_0 = arith.constant 0 : i32
    %2 = arith.cmpi ne, %1, %c0_i32_0 : i32
    scf.if %2 {
      %cst_12 = arith.constant 0.000000e+00 : f32
      %14 = vector.broadcast %cst_12 : f32 to vector<8x256xf32>
      %c0_13 = arith.constant 0 : index
      %c0_14 = arith.constant 0 : index
      %15 = vector.load %arg7[%c0_13, %c0_14] : memref<8x256xf32, #tpu.memory_space<vmem>>, vector<8x256xf32>
      tpu.vector_store %arg7[%c0_13, %c0_14], %14 {strides = array<i32>} : memref<8x256xf32, #tpu.memory_space<vmem>>, vector<8x256xf32>,
    } else {
    }
    %c0 = arith.constant 0 : index
    %c0_1 = arith.constant 0 : index
    %3 = vector.load %arg7[%c0, %c0_1] : memref<8x256xf32, #tpu.memory_space<vmem>>, vector<8x256xf32>
    %c0_2 = arith.constant 0 : index
    %c0_3 = arith.constant 0 : index
    %c0_4 = arith.constant 0 : index
    %4 = vector.load %arg3[%c0_2, %c0_3, %c0_4] : memref<1x8x128xbf16, #tpu.memory_space<vmem>>, vector<1x8x128xbf16>
    %5 = vector.shape_cast %4 : vector<1x8x128xbf16> to vector<8x128xbf16>
    %c0_5 = arith.constant 0 : index
    %c0_6 = arith.constant 0 : index
    %c0_7 = arith.constant 0 : index
    %6 = vector.load %arg4[%c0_5, %c0_6, %c0_7] : memref<1x128x256xbf16, #tpu.memory_space<vmem>>, vector<1x128x256xbf16>
    %7 = vector.shape_cast %6 : vector<1x128x256xbf16> to vector<128x256xbf16>
    %cst = arith.constant dense<0.000000e+00> : vector<8x256xf32>
    %8 = tpu.matmul %5, %7, %cst {dimension_numbers = #tpu.dot_dimension_numbers<[1], [0], [0], [1], [0, 0, 1, 1], [], []>} : vector<8x128xbf16>, vector<128x256xbf16>, vector<8x256xf32> -> vector<8x256xf32>
    %9 = arith.addf %3, %8 : vector<8x256xf32>
    %c0_8 = arith.constant 0 : index
    %c0_9 = arith.constant 0 : index
    %10 = vector.load %arg7[%c0_8, %c0_9] : memref<8x256xf32, #tpu.memory_space<vmem>>, vector<8x256xf32>
    tpu.vector_store %arg7[%c0_8, %c0_9], %9 {strides = array<i32>} : memref<8x256xf32, #tpu.memory_space<vmem>>, vector<8x256xf32>,
    %c0_i32_10 = arith.constant 0 : i32
    %11 = arith.cmpi eq, %arg2, %c0_i32_10 : i32
    %12 = arith.extui %11 : i1 to i32
    %c0_i32_11 = arith.constant 0 : i32
    %13 = arith.cmpi ne, %12, %c0_i32_11 : i32
    scf.if %13 {
      %c0_12 = arith.constant 0 : index
      %c0_13 = arith.constant 0 : index
      %14 = vector.load %arg7[%c0_12, %c0_13] : memref<8x256xf32, #tpu.memory_space<vmem>>, vector<8x256xf32>
      %c0_14 = arith.constant 0 : index
      %c0_15 = arith.constant 0 : index
      %15 = vector.load %arg5[%c0_14, %c0_15] : memref<1x256xf32, #tpu.memory_space<vmem>>, vector<1x256xf32>
      %16 = vector.broadcast %15 : vector<1x256xf32> to vector<8x256xf32>
      %17 = arith.addf %14, %16 : vector<8x256xf32>
      %c0_16 = arith.constant 0 : index
      %c0_17 = arith.constant 0 : index
      %18 = vector.load %arg6[%c0_16, %c0_17] : memref<8x256xf32, #tpu.memory_space<vmem>>, vector<8x256xf32>
      tpu.vector_store %arg6[%c0_16, %c0_17], %17 {strides = array<i32>} : memref<8x256xf32, #tpu.memory_space<vmem>>, vector<8x256xf32>,
    } else {
    }
    return
  }
  func.func @transform_0(%arg0: i32, %arg1: i32, %arg2: i32) -> (i32, i32, i32) {
    %c0_i32 = arith.constant 0 : i32
    %c0_i32_0 = arith.constant 0 : i32
    return %arg2, %arg0, %c0_i32 : i32, i32, i32
  }
  func.func @transform_1(%arg0: i32, %arg1: i32, %arg2: i32) -> (i32, i32, i32) {
    %c0_i32 = arith.constant 0 : i32
    %c0_i32_0 = arith.constant 0 : i32
    return %arg2, %c0_i32, %arg1 : i32, i32, i32
  }
  func.func @transform_2(%arg0: i32, %arg1: i32, %arg2: i32) -> (i32, i32) {
    %c0_i32 = arith.constant 0 : i32
    %c0_i32_0 = arith.constant 0 : i32
    return %c0_i32, %arg1 : i32, i32
  }
  func.func @transform_3(%arg0: i32, %arg1: i32, %arg2: i32) -> (i32, i32) {
    %c0_i32 = arith.constant 0 : i32
    return %arg0, %arg1 : i32, i32
  }
}

module attributes {stable_mosaic.version = 11 : i64} {
  func.func @_conv_bn_res_kernel(%arg0: i32, %arg1: i32, %arg2: i32, %arg3: memref<1x8x256xbf16, #tpu.memory_space<vmem>>, %arg4: memref<1x256x256xbf16, #tpu.memory_space<vmem>>, %arg5: memref<1x256xf32, #tpu.memory_space<vmem>>, %arg6: memref<8x256xf32, #tpu.memory_space<vmem>>, %arg7: memref<8x256xf32, #tpu.memory_space<vmem>>, %arg8: memref<8x256xf32, #tpu.memory_space<vmem>>) attributes {dimension_semantics = [#tpu.dimension_semantics<parallel>, #tpu.dimension_semantics<parallel>, #tpu.dimension_semantics<arbitrary>], iteration_bounds = array<i64: 1, 1, 9>, scalar_prefetch = 0 : i64, scratch_operands = 1 : i64, tpu.core_type = #tpu.core_type<tc>, window_params = [{transform_indices = @transform_0, window_bounds = array<i64: 1, 8, 256>}, {transform_indices = @transform_1, window_bounds = array<i64: 1, 256, 256>}, {transform_indices = @transform_2, window_bounds = array<i64: 1, 256>}, {transform_indices = @transform_3, window_bounds = array<i64: 8, 256>}, {transform_indices = @transform_4, window_bounds = array<i64: 8, 256>}]} {
    %c0_i32 = arith.constant 0 : i32
    %0 = arith.cmpi eq, %arg2, %c0_i32 : i32
    %1 = arith.extui %0 : i1 to i32
    %c0_i32_0 = arith.constant 0 : i32
    %2 = arith.cmpi ne, %1, %c0_i32_0 : i32
    scf.if %2 {
      %cst_11 = arith.constant 0.000000e+00 : f32
      %14 = vector.broadcast %cst_11 : f32 to vector<8x256xf32>
      %c0_12 = arith.constant 0 : index
      %c0_13 = arith.constant 0 : index
      %15 = vector.load %arg8[%c0_12, %c0_13] : memref<8x256xf32, #tpu.memory_space<vmem>>, vector<8x256xf32>
      tpu.vector_store %arg8[%c0_12, %c0_13], %14 {strides = array<i32>} : memref<8x256xf32, #tpu.memory_space<vmem>>, vector<8x256xf32>,
    } else {
    }
    %c0 = arith.constant 0 : index
    %c0_1 = arith.constant 0 : index
    %3 = vector.load %arg8[%c0, %c0_1] : memref<8x256xf32, #tpu.memory_space<vmem>>, vector<8x256xf32>
    %c0_2 = arith.constant 0 : index
    %c0_3 = arith.constant 0 : index
    %c0_4 = arith.constant 0 : index
    %4 = vector.load %arg3[%c0_2, %c0_3, %c0_4] : memref<1x8x256xbf16, #tpu.memory_space<vmem>>, vector<1x8x256xbf16>
    %5 = vector.shape_cast %4 : vector<1x8x256xbf16> to vector<8x256xbf16>
    %c0_5 = arith.constant 0 : index
    %c0_6 = arith.constant 0 : index
    %c0_7 = arith.constant 0 : index
    %6 = vector.load %arg4[%c0_5, %c0_6, %c0_7] : memref<1x256x256xbf16, #tpu.memory_space<vmem>>, vector<1x256x256xbf16>
    %7 = vector.shape_cast %6 : vector<1x256x256xbf16> to vector<256x256xbf16>
    %cst = arith.constant dense<0.000000e+00> : vector<8x256xf32>
    %8 = tpu.matmul %5, %7, %cst {dimension_numbers = #tpu.dot_dimension_numbers<[1], [0], [0], [1], [0, 0, 1, 1], [], []>} : vector<8x256xbf16>, vector<256x256xbf16>, vector<8x256xf32> -> vector<8x256xf32>
    %9 = arith.addf %3, %8 : vector<8x256xf32>
    %c0_8 = arith.constant 0 : index
    %c0_9 = arith.constant 0 : index
    %10 = vector.load %arg8[%c0_8, %c0_9] : memref<8x256xf32, #tpu.memory_space<vmem>>, vector<8x256xf32>
    tpu.vector_store %arg8[%c0_8, %c0_9], %9 {strides = array<i32>} : memref<8x256xf32, #tpu.memory_space<vmem>>, vector<8x256xf32>,
    %c8_i32 = arith.constant 8 : i32
    %11 = arith.cmpi eq, %arg2, %c8_i32 : i32
    %12 = arith.extui %11 : i1 to i32
    %c0_i32_10 = arith.constant 0 : i32
    %13 = arith.cmpi ne, %12, %c0_i32_10 : i32
    scf.if %13 {
      %c0_11 = arith.constant 0 : index
      %c0_12 = arith.constant 0 : index
      %14 = vector.load %arg8[%c0_11, %c0_12] : memref<8x256xf32, #tpu.memory_space<vmem>>, vector<8x256xf32>
      %c0_13 = arith.constant 0 : index
      %c0_14 = arith.constant 0 : index
      %15 = vector.load %arg5[%c0_13, %c0_14] : memref<1x256xf32, #tpu.memory_space<vmem>>, vector<1x256xf32>
      %16 = vector.broadcast %15 : vector<1x256xf32> to vector<8x256xf32>
      %17 = arith.addf %14, %16 : vector<8x256xf32>
      %c0_15 = arith.constant 0 : index
      %c0_16 = arith.constant 0 : index
      %18 = vector.load %arg6[%c0_15, %c0_16] : memref<8x256xf32, #tpu.memory_space<vmem>>, vector<8x256xf32>
      %19 = arith.addf %17, %18 : vector<8x256xf32>
      %cst_17 = arith.constant 0.000000e+00 : f32
      %20 = vector.broadcast %cst_17 : f32 to vector<8x256xf32>
      %21 = arith.maximumf %19, %20 : vector<8x256xf32>
      %c0_18 = arith.constant 0 : index
      %c0_19 = arith.constant 0 : index
      %22 = vector.load %arg7[%c0_18, %c0_19] : memref<8x256xf32, #tpu.memory_space<vmem>>, vector<8x256xf32>
      tpu.vector_store %arg7[%c0_18, %c0_19], %21 {strides = array<i32>} : memref<8x256xf32, #tpu.memory_space<vmem>>, vector<8x256xf32>,
    } else {
    }
    return
  }
  func.func @transform_0(%arg0: i32, %arg1: i32, %arg2: i32) -> (i32, i32, i32) {
    %c0_i32 = arith.constant 0 : i32
    %c0_i32_0 = arith.constant 0 : i32
    return %arg2, %arg0, %c0_i32 : i32, i32, i32
  }
  func.func @transform_1(%arg0: i32, %arg1: i32, %arg2: i32) -> (i32, i32, i32) {
    %c0_i32 = arith.constant 0 : i32
    %c0_i32_0 = arith.constant 0 : i32
    return %arg2, %c0_i32, %arg1 : i32, i32, i32
  }
  func.func @transform_2(%arg0: i32, %arg1: i32, %arg2: i32) -> (i32, i32) {
    %c0_i32 = arith.constant 0 : i32
    %c0_i32_0 = arith.constant 0 : i32
    return %c0_i32, %arg1 : i32, i32
  }
  func.func @transform_3(%arg0: i32, %arg1: i32, %arg2: i32) -> (i32, i32) {
    %c0_i32 = arith.constant 0 : i32
    return %arg0, %arg1 : i32, i32
  }
  func.func @transform_4(%arg0: i32, %arg1: i32, %arg2: i32) -> (i32, i32) {
    %c0_i32 = arith.constant 0 : i32
    return %arg0, %arg1 : i32, i32
  }
}

module attributes {stable_mosaic.version = 11 : i64} {
  func.func @_conv_bn_kernel(%arg0: i32, %arg1: i32, %arg2: i32, %arg3: memref<1x8x256xbf16, #tpu.memory_space<vmem>>, %arg4: memref<1x256x256xbf16, #tpu.memory_space<vmem>>, %arg5: memref<1x256xf32, #tpu.memory_space<vmem>>, %arg6: memref<8x256xf32, #tpu.memory_space<vmem>>, %arg7: memref<8x256xf32, #tpu.memory_space<vmem>>) attributes {dimension_semantics = [#tpu.dimension_semantics<parallel>, #tpu.dimension_semantics<parallel>, #tpu.dimension_semantics<arbitrary>], iteration_bounds = array<i64: 1, 1, 9>, scalar_prefetch = 0 : i64, scratch_operands = 1 : i64, tpu.core_type = #tpu.core_type<tc>, window_params = [{transform_indices = @transform_0, window_bounds = array<i64: 1, 8, 256>}, {transform_indices = @transform_1, window_bounds = array<i64: 1, 256, 256>}, {transform_indices = @transform_2, window_bounds = array<i64: 1, 256>}, {transform_indices = @transform_3, window_bounds = array<i64: 8, 256>}]} {
    %c0_i32 = arith.constant 0 : i32
    %0 = arith.cmpi eq, %arg2, %c0_i32 : i32
    %1 = arith.extui %0 : i1 to i32
    %c0_i32_0 = arith.constant 0 : i32
    %2 = arith.cmpi ne, %1, %c0_i32_0 : i32
    scf.if %2 {
      %cst_11 = arith.constant 0.000000e+00 : f32
      %14 = vector.broadcast %cst_11 : f32 to vector<8x256xf32>
      %c0_12 = arith.constant 0 : index
      %c0_13 = arith.constant 0 : index
      %15 = vector.load %arg7[%c0_12, %c0_13] : memref<8x256xf32, #tpu.memory_space<vmem>>, vector<8x256xf32>
      tpu.vector_store %arg7[%c0_12, %c0_13], %14 {strides = array<i32>} : memref<8x256xf32, #tpu.memory_space<vmem>>, vector<8x256xf32>,
    } else {
    }
    %c0 = arith.constant 0 : index
    %c0_1 = arith.constant 0 : index
    %3 = vector.load %arg7[%c0, %c0_1] : memref<8x256xf32, #tpu.memory_space<vmem>>, vector<8x256xf32>
    %c0_2 = arith.constant 0 : index
    %c0_3 = arith.constant 0 : index
    %c0_4 = arith.constant 0 : index
    %4 = vector.load %arg3[%c0_2, %c0_3, %c0_4] : memref<1x8x256xbf16, #tpu.memory_space<vmem>>, vector<1x8x256xbf16>
    %5 = vector.shape_cast %4 : vector<1x8x256xbf16> to vector<8x256xbf16>
    %c0_5 = arith.constant 0 : index
    %c0_6 = arith.constant 0 : index
    %c0_7 = arith.constant 0 : index
    %6 = vector.load %arg4[%c0_5, %c0_6, %c0_7] : memref<1x256x256xbf16, #tpu.memory_space<vmem>>, vector<1x256x256xbf16>
    %7 = vector.shape_cast %6 : vector<1x256x256xbf16> to vector<256x256xbf16>
    %cst = arith.constant dense<0.000000e+00> : vector<8x256xf32>
    %8 = tpu.matmul %5, %7, %cst {dimension_numbers = #tpu.dot_dimension_numbers<[1], [0], [0], [1], [0, 0, 1, 1], [], []>} : vector<8x256xbf16>, vector<256x256xbf16>, vector<8x256xf32> -> vector<8x256xf32>
    %9 = arith.addf %3, %8 : vector<8x256xf32>
    %c0_8 = arith.constant 0 : index
    %c0_9 = arith.constant 0 : index
    %10 = vector.load %arg7[%c0_8, %c0_9] : memref<8x256xf32, #tpu.memory_space<vmem>>, vector<8x256xf32>
    tpu.vector_store %arg7[%c0_8, %c0_9], %9 {strides = array<i32>} : memref<8x256xf32, #tpu.memory_space<vmem>>, vector<8x256xf32>,
    %c8_i32 = arith.constant 8 : i32
    %11 = arith.cmpi eq, %arg2, %c8_i32 : i32
    %12 = arith.extui %11 : i1 to i32
    %c0_i32_10 = arith.constant 0 : i32
    %13 = arith.cmpi ne, %12, %c0_i32_10 : i32
    scf.if %13 {
      %c0_11 = arith.constant 0 : index
      %c0_12 = arith.constant 0 : index
      %14 = vector.load %arg7[%c0_11, %c0_12] : memref<8x256xf32, #tpu.memory_space<vmem>>, vector<8x256xf32>
      %c0_13 = arith.constant 0 : index
      %c0_14 = arith.constant 0 : index
      %15 = vector.load %arg5[%c0_13, %c0_14] : memref<1x256xf32, #tpu.memory_space<vmem>>, vector<1x256xf32>
      %16 = vector.broadcast %15 : vector<1x256xf32> to vector<8x256xf32>
      %17 = arith.addf %14, %16 : vector<8x256xf32>
      %cst_15 = arith.constant 0.000000e+00 : f32
      %18 = vector.broadcast %cst_15 : f32 to vector<8x256xf32>
      %19 = arith.maximumf %17, %18 : vector<8x256xf32>
      %c0_16 = arith.constant 0 : index
      %c0_17 = arith.constant 0 : index
      %20 = vector.load %arg6[%c0_16, %c0_17] : memref<8x256xf32, #tpu.memory_space<vmem>>, vector<8x256xf32>
      tpu.vector_store %arg6[%c0_16, %c0_17], %19 {strides = array<i32>} : memref<8x256xf32, #tpu.memory_space<vmem>>, vector<8x256xf32>,
    } else {
    }
    return
  }
  func.func @transform_0(%arg0: i32, %arg1: i32, %arg2: i32) -> (i32, i32, i32) {
    %c0_i32 = arith.constant 0 : i32
    %c0_i32_0 = arith.constant 0 : i32
    return %arg2, %arg0, %c0_i32 : i32, i32, i32
  }
  func.func @transform_1(%arg0: i32, %arg1: i32, %arg2: i32) -> (i32, i32, i32) {
    %c0_i32 = arith.constant 0 : i32
    %c0_i32_0 = arith.constant 0 : i32
    return %arg2, %c0_i32, %arg1 : i32, i32, i32
  }
  func.func @transform_2(%arg0: i32, %arg1: i32, %arg2: i32) -> (i32, i32) {
    %c0_i32 = arith.constant 0 : i32
    %c0_i32_0 = arith.constant 0 : i32
    return %c0_i32, %arg1 : i32, i32
  }
  func.func @transform_3(%arg0: i32, %arg1: i32, %arg2: i32) -> (i32, i32) {
    %c0_i32 = arith.constant 0 : i32
    return %arg0, %arg1 : i32, i32
  }
}

module attributes {stable_mosaic.version = 11 : i64} {
  func.func @_conv_bn_kernel(%arg0: i32, %arg1: i32, %arg2: i32, %arg3: memref<1x8x256xbf16, #tpu.memory_space<vmem>>, %arg4: memref<1x256x256xbf16, #tpu.memory_space<vmem>>, %arg5: memref<1x256xf32, #tpu.memory_space<vmem>>, %arg6: memref<8x256xf32, #tpu.memory_space<vmem>>, %arg7: memref<8x256xf32, #tpu.memory_space<vmem>>) attributes {dimension_semantics = [#tpu.dimension_semantics<parallel>, #tpu.dimension_semantics<parallel>, #tpu.dimension_semantics<arbitrary>], iteration_bounds = array<i64: 1, 2, 9>, scalar_prefetch = 0 : i64, scratch_operands = 1 : i64, tpu.core_type = #tpu.core_type<tc>, window_params = [{transform_indices = @transform_0, window_bounds = array<i64: 1, 8, 256>}, {transform_indices = @transform_1, window_bounds = array<i64: 1, 256, 256>}, {transform_indices = @transform_2, window_bounds = array<i64: 1, 256>}, {transform_indices = @transform_3, window_bounds = array<i64: 8, 256>}]} {
    %c0_i32 = arith.constant 0 : i32
    %0 = arith.cmpi eq, %arg2, %c0_i32 : i32
    %1 = arith.extui %0 : i1 to i32
    %c0_i32_0 = arith.constant 0 : i32
    %2 = arith.cmpi ne, %1, %c0_i32_0 : i32
    scf.if %2 {
      %cst_11 = arith.constant 0.000000e+00 : f32
      %14 = vector.broadcast %cst_11 : f32 to vector<8x256xf32>
      %c0_12 = arith.constant 0 : index
      %c0_13 = arith.constant 0 : index
      %15 = vector.load %arg7[%c0_12, %c0_13] : memref<8x256xf32, #tpu.memory_space<vmem>>, vector<8x256xf32>
      tpu.vector_store %arg7[%c0_12, %c0_13], %14 {strides = array<i32>} : memref<8x256xf32, #tpu.memory_space<vmem>>, vector<8x256xf32>,
    } else {
    }
    %c0 = arith.constant 0 : index
    %c0_1 = arith.constant 0 : index
    %3 = vector.load %arg7[%c0, %c0_1] : memref<8x256xf32, #tpu.memory_space<vmem>>, vector<8x256xf32>
    %c0_2 = arith.constant 0 : index
    %c0_3 = arith.constant 0 : index
    %c0_4 = arith.constant 0 : index
    %4 = vector.load %arg3[%c0_2, %c0_3, %c0_4] : memref<1x8x256xbf16, #tpu.memory_space<vmem>>, vector<1x8x256xbf16>
    %5 = vector.shape_cast %4 : vector<1x8x256xbf16> to vector<8x256xbf16>
    %c0_5 = arith.constant 0 : index
    %c0_6 = arith.constant 0 : index
    %c0_7 = arith.constant 0 : index
    %6 = vector.load %arg4[%c0_5, %c0_6, %c0_7] : memref<1x256x256xbf16, #tpu.memory_space<vmem>>, vector<1x256x256xbf16>
    %7 = vector.shape_cast %6 : vector<1x256x256xbf16> to vector<256x256xbf16>
    %cst = arith.constant dense<0.000000e+00> : vector<8x256xf32>
    %8 = tpu.matmul %5, %7, %cst {dimension_numbers = #tpu.dot_dimension_numbers<[1], [0], [0], [1], [0, 0, 1, 1], [], []>} : vector<8x256xbf16>, vector<256x256xbf16>, vector<8x256xf32> -> vector<8x256xf32>
    %9 = arith.addf %3, %8 : vector<8x256xf32>
    %c0_8 = arith.constant 0 : index
    %c0_9 = arith.constant 0 : index
    %10 = vector.load %arg7[%c0_8, %c0_9] : memref<8x256xf32, #tpu.memory_space<vmem>>, vector<8x256xf32>
    tpu.vector_store %arg7[%c0_8, %c0_9], %9 {strides = array<i32>} : memref<8x256xf32, #tpu.memory_space<vmem>>, vector<8x256xf32>,
    %c8_i32 = arith.constant 8 : i32
    %11 = arith.cmpi eq, %arg2, %c8_i32 : i32
    %12 = arith.extui %11 : i1 to i32
    %c0_i32_10 = arith.constant 0 : i32
    %13 = arith.cmpi ne, %12, %c0_i32_10 : i32
    scf.if %13 {
      %c0_11 = arith.constant 0 : index
      %c0_12 = arith.constant 0 : index
      %14 = vector.load %arg7[%c0_11, %c0_12] : memref<8x256xf32, #tpu.memory_space<vmem>>, vector<8x256xf32>
      %c0_13 = arith.constant 0 : index
      %c0_14 = arith.constant 0 : index
      %15 = vector.load %arg5[%c0_13, %c0_14] : memref<1x256xf32, #tpu.memory_space<vmem>>, vector<1x256xf32>
      %16 = vector.broadcast %15 : vector<1x256xf32> to vector<8x256xf32>
      %17 = arith.addf %14, %16 : vector<8x256xf32>
      %cst_15 = arith.constant 0.000000e+00 : f32
      %18 = vector.broadcast %cst_15 : f32 to vector<8x256xf32>
      %19 = arith.maximumf %17, %18 : vector<8x256xf32>
      %c0_16 = arith.constant 0 : index
      %c0_17 = arith.constant 0 : index
      %20 = vector.load %arg6[%c0_16, %c0_17] : memref<8x256xf32, #tpu.memory_space<vmem>>, vector<8x256xf32>
      tpu.vector_store %arg6[%c0_16, %c0_17], %19 {strides = array<i32>} : memref<8x256xf32, #tpu.memory_space<vmem>>, vector<8x256xf32>,
    } else {
    }
    return
  }
  func.func @transform_0(%arg0: i32, %arg1: i32, %arg2: i32) -> (i32, i32, i32) {
    %c0_i32 = arith.constant 0 : i32
    %c0_i32_0 = arith.constant 0 : i32
    return %arg2, %arg0, %c0_i32 : i32, i32, i32
  }
  func.func @transform_1(%arg0: i32, %arg1: i32, %arg2: i32) -> (i32, i32, i32) {
    %c0_i32 = arith.constant 0 : i32
    %c0_i32_0 = arith.constant 0 : i32
    return %arg2, %c0_i32, %arg1 : i32, i32, i32
  }
  func.func @transform_2(%arg0: i32, %arg1: i32, %arg2: i32) -> (i32, i32) {
    %c0_i32 = arith.constant 0 : i32
    %c0_i32_0 = arith.constant 0 : i32
    return %c0_i32, %arg1 : i32, i32
  }
  func.func @transform_3(%arg0: i32, %arg1: i32, %arg2: i32) -> (i32, i32) {
    %c0_i32 = arith.constant 0 : i32
    return %arg0, %arg1 : i32, i32
  }
}

module attributes {stable_mosaic.version = 11 : i64} {
  func.func @_conv_bn_kernel(%arg0: i32, %arg1: i32, %arg2: i32, %arg3: memref<1x8x256xbf16, #tpu.memory_space<vmem>>, %arg4: memref<1x256x256xbf16, #tpu.memory_space<vmem>>, %arg5: memref<1x256xf32, #tpu.memory_space<vmem>>, %arg6: memref<8x256xf32, #tpu.memory_space<vmem>>, %arg7: memref<8x256xf32, #tpu.memory_space<vmem>>) attributes {dimension_semantics = [#tpu.dimension_semantics<parallel>, #tpu.dimension_semantics<parallel>, #tpu.dimension_semantics<arbitrary>], iteration_bounds = array<i64: 1, 2, 1>, scalar_prefetch = 0 : i64, scratch_operands = 1 : i64, tpu.core_type = #tpu.core_type<tc>, window_params = [{transform_indices = @transform_0, window_bounds = array<i64: 1, 8, 256>}, {transform_indices = @transform_1, window_bounds = array<i64: 1, 256, 256>}, {transform_indices = @transform_2, window_bounds = array<i64: 1, 256>}, {transform_indices = @transform_3, window_bounds = array<i64: 8, 256>}]} {
    %c0_i32 = arith.constant 0 : i32
    %0 = arith.cmpi eq, %arg2, %c0_i32 : i32
    %1 = arith.extui %0 : i1 to i32
    %c0_i32_0 = arith.constant 0 : i32
    %2 = arith.cmpi ne, %1, %c0_i32_0 : i32
    scf.if %2 {
      %cst_12 = arith.constant 0.000000e+00 : f32
      %14 = vector.broadcast %cst_12 : f32 to vector<8x256xf32>
      %c0_13 = arith.constant 0 : index
      %c0_14 = arith.constant 0 : index
      %15 = vector.load %arg7[%c0_13, %c0_14] : memref<8x256xf32, #tpu.memory_space<vmem>>, vector<8x256xf32>
      tpu.vector_store %arg7[%c0_13, %c0_14], %14 {strides = array<i32>} : memref<8x256xf32, #tpu.memory_space<vmem>>, vector<8x256xf32>,
    } else {
    }
    %c0 = arith.constant 0 : index
    %c0_1 = arith.constant 0 : index
    %3 = vector.load %arg7[%c0, %c0_1] : memref<8x256xf32, #tpu.memory_space<vmem>>, vector<8x256xf32>
    %c0_2 = arith.constant 0 : index
    %c0_3 = arith.constant 0 : index
    %c0_4 = arith.constant 0 : index
    %4 = vector.load %arg3[%c0_2, %c0_3, %c0_4] : memref<1x8x256xbf16, #tpu.memory_space<vmem>>, vector<1x8x256xbf16>
    %5 = vector.shape_cast %4 : vector<1x8x256xbf16> to vector<8x256xbf16>
    %c0_5 = arith.constant 0 : index
    %c0_6 = arith.constant 0 : index
    %c0_7 = arith.constant 0 : index
    %6 = vector.load %arg4[%c0_5, %c0_6, %c0_7] : memref<1x256x256xbf16, #tpu.memory_space<vmem>>, vector<1x256x256xbf16>
    %7 = vector.shape_cast %6 : vector<1x256x256xbf16> to vector<256x256xbf16>
    %cst = arith.constant dense<0.000000e+00> : vector<8x256xf32>
    %8 = tpu.matmul %5, %7, %cst {dimension_numbers = #tpu.dot_dimension_numbers<[1], [0], [0], [1], [0, 0, 1, 1], [], []>} : vector<8x256xbf16>, vector<256x256xbf16>, vector<8x256xf32> -> vector<8x256xf32>
    %9 = arith.addf %3, %8 : vector<8x256xf32>
    %c0_8 = arith.constant 0 : index
    %c0_9 = arith.constant 0 : index
    %10 = vector.load %arg7[%c0_8, %c0_9] : memref<8x256xf32, #tpu.memory_space<vmem>>, vector<8x256xf32>
    tpu.vector_store %arg7[%c0_8, %c0_9], %9 {strides = array<i32>} : memref<8x256xf32, #tpu.memory_space<vmem>>, vector<8x256xf32>,
    %c0_i32_10 = arith.constant 0 : i32
    %11 = arith.cmpi eq, %arg2, %c0_i32_10 : i32
    %12 = arith.extui %11 : i1 to i32
    %c0_i32_11 = arith.constant 0 : i32
    %13 = arith.cmpi ne, %12, %c0_i32_11 : i32
    scf.if %13 {
      %c0_12 = arith.constant 0 : index
      %c0_13 = arith.constant 0 : index
      %14 = vector.load %arg7[%c0_12, %c0_13] : memref<8x256xf32, #tpu.memory_space<vmem>>, vector<8x256xf32>
      %c0_14 = arith.constant 0 : index
      %c0_15 = arith.constant 0 : index
      %15 = vector.load %arg5[%c0_14, %c0_15] : memref<1x256xf32, #tpu.memory_space<vmem>>, vector<1x256xf32>
      %16 = vector.broadcast %15 : vector<1x256xf32> to vector<8x256xf32>
      %17 = arith.addf %14, %16 : vector<8x256xf32>
      %c0_16 = arith.constant 0 : index
      %c0_17 = arith.constant 0 : index
      %18 = vector.load %arg6[%c0_16, %c0_17] : memref<8x256xf32, #tpu.memory_space<vmem>>, vector<8x256xf32>
      tpu.vector_store %arg6[%c0_16, %c0_17], %17 {strides = array<i32>} : memref<8x256xf32, #tpu.memory_space<vmem>>, vector<8x256xf32>,
    } else {
    }
    return
  }
  func.func @transform_0(%arg0: i32, %arg1: i32, %arg2: i32) -> (i32, i32, i32) {
    %c0_i32 = arith.constant 0 : i32
    %c0_i32_0 = arith.constant 0 : i32
    return %arg2, %arg0, %c0_i32 : i32, i32, i32
  }
  func.func @transform_1(%arg0: i32, %arg1: i32, %arg2: i32) -> (i32, i32, i32) {
    %c0_i32 = arith.constant 0 : i32
    %c0_i32_0 = arith.constant 0 : i32
    return %arg2, %c0_i32, %arg1 : i32, i32, i32
  }
  func.func @transform_2(%arg0: i32, %arg1: i32, %arg2: i32) -> (i32, i32) {
    %c0_i32 = arith.constant 0 : i32
    %c0_i32_0 = arith.constant 0 : i32
    return %c0_i32, %arg1 : i32, i32
  }
  func.func @transform_3(%arg0: i32, %arg1: i32, %arg2: i32) -> (i32, i32) {
    %c0_i32 = arith.constant 0 : i32
    return %arg0, %arg1 : i32, i32
  }
}

module attributes {stable_mosaic.version = 11 : i64} {
  func.func @_conv_bn_res_kernel(%arg0: i32, %arg1: i32, %arg2: i32, %arg3: memref<1x8x512xbf16, #tpu.memory_space<vmem>>, %arg4: memref<1x512x256xbf16, #tpu.memory_space<vmem>>, %arg5: memref<1x256xf32, #tpu.memory_space<vmem>>, %arg6: memref<8x256xf32, #tpu.memory_space<vmem>>, %arg7: memref<8x256xf32, #tpu.memory_space<vmem>>, %arg8: memref<8x256xf32, #tpu.memory_space<vmem>>) attributes {dimension_semantics = [#tpu.dimension_semantics<parallel>, #tpu.dimension_semantics<parallel>, #tpu.dimension_semantics<arbitrary>], iteration_bounds = array<i64: 1, 2, 9>, scalar_prefetch = 0 : i64, scratch_operands = 1 : i64, tpu.core_type = #tpu.core_type<tc>, window_params = [{transform_indices = @transform_0, window_bounds = array<i64: 1, 8, 512>}, {transform_indices = @transform_1, window_bounds = array<i64: 1, 512, 256>}, {transform_indices = @transform_2, window_bounds = array<i64: 1, 256>}, {transform_indices = @transform_3, window_bounds = array<i64: 8, 256>}, {transform_indices = @transform_4, window_bounds = array<i64: 8, 256>}]} {
    %c0_i32 = arith.constant 0 : i32
    %0 = arith.cmpi eq, %arg2, %c0_i32 : i32
    %1 = arith.extui %0 : i1 to i32
    %c0_i32_0 = arith.constant 0 : i32
    %2 = arith.cmpi ne, %1, %c0_i32_0 : i32
    scf.if %2 {
      %cst_11 = arith.constant 0.000000e+00 : f32
      %14 = vector.broadcast %cst_11 : f32 to vector<8x256xf32>
      %c0_12 = arith.constant 0 : index
      %c0_13 = arith.constant 0 : index
      %15 = vector.load %arg8[%c0_12, %c0_13] : memref<8x256xf32, #tpu.memory_space<vmem>>, vector<8x256xf32>
      tpu.vector_store %arg8[%c0_12, %c0_13], %14 {strides = array<i32>} : memref<8x256xf32, #tpu.memory_space<vmem>>, vector<8x256xf32>,
    } else {
    }
    %c0 = arith.constant 0 : index
    %c0_1 = arith.constant 0 : index
    %3 = vector.load %arg8[%c0, %c0_1] : memref<8x256xf32, #tpu.memory_space<vmem>>, vector<8x256xf32>
    %c0_2 = arith.constant 0 : index
    %c0_3 = arith.constant 0 : index
    %c0_4 = arith.constant 0 : index
    %4 = vector.load %arg3[%c0_2, %c0_3, %c0_4] : memref<1x8x512xbf16, #tpu.memory_space<vmem>>, vector<1x8x512xbf16>
    %5 = vector.shape_cast %4 : vector<1x8x512xbf16> to vector<8x512xbf16>
    %c0_5 = arith.constant 0 : index
    %c0_6 = arith.constant 0 : index
    %c0_7 = arith.constant 0 : index
    %6 = vector.load %arg4[%c0_5, %c0_6, %c0_7] : memref<1x512x256xbf16, #tpu.memory_space<vmem>>, vector<1x512x256xbf16>
    %7 = vector.shape_cast %6 : vector<1x512x256xbf16> to vector<512x256xbf16>
    %cst = arith.constant dense<0.000000e+00> : vector<8x256xf32>
    %8 = tpu.matmul %5, %7, %cst {dimension_numbers = #tpu.dot_dimension_numbers<[1], [0], [0], [1], [0, 0, 1, 1], [], []>} : vector<8x512xbf16>, vector<512x256xbf16>, vector<8x256xf32> -> vector<8x256xf32>
    %9 = arith.addf %3, %8 : vector<8x256xf32>
    %c0_8 = arith.constant 0 : index
    %c0_9 = arith.constant 0 : index
    %10 = vector.load %arg8[%c0_8, %c0_9] : memref<8x256xf32, #tpu.memory_space<vmem>>, vector<8x256xf32>
    tpu.vector_store %arg8[%c0_8, %c0_9], %9 {strides = array<i32>} : memref<8x256xf32, #tpu.memory_space<vmem>>, vector<8x256xf32>,
    %c8_i32 = arith.constant 8 : i32
    %11 = arith.cmpi eq, %arg2, %c8_i32 : i32
    %12 = arith.extui %11 : i1 to i32
    %c0_i32_10 = arith.constant 0 : i32
    %13 = arith.cmpi ne, %12, %c0_i32_10 : i32
    scf.if %13 {
      %c0_11 = arith.constant 0 : index
      %c0_12 = arith.constant 0 : index
      %14 = vector.load %arg8[%c0_11, %c0_12] : memref<8x256xf32, #tpu.memory_space<vmem>>, vector<8x256xf32>
      %c0_13 = arith.constant 0 : index
      %c0_14 = arith.constant 0 : index
      %15 = vector.load %arg5[%c0_13, %c0_14] : memref<1x256xf32, #tpu.memory_space<vmem>>, vector<1x256xf32>
      %16 = vector.broadcast %15 : vector<1x256xf32> to vector<8x256xf32>
      %17 = arith.addf %14, %16 : vector<8x256xf32>
      %c0_15 = arith.constant 0 : index
      %c0_16 = arith.constant 0 : index
      %18 = vector.load %arg6[%c0_15, %c0_16] : memref<8x256xf32, #tpu.memory_space<vmem>>, vector<8x256xf32>
      %19 = arith.addf %17, %18 : vector<8x256xf32>
      %cst_17 = arith.constant 0.000000e+00 : f32
      %20 = vector.broadcast %cst_17 : f32 to vector<8x256xf32>
      %21 = arith.maximumf %19, %20 : vector<8x256xf32>
      %c0_18 = arith.constant 0 : index
      %c0_19 = arith.constant 0 : index
      %22 = vector.load %arg7[%c0_18, %c0_19] : memref<8x256xf32, #tpu.memory_space<vmem>>, vector<8x256xf32>
      tpu.vector_store %arg7[%c0_18, %c0_19], %21 {strides = array<i32>} : memref<8x256xf32, #tpu.memory_space<vmem>>, vector<8x256xf32>,
    } else {
    }
    return
  }
  func.func @transform_0(%arg0: i32, %arg1: i32, %arg2: i32) -> (i32, i32, i32) {
    %c0_i32 = arith.constant 0 : i32
    %c0_i32_0 = arith.constant 0 : i32
    return %arg2, %arg0, %c0_i32 : i32, i32, i32
  }
  func.func @transform_1(%arg0: i32, %arg1: i32, %arg2: i32) -> (i32, i32, i32) {
    %c0_i32 = arith.constant 0 : i32
    %c0_i32_0 = arith.constant 0 : i32
    return %arg2, %c0_i32, %arg1 : i32, i32, i32
  }
  func.func @transform_2(%arg0: i32, %arg1: i32, %arg2: i32) -> (i32, i32) {
    %c0_i32 = arith.constant 0 : i32
    %c0_i32_0 = arith.constant 0 : i32
    return %c0_i32, %arg1 : i32, i32
  }
  func.func @transform_3(%arg0: i32, %arg1: i32, %arg2: i32) -> (i32, i32) {
    %c0_i32 = arith.constant 0 : i32
    return %arg0, %arg1 : i32, i32
  }
  func.func @transform_4(%arg0: i32, %arg1: i32, %arg2: i32) -> (i32, i32) {
    %c0_i32 = arith.constant 0 : i32
    return %arg0, %arg1 : i32, i32
  }
}

module attributes {stable_mosaic.version = 11 : i64} {
  func.func @_conv_bn_kernel(%arg0: i32, %arg1: i32, %arg2: i32, %arg3: memref<1x8x512xbf16, #tpu.memory_space<vmem>>, %arg4: memref<1x512x256xbf16, #tpu.memory_space<vmem>>, %arg5: memref<1x256xf32, #tpu.memory_space<vmem>>, %arg6: memref<8x256xf32, #tpu.memory_space<vmem>>, %arg7: memref<8x256xf32, #tpu.memory_space<vmem>>) attributes {dimension_semantics = [#tpu.dimension_semantics<parallel>, #tpu.dimension_semantics<parallel>, #tpu.dimension_semantics<arbitrary>], iteration_bounds = array<i64: 1, 2, 9>, scalar_prefetch = 0 : i64, scratch_operands = 1 : i64, tpu.core_type = #tpu.core_type<tc>, window_params = [{transform_indices = @transform_0, window_bounds = array<i64: 1, 8, 512>}, {transform_indices = @transform_1, window_bounds = array<i64: 1, 512, 256>}, {transform_indices = @transform_2, window_bounds = array<i64: 1, 256>}, {transform_indices = @transform_3, window_bounds = array<i64: 8, 256>}]} {
    %c0_i32 = arith.constant 0 : i32
    %0 = arith.cmpi eq, %arg2, %c0_i32 : i32
    %1 = arith.extui %0 : i1 to i32
    %c0_i32_0 = arith.constant 0 : i32
    %2 = arith.cmpi ne, %1, %c0_i32_0 : i32
    scf.if %2 {
      %cst_11 = arith.constant 0.000000e+00 : f32
      %14 = vector.broadcast %cst_11 : f32 to vector<8x256xf32>
      %c0_12 = arith.constant 0 : index
      %c0_13 = arith.constant 0 : index
      %15 = vector.load %arg7[%c0_12, %c0_13] : memref<8x256xf32, #tpu.memory_space<vmem>>, vector<8x256xf32>
      tpu.vector_store %arg7[%c0_12, %c0_13], %14 {strides = array<i32>} : memref<8x256xf32, #tpu.memory_space<vmem>>, vector<8x256xf32>,
    } else {
    }
    %c0 = arith.constant 0 : index
    %c0_1 = arith.constant 0 : index
    %3 = vector.load %arg7[%c0, %c0_1] : memref<8x256xf32, #tpu.memory_space<vmem>>, vector<8x256xf32>
    %c0_2 = arith.constant 0 : index
    %c0_3 = arith.constant 0 : index
    %c0_4 = arith.constant 0 : index
    %4 = vector.load %arg3[%c0_2, %c0_3, %c0_4] : memref<1x8x512xbf16, #tpu.memory_space<vmem>>, vector<1x8x512xbf16>
    %5 = vector.shape_cast %4 : vector<1x8x512xbf16> to vector<8x512xbf16>
    %c0_5 = arith.constant 0 : index
    %c0_6 = arith.constant 0 : index
    %c0_7 = arith.constant 0 : index
    %6 = vector.load %arg4[%c0_5, %c0_6, %c0_7] : memref<1x512x256xbf16, #tpu.memory_space<vmem>>, vector<1x512x256xbf16>
    %7 = vector.shape_cast %6 : vector<1x512x256xbf16> to vector<512x256xbf16>
    %cst = arith.constant dense<0.000000e+00> : vector<8x256xf32>
    %8 = tpu.matmul %5, %7, %cst {dimension_numbers = #tpu.dot_dimension_numbers<[1], [0], [0], [1], [0, 0, 1, 1], [], []>} : vector<8x512xbf16>, vector<512x256xbf16>, vector<8x256xf32> -> vector<8x256xf32>
    %9 = arith.addf %3, %8 : vector<8x256xf32>
    %c0_8 = arith.constant 0 : index
    %c0_9 = arith.constant 0 : index
    %10 = vector.load %arg7[%c0_8, %c0_9] : memref<8x256xf32, #tpu.memory_space<vmem>>, vector<8x256xf32>
    tpu.vector_store %arg7[%c0_8, %c0_9], %9 {strides = array<i32>} : memref<8x256xf32, #tpu.memory_space<vmem>>, vector<8x256xf32>,
    %c8_i32 = arith.constant 8 : i32
    %11 = arith.cmpi eq, %arg2, %c8_i32 : i32
    %12 = arith.extui %11 : i1 to i32
    %c0_i32_10 = arith.constant 0 : i32
    %13 = arith.cmpi ne, %12, %c0_i32_10 : i32
    scf.if %13 {
      %c0_11 = arith.constant 0 : index
      %c0_12 = arith.constant 0 : index
      %14 = vector.load %arg7[%c0_11, %c0_12] : memref<8x256xf32, #tpu.memory_space<vmem>>, vector<8x256xf32>
      %c0_13 = arith.constant 0 : index
      %c0_14 = arith.constant 0 : index
      %15 = vector.load %arg5[%c0_13, %c0_14] : memref<1x256xf32, #tpu.memory_space<vmem>>, vector<1x256xf32>
      %16 = vector.broadcast %15 : vector<1x256xf32> to vector<8x256xf32>
      %17 = arith.addf %14, %16 : vector<8x256xf32>
      %cst_15 = arith.constant 0.000000e+00 : f32
      %18 = vector.broadcast %cst_15 : f32 to vector<8x256xf32>
      %19 = arith.maximumf %17, %18 : vector<8x256xf32>
      %c0_16 = arith.constant 0 : index
      %c0_17 = arith.constant 0 : index
      %20 = vector.load %arg6[%c0_16, %c0_17] : memref<8x256xf32, #tpu.memory_space<vmem>>, vector<8x256xf32>
      tpu.vector_store %arg6[%c0_16, %c0_17], %19 {strides = array<i32>} : memref<8x256xf32, #tpu.memory_space<vmem>>, vector<8x256xf32>,
    } else {
    }
    return
  }
  func.func @transform_0(%arg0: i32, %arg1: i32, %arg2: i32) -> (i32, i32, i32) {
    %c0_i32 = arith.constant 0 : i32
    %c0_i32_0 = arith.constant 0 : i32
    return %arg2, %arg0, %c0_i32 : i32, i32, i32
  }
  func.func @transform_1(%arg0: i32, %arg1: i32, %arg2: i32) -> (i32, i32, i32) {
    %c0_i32 = arith.constant 0 : i32
    %c0_i32_0 = arith.constant 0 : i32
    return %arg2, %c0_i32, %arg1 : i32, i32, i32
  }
  func.func @transform_2(%arg0: i32, %arg1: i32, %arg2: i32) -> (i32, i32) {
    %c0_i32 = arith.constant 0 : i32
    %c0_i32_0 = arith.constant 0 : i32
    return %c0_i32, %arg1 : i32, i32
  }
  func.func @transform_3(%arg0: i32, %arg1: i32, %arg2: i32) -> (i32, i32) {
    %c0_i32 = arith.constant 0 : i32
    return %arg0, %arg1 : i32, i32
  }
}

</mosaic_0001>

<llo_original>
// kernel: _lambda_.22
$region0: #{_lambda_.22}
  #allocation0 [shape = 'u32[]', space=smem, size = 0x4, offset = 0x4, fixed_abs, tag = 'smem constant byte address 0x4 - core index']
  #allocation1 [shape = 'u32[144,128]{1,0:T(1,128)}', space=vmem, size = 0x12000, scoped, tag = 'internal scratch']
  %s0 = inlined_call_operand.vmem [shape: f32[32,64], index: 0, kind: input, shape index: {}]
  %s1 = inlined_call_operand.vmem [shape: f32[32,64], index: 1, kind: input, shape index: {}]
  %s2 = inlined_call_operand.vmem [shape: f32[32,64], index: 2, kind: input, shape index: {}]
  %s3 = inlined_call_operand.vmem [shape: f32[32,64], index: 3, kind: input, shape index: {}]
  %s4 = inlined_call_operand.vmem [shape: f32[32,64], index: 4, kind: input, shape index: {}]
  %s5 = inlined_call_operand.vmem [shape: f32[32,64], index: 5, kind: input, shape index: {}]
  %s6 = inlined_call_operand.vmem [shape: f32[32,64], index: 6, kind: input, shape index: {}]
  %s7 = inlined_call_operand.vmem [shape: f32[32,64], index: 7, kind: input, shape index: {}]
  %s8 = inlined_call_operand.vmem [shape: f32[32,64], index: 8, kind: input, shape index: {}]
  %s9 = inlined_call_operand.vmem [shape: f32[32,64], index: 9, kind: output, shape index: {}]
  %s10 = sld [smem:[#allocation0]]
  $region46: #{_lambda_.22} parent=0
    _
  %s12 = ssub.s32 1, %s10
  %s13 = scalar_select 0, %s12, %s10
  // Predicated region
  $region2: #{_lambda_.22} parent=0 // pred_check
    _
  $region3: #{_lambda_.22} parent=0 // pred_check_branch
    %15 = sbr.rel (0) target = $region5
  $region4: #{_lambda_.22} parent=0 // pred_region
    _
  $region5: #{_lambda_.22} parent=0 // pred_fallthru
    _
  // Predicated region
  $region6: #{_lambda_.22} parent=0 // pred_check
    _
  $region7: #{_lambda_.22} parent=0 // pred_check_branch
    %17 = sbr.rel (0) target = $region9
  $region8: #{_lambda_.22} parent=0 // pred_region
    _
  $region9: #{_lambda_.22} parent=0 // pred_fallthru
    _
  // Predicated region
  $region10: #{_lambda_.22} parent=0 // pred_check
    _
  $region11: #{_lambda_.22} parent=0 // pred_check_branch
    %19 = sbr.rel (0) target = $region13
  $region12: #{_lambda_.22} parent=0 // pred_region
    _
  $region13: #{_lambda_.22} parent=0 // pred_fallthru
    _
  // Predicated region
  $region14: #{_lambda_.22} parent=0 // pred_check
    _
  $region15: #{_lambda_.22} parent=0 // pred_check_branch
    %21 = sbr.rel (0) target = $region17
  $region16: #{_lambda_.22} parent=0 // pred_region
    _
  $region17: #{_lambda_.22} parent=0 // pred_fallthru
    _
  // Predicated region
  $region18: #{_lambda_.22} parent=0 // pred_check
    _
  $region19: #{_lambda_.22} parent=0 // pred_check_branch
    %23 = sbr.rel (0) target = $region21
  $region20: #{_lambda_.22} parent=0 // pred_region
    _
  $region21: #{_lambda_.22} parent=0 // pred_fallthru
    _
  // Predicated region
  $region22: #{_lambda_.22} parent=0 // pred_check
    _
  $region23: #{_lambda_.22} parent=0 // pred_check_branch
    %25 = sbr.rel (0) target = $region25
  $region24: #{_lambda_.22} parent=0 // pred_region
    _
  $region25: #{_lambda_.22} parent=0 // pred_fallthru
    _
  // Predicated region
  $region26: #{_lambda_.22} parent=0 // pred_check
    _
  $region27: #{_lambda_.22} parent=0 // pred_check_branch
    %27 = sbr.rel (0) target = $region29
  $region28: #{_lambda_.22} parent=0 // pred_region
    _
  $region29: #{_lambda_.22} parent=0 // pred_fallthru
    _
  // Predicated region
  $region30: #{_lambda_.22} parent=0 // pred_check
    _
  $region31: #{_lambda_.22} parent=0 // pred_check_branch
    %29 = sbr.rel (0) target = $region33
  $region32: #{_lambda_.22} parent=0 // pred_region
    _
  $region33: #{_lambda_.22} parent=0 // pred_fallthru
    _
  // Predicated region
  $region34: #{_lambda_.22} parent=0 // pred_check
    _
  $region35: #{_lambda_.22} parent=0 // pred_check_branch
    %31 = sbr.rel (0) target = $region37
  $region36: #{_lambda_.22} parent=0 // pred_region
    _
  $region37: #{_lambda_.22} parent=0 // pred_fallthru
    _
  %v32 = vld [vmem:[%s0] sm:$0xff]
  %v33 = vld [vmem:[%s0 + $0x8] sm:$0xff]
  %v34 = vld [vmem:[%s0 + $0x10] sm:$0xff]
  %v35 = vld [vmem:[%s0 + $0x18] sm:$0xff]
  %v36 = vld [vmem:[%s1] sm:$0xff]
  %v37 = vld [vmem:[%s1 + $0x8] sm:$0xff]
  %v38 = vld [vmem:[%s1 + $0x10] sm:$0xff]
  %v39 = vld [vmem:[%s1 + $0x18] sm:$0xff]
  %v40 = vmax.f32 %v32, %v36
  %v41 = vmax.f32 %v33, %v37
  %v42 = vmax.f32 %v34, %v38
  %v43 = vmax.f32 %v35, %v39
  %v44 = vld [vmem:[%s2] sm:$0xff]
  %v45 = vld [vmem:[%s2 + $0x8] sm:$0xff]
  %v46 = vld [vmem:[%s2 + $0x10] sm:$0xff]
  %v47 = vld [vmem:[%s2 + $0x18] sm:$0xff]
  %v48 = vmax.f32 %v40, %v44
  %v49 = vmax.f32 %v41, %v45
  %v50 = vmax.f32 %v42, %v46
  %v51 = vmax.f32 %v43, %v47
  %v52 = vld [vmem:[%s3] sm:$0xff]
  %v53 = vld [vmem:[%s3 + $0x8] sm:$0xff]
  %v54 = vld [vmem:[%s3 + $0x10] sm:$0xff]
  %v55 = vld [vmem:[%s3 + $0x18] sm:$0xff]
  %v56 = vmax.f32 %v48, %v52
  %v57 = vmax.f32 %v49, %v53
  %v58 = vmax.f32 %v50, %v54
  %v59 = vmax.f32 %v51, %v55
  %v60 = vld [vmem:[%s4] sm:$0xff]
  %v61 = vld [vmem:[%s4 + $0x8] sm:$0xff]
  %v62 = vld [vmem:[%s4 + $0x10] sm:$0xff]
  %v63 = vld [vmem:[%s4 + $0x18] sm:$0xff]
  %v64 = vmax.f32 %v56, %v60
  %v65 = vmax.f32 %v57, %v61
  %v66 = vmax.f32 %v58, %v62
  %v67 = vmax.f32 %v59, %v63
  %v68 = vld [vmem:[%s5] sm:$0xff]
  %v69 = vld [vmem:[%s5 + $0x8] sm:$0xff]
  %v70 = vld [vmem:[%s5 + $0x10] sm:$0xff]
  %v71 = vld [vmem:[%s5 + $0x18] sm:$0xff]
  %v72 = vmax.f32 %v64, %v68
  %v73 = vmax.f32 %v65, %v69
  %v74 = vmax.f32 %v66, %v70
  %v75 = vmax.f32 %v67, %v71
  %v76 = vld [vmem:[%s6] sm:$0xff]
  %v77 = vld [vmem:[%s6 + $0x8] sm:$0xff]
  %v78 = vld [vmem:[%s6 + $0x10] sm:$0xff]
  %v79 = vld [vmem:[%s6 + $0x18] sm:$0xff]
  %v80 = vmax.f32 %v72, %v76
  %v81 = vmax.f32 %v73, %v77
  %v82 = vmax.f32 %v74, %v78
  %v83 = vmax.f32 %v75, %v79
  %v84 = vld [vmem:[%s7] sm:$0xff]
  %v85 = vld [vmem:[%s7 + $0x8] sm:$0xff]
  %v86 = vld [vmem:[%s7 + $0x10] sm:$0xff]
  %v87 = vld [vmem:[%s7 + $0x18] sm:$0xff]
  %v88 = vmax.f32 %v80, %v84
  %v89 = vmax.f32 %v81, %v85
  %v90 = vmax.f32 %v82, %v86
  %v91 = vmax.f32 %v83, %v87
  %v92 = vld [vmem:[%s8] sm:$0xff]
  %v93 = vld [vmem:[%s8 + $0x8] sm:$0xff]
  %v94 = vld [vmem:[%s8 + $0x10] sm:$0xff]
  %v95 = vld [vmem:[%s8 + $0x18] sm:$0xff]
  %v96 = vmax.f32 %v88, %v92
  %v97 = vmax.f32 %v89, %v93
  %v98 = vmax.f32 %v90, %v94
  %v99 = vmax.f32 %v91, %v95
  %vm100 = vcmask 523264
  %101 = vst.msk [vmem:[%s9] sm:$0xff] %vm100, %v96
  %102 = vst.msk [vmem:[%s9 + $0x8] sm:$0xff] %vm100, %v97
  %103 = vst.msk [vmem:[%s9 + $0x10] sm:$0xff] %vm100, %v98
  %104 = vst.msk [vmem:[%s9 + $0x18] sm:$0xff] %vm100, %v99
  // Predicated region
  $region38: #{_lambda_.22} parent=0 // pred_check
    _
  $region39: #{_lambda_.22} parent=0 // pred_check_branch
    %106 = sbr.rel (0) target = $region41
  $region40: #{_lambda_.22} parent=0 // pred_region
    _
  $region41: #{_lambda_.22} parent=0 // pred_fallthru
    _
  // Predicated region
  $region42: #{_lambda_.22} parent=0 // pred_check
    _
  $region43: #{_lambda_.22} parent=0 // pred_check_branch
    %108 = sbr.rel (0) target = $region45
  $region44: #{_lambda_.22} parent=0 // pred_region
    _
  $region45: #{_lambda_.22} parent=0 // pred_fallthru
    _

// kernel: _lambda_.21
$region0: #{_lambda_.21}
  #allocation0 [shape = 'u32[]', space=smem, size = 0x4, offset = 0x4, fixed_abs, tag = 'smem constant byte address 0x4 - core index']
  #allocation1 [shape = 'u32[144,128]{1,0:T(1,128)}', space=vmem, size = 0x12000, scoped, tag = 'internal scratch']
  #allocation2 [shape = 'f32[128,64]{1,0:T(8,128)}', space=vmem, size = 0x10000, scoped, tag = 'scratch operand']
  %s0 = inlined_call_operand.vmem [shape: bf16[1,128,147], index: 0, kind: input, shape index: {}]
  %s1 = inlined_call_operand.vmem [shape: bf16[1,147,64], index: 1, kind: input, shape index: {}]
  %s2 = inlined_call_operand.vmem [shape: f32[1,64], index: 2, kind: input, shape index: {}]
  %s3 = inlined_call_operand.vmem [shape: f32[128,64], index: 3, kind: output, shape index: {}]
  %s4 = sld [smem:[#allocation0]]
  $region30: #{_lambda_.21} parent=0
    _
  %s6 = ssub.s32 1, %s4
  %s7 = scalar_select 0, %s6, %s4
  // Predicated region
  $region2: #{_lambda_.21} parent=0 // pred_check
    _
  $region3: #{_lambda_.21} parent=0 // pred_check_branch
    %9 = sbr.rel (0) target = $region5
  $region4: #{_lambda_.21} parent=0 // pred_region
    _
  $region5: #{_lambda_.21} parent=0 // pred_fallthru
    _
  // Predicated region
  $region6: #{_lambda_.21} parent=0 // pred_check
    _
  $region7: #{_lambda_.21} parent=0 // pred_check_branch
    %11 = sbr.rel (0) target = $region9
  $region8: #{_lambda_.21} parent=0 // pred_region
    _
  $region9: #{_lambda_.21} parent=0 // pred_fallthru
    _
  // Predicated region
  $region10: #{_lambda_.21} parent=0 // pred_check
    _
  $region11: #{_lambda_.21} parent=0 // pred_check_branch
    %13 = sbr.rel (0) target = $region13
  $region12: #{_lambda_.21} parent=0 // pred_region
    _
  $region13: #{_lambda_.21} parent=0 // pred_fallthru
    _
  %p15 = scmp.eq.s32.totalorder 0, 0
  // Predicated region
  $region14: #{_lambda_.21} parent=0 // pred_check
    %p16 = pneg %p15
  $region15: #{_lambda_.21} parent=0 // pred_check_branch
    %18 = sbr.rel (%p16) target = $region17
  $region16: #{_lambda_.21} parent=0 // pred_region
    %vm19 = vcmask 523264
    %20 = vst.msk [vmem:[#allocation2] sm:$0xff] %vm19, 0.0
    %21 = vst.msk [vmem:[#allocation2 + $0x8] sm:$0xff] %vm19, 0.0
    %22 = vst.msk [vmem:[#allocation2 + $0x10] sm:$0xff] %vm19, 0.0
    %23 = vst.msk [vmem:[#allocation2 + $0x18] sm:$0xff] %vm19, 0.0
    %24 = vst.msk [vmem:[#allocation2 + $0x20] sm:$0xff] %vm19, 0.0
    %25 = vst.msk [vmem:[#allocation2 + $0x28] sm:$0xff] %vm19, 0.0
    %26 = vst.msk [vmem:[#allocation2 + $0x30] sm:$0xff] %vm19, 0.0
    %27 = vst.msk [vmem:[#allocation2 + $0x38] sm:$0xff] %vm19, 0.0
    %28 = vst.msk [vmem:[#allocation2 + $0x40] sm:$0xff] %vm19, 0.0
    %29 = vst.msk [vmem:[#allocation2 + $0x48] sm:$0xff] %vm19, 0.0
    %30 = vst.msk [vmem:[#allocation2 + $0x50] sm:$0xff] %vm19, 0.0
    %31 = vst.msk [vmem:[#allocation2 + $0x58] sm:$0xff] %vm19, 0.0
    %32 = vst.msk [vmem:[#allocation2 + $0x60] sm:$0xff] %vm19, 0.0
    %33 = vst.msk [vmem:[#allocation2 + $0x68] sm:$0xff] %vm19, 0.0
    %34 = vst.msk [vmem:[#allocation2 + $0x70] sm:$0xff] %vm19, 0.0
    %35 = vst.msk [vmem:[#allocation2 + $0x78] sm:$0xff] %vm19, 0.0
  $region17: #{_lambda_.21} parent=0 // pred_fallthru
    _
  %v36 = vld [vmem:[#allocation2] sm:$0xff]
  %v37 = vld [vmem:[#allocation2 + $0x8] sm:$0xff]
  %v38 = vld [vmem:[#allocation2 + $0x10] sm:$0xff]
  %v39 = vld [vmem:[#allocation2 + $0x18] sm:$0xff]
  %v40 = vld [vmem:[#allocation2 + $0x20] sm:$0xff]
  %v41 = vld [vmem:[#allocation2 + $0x28] sm:$0xff]
  %v42 = vld [vmem:[#allocation2 + $0x30] sm:$0xff]
  %v43 = vld [vmem:[#allocation2 + $0x38] sm:$0xff]
  %v44 = vld [vmem:[#allocation2 + $0x40] sm:$0xff]
  %v45 = vld [vmem:[#allocation2 + $0x48] sm:$0xff]
  %v46 = vld [vmem:[#allocation2 + $0x50] sm:$0xff]
  %v47 = vld [vmem:[#allocation2 + $0x58] sm:$0xff]
  %v48 = vld [vmem:[#allocation2 + $0x60] sm:$0xff]
  %v49 = vld [vmem:[#allocation2 + $0x68] sm:$0xff]
  %v50 = vld [vmem:[#allocation2 + $0x70] sm:$0xff]
  %v51 = vld [vmem:[#allocation2 + $0x78] sm:$0xff]
  %v52 = vld [vmem:[%s0] sm:$0xff]
  %v53 = vld [vmem:[%s0 + $0x8] sm:$0xff]
  %v54 = vld [vmem:[%s0 + $0x10] sm:$0xff]
  %v55 = vld [vmem:[%s0 + $0x18] sm:$0xff]
  %v56 = vld [vmem:[%s0 + $0x20] sm:$0xff]
  %v57 = vld [vmem:[%s0 + $0x28] sm:$0xff]
  %v58 = vld [vmem:[%s0 + $0x30] sm:$0xff]
  %v59 = vld [vmem:[%s0 + $0x38] sm:$0xff]
  %v60 = vld [vmem:[%s0 + $0x40] sm:$0xff]
  %v61 = vld [vmem:[%s0 + $0x48] sm:$0xff]
  %v62 = vld [vmem:[%s0 + $0x50] sm:$0xff]
  %v63 = vld [vmem:[%s0 + $0x58] sm:$0xff]
  %v64 = vld [vmem:[%s0 + $0x60] sm:$0xff]
  %v65 = vld [vmem:[%s0 + $0x68] sm:$0xff]
  %v66 = vld [vmem:[%s0 + $0x70] sm:$0xff]
  %v67 = vld [vmem:[%s0 + $0x78] sm:$0xff]
  %v68 = vld [vmem:[%s1] sm:$0xf]
  %v69 = vld [vmem:[%s1 + $0x4] sm:$0xf]
  %v70 = vld [vmem:[%s1 + $0x8] sm:$0xf]
  %v71 = vld [vmem:[%s1 + $0xc] sm:$0xf]
  %v72 = vld [vmem:[%s1 + $0x10] sm:$0xf]
  %v73 = vld [vmem:[%s1 + $0x14] sm:$0xf]
  %v74 = vld [vmem:[%s1 + $0x18] sm:$0xf]
  %v75 = vld [vmem:[%s1 + $0x1c] sm:$0xf]
  %v76 = vld [vmem:[%s1 + $0x20] sm:$0xf]
  %v77 = vld [vmem:[%s1 + $0x24] sm:$0xf]
  %v78 = vld [vmem:[%s1 + $0x28] sm:$0xf]
  %v79 = vld [vmem:[%s1 + $0x2c] sm:$0xf]
  %v80 = vld [vmem:[%s1 + $0x30] sm:$0xf]
  %v81 = vld [vmem:[%s1 + $0x34] sm:$0xf]
  %v82 = vld [vmem:[%s1 + $0x38] sm:$0xf]
  %v83 = vld [vmem:[%s1 + $0x3c] sm:$0xf]
  %v84 = vld [vmem:[%s1 + $0x40] sm:$0xf]
  %v85 = vld [vmem:[%s1 + $0x44] sm:$0xf]
  %v86 = vld [vmem:[%s1 + $0x48] sm:$0x3]
  %v103 = vunpack.c.l.b16 %v52
  %v104 = vunpack.c.h.b16 %v52
  %v105 = vunpack.c.l.b16 %v53
  %v106 = vunpack.c.h.b16 %v53
  %v107 = vunpack.c.l.b16 %v54
  %v108 = vunpack.c.h.b16 %v54
  %v109 = vunpack.c.l.b16 %v55
  %v110 = vunpack.c.h.b16 %v55
  %v111 = vunpack.c.l.b16 %v56
  %v112 = vunpack.c.h.b16 %v56
  %v113 = vunpack.c.l.b16 %v57
  %v114 = vunpack.c.h.b16 %v57
  %v115 = vunpack.c.l.b16 %v58
  %v116 = vunpack.c.h.b16 %v58
  %v117 = vunpack.c.l.b16 %v59
  %v118 = vunpack.c.h.b16 %v59
  %v119 = vunpack.c.l.b16 %v60
  %v120 = vunpack.c.h.b16 %v60
  %v121 = vunpack.c.l.b16 %v61
  %v122 = vunpack.c.h.b16 %v61
  %v123 = vunpack.c.l.b16 %v62
  %v124 = vunpack.c.h.b16 %v62
  %v125 = vunpack.c.l.b16 %v63
  %v126 = vunpack.c.h.b16 %v63
  %v127 = vunpack.c.l.b16 %v64
  %v128 = vunpack.c.h.b16 %v64
  %v129 = vunpack.c.l.b16 %v65
  %v130 = vunpack.c.h.b16 %v65
  %v131 = vunpack.c.l.b16 %v66
  %v132 = vunpack.c.h.b16 %v66
  %v133 = vunpack.c.l.b16 %v67
  %v134 = vunpack.c.h.b16 %v67
  %v135 = vpack.c.b16 %v105, %v103
  %v136 = vpack.c.b16 %v106, %v104
  %v137 = vpack.c.b16 %v109, %v107
  %v138 = vpack.c.b16 %v110, %v108
  %v139 = vpack.c.b16 %v113, %v111
  %v140 = vpack.c.b16 %v114, %v112
  %v141 = vpack.c.b16 %v117, %v115
  %v142 = vpack.c.b16 %v118, %v116
  %v143 = vpack.c.b16 %v121, %v119
  %v144 = vpack.c.b16 %v122, %v120
  %v145 = vpack.c.b16 %v125, %v123
  %v146 = vpack.c.b16 %v126, %v124
  %v147 = vpack.c.b16 %v129, %v127
  %v148 = vpack.c.b16 %v130, %v128
  %v149 = vpack.c.b16 %v133, %v131
  %v150 = vpack.c.b16 %v134, %v132
  %v178 = vunpack.c.l.b16 %v68
  %v179 = vunpack.c.l.b16 %v69
  %v180 = vunpack.c.l.b16 %v70
  %v181 = vunpack.c.l.b16 %v71
  %v182 = vunpack.c.l.b16 %v72
  %v183 = vunpack.c.l.b16 %v73
  %v184 = vunpack.c.l.b16 %v74
  %v185 = vunpack.c.l.b16 %v75
  %v186 = vunpack.c.l.b16 %v76
  %v187 = vunpack.c.l.b16 %v77
  %v188 = vunpack.c.l.b16 %v78
  %v189 = vunpack.c.l.b16 %v79
  %v190 = vunpack.c.l.b16 %v80
  %v191 = vunpack.c.l.b16 %v81
  %v192 = vunpack.c.l.b16 %v82
  %v193 = vunpack.c.l.b16 %v83
  %v194 = vunpack.c.l.b16 %v84
  %v195 = vunpack.c.l.b16 %v85
  %v196 = vunpack.c.l.b16 %v86
  %v197 = vpack.c.b16 %v179, %v178
  %v198 = vpack.c.b16 %v181, %v180
  %v199 = vpack.c.b16 %v183, %v182
  %v200 = vpack.c.b16 %v185, %v184
  %v201 = vpack.c.b16 %v187, %v186
  %v202 = vpack.c.b16 %v189, %v188
  %v203 = vpack.c.b16 %v191, %v190
  %v204 = vpack.c.b16 %v193, %v192
  %v205 = vpack.c.b16 %v195, %v194
  %v206 = vpack.c.b16 %v196, %v196
  %vm216 = vcmask 154624
  %v218 = vsel %vm216, %v136, 0
  %v221 = vsel %vm216, %v138, 0
  %v224 = vsel %vm216, %v140, 0
  %v227 = vsel %vm216, %v142, 0
  %v230 = vsel %vm216, %v144, 0
  %v233 = vsel %vm216, %v146, 0
  %v236 = vsel %vm216, %v148, 0
  %v239 = vsel %vm216, %v150, 0
  %vm241 = vcmask 1040384
  %vm242 = vcmask 1041408
  %v243 = vsel %vm241, 4294967295, 65535
  %v244 = vsel %vm242, %v243, 0
  %v246 = vand.u32 %v206, %v244
  %248 = vmatprep.subr.bf16.mxu0 0
  %249 = vmatpush1.bf16.msra.mxu0 %v197
  %250 = vmatprep.subr.bf16.mxu0 0
  %251 = vmatpush1.bf16.msra.mxu0 %v198
  %252 = vmatprep.subr.bf16.mxu0 0
  %253 = vmatpush1.bf16.msra.mxu0 %v199
  %254 = vmatprep.subr.bf16.mxu0 0
  %255 = vmatpush1.bf16.msra.mxu0 %v200
  %256 = vmatprep.subr.bf16.mxu0 0
  %257 = vmatpush1.bf16.msra.mxu0 %v201
  %258 = vmatprep.subr.bf16.mxu0 0
  %259 = vmatpush1.bf16.msra.mxu0 %v202
  %260 = vmatprep.subr.bf16.mxu0 0
  %261 = vmatpush1.bf16.msra.mxu0 %v203
  %262 = vmatprep.subr.bf16.mxu0 0
  %263 = vmatpush1.bf16.msra.mxu0 %v204
  %264 = vmatprep.subr.bf16.mxu0 0
  %265 = vmatpush1.bf16.msra.mxu0 %v205
  %266 = vmatprep.subr.bf16.mxu0 0
  %267 = vmatpush1.bf16.msra.mxu0 %v246
  %268 = vmatprep.subr.bf16.mxu0 0
  %269 = vmatpush1.bf16.msra.mxu0 0
  %270 = vmatprep.subr.bf16.mxu0 0
  %271 = vmatpush1.bf16.msra.mxu0 0
  %272 = vmatprep.subr.bf16.mxu0 0
  %273 = vmatpush1.bf16.msra.mxu0 0
  %274 = vmatprep.subr.bf16.mxu0 0
  %275 = vmatpush1.bf16.msra.mxu0 0
  %276 = vmatprep.subr.bf16.mxu0 0
  %277 = vmatpush1.bf16.msra.mxu0 0
  %278 = vmatprep.subr.bf16.mxu0 0
  %279 = vmatpush1.bf16.msra.mxu0 0
  %280 = vmatprep.mubr.bf16.mxu0 %v218
  %281 = vmatmul.mubr.bf16.gmra.mrb[0].mxu0 %v135
  %v282 = vpop.f32.mrb[0].mxu0
  %v283 = vadd.f32 0.0, %v282
  %v284 = vpop.f32.mrb[0].mxu0
  %v285 = vpop.f32.mrb[0].mxu0
  %v286 = vadd.f32 0.0, %v285
  %v287 = vpop.f32.mrb[0].mxu0
  %288 = vmatprep.mubr.bf16.mxu0 %v221
  %289 = vmatmul.mubr.bf16.gmra.mrb[0].mxu0 %v137
  %v290 = vpop.f32.mrb[0].mxu0
  %v291 = vadd.f32 0.0, %v290
  %v292 = vpop.f32.mrb[0].mxu0
  %v293 = vpop.f32.mrb[0].mxu0
  %v294 = vadd.f32 0.0, %v293
  %v295 = vpop.f32.mrb[0].mxu0
  %296 = vmatprep.mubr.bf16.mxu0 %v224
  %297 = vmatmul.mubr.bf16.gmra.mrb[0].mxu0 %v139
  %v298 = vpop.f32.mrb[0].mxu0
  %v299 = vadd.f32 0.0, %v298
  %v300 = vpop.f32.mrb[0].mxu0
  %v301 = vpop.f32.mrb[0].mxu0
  %v302 = vadd.f32 0.0, %v301
  %v303 = vpop.f32.mrb[0].mxu0
  %304 = vmatprep.mubr.bf16.mxu0 %v227
  %305 = vmatmul.mubr.bf16.gmra.mrb[0].mxu0 %v141
  %v306 = vpop.f32.mrb[0].mxu0
  %v307 = vadd.f32 0.0, %v306
  %v308 = vpop.f32.mrb[0].mxu0
  %v309 = vpop.f32.mrb[0].mxu0
  %v310 = vadd.f32 0.0, %v309
  %v311 = vpop.f32.mrb[0].mxu0
  %312 = vmatprep.mubr.bf16.mxu0 %v230
  %313 = vmatmul.mubr.bf16.gmra.mrb[0].mxu0 %v143
  %v314 = vpop.f32.mrb[0].mxu0
  %v315 = vadd.f32 0.0, %v314
  %v316 = vpop.f32.mrb[0].mxu0
  %v317 = vpop.f32.mrb[0].mxu0
  %v318 = vadd.f32 0.0, %v317
  %v319 = vpop.f32.mrb[0].mxu0
  %320 = vmatprep.mubr.bf16.mxu0 %v233
  %321 = vmatmul.mubr.bf16.gmra.mrb[0].mxu0 %v145
  %v322 = vpop.f32.mrb[0].mxu0
  %v323 = vadd.f32 0.0, %v322
  %v324 = vpop.f32.mrb[0].mxu0
  %v325 = vpop.f32.mrb[0].mxu0
  %v326 = vadd.f32 0.0, %v325
  %v327 = vpop.f32.mrb[0].mxu0
  %328 = vmatprep.mubr.bf16.mxu0 %v236
  %329 = vmatmul.mubr.bf16.gmra.mrb[0].mxu0 %v147
  %v330 = vpop.f32.mrb[0].mxu0
  %v331 = vadd.f32 0.0, %v330
  %v332 = vpop.f32.mrb[0].mxu0
  %v333 = vpop.f32.mrb[0].mxu0
  %v334 = vadd.f32 0.0, %v333
  %v335 = vpop.f32.mrb[0].mxu0
  %336 = vmatprep.mubr.bf16.mxu0 %v239
  %337 = vmatmul.mubr.bf16.gmra.mrb[0].mxu0 %v149
  %v338 = vpop.f32.mrb[0].mxu0
  %v339 = vadd.f32 0.0, %v338
  %v340 = vpop.f32.mrb[0].mxu0
  %v341 = vpop.f32.mrb[0].mxu0
  %v342 = vadd.f32 0.0, %v341
  %v343 = vpop.f32.mrb[0].mxu0
  %344 = vdwg.mxu0
  %v345 = vadd.f32 %v36, %v283
  %v346 = vadd.f32 %v37, %v286
  %v347 = vadd.f32 %v38, %v291
  %v348 = vadd.f32 %v39, %v294
  %v349 = vadd.f32 %v40, %v299
  %v350 = vadd.f32 %v41, %v302
  %v351 = vadd.f32 %v42, %v307
  %v352 = vadd.f32 %v43, %v310
  %v353 = vadd.f32 %v44, %v315
  %v354 = vadd.f32 %v45, %v318
  %v355 = vadd.f32 %v46, %v323
  %v356 = vadd.f32 %v47, %v326
  %v357 = vadd.f32 %v48, %v331
  %v358 = vadd.f32 %v49, %v334
  %v359 = vadd.f32 %v50, %v339
  %v360 = vadd.f32 %v51, %v342
  %vm361 = vcmask 523264
  %362 = vst.msk [vmem:[#allocation2] sm:$0xff] %vm361, %v345
  %363 = vst.msk [vmem:[#allocation2 + $0x8] sm:$0xff] %vm361, %v346
  %364 = vst.msk [vmem:[#allocation2 + $0x10] sm:$0xff] %vm361, %v347
  %365 = vst.msk [vmem:[#allocation2 + $0x18] sm:$0xff] %vm361, %v348
  %366 = vst.msk [vmem:[#allocation2 + $0x20] sm:$0xff] %vm361, %v349
  %367 = vst.msk [vmem:[#allocation2 + $0x28] sm:$0xff] %vm361, %v350
  %368 = vst.msk [vmem:[#allocation2 + $0x30] sm:$0xff] %vm361, %v351
  %369 = vst.msk [vmem:[#allocation2 + $0x38] sm:$0xff] %vm361, %v352
  %370 = vst.msk [vmem:[#allocation2 + $0x40] sm:$0xff] %vm361, %v353
  %371 = vst.msk [vmem:[#allocation2 + $0x48] sm:$0xff] %vm361, %v354
  %372 = vst.msk [vmem:[#allocation2 + $0x50] sm:$0xff] %vm361, %v355
  %373 = vst.msk [vmem:[#allocation2 + $0x58] sm:$0xff] %vm361, %v356
  %374 = vst.msk [vmem:[#allocation2 + $0x60] sm:$0xff] %vm361, %v357
  %375 = vst.msk [vmem:[#allocation2 + $0x68] sm:$0xff] %vm361, %v358
  %376 = vst.msk [vmem:[#allocation2 + $0x70] sm:$0xff] %vm361, %v359
  %377 = vst.msk [vmem:[#allocation2 + $0x78] sm:$0xff] %vm361, %v360
  // Predicated region
  $region18: #{_lambda_.21} parent=0 // pred_check
    %p378 = pneg %p15
  $region19: #{_lambda_.21} parent=0 // pred_check_branch
    %380 = sbr.rel (%p378) target = $region21
  $region20: #{_lambda_.21} parent=0 // pred_region
    %v381 = vld [vmem:[#allocation2] sm:$0xff]
    %v382 = vld [vmem:[#allocation2 + $0x8] sm:$0xff]
    %v383 = vld [vmem:[#allocation2 + $0x10] sm:$0xff]
    %v384 = vld [vmem:[#allocation2 + $0x18] sm:$0xff]
    %v385 = vld [vmem:[#allocation2 + $0x20] sm:$0xff]
    %v386 = vld [vmem:[#allocation2 + $0x28] sm:$0xff]
    %v387 = vld [vmem:[#allocation2 + $0x30] sm:$0xff]
    %v388 = vld [vmem:[#allocation2 + $0x38] sm:$0xff]
    %v389 = vld [vmem:[#allocation2 + $0x40] sm:$0xff]
    %v390 = vld [vmem:[#allocation2 + $0x48] sm:$0xff]
    %v391 = vld [vmem:[#allocation2 + $0x50] sm:$0xff]
    %v392 = vld [vmem:[#allocation2 + $0x58] sm:$0xff]
    %v393 = vld [vmem:[#allocation2 + $0x60] sm:$0xff]
    %v394 = vld [vmem:[#allocation2 + $0x68] sm:$0xff]
    %v395 = vld [vmem:[#allocation2 + $0x70] sm:$0xff]
    %v396 = vld [vmem:[#allocation2 + $0x78] sm:$0xff]
    %v397 = vld [vmem:[%s2] sm:$0x1]
    %v399 = vlaneseq
    %v400 = vshrl.u32 %v399, 7
    %v401 = vsub.s32 0, %v400
    %v402 = vrot.slane %v397, %v401
    %v404 = vadd.f32 %v381, %v402
    %v405 = vadd.f32 %v382, %v402
    %v406 = vadd.f32 %v383, %v402
    %v407 = vadd.f32 %v384, %v402
    %v408 = vadd.f32 %v385, %v402
    %v409 = vadd.f32 %v386, %v402
    %v410 = vadd.f32 %v387, %v402
    %v411 = vadd.f32 %v388, %v402
    %v412 = vadd.f32 %v389, %v402
    %v413 = vadd.f32 %v390, %v402
    %v414 = vadd.f32 %v391, %v402
    %v415 = vadd.f32 %v392, %v402
    %v416 = vadd.f32 %v393, %v402
    %v417 = vadd.f32 %v394, %v402
    %v418 = vadd.f32 %v395, %v402
    %v419 = vadd.f32 %v396, %v402
    %v420 = vmax.f32 %v404, 0.0
    %v421 = vmax.f32 %v405, 0.0
    %v422 = vmax.f32 %v406, 0.0
    %v423 = vmax.f32 %v407, 0.0
    %v424 = vmax.f32 %v408, 0.0
    %v425 = vmax.f32 %v409, 0.0
    %v426 = vmax.f32 %v410, 0.0
    %v427 = vmax.f32 %v411, 0.0
    %v428 = vmax.f32 %v412, 0.0
    %v429 = vmax.f32 %v413, 0.0
    %v430 = vmax.f32 %v414, 0.0
    %v431 = vmax.f32 %v415, 0.0
    %v432 = vmax.f32 %v416, 0.0
    %v433 = vmax.f32 %v417, 0.0
    %v434 = vmax.f32 %v418, 0.0
    %v435 = vmax.f32 %v419, 0.0
    %436 = vst.msk [vmem:[%s3] sm:$0xff] %vm361, %v420
    %437 = vst.msk [vmem:[%s3 + $0x8] sm:$0xff] %vm361, %v421
    %438 = vst.msk [vmem:[%s3 + $0x10] sm:$0xff] %vm361, %v422
    %439 = vst.msk [vmem:[%s3 + $0x18] sm:$0xff] %vm361, %v423
    %440 = vst.msk [vmem:[%s3 + $0x20] sm:$0xff] %vm361, %v424
    %441 = vst.msk [vmem:[%s3 + $0x28] sm:$0xff] %vm361, %v425
    %442 = vst.msk [vmem:[%s3 + $0x30] sm:$0xff] %vm361, %v426
    %443 = vst.msk [vmem:[%s3 + $0x38] sm:$0xff] %vm361, %v427
    %444 = vst.msk [vmem:[%s3 + $0x40] sm:$0xff] %vm361, %v428
    %445 = vst.msk [vmem:[%s3 + $0x48] sm:$0xff] %vm361, %v429
    %446 = vst.msk [vmem:[%s3 + $0x50] sm:$0xff] %vm361, %v430
    %447 = vst.msk [vmem:[%s3 + $0x58] sm:$0xff] %vm361, %v431
    %448 = vst.msk [vmem:[%s3 + $0x60] sm:$0xff] %vm361, %v432
    %449 = vst.msk [vmem:[%s3 + $0x68] sm:$0xff] %vm361, %v433
    %450 = vst.msk [vmem:[%s3 + $0x70] sm:$0xff] %vm361, %v434
    %451 = vst.msk [vmem:[%s3 + $0x78] sm:$0xff] %vm361, %v435
  $region21: #{_lambda_.21} parent=0 // pred_fallthru
    _
  // Predicated region
  $region22: #{_lambda_.21} parent=0 // pred_check
    _
  $region23: #{_lambda_.21} parent=0 // pred_check_branch
    %453 = sbr.rel (0) target = $region25
  $region24: #{_lambda_.21} parent=0 // pred_region
    _
  $region25: #{_lambda_.21} parent=0 // pred_fallthru
    _
  // Predicated region
  $region26: #{_lambda_.21} parent=0 // pred_check
    _
  $region27: #{_lambda_.21} parent=0 // pred_check_branch
    %455 = sbr.rel (0) target = $region29
  $region28: #{_lambda_.21} parent=0 // pred_region
    _
  $region29: #{_lambda_.21} parent=0 // pred_fallthru
    _

// kernel: _lambda_.23
$region0: #{_lambda_.23}
  #allocation0 [shape = 'u32[]', space=smem, size = 0x4, offset = 0x4, fixed_abs, tag = 'smem constant byte address 0x4 - core index']
  #allocation1 [shape = 'u32[144,128]{1,0:T(1,128)}', space=vmem, size = 0x12000, scoped, tag = 'internal scratch']
  #allocation2 [shape = 'f32[32,64]{1,0:T(8,128)}', space=vmem, size = 0x4000, scoped, tag = 'scratch operand']
  %s0 = inlined_call_operand.vmem [shape: bf16[1,32,576], index: 0, kind: input, shape index: {}]
  %s1 = inlined_call_operand.vmem [shape: bf16[1,576,64], index: 1, kind: input, shape index: {}]
  %s2 = inlined_call_operand.vmem [shape: f32[1,64], index: 2, kind: input, shape index: {}]
  %s3 = inlined_call_operand.vmem [shape: f32[32,64], index: 3, kind: output, shape index: {}]
  %s4 = sld [smem:[#allocation0]]
  $region30: #{_lambda_.23} parent=0
    _
  %s6 = ssub.s32 1, %s4
  %s7 = scalar_select 0, %s6, %s4
  // Predicated region
  $region2: #{_lambda_.23} parent=0 // pred_check
    _
  $region3: #{_lambda_.23} parent=0 // pred_check_branch
    %9 = sbr.rel (0) target = $region5
  $region4: #{_lambda_.23} parent=0 // pred_region
    _
  $region5: #{_lambda_.23} parent=0 // pred_fallthru
    _
  // Predicated region
  $region6: #{_lambda_.23} parent=0 // pred_check
    _
  $region7: #{_lambda_.23} parent=0 // pred_check_branch
    %11 = sbr.rel (0) target = $region9
  $region8: #{_lambda_.23} parent=0 // pred_region
    _
  $region9: #{_lambda_.23} parent=0 // pred_fallthru
    _
  // Predicated region
  $region10: #{_lambda_.23} parent=0 // pred_check
    _
  $region11: #{_lambda_.23} parent=0 // pred_check_branch
    %13 = sbr.rel (0) target = $region13
  $region12: #{_lambda_.23} parent=0 // pred_region
    _
  $region13: #{_lambda_.23} parent=0 // pred_fallthru
    _
  %p15 = scmp.eq.s32.totalorder 0, 0
  // Predicated region
  $region14: #{_lambda_.23} parent=0 // pred_check
    %p16 = pneg %p15
  $region15: #{_lambda_.23} parent=0 // pred_check_branch
    %18 = sbr.rel (%p16) target = $region17
  $region16: #{_lambda_.23} parent=0 // pred_region
    %vm19 = vcmask 523264
    %20 = vst.msk [vmem:[#allocation2] sm:$0xff] %vm19, 0.0
    %21 = vst.msk [vmem:[#allocation2 + $0x8] sm:$0xff] %vm19, 0.0
    %22 = vst.msk [vmem:[#allocation2 + $0x10] sm:$0xff] %vm19, 0.0
    %23 = vst.msk [vmem:[#allocation2 + $0x18] sm:$0xff] %vm19, 0.0
  $region17: #{_lambda_.23} parent=0 // pred_fallthru
    _
  %v24 = vld [vmem:[#allocation2] sm:$0xff]
  %v25 = vld [vmem:[#allocation2 + $0x8] sm:$0xff]
  %v26 = vld [vmem:[#allocation2 + $0x10] sm:$0xff]
  %v27 = vld [vmem:[#allocation2 + $0x18] sm:$0xff]
  %v28 = vld [vmem:[%s0] sm:$0xff]
  %v29 = vld [vmem:[%s0 + $0x8] sm:$0xff]
  %v30 = vld [vmem:[%s0 + $0x10] sm:$0xf]
  %v31 = vld [vmem:[%s0 + $0x14] sm:$0xff]
  %v32 = vld [vmem:[%s0 + $0x1c] sm:$0xff]
  %v33 = vld [vmem:[%s0 + $0x24] sm:$0xf]
  %v34 = vld [vmem:[%s0 + $0x28] sm:$0xff]
  %v35 = vld [vmem:[%s0 + $0x30] sm:$0xff]
  %v36 = vld [vmem:[%s0 + $0x38] sm:$0xf]
  %v37 = vld [vmem:[%s0 + $0x3c] sm:$0xff]
  %v38 = vld [vmem:[%s0 + $0x44] sm:$0xff]
  %v39 = vld [vmem:[%s0 + $0x4c] sm:$0xf]
  %v40 = vld [vmem:[%s1] sm:$0xf]
  %v41 = vld [vmem:[%s1 + $0x4] sm:$0xf]
  %v42 = vld [vmem:[%s1 + $0x8] sm:$0xf]
  %v43 = vld [vmem:[%s1 + $0xc] sm:$0xf]
  %v44 = vld [vmem:[%s1 + $0x10] sm:$0xf]
  %v45 = vld [vmem:[%s1 + $0x14] sm:$0xf]
  %v46 = vld [vmem:[%s1 + $0x18] sm:$0xf]
  %v47 = vld [vmem:[%s1 + $0x1c] sm:$0xf]
  %v48 = vld [vmem:[%s1 + $0x20] sm:$0xf]
  %v49 = vld [vmem:[%s1 + $0x24] sm:$0xf]
  %v50 = vld [vmem:[%s1 + $0x28] sm:$0xf]
  %v51 = vld [vmem:[%s1 + $0x2c] sm:$0xf]
  %v52 = vld [vmem:[%s1 + $0x30] sm:$0xf]
  %v53 = vld [vmem:[%s1 + $0x34] sm:$0xf]
  %v54 = vld [vmem:[%s1 + $0x38] sm:$0xf]
  %v55 = vld [vmem:[%s1 + $0x3c] sm:$0xf]
  %v56 = vld [vmem:[%s1 + $0x40] sm:$0xf]
  %v57 = vld [vmem:[%s1 + $0x44] sm:$0xf]
  %v58 = vld [vmem:[%s1 + $0x48] sm:$0xf]
  %v59 = vld [vmem:[%s1 + $0x4c] sm:$0xf]
  %v60 = vld [vmem:[%s1 + $0x50] sm:$0xf]
  %v61 = vld [vmem:[%s1 + $0x54] sm:$0xf]
  %v62 = vld [vmem:[%s1 + $0x58] sm:$0xf]
  %v63 = vld [vmem:[%s1 + $0x5c] sm:$0xf]
  %v64 = vld [vmem:[%s1 + $0x60] sm:$0xf]
  %v65 = vld [vmem:[%s1 + $0x64] sm:$0xf]
  %v66 = vld [vmem:[%s1 + $0x68] sm:$0xf]
  %v67 = vld [vmem:[%s1 + $0x6c] sm:$0xf]
  %v68 = vld [vmem:[%s1 + $0x70] sm:$0xf]
  %v69 = vld [vmem:[%s1 + $0x74] sm:$0xf]
  %v70 = vld [vmem:[%s1 + $0x78] sm:$0xf]
  %v71 = vld [vmem:[%s1 + $0x7c] sm:$0xf]
  %v72 = vld [vmem:[%s1 + $0x80] sm:$0xf]
  %v73 = vld [vmem:[%s1 + $0x84] sm:$0xf]
  %v74 = vld [vmem:[%s1 + $0x88] sm:$0xf]
  %v75 = vld [vmem:[%s1 + $0x8c] sm:$0xf]
  %v76 = vld [vmem:[%s1 + $0x90] sm:$0xf]
  %v77 = vld [vmem:[%s1 + $0x94] sm:$0xf]
  %v78 = vld [vmem:[%s1 + $0x98] sm:$0xf]
  %v79 = vld [vmem:[%s1 + $0x9c] sm:$0xf]
  %v80 = vld [vmem:[%s1 + $0xa0] sm:$0xf]
  %v81 = vld [vmem:[%s1 + $0xa4] sm:$0xf]
  %v82 = vld [vmem:[%s1 + $0xa8] sm:$0xf]
  %v83 = vld [vmem:[%s1 + $0xac] sm:$0xf]
  %v84 = vld [vmem:[%s1 + $0xb0] sm:$0xf]
  %v85 = vld [vmem:[%s1 + $0xb4] sm:$0xf]
  %v86 = vld [vmem:[%s1 + $0xb8] sm:$0xf]
  %v87 = vld [vmem:[%s1 + $0xbc] sm:$0xf]
  %v88 = vld [vmem:[%s1 + $0xc0] sm:$0xf]
  %v89 = vld [vmem:[%s1 + $0xc4] sm:$0xf]
  %v90 = vld [vmem:[%s1 + $0xc8] sm:$0xf]
  %v91 = vld [vmem:[%s1 + $0xcc] sm:$0xf]
  %v92 = vld [vmem:[%s1 + $0xd0] sm:$0xf]
  %v93 = vld [vmem:[%s1 + $0xd4] sm:$0xf]
  %v94 = vld [vmem:[%s1 + $0xd8] sm:$0xf]
  %v95 = vld [vmem:[%s1 + $0xdc] sm:$0xf]
  %v96 = vld [vmem:[%s1 + $0xe0] sm:$0xf]
  %v97 = vld [vmem:[%s1 + $0xe4] sm:$0xf]
  %v98 = vld [vmem:[%s1 + $0xe8] sm:$0xf]
  %v99 = vld [vmem:[%s1 + $0xec] sm:$0xf]
  %v100 = vld [vmem:[%s1 + $0xf0] sm:$0xf]
  %v101 = vld [vmem:[%s1 + $0xf4] sm:$0xf]
  %v102 = vld [vmem:[%s1 + $0xf8] sm:$0xf]
  %v103 = vld [vmem:[%s1 + $0xfc] sm:$0xf]
  %v104 = vld [vmem:[%s1 + $0x100] sm:$0xf]
  %v105 = vld [vmem:[%s1 + $0x104] sm:$0xf]
  %v106 = vld [vmem:[%s1 + $0x108] sm:$0xf]
  %v107 = vld [vmem:[%s1 + $0x10c] sm:$0xf]
  %v108 = vld [vmem:[%s1 + $0x110] sm:$0xf]
  %v109 = vld [vmem:[%s1 + $0x114] sm:$0xf]
  %v110 = vld [vmem:[%s1 + $0x118] sm:$0xf]
  %v111 = vld [vmem:[%s1 + $0x11c] sm:$0xf]
  %v124 = vunpack.c.l.b16 %v28
  %v125 = vunpack.c.h.b16 %v28
  %v126 = vunpack.c.l.b16 %v29
  %v127 = vunpack.c.h.b16 %v29
  %v128 = vunpack.c.l.b16 %v30
  %v129 = vunpack.c.l.b16 %v31
  %v130 = vunpack.c.h.b16 %v31
  %v131 = vunpack.c.l.b16 %v32
  %v132 = vunpack.c.h.b16 %v32
  %v133 = vunpack.c.l.b16 %v33
  %v134 = vunpack.c.l.b16 %v34
  %v135 = vunpack.c.h.b16 %v34
  %v136 = vunpack.c.l.b16 %v35
  %v137 = vunpack.c.h.b16 %v35
  %v138 = vunpack.c.l.b16 %v36
  %v139 = vunpack.c.l.b16 %v37
  %v140 = vunpack.c.h.b16 %v37
  %v141 = vunpack.c.l.b16 %v38
  %v142 = vunpack.c.h.b16 %v38
  %v143 = vunpack.c.l.b16 %v39
  %v144 = vpack.c.b16 %v129, %v124
  %v145 = vpack.c.b16 %v130, %v125
  %v146 = vpack.c.b16 %v131, %v126
  %v147 = vpack.c.b16 %v132, %v127
  %v148 = vpack.c.b16 %v133, %v128
  %v149 = vpack.c.b16 %v139, %v134
  %v150 = vpack.c.b16 %v140, %v135
  %v151 = vpack.c.b16 %v141, %v136
  %v152 = vpack.c.b16 %v142, %v137
  %v153 = vpack.c.b16 %v143, %v138
  %v234 = vunpack.c.l.b16 %v40
  %v235 = vunpack.c.l.b16 %v41
  %v236 = vunpack.c.l.b16 %v42
  %v237 = vunpack.c.l.b16 %v43
  %v238 = vunpack.c.l.b16 %v44
  %v239 = vunpack.c.l.b16 %v45
  %v240 = vunpack.c.l.b16 %v46
  %v241 = vunpack.c.l.b16 %v47
  %v242 = vunpack.c.l.b16 %v48
  %v243 = vunpack.c.l.b16 %v49
  %v244 = vunpack.c.l.b16 %v50
  %v245 = vunpack.c.l.b16 %v51
  %v246 = vunpack.c.l.b16 %v52
  %v247 = vunpack.c.l.b16 %v53
  %v248 = vunpack.c.l.b16 %v54
  %v249 = vunpack.c.l.b16 %v55
  %v250 = vunpack.c.l.b16 %v56
  %v251 = vunpack.c.l.b16 %v57
  %v252 = vunpack.c.l.b16 %v58
  %v253 = vunpack.c.l.b16 %v59
  %v254 = vunpack.c.l.b16 %v60
  %v255 = vunpack.c.l.b16 %v61
  %v256 = vunpack.c.l.b16 %v62
  %v257 = vunpack.c.l.b16 %v63
  %v258 = vunpack.c.l.b16 %v64
  %v259 = vunpack.c.l.b16 %v65
  %v260 = vunpack.c.l.b16 %v66
  %v261 = vunpack.c.l.b16 %v67
  %v262 = vunpack.c.l.b16 %v68
  %v263 = vunpack.c.l.b16 %v69
  %v264 = vunpack.c.l.b16 %v70
  %v265 = vunpack.c.l.b16 %v71
  %v266 = vunpack.c.l.b16 %v72
  %v267 = vunpack.c.l.b16 %v73
  %v268 = vunpack.c.l.b16 %v74
  %v269 = vunpack.c.l.b16 %v75
  %v270 = vunpack.c.l.b16 %v76
  %v271 = vunpack.c.l.b16 %v77
  %v272 = vunpack.c.l.b16 %v78
  %v273 = vunpack.c.l.b16 %v79
  %v274 = vunpack.c.l.b16 %v80
  %v275 = vunpack.c.l.b16 %v81
  %v276 = vunpack.c.l.b16 %v82
  %v277 = vunpack.c.l.b16 %v83
  %v278 = vunpack.c.l.b16 %v84
  %v279 = vunpack.c.l.b16 %v85
  %v280 = vunpack.c.l.b16 %v86
  %v281 = vunpack.c.l.b16 %v87
  %v282 = vunpack.c.l.b16 %v88
  %v283 = vunpack.c.l.b16 %v89
  %v284 = vunpack.c.l.b16 %v90
  %v285 = vunpack.c.l.b16 %v91
  %v286 = vunpack.c.l.b16 %v92
  %v287 = vunpack.c.l.b16 %v93
  %v288 = vunpack.c.l.b16 %v94
  %v289 = vunpack.c.l.b16 %v95
  %v290 = vunpack.c.l.b16 %v96
  %v291 = vunpack.c.l.b16 %v97
  %v292 = vunpack.c.l.b16 %v98
  %v293 = vunpack.c.l.b16 %v99
  %v294 = vunpack.c.l.b16 %v100
  %v295 = vunpack.c.l.b16 %v101
  %v296 = vunpack.c.l.b16 %v102
  %v297 = vunpack.c.l.b16 %v103
  %v298 = vunpack.c.l.b16 %v104
  %v299 = vunpack.c.l.b16 %v105
  %v300 = vunpack.c.l.b16 %v106
  %v301 = vunpack.c.l.b16 %v107
  %v302 = vunpack.c.l.b16 %v108
  %v303 = vunpack.c.l.b16 %v109
  %v304 = vunpack.c.l.b16 %v110
  %v305 = vunpack.c.l.b16 %v111
  %v306 = vpack.c.b16 %v235, %v234
  %v307 = vpack.c.b16 %v237, %v236
  %v308 = vpack.c.b16 %v239, %v238
  %v309 = vpack.c.b16 %v241, %v240
  %v310 = vpack.c.b16 %v243, %v242
  %v311 = vpack.c.b16 %v245, %v244
  %v312 = vpack.c.b16 %v247, %v246
  %v313 = vpack.c.b16 %v249, %v248
  %v314 = vpack.c.b16 %v251, %v250
  %v315 = vpack.c.b16 %v253, %v252
  %v316 = vpack.c.b16 %v255, %v254
  %v317 = vpack.c.b16 %v257, %v256
  %v318 = vpack.c.b16 %v259, %v258
  %v319 = vpack.c.b16 %v261, %v260
  %v320 = vpack.c.b16 %v263, %v262
  %v321 = vpack.c.b16 %v265, %v264
  %v322 = vpack.c.b16 %v267, %v266
  %v323 = vpack.c.b16 %v269, %v268
  %v324 = vpack.c.b16 %v271, %v270
  %v325 = vpack.c.b16 %v273, %v272
  %v326 = vpack.c.b16 %v275, %v274
  %v327 = vpack.c.b16 %v277, %v276
  %v328 = vpack.c.b16 %v279, %v278
  %v329 = vpack.c.b16 %v281, %v280
  %v330 = vpack.c.b16 %v283, %v282
  %v331 = vpack.c.b16 %v285, %v284
  %v332 = vpack.c.b16 %v287, %v286
  %v333 = vpack.c.b16 %v289, %v288
  %v334 = vpack.c.b16 %v291, %v290
  %v335 = vpack.c.b16 %v293, %v292
  %v336 = vpack.c.b16 %v295, %v294
  %v337 = vpack.c.b16 %v297, %v296
  %v338 = vpack.c.b16 %v299, %v298
  %v339 = vpack.c.b16 %v301, %v300
  %v340 = vpack.c.b16 %v303, %v302
  %v341 = vpack.c.b16 %v305, %v304
  %vm378 = vcmask 523264
  %v380 = vsel %vm378, %v148, 0
  %v383 = vsel %vm378, %v153, 0
  %385 = vmatprep.subr.bf16.mxu0 0
  %386 = vmatpush1.bf16.msra.mxu0 %v306
  %387 = vmatprep.subr.bf16.mxu0 0
  %388 = vmatpush1.bf16.msra.mxu0 %v307
  %389 = vmatprep.subr.bf16.mxu0 0
  %390 = vmatpush1.bf16.msra.mxu0 %v308
  %391 = vmatprep.subr.bf16.mxu0 0
  %392 = vmatpush1.bf16.msra.mxu0 %v309
  %393 = vmatprep.subr.bf16.mxu0 0
  %394 = vmatpush1.bf16.msra.mxu0 %v310
  %395 = vmatprep.subr.bf16.mxu0 0
  %396 = vmatpush1.bf16.msra.mxu0 %v311
  %397 = vmatprep.subr.bf16.mxu0 0
  %398 = vmatpush1.bf16.msra.mxu0 %v312
  %399 = vmatprep.subr.bf16.mxu0 0
  %400 = vmatpush1.bf16.msra.mxu0 %v313
  %401 = vmatprep.subr.bf16.mxu0 0
  %402 = vmatpush1.bf16.msra.mxu0 %v314
  %403 = vmatprep.subr.bf16.mxu0 0
  %404 = vmatpush1.bf16.msra.mxu0 %v315
  %405 = vmatprep.subr.bf16.mxu0 0
  %406 = vmatpush1.bf16.msra.mxu0 %v316
  %407 = vmatprep.subr.bf16.mxu0 0
  %408 = vmatpush1.bf16.msra.mxu0 %v317
  %409 = vmatprep.subr.bf16.mxu0 0
  %410 = vmatpush1.bf16.msra.mxu0 %v318
  %411 = vmatprep.subr.bf16.mxu0 0
  %412 = vmatpush1.bf16.msra.mxu0 %v319
  %413 = vmatprep.subr.bf16.mxu0 0
  %414 = vmatpush1.bf16.msra.mxu0 %v320
  %415 = vmatprep.subr.bf16.mxu0 0
  %416 = vmatpush1.bf16.msra.mxu0 %v321
  %417 = vmatprep.mubr.bf16.mxu0 %v145
  %418 = vmatmul.mubr.bf16.gmra.mrb[0].mxu0 %v144
  %v419 = vpop.f32.mrb[0].mxu0
  %v420 = vadd.f32 0.0, %v419
  %v421 = vpop.f32.mrb[0].mxu0
  %v422 = vpop.f32.mrb[0].mxu0
  %v423 = vadd.f32 0.0, %v422
  %v424 = vpop.f32.mrb[0].mxu0
  %425 = vmatprep.mubr.bf16.mxu0 %v150
  %426 = vmatmul.mubr.bf16.gmra.mrb[0].mxu0 %v149
  %v427 = vpop.f32.mrb[0].mxu0
  %v428 = vadd.f32 0.0, %v427
  %v429 = vpop.f32.mrb[0].mxu0
  %v430 = vpop.f32.mrb[0].mxu0
  %v431 = vadd.f32 0.0, %v430
  %v432 = vpop.f32.mrb[0].mxu0
  %433 = vdwg.mxu0
  %434 = vmatprep.subr.bf16.mxu0 0
  %435 = vmatpush1.bf16.msra.mxu0 %v322
  %436 = vmatprep.subr.bf16.mxu0 0
  %437 = vmatpush1.bf16.msra.mxu0 %v323
  %438 = vmatprep.subr.bf16.mxu0 0
  %439 = vmatpush1.bf16.msra.mxu0 %v324
  %440 = vmatprep.subr.bf16.mxu0 0
  %441 = vmatpush1.bf16.msra.mxu0 %v325
  %442 = vmatprep.subr.bf16.mxu0 0
  %443 = vmatpush1.bf16.msra.mxu0 %v326
  %444 = vmatprep.subr.bf16.mxu0 0
  %445 = vmatpush1.bf16.msra.mxu0 %v327
  %446 = vmatprep.subr.bf16.mxu0 0
  %447 = vmatpush1.bf16.msra.mxu0 %v328
  %448 = vmatprep.subr.bf16.mxu0 0
  %449 = vmatpush1.bf16.msra.mxu0 %v329
  %450 = vmatprep.subr.bf16.mxu0 0
  %451 = vmatpush1.bf16.msra.mxu0 %v330
  %452 = vmatprep.subr.bf16.mxu0 0
  %453 = vmatpush1.bf16.msra.mxu0 %v331
  %454 = vmatprep.subr.bf16.mxu0 0
  %455 = vmatpush1.bf16.msra.mxu0 %v332
  %456 = vmatprep.subr.bf16.mxu0 0
  %457 = vmatpush1.bf16.msra.mxu0 %v333
  %458 = vmatprep.subr.bf16.mxu0 0
  %459 = vmatpush1.bf16.msra.mxu0 %v334
  %460 = vmatprep.subr.bf16.mxu0 0
  %461 = vmatpush1.bf16.msra.mxu0 %v335
  %462 = vmatprep.subr.bf16.mxu0 0
  %463 = vmatpush1.bf16.msra.mxu0 %v336
  %464 = vmatprep.subr.bf16.mxu0 0
  %465 = vmatpush1.bf16.msra.mxu0 %v337
  %466 = vmatprep.mubr.bf16.mxu0 %v147
  %467 = vmatmul.mubr.bf16.gmra.mrb[0].mxu0 %v146
  %v468 = vpop.f32.mrb[0].mxu0
  %v469 = vadd.f32 %v420, %v468
  %v470 = vpop.f32.mrb[0].mxu0
  %v471 = vpop.f32.mrb[0].mxu0
  %v472 = vadd.f32 %v423, %v471
  %v473 = vpop.f32.mrb[0].mxu0
  %474 = vmatprep.mubr.bf16.mxu0 %v152
  %475 = vmatmul.mubr.bf16.gmra.mrb[0].mxu0 %v151
  %v476 = vpop.f32.mrb[0].mxu0
  %v477 = vadd.f32 %v428, %v476
  %v478 = vpop.f32.mrb[0].mxu0
  %v479 = vpop.f32.mrb[0].mxu0
  %v480 = vadd.f32 %v431, %v479
  %v481 = vpop.f32.mrb[0].mxu0
  %482 = vdwg.mxu0
  %483 = vmatprep.subr.bf16.mxu0 0
  %484 = vmatpush1.bf16.msra.mxu0 %v338
  %485 = vmatprep.subr.bf16.mxu0 0
  %486 = vmatpush1.bf16.msra.mxu0 %v339
  %487 = vmatprep.subr.bf16.mxu0 0
  %488 = vmatpush1.bf16.msra.mxu0 %v340
  %489 = vmatprep.subr.bf16.mxu0 0
  %490 = vmatpush1.bf16.msra.mxu0 %v341
  %491 = vmatprep.subr.bf16.mxu0 0
  %492 = vmatpush1.bf16.msra.mxu0 0
  %493 = vmatprep.subr.bf16.mxu0 0
  %494 = vmatpush1.bf16.msra.mxu0 0
  %495 = vmatprep.subr.bf16.mxu0 0
  %496 = vmatpush1.bf16.msra.mxu0 0
  %497 = vmatprep.subr.bf16.mxu0 0
  %498 = vmatpush1.bf16.msra.mxu0 0
  %499 = vmatprep.subr.bf16.mxu0 0
  %500 = vmatpush1.bf16.msra.mxu0 0
  %501 = vmatprep.subr.bf16.mxu0 0
  %502 = vmatpush1.bf16.msra.mxu0 0
  %503 = vmatprep.subr.bf16.mxu0 0
  %504 = vmatpush1.bf16.msra.mxu0 0
  %505 = vmatprep.subr.bf16.mxu0 0
  %506 = vmatpush1.bf16.msra.mxu0 0
  %507 = vmatprep.subr.bf16.mxu0 0
  %508 = vmatpush1.bf16.msra.mxu0 0
  %509 = vmatprep.subr.bf16.mxu0 0
  %510 = vmatpush1.bf16.msra.mxu0 0
  %511 = vmatprep.subr.bf16.mxu0 0
  %512 = vmatpush1.bf16.msra.mxu0 0
  %513 = vmatprep.subr.bf16.mxu0 0
  %514 = vmatpush1.bf16.msra.mxu0 0
  %515 = vmatprep.mubr.bf16.mxu0 0
  %516 = vmatmul.mubr.bf16.gmra.mrb[0].mxu0 %v380
  %v517 = vpop.f32.mrb[0].mxu0
  %v518 = vadd.f32 %v469, %v517
  %v519 = vpop.f32.mrb[0].mxu0
  %v520 = vpop.f32.mrb[0].mxu0
  %v521 = vadd.f32 %v472, %v520
  %v522 = vpop.f32.mrb[0].mxu0
  %523 = vmatprep.mubr.bf16.mxu0 0
  %524 = vmatmul.mubr.bf16.gmra.mrb[0].mxu0 %v383
  %v525 = vpop.f32.mrb[0].mxu0
  %v526 = vadd.f32 %v477, %v525
  %v527 = vpop.f32.mrb[0].mxu0
  %v528 = vpop.f32.mrb[0].mxu0
  %v529 = vadd.f32 %v480, %v528
  %v530 = vpop.f32.mrb[0].mxu0
  %531 = vdwg.mxu0
  %v532 = vadd.f32 %v24, %v518
  %v533 = vadd.f32 %v25, %v521
  %v534 = vadd.f32 %v26, %v526
  %v535 = vadd.f32 %v27, %v529
  %536 = vst.msk [vmem:[#allocation2] sm:$0xff] %vm378, %v532
  %537 = vst.msk [vmem:[#allocation2 + $0x8] sm:$0xff] %vm378, %v533
  %538 = vst.msk [vmem:[#allocation2 + $0x10] sm:$0xff] %vm378, %v534
  %539 = vst.msk [vmem:[#allocation2 + $0x18] sm:$0xff] %vm378, %v535
  // Predicated region
  $region18: #{_lambda_.23} parent=0 // pred_check
    %p540 = pneg %p15
  $region19: #{_lambda_.23} parent=0 // pred_check_branch
    %542 = sbr.rel (%p540) target = $region21
  $region20: #{_lambda_.23} parent=0 // pred_region
    %v543 = vld [vmem:[#allocation2] sm:$0xff]
    %v544 = vld [vmem:[#allocation2 + $0x8] sm:$0xff]
    %v545 = vld [vmem:[#allocation2 + $0x10] sm:$0xff]
    %v546 = vld [vmem:[#allocation2 + $0x18] sm:$0xff]
    %v547 = vld [vmem:[%s2] sm:$0x1]
    %v549 = vlaneseq
    %v550 = vshrl.u32 %v549, 7
    %v551 = vsub.s32 0, %v550
    %v552 = vrot.slane %v547, %v551
    %v554 = vadd.f32 %v543, %v552
    %v555 = vadd.f32 %v544, %v552
    %v556 = vadd.f32 %v545, %v552
    %v557 = vadd.f32 %v546, %v552
    %v558 = vmax.f32 %v554, 0.0
    %v559 = vmax.f32 %v555, 0.0
    %v560 = vmax.f32 %v556, 0.0
    %v561 = vmax.f32 %v557, 0.0
    %562 = vst.msk [vmem:[%s3] sm:$0xff] %vm378, %v558
    %563 = vst.msk [vmem:[%s3 + $0x8] sm:$0xff] %vm378, %v559
    %564 = vst.msk [vmem:[%s3 + $0x10] sm:$0xff] %vm378, %v560
    %565 = vst.msk [vmem:[%s3 + $0x18] sm:$0xff] %vm378, %v561
  $region21: #{_lambda_.23} parent=0 // pred_fallthru
    _
  // Predicated region
  $region22: #{_lambda_.23} parent=0 // pred_check
    _
  $region23: #{_lambda_.23} parent=0 // pred_check_branch
    %567 = sbr.rel (0) target = $region25
  $region24: #{_lambda_.23} parent=0 // pred_region
    _
  $region25: #{_lambda_.23} parent=0 // pred_fallthru
    _
  // Predicated region
  $region26: #{_lambda_.23} parent=0 // pred_check
    _
  $region27: #{_lambda_.23} parent=0 // pred_check_branch
    %569 = sbr.rel (0) target = $region29
  $region28: #{_lambda_.23} parent=0 // pred_region
    _
  $region29: #{_lambda_.23} parent=0 // pred_fallthru
    _

// kernel: _lambda_.24
$region0: #{_lambda_.24}
  #allocation0 [shape = 'u32[]', space=smem, size = 0x4, offset = 0x4, fixed_abs, tag = 'smem constant byte address 0x4 - core index']
  #allocation1 [shape = 'u32[144,128]{1,0:T(1,128)}', space=vmem, size = 0x12000, scoped, tag = 'internal scratch']
  #allocation2 [shape = 'f32[32,64]{1,0:T(8,128)}', space=vmem, size = 0x4000, scoped, tag = 'scratch operand']
  %s0 = inlined_call_operand.vmem [shape: bf16[1,32,576], index: 0, kind: input, shape index: {}]
  %s1 = inlined_call_operand.vmem [shape: bf16[1,576,64], index: 1, kind: input, shape index: {}]
  %s2 = inlined_call_operand.vmem [shape: f32[1,64], index: 2, kind: input, shape index: {}]
  %s3 = inlined_call_operand.vmem [shape: f32[32,64], index: 3, kind: input, shape index: {}]
  %s4 = inlined_call_operand.vmem [shape: f32[32,64], index: 4, kind: output, shape index: {}]
  %s5 = sld [smem:[#allocation0]]
  $region34: #{_lambda_.24} parent=0
    _
  %s7 = ssub.s32 1, %s5
  %s8 = scalar_select 0, %s7, %s5
  // Predicated region
  $region2: #{_lambda_.24} parent=0 // pred_check
    _
  $region3: #{_lambda_.24} parent=0 // pred_check_branch
    %10 = sbr.rel (0) target = $region5
  $region4: #{_lambda_.24} parent=0 // pred_region
    _
  $region5: #{_lambda_.24} parent=0 // pred_fallthru
    _
  // Predicated region
  $region6: #{_lambda_.24} parent=0 // pred_check
    _
  $region7: #{_lambda_.24} parent=0 // pred_check_branch
    %12 = sbr.rel (0) target = $region9
  $region8: #{_lambda_.24} parent=0 // pred_region
    _
  $region9: #{_lambda_.24} parent=0 // pred_fallthru
    _
  // Predicated region
  $region10: #{_lambda_.24} parent=0 // pred_check
    _
  $region11: #{_lambda_.24} parent=0 // pred_check_branch
    %14 = sbr.rel (0) target = $region13
  $region12: #{_lambda_.24} parent=0 // pred_region
    _
  $region13: #{_lambda_.24} parent=0 // pred_fallthru
    _
  // Predicated region
  $region14: #{_lambda_.24} parent=0 // pred_check
    _
  $region15: #{_lambda_.24} parent=0 // pred_check_branch
    %16 = sbr.rel (0) target = $region17
  $region16: #{_lambda_.24} parent=0 // pred_region
    _
  $region17: #{_lambda_.24} parent=0 // pred_fallthru
    _
  %p18 = scmp.eq.s32.totalorder 0, 0
  // Predicated region
  $region18: #{_lambda_.24} parent=0 // pred_check
    %p19 = pneg %p18
  $region19: #{_lambda_.24} parent=0 // pred_check_branch
    %21 = sbr.rel (%p19) target = $region21
  $region20: #{_lambda_.24} parent=0 // pred_region
    %vm22 = vcmask 523264
    %23 = vst.msk [vmem:[#allocation2] sm:$0xff] %vm22, 0.0
    %24 = vst.msk [vmem:[#allocation2 + $0x8] sm:$0xff] %vm22, 0.0
    %25 = vst.msk [vmem:[#allocation2 + $0x10] sm:$0xff] %vm22, 0.0
    %26 = vst.msk [vmem:[#allocation2 + $0x18] sm:$0xff] %vm22, 0.0
  $region21: #{_lambda_.24} parent=0 // pred_fallthru
    _
  %v27 = vld [vmem:[#allocation2] sm:$0xff]
  %v28 = vld [vmem:[#allocation2 + $0x8] sm:$0xff]
  %v29 = vld [vmem:[#allocation2 + $0x10] sm:$0xff]
  %v30 = vld [vmem:[#allocation2 + $0x18] sm:$0xff]
  %v31 = vld [vmem:[%s0] sm:$0xff]
  %v32 = vld [vmem:[%s0 + $0x8] sm:$0xff]
  %v33 = vld [vmem:[%s0 + $0x10] sm:$0xf]
  %v34 = vld [vmem:[%s0 + $0x14] sm:$0xff]
  %v35 = vld [vmem:[%s0 + $0x1c] sm:$0xff]
  %v36 = vld [vmem:[%s0 + $0x24] sm:$0xf]
  %v37 = vld [vmem:[%s0 + $0x28] sm:$0xff]
  %v38 = vld [vmem:[%s0 + $0x30] sm:$0xff]
  %v39 = vld [vmem:[%s0 + $0x38] sm:$0xf]
  %v40 = vld [vmem:[%s0 + $0x3c] sm:$0xff]
  %v41 = vld [vmem:[%s0 + $0x44] sm:$0xff]
  %v42 = vld [vmem:[%s0 + $0x4c] sm:$0xf]
  %v43 = vld [vmem:[%s1] sm:$0xf]
  %v44 = vld [vmem:[%s1 + $0x4] sm:$0xf]
  %v45 = vld [vmem:[%s1 + $0x8] sm:$0xf]
  %v46 = vld [vmem:[%s1 + $0xc] sm:$0xf]
  %v47 = vld [vmem:[%s1 + $0x10] sm:$0xf]
  %v48 = vld [vmem:[%s1 + $0x14] sm:$0xf]
  %v49 = vld [vmem:[%s1 + $0x18] sm:$0xf]
  %v50 = vld [vmem:[%s1 + $0x1c] sm:$0xf]
  %v51 = vld [vmem:[%s1 + $0x20] sm:$0xf]
  %v52 = vld [vmem:[%s1 + $0x24] sm:$0xf]
  %v53 = vld [vmem:[%s1 + $0x28] sm:$0xf]
  %v54 = vld [vmem:[%s1 + $0x2c] sm:$0xf]
  %v55 = vld [vmem:[%s1 + $0x30] sm:$0xf]
  %v56 = vld [vmem:[%s1 + $0x34] sm:$0xf]
  %v57 = vld [vmem:[%s1 + $0x38] sm:$0xf]
  %v58 = vld [vmem:[%s1 + $0x3c] sm:$0xf]
  %v59 = vld [vmem:[%s1 + $0x40] sm:$0xf]
  %v60 = vld [vmem:[%s1 + $0x44] sm:$0xf]
  %v61 = vld [vmem:[%s1 + $0x48] sm:$0xf]
  %v62 = vld [vmem:[%s1 + $0x4c] sm:$0xf]
  %v63 = vld [vmem:[%s1 + $0x50] sm:$0xf]
  %v64 = vld [vmem:[%s1 + $0x54] sm:$0xf]
  %v65 = vld [vmem:[%s1 + $0x58] sm:$0xf]
  %v66 = vld [vmem:[%s1 + $0x5c] sm:$0xf]
  %v67 = vld [vmem:[%s1 + $0x60] sm:$0xf]
  %v68 = vld [vmem:[%s1 + $0x64] sm:$0xf]
  %v69 = vld [vmem:[%s1 + $0x68] sm:$0xf]
  %v70 = vld [vmem:[%s1 + $0x6c] sm:$0xf]
  %v71 = vld [vmem:[%s1 + $0x70] sm:$0xf]
  %v72 = vld [vmem:[%s1 + $0x74] sm:$0xf]
  %v73 = vld [vmem:[%s1 + $0x78] sm:$0xf]
  %v74 = vld [vmem:[%s1 + $0x7c] sm:$0xf]
  %v75 = vld [vmem:[%s1 + $0x80] sm:$0xf]
  %v76 = vld [vmem:[%s1 + $0x84] sm:$0xf]
  %v77 = vld [vmem:[%s1 + $0x88] sm:$0xf]
  %v78 = vld [vmem:[%s1 + $0x8c] sm:$0xf]
  %v79 = vld [vmem:[%s1 + $0x90] sm:$0xf]
  %v80 = vld [vmem:[%s1 + $0x94] sm:$0xf]
  %v81 = vld [vmem:[%s1 + $0x98] sm:$0xf]
  %v82 = vld [vmem:[%s1 + $0x9c] sm:$0xf]
  %v83 = vld [vmem:[%s1 + $0xa0] sm:$0xf]
  %v84 = vld [vmem:[%s1 + $0xa4] sm:$0xf]
  %v85 = vld [vmem:[%s1 + $0xa8] sm:$0xf]
  %v86 = vld [vmem:[%s1 + $0xac] sm:$0xf]
  %v87 = vld [vmem:[%s1 + $0xb0] sm:$0xf]
  %v88 = vld [vmem:[%s1 + $0xb4] sm:$0xf]
  %v89 = vld [vmem:[%s1 + $0xb8] sm:$0xf]
  %v90 = vld [vmem:[%s1 + $0xbc] sm:$0xf]
  %v91 = vld [vmem:[%s1 + $0xc0] sm:$0xf]
  %v92 = vld [vmem:[%s1 + $0xc4] sm:$0xf]
  %v93 = vld [vmem:[%s1 + $0xc8] sm:$0xf]
  %v94 = vld [vmem:[%s1 + $0xcc] sm:$0xf]
  %v95 = vld [vmem:[%s1 + $0xd0] sm:$0xf]
  %v96 = vld [vmem:[%s1 + $0xd4] sm:$0xf]
  %v97 = vld [vmem:[%s1 + $0xd8] sm:$0xf]
  %v98 = vld [vmem:[%s1 + $0xdc] sm:$0xf]
  %v99 = vld [vmem:[%s1 + $0xe0] sm:$0xf]
  %v100 = vld [vmem:[%s1 + $0xe4] sm:$0xf]
  %v101 = vld [vmem:[%s1 + $0xe8] sm:$0xf]
  %v102 = vld [vmem:[%s1 + $0xec] sm:$0xf]
  %v103 = vld [vmem:[%s1 + $0xf0] sm:$0xf]
  %v104 = vld [vmem:[%s1 + $0xf4] sm:$0xf]
  %v105 = vld [vmem:[%s1 + $0xf8] sm:$0xf]
  %v106 = vld [vmem:[%s1 + $0xfc] sm:$0xf]
  %v107 = vld [vmem:[%s1 + $0x100] sm:$0xf]
  %v108 = vld [vmem:[%s1 + $0x104] sm:$0xf]
  %v109 = vld [vmem:[%s1 + $0x108] sm:$0xf]
  %v110 = vld [vmem:[%s1 + $0x10c] sm:$0xf]
  %v111 = vld [vmem:[%s1 + $0x110] sm:$0xf]
  %v112 = vld [vmem:[%s1 + $0x114] sm:$0xf]
  %v113 = vld [vmem:[%s1 + $0x118] sm:$0xf]
  %v114 = vld [vmem:[%s1 + $0x11c] sm:$0xf]
  %v127 = vunpack.c.l.b16 %v31
  %v128 = vunpack.c.h.b16 %v31
  %v129 = vunpack.c.l.b16 %v32
  %v130 = vunpack.c.h.b16 %v32
  %v131 = vunpack.c.l.b16 %v33
  %v132 = vunpack.c.l.b16 %v34
  %v133 = vunpack.c.h.b16 %v34
  %v134 = vunpack.c.l.b16 %v35
  %v135 = vunpack.c.h.b16 %v35
  %v136 = vunpack.c.l.b16 %v36
  %v137 = vunpack.c.l.b16 %v37
  %v138 = vunpack.c.h.b16 %v37
  %v139 = vunpack.c.l.b16 %v38
  %v140 = vunpack.c.h.b16 %v38
  %v141 = vunpack.c.l.b16 %v39
  %v142 = vunpack.c.l.b16 %v40
  %v143 = vunpack.c.h.b16 %v40
  %v144 = vunpack.c.l.b16 %v41
  %v145 = vunpack.c.h.b16 %v41
  %v146 = vunpack.c.l.b16 %v42
  %v147 = vpack.c.b16 %v132, %v127
  %v148 = vpack.c.b16 %v133, %v128
  %v149 = vpack.c.b16 %v134, %v129
  %v150 = vpack.c.b16 %v135, %v130
  %v151 = vpack.c.b16 %v136, %v131
  %v152 = vpack.c.b16 %v142, %v137
  %v153 = vpack.c.b16 %v143, %v138
  %v154 = vpack.c.b16 %v144, %v139
  %v155 = vpack.c.b16 %v145, %v140
  %v156 = vpack.c.b16 %v146, %v141
  %v237 = vunpack.c.l.b16 %v43
  %v238 = vunpack.c.l.b16 %v44
  %v239 = vunpack.c.l.b16 %v45
  %v240 = vunpack.c.l.b16 %v46
  %v241 = vunpack.c.l.b16 %v47
  %v242 = vunpack.c.l.b16 %v48
  %v243 = vunpack.c.l.b16 %v49
  %v244 = vunpack.c.l.b16 %v50
  %v245 = vunpack.c.l.b16 %v51
  %v246 = vunpack.c.l.b16 %v52
  %v247 = vunpack.c.l.b16 %v53
  %v248 = vunpack.c.l.b16 %v54
  %v249 = vunpack.c.l.b16 %v55
  %v250 = vunpack.c.l.b16 %v56
  %v251 = vunpack.c.l.b16 %v57
  %v252 = vunpack.c.l.b16 %v58
  %v253 = vunpack.c.l.b16 %v59
  %v254 = vunpack.c.l.b16 %v60
  %v255 = vunpack.c.l.b16 %v61
  %v256 = vunpack.c.l.b16 %v62
  %v257 = vunpack.c.l.b16 %v63
  %v258 = vunpack.c.l.b16 %v64
  %v259 = vunpack.c.l.b16 %v65
  %v260 = vunpack.c.l.b16 %v66
  %v261 = vunpack.c.l.b16 %v67
  %v262 = vunpack.c.l.b16 %v68
  %v263 = vunpack.c.l.b16 %v69
  %v264 = vunpack.c.l.b16 %v70
  %v265 = vunpack.c.l.b16 %v71
  %v266 = vunpack.c.l.b16 %v72
  %v267 = vunpack.c.l.b16 %v73
  %v268 = vunpack.c.l.b16 %v74
  %v269 = vunpack.c.l.b16 %v75
  %v270 = vunpack.c.l.b16 %v76
  %v271 = vunpack.c.l.b16 %v77
  %v272 = vunpack.c.l.b16 %v78
  %v273 = vunpack.c.l.b16 %v79
  %v274 = vunpack.c.l.b16 %v80
  %v275 = vunpack.c.l.b16 %v81
  %v276 = vunpack.c.l.b16 %v82
  %v277 = vunpack.c.l.b16 %v83
  %v278 = vunpack.c.l.b16 %v84
  %v279 = vunpack.c.l.b16 %v85
  %v280 = vunpack.c.l.b16 %v86
  %v281 = vunpack.c.l.b16 %v87
  %v282 = vunpack.c.l.b16 %v88
  %v283 = vunpack.c.l.b16 %v89
  %v284 = vunpack.c.l.b16 %v90
  %v285 = vunpack.c.l.b16 %v91
  %v286 = vunpack.c.l.b16 %v92
  %v287 = vunpack.c.l.b16 %v93
  %v288 = vunpack.c.l.b16 %v94
  %v289 = vunpack.c.l.b16 %v95
  %v290 = vunpack.c.l.b16 %v96
  %v291 = vunpack.c.l.b16 %v97
  %v292 = vunpack.c.l.b16 %v98
  %v293 = vunpack.c.l.b16 %v99
  %v294 = vunpack.c.l.b16 %v100
  %v295 = vunpack.c.l.b16 %v101
  %v296 = vunpack.c.l.b16 %v102
  %v297 = vunpack.c.l.b16 %v103
  %v298 = vunpack.c.l.b16 %v104
  %v299 = vunpack.c.l.b16 %v105
  %v300 = vunpack.c.l.b16 %v106
  %v301 = vunpack.c.l.b16 %v107
  %v302 = vunpack.c.l.b16 %v108
  %v303 = vunpack.c.l.b16 %v109
  %v304 = vunpack.c.l.b16 %v110
  %v305 = vunpack.c.l.b16 %v111
  %v306 = vunpack.c.l.b16 %v112
  %v307 = vunpack.c.l.b16 %v113
  %v308 = vunpack.c.l.b16 %v114
  %v309 = vpack.c.b16 %v238, %v237
  %v310 = vpack.c.b16 %v240, %v239
  %v311 = vpack.c.b16 %v242, %v241
  %v312 = vpack.c.b16 %v244, %v243
  %v313 = vpack.c.b16 %v246, %v245
  %v314 = vpack.c.b16 %v248, %v247
  %v315 = vpack.c.b16 %v250, %v249
  %v316 = vpack.c.b16 %v252, %v251
  %v317 = vpack.c.b16 %v254, %v253
  %v318 = vpack.c.b16 %v256, %v255
  %v319 = vpack.c.b16 %v258, %v257
  %v320 = vpack.c.b16 %v260, %v259
  %v321 = vpack.c.b16 %v262, %v261
  %v322 = vpack.c.b16 %v264, %v263
  %v323 = vpack.c.b16 %v266, %v265
  %v324 = vpack.c.b16 %v268, %v267
  %v325 = vpack.c.b16 %v270, %v269
  %v326 = vpack.c.b16 %v272, %v271
  %v327 = vpack.c.b16 %v274, %v273
  %v328 = vpack.c.b16 %v276, %v275
  %v329 = vpack.c.b16 %v278, %v277
  %v330 = vpack.c.b16 %v280, %v279
  %v331 = vpack.c.b16 %v282, %v281
  %v332 = vpack.c.b16 %v284, %v283
  %v333 = vpack.c.b16 %v286, %v285
  %v334 = vpack.c.b16 %v288, %v287
  %v335 = vpack.c.b16 %v290, %v289
  %v336 = vpack.c.b16 %v292, %v291
  %v337 = vpack.c.b16 %v294, %v293
  %v338 = vpack.c.b16 %v296, %v295
  %v339 = vpack.c.b16 %v298, %v297
  %v340 = vpack.c.b16 %v300, %v299
  %v341 = vpack.c.b16 %v302, %v301
  %v342 = vpack.c.b16 %v304, %v303
  %v343 = vpack.c.b16 %v306, %v305
  %v344 = vpack.c.b16 %v308, %v307
  %vm381 = vcmask 523264
  %v383 = vsel %vm381, %v151, 0
  %v386 = vsel %vm381, %v156, 0
  %388 = vmatprep.subr.bf16.mxu0 0
  %389 = vmatpush1.bf16.msra.mxu0 %v309
  %390 = vmatprep.subr.bf16.mxu0 0
  %391 = vmatpush1.bf16.msra.mxu0 %v310
  %392 = vmatprep.subr.bf16.mxu0 0
  %393 = vmatpush1.bf16.msra.mxu0 %v311
  %394 = vmatprep.subr.bf16.mxu0 0
  %395 = vmatpush1.bf16.msra.mxu0 %v312
  %396 = vmatprep.subr.bf16.mxu0 0
  %397 = vmatpush1.bf16.msra.mxu0 %v313
  %398 = vmatprep.subr.bf16.mxu0 0
  %399 = vmatpush1.bf16.msra.mxu0 %v314
  %400 = vmatprep.subr.bf16.mxu0 0
  %401 = vmatpush1.bf16.msra.mxu0 %v315
  %402 = vmatprep.subr.bf16.mxu0 0
  %403 = vmatpush1.bf16.msra.mxu0 %v316
  %404 = vmatprep.subr.bf16.mxu0 0
  %405 = vmatpush1.bf16.msra.mxu0 %v317
  %406 = vmatprep.subr.bf16.mxu0 0
  %407 = vmatpush1.bf16.msra.mxu0 %v318
  %408 = vmatprep.subr.bf16.mxu0 0
  %409 = vmatpush1.bf16.msra.mxu0 %v319
  %410 = vmatprep.subr.bf16.mxu0 0
  %411 = vmatpush1.bf16.msra.mxu0 %v320
  %412 = vmatprep.subr.bf16.mxu0 0
  %413 = vmatpush1.bf16.msra.mxu0 %v321
  %414 = vmatprep.subr.bf16.mxu0 0
  %415 = vmatpush1.bf16.msra.mxu0 %v322
  %416 = vmatprep.subr.bf16.mxu0 0
  %417 = vmatpush1.bf16.msra.mxu0 %v323
  %418 = vmatprep.subr.bf16.mxu0 0
  %419 = vmatpush1.bf16.msra.mxu0 %v324
  %420 = vmatprep.mubr.bf16.mxu0 %v148
  %421 = vmatmul.mubr.bf16.gmra.mrb[0].mxu0 %v147
  %v422 = vpop.f32.mrb[0].mxu0
  %v423 = vadd.f32 0.0, %v422
  %v424 = vpop.f32.mrb[0].mxu0
  %v425 = vpop.f32.mrb[0].mxu0
  %v426 = vadd.f32 0.0, %v425
  %v427 = vpop.f32.mrb[0].mxu0
  %428 = vmatprep.mubr.bf16.mxu0 %v153
  %429 = vmatmul.mubr.bf16.gmra.mrb[0].mxu0 %v152
  %v430 = vpop.f32.mrb[0].mxu0
  %v431 = vadd.f32 0.0, %v430
  %v432 = vpop.f32.mrb[0].mxu0
  %v433 = vpop.f32.mrb[0].mxu0
  %v434 = vadd.f32 0.0, %v433
  %v435 = vpop.f32.mrb[0].mxu0
  %436 = vdwg.mxu0
  %437 = vmatprep.subr.bf16.mxu0 0
  %438 = vmatpush1.bf16.msra.mxu0 %v325
  %439 = vmatprep.subr.bf16.mxu0 0
  %440 = vmatpush1.bf16.msra.mxu0 %v326
  %441 = vmatprep.subr.bf16.mxu0 0
  %442 = vmatpush1.bf16.msra.mxu0 %v327
  %443 = vmatprep.subr.bf16.mxu0 0
  %444 = vmatpush1.bf16.msra.mxu0 %v328
  %445 = vmatprep.subr.bf16.mxu0 0
  %446 = vmatpush1.bf16.msra.mxu0 %v329
  %447 = vmatprep.subr.bf16.mxu0 0
  %448 = vmatpush1.bf16.msra.mxu0 %v330
  %449 = vmatprep.subr.bf16.mxu0 0
  %450 = vmatpush1.bf16.msra.mxu0 %v331
  %451 = vmatprep.subr.bf16.mxu0 0
  %452 = vmatpush1.bf16.msra.mxu0 %v332
  %453 = vmatprep.subr.bf16.mxu0 0
  %454 = vmatpush1.bf16.msra.mxu0 %v333
  %455 = vmatprep.subr.bf16.mxu0 0
  %456 = vmatpush1.bf16.msra.mxu0 %v334
  %457 = vmatprep.subr.bf16.mxu0 0
  %458 = vmatpush1.bf16.msra.mxu0 %v335
  %459 = vmatprep.subr.bf16.mxu0 0
  %460 = vmatpush1.bf16.msra.mxu0 %v336
  %461 = vmatprep.subr.bf16.mxu0 0
  %462 = vmatpush1.bf16.msra.mxu0 %v337
  %463 = vmatprep.subr.bf16.mxu0 0
  %464 = vmatpush1.bf16.msra.mxu0 %v338
  %465 = vmatprep.subr.bf16.mxu0 0
  %466 = vmatpush1.bf16.msra.mxu0 %v339
  %467 = vmatprep.subr.bf16.mxu0 0
  %468 = vmatpush1.bf16.msra.mxu0 %v340
  %469 = vmatprep.mubr.bf16.mxu0 %v150
  %470 = vmatmul.mubr.bf16.gmra.mrb[0].mxu0 %v149
  %v471 = vpop.f32.mrb[0].mxu0
  %v472 = vadd.f32 %v423, %v471
  %v473 = vpop.f32.mrb[0].mxu0
  %v474 = vpop.f32.mrb[0].mxu0
  %v475 = vadd.f32 %v426, %v474
  %v476 = vpop.f32.mrb[0].mxu0
  %477 = vmatprep.mubr.bf16.mxu0 %v155
  %478 = vmatmul.mubr.bf16.gmra.mrb[0].mxu0 %v154
  %v479 = vpop.f32.mrb[0].mxu0
  %v480 = vadd.f32 %v431, %v479
  %v481 = vpop.f32.mrb[0].mxu0
  %v482 = vpop.f32.mrb[0].mxu0
  %v483 = vadd.f32 %v434, %v482
  %v484 = vpop.f32.mrb[0].mxu0
  %485 = vdwg.mxu0
  %486 = vmatprep.subr.bf16.mxu0 0
  %487 = vmatpush1.bf16.msra.mxu0 %v341
  %488 = vmatprep.subr.bf16.mxu0 0
  %489 = vmatpush1.bf16.msra.mxu0 %v342
  %490 = vmatprep.subr.bf16.mxu0 0
  %491 = vmatpush1.bf16.msra.mxu0 %v343
  %492 = vmatprep.subr.bf16.mxu0 0
  %493 = vmatpush1.bf16.msra.mxu0 %v344
  %494 = vmatprep.subr.bf16.mxu0 0
  %495 = vmatpush1.bf16.msra.mxu0 0
  %496 = vmatprep.subr.bf16.mxu0 0
  %497 = vmatpush1.bf16.msra.mxu0 0
  %498 = vmatprep.subr.bf16.mxu0 0
  %499 = vmatpush1.bf16.msra.mxu0 0
  %500 = vmatprep.subr.bf16.mxu0 0
  %501 = vmatpush1.bf16.msra.mxu0 0
  %502 = vmatprep.subr.bf16.mxu0 0
  %503 = vmatpush1.bf16.msra.mxu0 0
  %504 = vmatprep.subr.bf16.mxu0 0
  %505 = vmatpush1.bf16.msra.mxu0 0
  %506 = vmatprep.subr.bf16.mxu0 0
  %507 = vmatpush1.bf16.msra.mxu0 0
  %508 = vmatprep.subr.bf16.mxu0 0
  %509 = vmatpush1.bf16.msra.mxu0 0
  %510 = vmatprep.subr.bf16.mxu0 0
  %511 = vmatpush1.bf16.msra.mxu0 0
  %512 = vmatprep.subr.bf16.mxu0 0
  %513 = vmatpush1.bf16.msra.mxu0 0
  %514 = vmatprep.subr.bf16.mxu0 0
  %515 = vmatpush1.bf16.msra.mxu0 0
  %516 = vmatprep.subr.bf16.mxu0 0
  %517 = vmatpush1.bf16.msra.mxu0 0
  %518 = vmatprep.mubr.bf16.mxu0 0
  %519 = vmatmul.mubr.bf16.gmra.mrb[0].mxu0 %v383
  %v520 = vpop.f32.mrb[0].mxu0
  %v521 = vadd.f32 %v472, %v520
  %v522 = vpop.f32.mrb[0].mxu0
  %v523 = vpop.f32.mrb[0].mxu0
  %v524 = vadd.f32 %v475, %v523
  %v525 = vpop.f32.mrb[0].mxu0
  %526 = vmatprep.mubr.bf16.mxu0 0
  %527 = vmatmul.mubr.bf16.gmra.mrb[0].mxu0 %v386
  %v528 = vpop.f32.mrb[0].mxu0
  %v529 = vadd.f32 %v480, %v528
  %v530 = vpop.f32.mrb[0].mxu0
  %v531 = vpop.f32.mrb[0].mxu0
  %v532 = vadd.f32 %v483, %v531
  %v533 = vpop.f32.mrb[0].mxu0
  %534 = vdwg.mxu0
  %v535 = vadd.f32 %v27, %v521
  %v536 = vadd.f32 %v28, %v524
  %v537 = vadd.f32 %v29, %v529
  %v538 = vadd.f32 %v30, %v532
  %539 = vst.msk [vmem:[#allocation2] sm:$0xff] %vm381, %v535
  %540 = vst.msk [vmem:[#allocation2 + $0x8] sm:$0xff] %vm381, %v536
  %541 = vst.msk [vmem:[#allocation2 + $0x10] sm:$0xff] %vm381, %v537
  %542 = vst.msk [vmem:[#allocation2 + $0x18] sm:$0xff] %vm381, %v538
  // Predicated region
  $region22: #{_lambda_.24} parent=0 // pred_check
    %p543 = pneg %p18
  $region23: #{_lambda_.24} parent=0 // pred_check_branch
    %545 = sbr.rel (%p543) target = $region25
  $region24: #{_lambda_.24} parent=0 // pred_region
    %v546 = vld [vmem:[#allocation2] sm:$0xff]
    %v547 = vld [vmem:[#allocation2 + $0x8] sm:$0xff]
    %v548 = vld [vmem:[#allocation2 + $0x10] sm:$0xff]
    %v549 = vld [vmem:[#allocation2 + $0x18] sm:$0xff]
    %v550 = vld [vmem:[%s2] sm:$0x1]
    %v552 = vlaneseq
    %v553 = vshrl.u32 %v552, 7
    %v554 = vsub.s32 0, %v553
    %v555 = vrot.slane %v550, %v554
    %v557 = vadd.f32 %v546, %v555
    %v558 = vadd.f32 %v547, %v555
    %v559 = vadd.f32 %v548, %v555
    %v560 = vadd.f32 %v549, %v555
    %v561 = vld [vmem:[%s3] sm:$0xff]
    %v562 = vld [vmem:[%s3 + $0x8] sm:$0xff]
    %v563 = vld [vmem:[%s3 + $0x10] sm:$0xff]
    %v564 = vld [vmem:[%s3 + $0x18] sm:$0xff]
    %v565 = vadd.f32 %v557, %v561
    %v566 = vadd.f32 %v558, %v562
    %v567 = vadd.f32 %v559, %v563
    %v568 = vadd.f32 %v560, %v564
    %v569 = vmax.f32 %v565, 0.0
    %v570 = vmax.f32 %v566, 0.0
    %v571 = vmax.f32 %v567, 0.0
    %v572 = vmax.f32 %v568, 0.0
    %573 = vst.msk [vmem:[%s4] sm:$0xff] %vm381, %v569
    %574 = vst.msk [vmem:[%s4 + $0x8] sm:$0xff] %vm381, %v570
    %575 = vst.msk [vmem:[%s4 + $0x10] sm:$0xff] %vm381, %v571
    %576 = vst.msk [vmem:[%s4 + $0x18] sm:$0xff] %vm381, %v572
  $region25: #{_lambda_.24} parent=0 // pred_fallthru
    _
  // Predicated region
  $region26: #{_lambda_.24} parent=0 // pred_check
    _
  $region27: #{_lambda_.24} parent=0 // pred_check_branch
    %578 = sbr.rel (0) target = $region29
  $region28: #{_lambda_.24} parent=0 // pred_region
    _
  $region29: #{_lambda_.24} parent=0 // pred_fallthru
    _
  // Predicated region
  $region30: #{_lambda_.24} parent=0 // pred_check
    _
  $region31: #{_lambda_.24} parent=0 // pred_check_branch
    %580 = sbr.rel (0) target = $region33
  $region32: #{_lambda_.24} parent=0 // pred_region
    _
  $region33: #{_lambda_.24} parent=0 // pred_fallthru
    _

// kernel: _lambda_.28
$region0: #{_lambda_.28}
  #allocation0 [shape = 'u32[]', space=smem, size = 0x4, offset = 0x4, fixed_abs, tag = 'smem constant byte address 0x4 - core index']
  #allocation1 [shape = 'u32[144,128]{1,0:T(1,128)}', space=vmem, size = 0x12000, scoped, tag = 'internal scratch']
  #allocation2 [shape = 'f32[8,128]{1,0:T(8,128)}', space=vmem, size = 0x1000, scoped, tag = 'scratch operand']
  %s0 = inlined_call_operand.vmem [shape: bf16[1,8,576], index: 0, kind: input, shape index: {}]
  %s1 = inlined_call_operand.vmem [shape: bf16[1,576,128], index: 1, kind: input, shape index: {}]
  %s2 = inlined_call_operand.vmem [shape: f32[1,128], index: 2, kind: input, shape index: {}]
  %s3 = inlined_call_operand.vmem [shape: f32[8,128], index: 3, kind: output, shape index: {}]
  %s4 = sld [smem:[#allocation0]]
  $region30: #{_lambda_.28} parent=0
    _
  %s6 = ssub.s32 1, %s4
  %s7 = scalar_select 0, %s6, %s4
  // Predicated region
  $region2: #{_lambda_.28} parent=0 // pred_check
    _
  $region3: #{_lambda_.28} parent=0 // pred_check_branch
    %9 = sbr.rel (0) target = $region5
  $region4: #{_lambda_.28} parent=0 // pred_region
    _
  $region5: #{_lambda_.28} parent=0 // pred_fallthru
    _
  // Predicated region
  $region6: #{_lambda_.28} parent=0 // pred_check
    _
  $region7: #{_lambda_.28} parent=0 // pred_check_branch
    %11 = sbr.rel (0) target = $region9
  $region8: #{_lambda_.28} parent=0 // pred_region
    _
  $region9: #{_lambda_.28} parent=0 // pred_fallthru
    _
  // Predicated region
  $region10: #{_lambda_.28} parent=0 // pred_check
    _
  $region11: #{_lambda_.28} parent=0 // pred_check_branch
    %13 = sbr.rel (0) target = $region13
  $region12: #{_lambda_.28} parent=0 // pred_region
    _
  $region13: #{_lambda_.28} parent=0 // pred_fallthru
    _
  %p15 = scmp.eq.s32.totalorder 0, 0
  // Predicated region
  $region14: #{_lambda_.28} parent=0 // pred_check
    %p16 = pneg %p15
  $region15: #{_lambda_.28} parent=0 // pred_check_branch
    %18 = sbr.rel (%p16) target = $region17
  $region16: #{_lambda_.28} parent=0 // pred_region
    %19 = vst [vmem:[#allocation2] sm:$0xff] 0.0
  $region17: #{_lambda_.28} parent=0 // pred_fallthru
    _
  %v20 = vld [vmem:[#allocation2] sm:$0xff]
  %v21 = vld [vmem:[%s0] sm:$0xff]
  %v22 = vld [vmem:[%s0 + $0x8] sm:$0xff]
  %v23 = vld [vmem:[%s0 + $0x10] sm:$0xf]
  %v24 = vld [vmem:[%s1] sm:$0xf]
  %v25 = vld [vmem:[%s1 + $0x4] sm:$0xf]
  %v26 = vld [vmem:[%s1 + $0x8] sm:$0xf]
  %v27 = vld [vmem:[%s1 + $0xc] sm:$0xf]
  %v28 = vld [vmem:[%s1 + $0x10] sm:$0xf]
  %v29 = vld [vmem:[%s1 + $0x14] sm:$0xf]
  %v30 = vld [vmem:[%s1 + $0x18] sm:$0xf]
  %v31 = vld [vmem:[%s1 + $0x1c] sm:$0xf]
  %v32 = vld [vmem:[%s1 + $0x20] sm:$0xf]
  %v33 = vld [vmem:[%s1 + $0x24] sm:$0xf]
  %v34 = vld [vmem:[%s1 + $0x28] sm:$0xf]
  %v35 = vld [vmem:[%s1 + $0x2c] sm:$0xf]
  %v36 = vld [vmem:[%s1 + $0x30] sm:$0xf]
  %v37 = vld [vmem:[%s1 + $0x34] sm:$0xf]
  %v38 = vld [vmem:[%s1 + $0x38] sm:$0xf]
  %v39 = vld [vmem:[%s1 + $0x3c] sm:$0xf]
  %v40 = vld [vmem:[%s1 + $0x40] sm:$0xf]
  %v41 = vld [vmem:[%s1 + $0x44] sm:$0xf]
  %v42 = vld [vmem:[%s1 + $0x48] sm:$0xf]
  %v43 = vld [vmem:[%s1 + $0x4c] sm:$0xf]
  %v44 = vld [vmem:[%s1 + $0x50] sm:$0xf]
  %v45 = vld [vmem:[%s1 + $0x54] sm:$0xf]
  %v46 = vld [vmem:[%s1 + $0x58] sm:$0xf]
  %v47 = vld [vmem:[%s1 + $0x5c] sm:$0xf]
  %v48 = vld [vmem:[%s1 + $0x60] sm:$0xf]
  %v49 = vld [vmem:[%s1 + $0x64] sm:$0xf]
  %v50 = vld [vmem:[%s1 + $0x68] sm:$0xf]
  %v51 = vld [vmem:[%s1 + $0x6c] sm:$0xf]
  %v52 = vld [vmem:[%s1 + $0x70] sm:$0xf]
  %v53 = vld [vmem:[%s1 + $0x74] sm:$0xf]
  %v54 = vld [vmem:[%s1 + $0x78] sm:$0xf]
  %v55 = vld [vmem:[%s1 + $0x7c] sm:$0xf]
  %v56 = vld [vmem:[%s1 + $0x80] sm:$0xf]
  %v57 = vld [vmem:[%s1 + $0x84] sm:$0xf]
  %v58 = vld [vmem:[%s1 + $0x88] sm:$0xf]
  %v59 = vld [vmem:[%s1 + $0x8c] sm:$0xf]
  %v60 = vld [vmem:[%s1 + $0x90] sm:$0xf]
  %v61 = vld [vmem:[%s1 + $0x94] sm:$0xf]
  %v62 = vld [vmem:[%s1 + $0x98] sm:$0xf]
  %v63 = vld [vmem:[%s1 + $0x9c] sm:$0xf]
  %v64 = vld [vmem:[%s1 + $0xa0] sm:$0xf]
  %v65 = vld [vmem:[%s1 + $0xa4] sm:$0xf]
  %v66 = vld [vmem:[%s1 + $0xa8] sm:$0xf]
  %v67 = vld [vmem:[%s1 + $0xac] sm:$0xf]
  %v68 = vld [vmem:[%s1 + $0xb0] sm:$0xf]
  %v69 = vld [vmem:[%s1 + $0xb4] sm:$0xf]
  %v70 = vld [vmem:[%s1 + $0xb8] sm:$0xf]
  %v71 = vld [vmem:[%s1 + $0xbc] sm:$0xf]
  %v72 = vld [vmem:[%s1 + $0xc0] sm:$0xf]
  %v73 = vld [vmem:[%s1 + $0xc4] sm:$0xf]
  %v74 = vld [vmem:[%s1 + $0xc8] sm:$0xf]
  %v75 = vld [vmem:[%s1 + $0xcc] sm:$0xf]
  %v76 = vld [vmem:[%s1 + $0xd0] sm:$0xf]
  %v77 = vld [vmem:[%s1 + $0xd4] sm:$0xf]
  %v78 = vld [vmem:[%s1 + $0xd8] sm:$0xf]
  %v79 = vld [vmem:[%s1 + $0xdc] sm:$0xf]
  %v80 = vld [vmem:[%s1 + $0xe0] sm:$0xf]
  %v81 = vld [vmem:[%s1 + $0xe4] sm:$0xf]
  %v82 = vld [vmem:[%s1 + $0xe8] sm:$0xf]
  %v83 = vld [vmem:[%s1 + $0xec] sm:$0xf]
  %v84 = vld [vmem:[%s1 + $0xf0] sm:$0xf]
  %v85 = vld [vmem:[%s1 + $0xf4] sm:$0xf]
  %v86 = vld [vmem:[%s1 + $0xf8] sm:$0xf]
  %v87 = vld [vmem:[%s1 + $0xfc] sm:$0xf]
  %v88 = vld [vmem:[%s1 + $0x100] sm:$0xf]
  %v89 = vld [vmem:[%s1 + $0x104] sm:$0xf]
  %v90 = vld [vmem:[%s1 + $0x108] sm:$0xf]
  %v91 = vld [vmem:[%s1 + $0x10c] sm:$0xf]
  %v92 = vld [vmem:[%s1 + $0x110] sm:$0xf]
  %v93 = vld [vmem:[%s1 + $0x114] sm:$0xf]
  %v94 = vld [vmem:[%s1 + $0x118] sm:$0xf]
  %v95 = vld [vmem:[%s1 + $0x11c] sm:$0xf]
  %v99 = vunpack.c.l.b16 %v21
  %v100 = vunpack.c.h.b16 %v21
  %v101 = vunpack.c.l.b16 %v22
  %v102 = vunpack.c.h.b16 %v22
  %v103 = vunpack.c.l.b16 %v23
  %v104 = vpack.c.b16 %v99, %v99
  %v105 = vpack.c.b16 %v100, %v100
  %v106 = vpack.c.b16 %v101, %v101
  %v107 = vpack.c.b16 %v102, %v102
  %v108 = vpack.c.b16 %v103, %v103
  %v185 = vunpack.c.l.b16 %v24
  %v186 = vunpack.c.l.b16 %v25
  %v187 = vunpack.c.l.b16 %v26
  %v188 = vunpack.c.l.b16 %v27
  %v189 = vunpack.c.l.b16 %v28
  %v190 = vunpack.c.l.b16 %v29
  %v191 = vunpack.c.l.b16 %v30
  %v192 = vunpack.c.l.b16 %v31
  %v193 = vunpack.c.l.b16 %v32
  %v194 = vunpack.c.l.b16 %v33
  %v195 = vunpack.c.l.b16 %v34
  %v196 = vunpack.c.l.b16 %v35
  %v197 = vunpack.c.l.b16 %v36
  %v198 = vunpack.c.l.b16 %v37
  %v199 = vunpack.c.l.b16 %v38
  %v200 = vunpack.c.l.b16 %v39
  %v201 = vunpack.c.l.b16 %v40
  %v202 = vunpack.c.l.b16 %v41
  %v203 = vunpack.c.l.b16 %v42
  %v204 = vunpack.c.l.b16 %v43
  %v205 = vunpack.c.l.b16 %v44
  %v206 = vunpack.c.l.b16 %v45
  %v207 = vunpack.c.l.b16 %v46
  %v208 = vunpack.c.l.b16 %v47
  %v209 = vunpack.c.l.b16 %v48
  %v210 = vunpack.c.l.b16 %v49
  %v211 = vunpack.c.l.b16 %v50
  %v212 = vunpack.c.l.b16 %v51
  %v213 = vunpack.c.l.b16 %v52
  %v214 = vunpack.c.l.b16 %v53
  %v215 = vunpack.c.l.b16 %v54
  %v216 = vunpack.c.l.b16 %v55
  %v217 = vunpack.c.l.b16 %v56
  %v218 = vunpack.c.l.b16 %v57
  %v219 = vunpack.c.l.b16 %v58
  %v220 = vunpack.c.l.b16 %v59
  %v221 = vunpack.c.l.b16 %v60
  %v222 = vunpack.c.l.b16 %v61
  %v223 = vunpack.c.l.b16 %v62
  %v224 = vunpack.c.l.b16 %v63
  %v225 = vunpack.c.l.b16 %v64
  %v226 = vunpack.c.l.b16 %v65
  %v227 = vunpack.c.l.b16 %v66
  %v228 = vunpack.c.l.b16 %v67
  %v229 = vunpack.c.l.b16 %v68
  %v230 = vunpack.c.l.b16 %v69
  %v231 = vunpack.c.l.b16 %v70
  %v232 = vunpack.c.l.b16 %v71
  %v233 = vunpack.c.l.b16 %v72
  %v234 = vunpack.c.l.b16 %v73
  %v235 = vunpack.c.l.b16 %v74
  %v236 = vunpack.c.l.b16 %v75
  %v237 = vunpack.c.l.b16 %v76
  %v238 = vunpack.c.l.b16 %v77
  %v239 = vunpack.c.l.b16 %v78
  %v240 = vunpack.c.l.b16 %v79
  %v241 = vunpack.c.l.b16 %v80
  %v242 = vunpack.c.l.b16 %v81
  %v243 = vunpack.c.l.b16 %v82
  %v244 = vunpack.c.l.b16 %v83
  %v245 = vunpack.c.l.b16 %v84
  %v246 = vunpack.c.l.b16 %v85
  %v247 = vunpack.c.l.b16 %v86
  %v248 = vunpack.c.l.b16 %v87
  %v249 = vunpack.c.l.b16 %v88
  %v250 = vunpack.c.l.b16 %v89
  %v251 = vunpack.c.l.b16 %v90
  %v252 = vunpack.c.l.b16 %v91
  %v253 = vunpack.c.l.b16 %v92
  %v254 = vunpack.c.l.b16 %v93
  %v255 = vunpack.c.l.b16 %v94
  %v256 = vunpack.c.l.b16 %v95
  %v257 = vpack.c.b16 %v186, %v185
  %v258 = vpack.c.b16 %v188, %v187
  %v259 = vpack.c.b16 %v190, %v189
  %v260 = vpack.c.b16 %v192, %v191
  %v261 = vpack.c.b16 %v194, %v193
  %v262 = vpack.c.b16 %v196, %v195
  %v263 = vpack.c.b16 %v198, %v197
  %v264 = vpack.c.b16 %v200, %v199
  %v265 = vpack.c.b16 %v202, %v201
  %v266 = vpack.c.b16 %v204, %v203
  %v267 = vpack.c.b16 %v206, %v205
  %v268 = vpack.c.b16 %v208, %v207
  %v269 = vpack.c.b16 %v210, %v209
  %v270 = vpack.c.b16 %v212, %v211
  %v271 = vpack.c.b16 %v214, %v213
  %v272 = vpack.c.b16 %v216, %v215
  %v273 = vpack.c.b16 %v218, %v217
  %v274 = vpack.c.b16 %v220, %v219
  %v275 = vpack.c.b16 %v222, %v221
  %v276 = vpack.c.b16 %v224, %v223
  %v277 = vpack.c.b16 %v226, %v225
  %v278 = vpack.c.b16 %v228, %v227
  %v279 = vpack.c.b16 %v230, %v229
  %v280 = vpack.c.b16 %v232, %v231
  %v281 = vpack.c.b16 %v234, %v233
  %v282 = vpack.c.b16 %v236, %v235
  %v283 = vpack.c.b16 %v238, %v237
  %v284 = vpack.c.b16 %v240, %v239
  %v285 = vpack.c.b16 %v242, %v241
  %v286 = vpack.c.b16 %v244, %v243
  %v287 = vpack.c.b16 %v246, %v245
  %v288 = vpack.c.b16 %v248, %v247
  %v289 = vpack.c.b16 %v250, %v249
  %v290 = vpack.c.b16 %v252, %v251
  %v291 = vpack.c.b16 %v254, %v253
  %v292 = vpack.c.b16 %v256, %v255
  %vm329 = vcmask 523264
  %v331 = vsel %vm329, %v108, 0
  %333 = vmatprep.subr.bf16.mxu0 0
  %334 = vmatpush1.bf16.msra.mxu0 %v257
  %335 = vmatprep.subr.bf16.mxu0 0
  %336 = vmatpush1.bf16.msra.mxu0 %v258
  %337 = vmatprep.subr.bf16.mxu0 0
  %338 = vmatpush1.bf16.msra.mxu0 %v259
  %339 = vmatprep.subr.bf16.mxu0 0
  %340 = vmatpush1.bf16.msra.mxu0 %v260
  %341 = vmatprep.subr.bf16.mxu0 0
  %342 = vmatpush1.bf16.msra.mxu0 %v261
  %343 = vmatprep.subr.bf16.mxu0 0
  %344 = vmatpush1.bf16.msra.mxu0 %v262
  %345 = vmatprep.subr.bf16.mxu0 0
  %346 = vmatpush1.bf16.msra.mxu0 %v263
  %347 = vmatprep.subr.bf16.mxu0 0
  %348 = vmatpush1.bf16.msra.mxu0 %v264
  %349 = vmatprep.subr.bf16.mxu0 0
  %350 = vmatpush1.bf16.msra.mxu0 %v265
  %351 = vmatprep.subr.bf16.mxu0 0
  %352 = vmatpush1.bf16.msra.mxu0 %v266
  %353 = vmatprep.subr.bf16.mxu0 0
  %354 = vmatpush1.bf16.msra.mxu0 %v267
  %355 = vmatprep.subr.bf16.mxu0 0
  %356 = vmatpush1.bf16.msra.mxu0 %v268
  %357 = vmatprep.subr.bf16.mxu0 0
  %358 = vmatpush1.bf16.msra.mxu0 %v269
  %359 = vmatprep.subr.bf16.mxu0 0
  %360 = vmatpush1.bf16.msra.mxu0 %v270
  %361 = vmatprep.subr.bf16.mxu0 0
  %362 = vmatpush1.bf16.msra.mxu0 %v271
  %363 = vmatprep.subr.bf16.mxu0 0
  %364 = vmatpush1.bf16.msra.mxu0 %v272
  %365 = vmatprep.mubr.bf16.mxu0 %v105
  %366 = vmatmul.mubr.bf16.gmra.mrb[0].mxu0 %v104
  %v367 = vpop.f32.mrb[0].mxu0
  %v368 = vadd.f32 0.0, %v367
  %v369 = vpop.f32.mrb[0].mxu0
  %v370 = vpop.f32.mrb[0].mxu0
  %v371 = vpop.f32.mrb[0].mxu0
  %372 = vdwg.mxu0
  %373 = vmatprep.subr.bf16.mxu0 0
  %374 = vmatpush1.bf16.msra.mxu0 %v273
  %375 = vmatprep.subr.bf16.mxu0 0
  %376 = vmatpush1.bf16.msra.mxu0 %v274
  %377 = vmatprep.subr.bf16.mxu0 0
  %378 = vmatpush1.bf16.msra.mxu0 %v275
  %379 = vmatprep.subr.bf16.mxu0 0
  %380 = vmatpush1.bf16.msra.mxu0 %v276
  %381 = vmatprep.subr.bf16.mxu0 0
  %382 = vmatpush1.bf16.msra.mxu0 %v277
  %383 = vmatprep.subr.bf16.mxu0 0
  %384 = vmatpush1.bf16.msra.mxu0 %v278
  %385 = vmatprep.subr.bf16.mxu0 0
  %386 = vmatpush1.bf16.msra.mxu0 %v279
  %387 = vmatprep.subr.bf16.mxu0 0
  %388 = vmatpush1.bf16.msra.mxu0 %v280
  %389 = vmatprep.subr.bf16.mxu0 0
  %390 = vmatpush1.bf16.msra.mxu0 %v281
  %391 = vmatprep.subr.bf16.mxu0 0
  %392 = vmatpush1.bf16.msra.mxu0 %v282
  %393 = vmatprep.subr.bf16.mxu0 0
  %394 = vmatpush1.bf16.msra.mxu0 %v283
  %395 = vmatprep.subr.bf16.mxu0 0
  %396 = vmatpush1.bf16.msra.mxu0 %v284
  %397 = vmatprep.subr.bf16.mxu0 0
  %398 = vmatpush1.bf16.msra.mxu0 %v285
  %399 = vmatprep.subr.bf16.mxu0 0
  %400 = vmatpush1.bf16.msra.mxu0 %v286
  %401 = vmatprep.subr.bf16.mxu0 0
  %402 = vmatpush1.bf16.msra.mxu0 %v287
  %403 = vmatprep.subr.bf16.mxu0 0
  %404 = vmatpush1.bf16.msra.mxu0 %v288
  %405 = vmatprep.mubr.bf16.mxu0 %v107
  %406 = vmatmul.mubr.bf16.gmra.mrb[0].mxu0 %v106
  %v407 = vpop.f32.mrb[0].mxu0
  %v408 = vadd.f32 %v368, %v407
  %v409 = vpop.f32.mrb[0].mxu0
  %v410 = vpop.f32.mrb[0].mxu0
  %v411 = vpop.f32.mrb[0].mxu0
  %412 = vdwg.mxu0
  %413 = vmatprep.subr.bf16.mxu0 0
  %414 = vmatpush1.bf16.msra.mxu0 %v289
  %415 = vmatprep.subr.bf16.mxu0 0
  %416 = vmatpush1.bf16.msra.mxu0 %v290
  %417 = vmatprep.subr.bf16.mxu0 0
  %418 = vmatpush1.bf16.msra.mxu0 %v291
  %419 = vmatprep.subr.bf16.mxu0 0
  %420 = vmatpush1.bf16.msra.mxu0 %v292
  %421 = vmatprep.subr.bf16.mxu0 0
  %422 = vmatpush1.bf16.msra.mxu0 0
  %423 = vmatprep.subr.bf16.mxu0 0
  %424 = vmatpush1.bf16.msra.mxu0 0
  %425 = vmatprep.subr.bf16.mxu0 0
  %426 = vmatpush1.bf16.msra.mxu0 0
  %427 = vmatprep.subr.bf16.mxu0 0
  %428 = vmatpush1.bf16.msra.mxu0 0
  %429 = vmatprep.subr.bf16.mxu0 0
  %430 = vmatpush1.bf16.msra.mxu0 0
  %431 = vmatprep.subr.bf16.mxu0 0
  %432 = vmatpush1.bf16.msra.mxu0 0
  %433 = vmatprep.subr.bf16.mxu0 0
  %434 = vmatpush1.bf16.msra.mxu0 0
  %435 = vmatprep.subr.bf16.mxu0 0
  %436 = vmatpush1.bf16.msra.mxu0 0
  %437 = vmatprep.subr.bf16.mxu0 0
  %438 = vmatpush1.bf16.msra.mxu0 0
  %439 = vmatprep.subr.bf16.mxu0 0
  %440 = vmatpush1.bf16.msra.mxu0 0
  %441 = vmatprep.subr.bf16.mxu0 0
  %442 = vmatpush1.bf16.msra.mxu0 0
  %443 = vmatprep.subr.bf16.mxu0 0
  %444 = vmatpush1.bf16.msra.mxu0 0
  %445 = vmatprep.mubr.bf16.mxu0 0
  %446 = vmatmul.mubr.bf16.gmra.mrb[0].mxu0 %v331
  %v447 = vpop.f32.mrb[0].mxu0
  %v448 = vadd.f32 %v408, %v447
  %v449 = vpop.f32.mrb[0].mxu0
  %v450 = vpop.f32.mrb[0].mxu0
  %v451 = vpop.f32.mrb[0].mxu0
  %452 = vdwg.mxu0
  %v453 = vadd.f32 %v20, %v448
  %454 = vst [vmem:[#allocation2] sm:$0xff] %v453
  // Predicated region
  $region18: #{_lambda_.28} parent=0 // pred_check
    %p455 = pneg %p15
  $region19: #{_lambda_.28} parent=0 // pred_check_branch
    %457 = sbr.rel (%p455) target = $region21
  $region20: #{_lambda_.28} parent=0 // pred_region
    %v458 = vld [vmem:[#allocation2] sm:$0xff]
    %v459 = vld [vmem:[%s2] sm:$0x1]
    %v461 = vlaneseq
    %v462 = vshrl.u32 %v461, 7
    %v463 = vsub.s32 0, %v462
    %v464 = vrot.slane %v459, %v463
    %v466 = vadd.f32 %v458, %v464
    %v467 = vmax.f32 %v466, 0.0
    %468 = vst [vmem:[%s3] sm:$0xff] %v467
  $region21: #{_lambda_.28} parent=0 // pred_fallthru
    _
  // Predicated region
  $region22: #{_lambda_.28} parent=0 // pred_check
    _
  $region23: #{_lambda_.28} parent=0 // pred_check_branch
    %470 = sbr.rel (0) target = $region25
  $region24: #{_lambda_.28} parent=0 // pred_region
    _
  $region25: #{_lambda_.28} parent=0 // pred_fallthru
    _
  // Predicated region
  $region26: #{_lambda_.28} parent=0 // pred_check
    _
  $region27: #{_lambda_.28} parent=0 // pred_check_branch
    %472 = sbr.rel (0) target = $region29
  $region28: #{_lambda_.28} parent=0 // pred_region
    _
  $region29: #{_lambda_.28} parent=0 // pred_fallthru
    _

// kernel: _lambda_.27
$region0: #{_lambda_.27}
  #allocation0 [shape = 'u32[]', space=smem, size = 0x4, offset = 0x4, fixed_abs, tag = 'smem constant byte address 0x4 - core index']
  #allocation1 [shape = 'u32[144,128]{1,0:T(1,128)}', space=vmem, size = 0x12000, scoped, tag = 'internal scratch']
  #allocation2 [shape = 'f32[8,128]{1,0:T(8,128)}', space=vmem, size = 0x1000, scoped, tag = 'scratch operand']
  %s0 = inlined_call_operand.vmem [shape: bf16[1,8,64], index: 0, kind: input, shape index: {}]
  %s1 = inlined_call_operand.vmem [shape: bf16[1,64,128], index: 1, kind: input, shape index: {}]
  %s2 = inlined_call_operand.vmem [shape: f32[1,128], index: 2, kind: input, shape index: {}]
  %s3 = inlined_call_operand.vmem [shape: f32[8,128], index: 3, kind: output, shape index: {}]
  %s4 = sld [smem:[#allocation0]]
  $region30: #{_lambda_.27} parent=0
    _
  %s6 = ssub.s32 1, %s4
  %s7 = scalar_select 0, %s6, %s4
  // Predicated region
  $region2: #{_lambda_.27} parent=0 // pred_check
    _
  $region3: #{_lambda_.27} parent=0 // pred_check_branch
    %9 = sbr.rel (0) target = $region5
  $region4: #{_lambda_.27} parent=0 // pred_region
    _
  $region5: #{_lambda_.27} parent=0 // pred_fallthru
    _
  // Predicated region
  $region6: #{_lambda_.27} parent=0 // pred_check
    _
  $region7: #{_lambda_.27} parent=0 // pred_check_branch
    %11 = sbr.rel (0) target = $region9
  $region8: #{_lambda_.27} parent=0 // pred_region
    _
  $region9: #{_lambda_.27} parent=0 // pred_fallthru
    _
  // Predicated region
  $region10: #{_lambda_.27} parent=0 // pred_check
    _
  $region11: #{_lambda_.27} parent=0 // pred_check_branch
    %13 = sbr.rel (0) target = $region13
  $region12: #{_lambda_.27} parent=0 // pred_region
    _
  $region13: #{_lambda_.27} parent=0 // pred_fallthru
    _
  %p15 = scmp.eq.s32.totalorder 0, 0
  // Predicated region
  $region14: #{_lambda_.27} parent=0 // pred_check
    %p16 = pneg %p15
  $region15: #{_lambda_.27} parent=0 // pred_check_branch
    %18 = sbr.rel (%p16) target = $region17
  $region16: #{_lambda_.27} parent=0 // pred_region
    %19 = vst [vmem:[#allocation2] sm:$0xff] 0.0
  $region17: #{_lambda_.27} parent=0 // pred_fallthru
    _
  %v20 = vld [vmem:[#allocation2] sm:$0xff]
  %v21 = vld [vmem:[%s0] sm:$0xf]
  %v22 = vld [vmem:[%s1] sm:$0xf]
  %v23 = vld [vmem:[%s1 + $0x4] sm:$0xf]
  %v24 = vld [vmem:[%s1 + $0x8] sm:$0xf]
  %v25 = vld [vmem:[%s1 + $0xc] sm:$0xf]
  %v26 = vld [vmem:[%s1 + $0x10] sm:$0xf]
  %v27 = vld [vmem:[%s1 + $0x14] sm:$0xf]
  %v28 = vld [vmem:[%s1 + $0x18] sm:$0xf]
  %v29 = vld [vmem:[%s1 + $0x1c] sm:$0xf]
  %v38 = vunpack.c.l.b16 %v22
  %v39 = vunpack.c.l.b16 %v23
  %v40 = vunpack.c.l.b16 %v24
  %v41 = vunpack.c.l.b16 %v25
  %v42 = vunpack.c.l.b16 %v26
  %v43 = vunpack.c.l.b16 %v27
  %v44 = vunpack.c.l.b16 %v28
  %v45 = vunpack.c.l.b16 %v29
  %v46 = vpack.c.b16 %v39, %v38
  %v47 = vpack.c.b16 %v41, %v40
  %v48 = vpack.c.b16 %v43, %v42
  %v49 = vpack.c.b16 %v45, %v44
  %vm54 = vcmask 523264
  %v56 = vsel %vm54, %v21, 0
  %58 = vmatprep.subr.bf16.mxu0 0
  %59 = vmatpush1.bf16.msra.mxu0 %v46
  %60 = vmatprep.subr.bf16.mxu0 0
  %61 = vmatpush1.bf16.msra.mxu0 %v47
  %62 = vmatprep.subr.bf16.mxu0 0
  %63 = vmatpush1.bf16.msra.mxu0 %v48
  %64 = vmatprep.subr.bf16.mxu0 0
  %65 = vmatpush1.bf16.msra.mxu0 %v49
  %66 = vmatprep.subr.bf16.mxu0 0
  %67 = vmatpush1.bf16.msra.mxu0 0
  %68 = vmatprep.subr.bf16.mxu0 0
  %69 = vmatpush1.bf16.msra.mxu0 0
  %70 = vmatprep.subr.bf16.mxu0 0
  %71 = vmatpush1.bf16.msra.mxu0 0
  %72 = vmatprep.subr.bf16.mxu0 0
  %73 = vmatpush1.bf16.msra.mxu0 0
  %74 = vmatprep.subr.bf16.mxu0 0
  %75 = vmatpush1.bf16.msra.mxu0 0
  %76 = vmatprep.subr.bf16.mxu0 0
  %77 = vmatpush1.bf16.msra.mxu0 0
  %78 = vmatprep.subr.bf16.mxu0 0
  %79 = vmatpush1.bf16.msra.mxu0 0
  %80 = vmatprep.subr.bf16.mxu0 0
  %81 = vmatpush1.bf16.msra.mxu0 0
  %82 = vmatprep.subr.bf16.mxu0 0
  %83 = vmatpush1.bf16.msra.mxu0 0
  %84 = vmatprep.subr.bf16.mxu0 0
  %85 = vmatpush1.bf16.msra.mxu0 0
  %86 = vmatprep.subr.bf16.mxu0 0
  %87 = vmatpush1.bf16.msra.mxu0 0
  %88 = vmatprep.subr.bf16.mxu0 0
  %89 = vmatpush1.bf16.msra.mxu0 0
  %90 = vmatprep.mubr.bf16.mxu0 0
  %91 = vmatmul.mubr.bf16.gmra.mrb[0].mxu0 %v56
  %v92 = vpop.f32.mrb[0].mxu0
  %v93 = vadd.f32 0.0, %v92
  %v94 = vpop.f32.mrb[0].mxu0
  %v95 = vpop.f32.mrb[0].mxu0
  %v96 = vpop.f32.mrb[0].mxu0
  %97 = vdwg.mxu0
  %v98 = vadd.f32 %v20, %v93
  %99 = vst [vmem:[#allocation2] sm:$0xff] %v98
  // Predicated region
  $region18: #{_lambda_.27} parent=0 // pred_check
    %p100 = pneg %p15
  $region19: #{_lambda_.27} parent=0 // pred_check_branch
    %102 = sbr.rel (%p100) target = $region21
  $region20: #{_lambda_.27} parent=0 // pred_region
    %v103 = vld [vmem:[#allocation2] sm:$0xff]
    %v104 = vld [vmem:[%s2] sm:$0x1]
    %v106 = vlaneseq
    %v107 = vshrl.u32 %v106, 7
    %v108 = vsub.s32 0, %v107
    %v109 = vrot.slane %v104, %v108
    %v111 = vadd.f32 %v103, %v109
    %112 = vst [vmem:[%s3] sm:$0xff] %v111
  $region21: #{_lambda_.27} parent=0 // pred_fallthru
    _
  // Predicated region
  $region22: #{_lambda_.27} parent=0 // pred_check
    _
  $region23: #{_lambda_.27} parent=0 // pred_check_branch
    %114 = sbr.rel (0) target = $region25
  $region24: #{_lambda_.27} parent=0 // pred_region
    _
  $region25: #{_lambda_.27} parent=0 // pred_fallthru
    _
  // Predicated region
  $region26: #{_lambda_.27} parent=0 // pred_check
    _
  $region27: #{_lambda_.27} parent=0 // pred_check_branch
    %116 = sbr.rel (0) target = $region29
  $region28: #{_lambda_.27} parent=0 // pred_region
    _
  $region29: #{_lambda_.27} parent=0 // pred_fallthru
    _

// kernel: _lambda_.29
$region0: #{_lambda_.29}
  #allocation0 [shape = 'u32[]', space=smem, size = 0x4, offset = 0x4, fixed_abs, tag = 'smem constant byte address 0x4 - core index']
  #allocation1 [shape = 'u32[144,128]{1,0:T(1,128)}', space=vmem, size = 0x12000, scoped, tag = 'internal scratch']
  #allocation2 [shape = 'f32[8,128]{1,0:T(8,128)}', space=vmem, size = 0x1000, scoped, tag = 'scratch operand']
  %s0 = inlined_call_operand.vmem [shape: bf16[9,8,128], index: 0, kind: input, shape index: {}]
  %s1 = inlined_call_operand.vmem [shape: bf16[9,128,128], index: 1, kind: input, shape index: {}]
  %s2 = inlined_call_operand.vmem [shape: f32[1,128], index: 2, kind: input, shape index: {}]
  %s3 = inlined_call_operand.vmem [shape: f32[8,128], index: 3, kind: input, shape index: {}]
  %s4 = inlined_call_operand.vmem [shape: f32[8,128], index: 4, kind: output, shape index: {}]
  %s5 = sld [smem:[#allocation0]]
  $region57: #{_lambda_.29} parent=0
    _
  %s7 = ssub.s32 1, %s5
  %s8 = scalar_select 0, %s7, %s5
  loop: start=0, step=1, limit=11
  $region2: #{_lambda_.29} parent=0 // loop_pre_header
    _
  $region3: #{_lambda_.29} parent=0 // loop_header
    %s10 = sphi 0, %s14
    %p11 = scmp.ge.s32.totalorder %s10, 11
    %s17 = sphi 0, %s36
    %s18 = sphi 0, %s32
    %s19 = sphi 0, %s28
    %s20 = sphi 0, %s17
    %s21 = sphi 0, %s18
    %s22 = sphi 0, %s19
    %s23 = sphi 0, %s20
    %s24 = sphi 0, %s21
    %s25 = sphi 0, %s22
    %s41 = sphi 0, %s43
    %s44 = sphi 0, %s41
    %s45 = sphi 0, %s44
    %s61 = sphi 0, %s45
    %s69 = sphi 0, %s71
    %s72 = sphi 0, %s69
    %s73 = sphi 0, %s72
    %s89 = sphi 0, %s73
    %s95 = sphi 0, %s97
    %s98 = sphi 0, %s95
    %s99 = sphi 0, %s98
    %s115 = sphi 0, %s99
    %s123 = sphi 0, %s125
    %s126 = sphi 0, %s123
    %s127 = sphi 0, %s126
    %s143 = sphi 0, %s127
    %s151 = sphi 0, %s153
    %s154 = sphi 0, %s151
    %s155 = sphi 0, %s154
    %s171 = sphi 0, %s155
  $region4: #{_lambda_.29} parent=0 // loop_header_branch
    %13 = sbr.rel (%p11) target = $region8
  $region5: #{_lambda_.29} parent=0 // loop_body
    %s15 = ssub.s32 %s10, 1
    %s16 = ssub.s32 %s10, 2
    %s26 = sadd.s32 1, %s19
    %p27 = scmp.ge.s32.totalorder %s26, 9
    %s28 = scalar_select %p27, 0, %s26
    %s29 = sadd.s32 1, %s18
    %s30 = scalar_select %p27, %s29, %s18
    %p31 = scmp.ge.s32.totalorder %s30, 1
    %s32 = scalar_select %p31, 0, %s30
    %s33 = sadd.s32 1, %s17
    %s34 = scalar_select %p31, %s33, %s17
    %p35 = scmp.ge.s32.totalorder %s34, 1
    %s36 = scalar_select %p35, 0, %s34
    %s37 = ssub.s32 %s19, %s28
    %s38 = ssub.s32 %s17, %s36
    %s39 = sor.u32 %s37, %s38
    %p40 = scmp.eq.s32.totalorder %s39, 0
    %s42 = sadd.s32 %s41, 1
    %s43 = scalar_select %p40, %s41, %s42
    %p46 = pneg %p40
    %p47 = scmp.eq.s32.totalorder %s10, 8
    %p48 = por %p46, %p47
    %p49 = scmp.ne.s32.totalorder %s41, %s44
    %p50 = scmp.eq.s32.totalorder %s10, 0
    %p51 = por %p49, %p50
    %p52 = scmp.ne.s32.totalorder %s41, %s44
    %p53 = scmp.eq.s32.totalorder %s15, 8
    %p54 = por %p52, %p53
    %p55 = scmp.ne.s32.totalorder %s44, %s45
    %p56 = scmp.eq.s32.totalorder %s15, 0
    %p57 = por %p55, %p56
    %p58 = scmp.ne.s32.totalorder %s44, %s45
    %p59 = scmp.eq.s32.totalorder %s16, 8
    %p60 = por %p58, %p59
    %p62 = scmp.ne.s32.totalorder %s45, %s61
    %p63 = scmp.eq.s32.totalorder %s16, 0
    %p64 = por %p62, %p63
    %s65 = ssub.s32 %s19, %s28
    %s66 = ssub.s32 %s18, %s32
    %s67 = sor.u32 %s65, %s66
    %p68 = scmp.eq.s32.totalorder %s67, 0
    %s70 = sadd.s32 %s69, 1
    %s71 = scalar_select %p68, %s69, %s70
    %p74 = pneg %p68
    %p75 = scmp.eq.s32.totalorder %s10, 8
    %p76 = por %p74, %p75
    %p77 = scmp.ne.s32.totalorder %s69, %s72
    %p78 = scmp.eq.s32.totalorder %s10, 0
    %p79 = por %p77, %p78
    %p80 = scmp.ne.s32.totalorder %s69, %s72
    %p81 = scmp.eq.s32.totalorder %s15, 8
    %p82 = por %p80, %p81
    %p83 = scmp.ne.s32.totalorder %s72, %s73
    %p84 = scmp.eq.s32.totalorder %s15, 0
    %p85 = por %p83, %p84
    %p86 = scmp.ne.s32.totalorder %s72, %s73
    %p87 = scmp.eq.s32.totalorder %s16, 8
    %p88 = por %p86, %p87
    %p90 = scmp.ne.s32.totalorder %s73, %s89
    %p91 = scmp.eq.s32.totalorder %s16, 0
    %p92 = por %p90, %p91
    %s93 = ssub.s32 %s18, %s32
    %p94 = scmp.eq.s32.totalorder %s93, 0
    %s96 = sadd.s32 %s95, 1
    %s97 = scalar_select %p94, %s95, %s96
    %p100 = pneg %p94
    %p101 = scmp.eq.s32.totalorder %s10, 8
    %p102 = por %p100, %p101
    %p103 = scmp.ne.s32.totalorder %s95, %s98
    %p104 = scmp.eq.s32.totalorder %s10, 0
    %p105 = por %p103, %p104
    %p106 = scmp.ne.s32.totalorder %s95, %s98
    %p107 = scmp.eq.s32.totalorder %s15, 8
    %p108 = por %p106, %p107
    %p109 = scmp.ne.s32.totalorder %s98, %s99
    %p110 = scmp.eq.s32.totalorder %s15, 0
    %p111 = por %p109, %p110
    %p112 = scmp.ne.s32.totalorder %s98, %s99
    %p113 = scmp.eq.s32.totalorder %s16, 8
    %p114 = por %p112, %p113
    %p116 = scmp.ne.s32.totalorder %s99, %s115
    %p117 = scmp.eq.s32.totalorder %s16, 0
    %p118 = por %p116, %p117
    %s119 = ssub.s32 %s17, %s36
    %s120 = ssub.s32 %s18, %s32
    %s121 = sor.u32 %s119, %s120
    %p122 = scmp.eq.s32.totalorder %s121, 0
    %s124 = sadd.s32 %s123, 1
    %s125 = scalar_select %p122, %s123, %s124
    %p128 = pneg %p122
    %p129 = scmp.eq.s32.totalorder %s10, 8
    %p130 = por %p128, %p129
    %p131 = scmp.ne.s32.totalorder %s123, %s126
    %p132 = scmp.eq.s32.totalorder %s10, 0
    %p133 = por %p131, %p132
    %p134 = scmp.ne.s32.totalorder %s123, %s126
    %p135 = scmp.eq.s32.totalorder %s15, 8
    %p136 = por %p134, %p135
    %p137 = scmp.ne.s32.totalorder %s126, %s127
    %p138 = scmp.eq.s32.totalorder %s15, 0
    %p139 = por %p137, %p138
    %p140 = scmp.ne.s32.totalorder %s126, %s127
    %p141 = scmp.eq.s32.totalorder %s16, 8
    %p142 = por %p140, %p141
    %p144 = scmp.ne.s32.totalorder %s127, %s143
    %p145 = scmp.eq.s32.totalorder %s16, 0
    %p146 = por %p144, %p145
    %s147 = ssub.s32 %s17, %s36
    %s148 = ssub.s32 %s18, %s32
    %s149 = sor.u32 %s147, %s148
    %p150 = scmp.eq.s32.totalorder %s149, 0
    %s152 = sadd.s32 %s151, 1
    %s153 = scalar_select %p150, %s151, %s152
    %p156 = pneg %p150
    %p157 = scmp.eq.s32.totalorder %s10, 8
    %p158 = por %p156, %p157
    %p159 = scmp.ne.s32.totalorder %s151, %s154
    %p160 = scmp.eq.s32.totalorder %s10, 0
    %p161 = por %p159, %p160
    %p162 = scmp.ne.s32.totalorder %s151, %s154
    %p163 = scmp.eq.s32.totalorder %s15, 8
    %p164 = por %p162, %p163
    %p165 = scmp.ne.s32.totalorder %s154, %s155
    %p166 = scmp.eq.s32.totalorder %s15, 0
    %p167 = por %p165, %p166
    %p168 = scmp.ne.s32.totalorder %s154, %s155
    %p169 = scmp.eq.s32.totalorder %s16, 8
    %p170 = por %p168, %p169
    %p172 = scmp.ne.s32.totalorder %s155, %s171
    %p173 = scmp.eq.s32.totalorder %s16, 0
    %p174 = por %p172, %p173
    %p175 = scmp.le.s32.totalorder 1, %s10
    %p176 = scmp.lt.s32.totalorder %s10, 10
    %p177 = pnand %p175, %p176
    %p178 = pneg %p177
    // Predicated region
    $region9: #{_lambda_.29} parent=5 // pred_check
      _
    $region10: #{_lambda_.29} parent=5 // pred_check_branch
      %180 = sbr.rel (%p177) target = $region12
    $region11: #{_lambda_.29} parent=5 // pred_region
      %s181 = ssub.s32 %s10, 1
      // Predicated region
      $region13: #{_lambda_.29} parent=11 // pred_check
        %p182 = pneg %p111
      $region14: #{_lambda_.29} parent=11 // pred_check_branch
        %184 = sbr.rel (%p182) target = $region16
      $region15: #{_lambda_.29} parent=11 // pred_region
        %p185 = scmp.lt.s32.totalorder %s21, 0
        %s186 = scalar_select %p185, %s21, 0
        %s187 = scalar_lea.vmem %s2, %s186
      $region16: #{_lambda_.29} parent=11 // pred_fallthru
        _
      // Predicated region
      $region17: #{_lambda_.29} parent=11 // pred_check
        %p188 = pneg %p139
      $region18: #{_lambda_.29} parent=11 // pred_check_branch
        %190 = sbr.rel (%p188) target = $region20
      $region19: #{_lambda_.29} parent=11 // pred_region
        %p191 = scmp.lt.s32.totalorder %s20, 0
        %s192 = scalar_select %p191, %s20, 0
        %p193 = scmp.lt.s32.totalorder %s21, 0
        %s194 = scalar_select %p193, %s21, 0
        %s195 = sadd.s32 %s194, %s192
        %s196 = smul.addr %s195, 8
        %s197 = scalar_lea.vmem %s3, %s196
      $region20: #{_lambda_.29} parent=11 // pred_fallthru
        _
    $region12: #{_lambda_.29} parent=5 // pred_fallthru
      _
    %p198 = scmp.lt.s32.totalorder %s10, 9
    // Predicated region
    $region21: #{_lambda_.29} parent=5 // pred_check
      %p199 = pneg %p198
    $region22: #{_lambda_.29} parent=5 // pred_check_branch
      %201 = sbr.rel (%p199) target = $region24
    $region23: #{_lambda_.29} parent=5 // pred_region
      // Predicated region
      $region25: #{_lambda_.29} parent=23 // pred_check
        %p202 = pneg %p51
      $region26: #{_lambda_.29} parent=23 // pred_check_branch
        %204 = sbr.rel (%p202) target = $region28
      $region27: #{_lambda_.29} parent=23 // pred_region
        %p205 = scmp.lt.s32.totalorder %s19, 8
        %s206 = scalar_select %p205, %s19, 8
        %p207 = scmp.lt.s32.totalorder %s17, 0
        %s208 = scalar_select %p207, %s17, 0
        %s209 = sadd.s32 %s208, %s206
        %s210 = smul.addr %s209, 4
        %s211 = scalar_lea.vmem %s0, %s210
      $region28: #{_lambda_.29} parent=23 // pred_fallthru
        _
      // Predicated region
      $region29: #{_lambda_.29} parent=23 // pred_check
        %p212 = pneg %p79
      $region30: #{_lambda_.29} parent=23 // pred_check_branch
        %214 = sbr.rel (%p212) target = $region32
      $region31: #{_lambda_.29} parent=23 // pred_region
        %p215 = scmp.lt.s32.totalorder %s19, 8
        %s216 = scalar_select %p215, %s19, 8
        %p217 = scmp.lt.s32.totalorder %s18, 0
        %s218 = scalar_select %p217, %s18, 0
        %s219 = smul.addr %s216, 16
        %s220 = sadd.s32 %s218, %s219
        %s221 = smul.addr %s220, 4
        %s222 = scalar_lea.vmem %s1, %s221
      $region32: #{_lambda_.29} parent=23 // pred_fallthru
        _
    $region24: #{_lambda_.29} parent=5 // pred_fallthru
      _
    %p223 = scmp.le.s32.totalorder 1, %s10
    %p224 = scmp.lt.s32.totalorder %s10, 10
    %p225 = pnand %p223, %p224
    %p226 = pneg %p225
    // Predicated region
    $region33: #{_lambda_.29} parent=5 // pred_check
      _
    $region34: #{_lambda_.29} parent=5 // pred_check_branch
      %228 = sbr.rel (%p225) target = $region36
    $region35: #{_lambda_.29} parent=5 // pred_region
      %s229 = ssub.s32 %s10, 1
      %p230 = scmp.lt.s32.totalorder %s22, 8
      %s231 = scalar_select %p230, %s22, 8
      %p232 = scmp.lt.s32.totalorder %s20, 0
      %s233 = scalar_select %p232, %s20, 0
      %s234 = sadd.s32 %s233, %s231
      %s235 = smul.addr %s234, 4
      %s236 = scalar_lea.vmem %s0, %s235
      %p237 = pneg %p57
      %p238 = pneg %p54
      %p239 = scmp.lt.s32.totalorder %s22, 8
      %s240 = scalar_select %p239, %s22, 8
      %p241 = scmp.lt.s32.totalorder %s21, 0
      %s242 = scalar_select %p241, %s21, 0
      %s243 = smul.addr %s240, 16
      %s244 = sadd.s32 %s242, %s243
      %s245 = smul.addr %s244, 4
      %s246 = scalar_lea.vmem %s1, %s245
      %p247 = pneg %p85
      %p248 = pneg %p82
      %p249 = scmp.lt.s32.totalorder %s21, 0
      %s250 = scalar_select %p249, %s21, 0
      %s251 = scalar_lea.vmem %s2, %s250
      %p252 = pneg %p111
      %p253 = pneg %p108
      %p254 = scmp.lt.s32.totalorder %s20, 0
      %s255 = scalar_select %p254, %s20, 0
      %p256 = scmp.lt.s32.totalorder %s21, 0
      %s257 = scalar_select %p256, %s21, 0
      %s258 = sadd.s32 %s257, %s255
      %s259 = smul.addr %s258, 8
      %s260 = scalar_lea.vmem %s3, %s259
      %p261 = pneg %p139
      %p262 = pneg %p136
      %p263 = pneg %p167
      %p264 = pneg %p164
      %p265 = scmp.lt.s32.totalorder %s20, 0
      %s266 = scalar_select %p265, %s20, 0
      %p267 = scmp.lt.s32.totalorder %s21, 0
      %s268 = scalar_select %p267, %s21, 0
      %s269 = sadd.s32 %s268, %s266
      %s270 = smul.addr %s269, 8
      %s271 = scalar_lea.vmem %s4, %s270
      %p272 = scmp.lt.s32.totalorder %s22, 8
      %s273 = scalar_select %p272, %s22, 8
      %p274 = scmp.lt.s32.totalorder %s20, 0
      %s275 = scalar_select %p274, %s20, 0
      %s276 = sadd.s32 %s275, %s273
      %s277 = smul.addr %s276, 4
      %s278 = scalar_lea.vmem %s0, %s277
      %p279 = scmp.lt.s32.totalorder %s22, 8
      %s280 = scalar_select %p279, %s22, 8
      %p281 = scmp.lt.s32.totalorder %s21, 0
      %s282 = scalar_select %p281, %s21, 0
      %s283 = smul.addr %s280, 16
      %s284 = sadd.s32 %s282, %s283
      %s285 = smul.addr %s284, 4
      %s286 = scalar_lea.vmem %s1, %s285
      %p287 = scmp.lt.s32.totalorder %s21, 0
      %s288 = scalar_select %p287, %s21, 0
      %s289 = scalar_lea.vmem %s2, %s288
      %p290 = scmp.lt.s32.totalorder %s20, 0
      %s291 = scalar_select %p290, %s20, 0
      %p292 = scmp.lt.s32.totalorder %s21, 0
      %s293 = scalar_select %p292, %s21, 0
      %s294 = sadd.s32 %s293, %s291
      %s295 = smul.addr %s294, 8
      %s296 = scalar_lea.vmem %s3, %s295
      %p297 = scmp.lt.s32.totalorder %s20, 0
      %s298 = scalar_select %p297, %s20, 0
      %p299 = scmp.lt.s32.totalorder %s21, 0
      %s300 = scalar_select %p299, %s21, 0
      %s301 = sadd.s32 %s300, %s298
      %s302 = smul.addr %s301, 8
      %s303 = scalar_lea.vmem %s4, %s302
      %p305 = scmp.eq.s32.totalorder %s22, 0
      // Predicated region
      $region37: #{_lambda_.29} parent=35 // pred_check
        %p306 = pneg %p305
      $region38: #{_lambda_.29} parent=35 // pred_check_branch
        %308 = sbr.rel (%p306) target = $region40
      $region39: #{_lambda_.29} parent=35 // pred_region
        %309 = vst [vmem:[#allocation2] sm:$0xff] 0.0
      $region40: #{_lambda_.29} parent=35 // pred_fallthru
        _
      %v310 = vld [vmem:[#allocation2] sm:$0xff]
      %v311 = vld [vmem:[%s278] sm:$0xf]
      %v312 = vld [vmem:[%s286] sm:$0xf]
      %v313 = vld [vmem:[%s286 + $0x4] sm:$0xf]
      %v314 = vld [vmem:[%s286 + $0x8] sm:$0xf]
      %v315 = vld [vmem:[%s286 + $0xc] sm:$0xf]
      %v316 = vld [vmem:[%s286 + $0x10] sm:$0xf]
      %v317 = vld [vmem:[%s286 + $0x14] sm:$0xf]
      %v318 = vld [vmem:[%s286 + $0x18] sm:$0xf]
      %v319 = vld [vmem:[%s286 + $0x1c] sm:$0xf]
      %v320 = vld [vmem:[%s286 + $0x20] sm:$0xf]
      %v321 = vld [vmem:[%s286 + $0x24] sm:$0xf]
      %v322 = vld [vmem:[%s286 + $0x28] sm:$0xf]
      %v323 = vld [vmem:[%s286 + $0x2c] sm:$0xf]
      %v324 = vld [vmem:[%s286 + $0x30] sm:$0xf]
      %v325 = vld [vmem:[%s286 + $0x34] sm:$0xf]
      %v326 = vld [vmem:[%s286 + $0x38] sm:$0xf]
      %v327 = vld [vmem:[%s286 + $0x3c] sm:$0xf]
      %v344 = vunpack.c.l.b16 %v312
      %v345 = vunpack.c.l.b16 %v313
      %v346 = vunpack.c.l.b16 %v314
      %v347 = vunpack.c.l.b16 %v315
      %v348 = vunpack.c.l.b16 %v316
      %v349 = vunpack.c.l.b16 %v317
      %v350 = vunpack.c.l.b16 %v318
      %v351 = vunpack.c.l.b16 %v319
      %v352 = vunpack.c.l.b16 %v320
      %v353 = vunpack.c.l.b16 %v321
      %v354 = vunpack.c.l.b16 %v322
      %v355 = vunpack.c.l.b16 %v323
      %v356 = vunpack.c.l.b16 %v324
      %v357 = vunpack.c.l.b16 %v325
      %v358 = vunpack.c.l.b16 %v326
      %v359 = vunpack.c.l.b16 %v327
      %v360 = vpack.c.b16 %v345, %v344
      %v361 = vpack.c.b16 %v347, %v346
      %v362 = vpack.c.b16 %v349, %v348
      %v363 = vpack.c.b16 %v351, %v350
      %v364 = vpack.c.b16 %v353, %v352
      %v365 = vpack.c.b16 %v355, %v354
      %v366 = vpack.c.b16 %v357, %v356
      %v367 = vpack.c.b16 %v359, %v358
      %376 = vmatprep.subr.bf16.mxu0 0
      %377 = vmatpush1.bf16.msra.mxu0 %v360
      %378 = vmatprep.subr.bf16.mxu0 0
      %379 = vmatpush1.bf16.msra.mxu0 %v361
      %380 = vmatprep.subr.bf16.mxu0 0
      %381 = vmatpush1.bf16.msra.mxu0 %v362
      %382 = vmatprep.subr.bf16.mxu0 0
      %383 = vmatpush1.bf16.msra.mxu0 %v363
      %384 = vmatprep.subr.bf16.mxu0 0
      %385 = vmatpush1.bf16.msra.mxu0 %v364
      %386 = vmatprep.subr.bf16.mxu0 0
      %387 = vmatpush1.bf16.msra.mxu0 %v365
      %388 = vmatprep.subr.bf16.mxu0 0
      %389 = vmatpush1.bf16.msra.mxu0 %v366
      %390 = vmatprep.subr.bf16.mxu0 0
      %391 = vmatpush1.bf16.msra.mxu0 %v367
      %392 = vmatprep.subr.bf16.mxu0 0
      %393 = vmatpush1.bf16.msra.mxu0 0
      %394 = vmatprep.subr.bf16.mxu0 0
      %395 = vmatpush1.bf16.msra.mxu0 0
      %396 = vmatprep.subr.bf16.mxu0 0
      %397 = vmatpush1.bf16.msra.mxu0 0
      %398 = vmatprep.subr.bf16.mxu0 0
      %399 = vmatpush1.bf16.msra.mxu0 0
      %400 = vmatprep.subr.bf16.mxu0 0
      %401 = vmatpush1.bf16.msra.mxu0 0
      %402 = vmatprep.subr.bf16.mxu0 0
      %403 = vmatpush1.bf16.msra.mxu0 0
      %404 = vmatprep.subr.bf16.mxu0 0
      %405 = vmatpush1.bf16.msra.mxu0 0
      %406 = vmatprep.subr.bf16.mxu0 0
      %407 = vmatpush1.bf16.msra.mxu0 0
      %408 = vmatprep.mubr.bf16.mxu0 0
      %409 = vmatmul.mubr.bf16.gmra.mrb[0].mxu0 %v311
      %v410 = vpop.f32.mrb[0].mxu0
      %v411 = vadd.f32 0.0, %v410
      %v412 = vpop.f32.mrb[0].mxu0
      %v413 = vpop.f32.mrb[0].mxu0
      %v414 = vpop.f32.mrb[0].mxu0
      %415 = vdwg.mxu0
      %v416 = vadd.f32 %v310, %v411
      %417 = vst [vmem:[#allocation2] sm:$0xff] %v416
      %p418 = scmp.eq.s32.totalorder %s22, 8
      // Predicated region
      $region41: #{_lambda_.29} parent=35 // pred_check
        %p419 = pneg %p418
      $region42: #{_lambda_.29} parent=35 // pred_check_branch
        %421 = sbr.rel (%p419) target = $region44
      $region43: #{_lambda_.29} parent=35 // pred_region
        %v422 = vld [vmem:[#allocation2] sm:$0xff]
        %v423 = vld [vmem:[%s289] sm:$0x1]
        %v425 = vlaneseq
        %v426 = vshrl.u32 %v425, 7
        %v427 = vsub.s32 0, %v426
        %v428 = vrot.slane %v423, %v427
        %v430 = vadd.f32 %v422, %v428
        %v431 = vld [vmem:[%s296] sm:$0xff]
        %v432 = vadd.f32 %v430, %v431
        %v433 = vmax.f32 %v432, 0.0
        %434 = vst [vmem:[%s303] sm:$0xff] %v433
      $region44: #{_lambda_.29} parent=35 // pred_fallthru
        _
      %p435 = scmp.lt.s32.totalorder %s20, 0
      %s436 = scalar_select %p435, %s20, 0
      %p437 = scmp.lt.s32.totalorder %s21, 0
      %s438 = scalar_select %p437, %s21, 0
      %s439 = sadd.s32 %s438, %s436
      %s440 = smul.addr %s439, 8
      %s441 = scalar_lea.vmem %s4, %s440
      // Predicated region
      $region45: #{_lambda_.29} parent=35 // pred_check
        %p442 = pneg %p164
      $region46: #{_lambda_.29} parent=35 // pred_check_branch
        %444 = sbr.rel (%p442) target = $region48
      $region47: #{_lambda_.29} parent=35 // pred_region
        _
      $region48: #{_lambda_.29} parent=35 // pred_fallthru
        _
      // Predicated region
      $region49: #{_lambda_.29} parent=35 // pred_check
        %p445 = pneg %p164
      $region50: #{_lambda_.29} parent=35 // pred_check_branch
        %447 = sbr.rel (%p445) target = $region52
      $region51: #{_lambda_.29} parent=35 // pred_region
        %p448 = scmp.lt.s32.totalorder %s20, 0
        %s449 = scalar_select %p448, %s20, 0
        %p450 = scmp.lt.s32.totalorder %s21, 0
        %s451 = scalar_select %p450, %s21, 0
        %s452 = sadd.s32 %s451, %s449
        %s453 = smul.addr %s452, 8
        %s454 = scalar_lea.vmem %s4, %s453
      $region52: #{_lambda_.29} parent=35 // pred_fallthru
        _
    $region36: #{_lambda_.29} parent=5 // pred_fallthru
      _
    %p455 = scmp.le.s32.totalorder 2, %s10
    // Predicated region
    $region53: #{_lambda_.29} parent=5 // pred_check
      %p456 = pneg %p455
    $region54: #{_lambda_.29} parent=5 // pred_check_branch
      %458 = sbr.rel (%p456) target = $region56
    $region55: #{_lambda_.29} parent=5 // pred_region
      %s459 = ssub.s32 %s10, 2
    $region56: #{_lambda_.29} parent=5 // pred_fallthru
      _
  $region6: #{_lambda_.29} parent=0 // loop_footer
    %s14 = sadd.s32 1, %s10
  $region7: #{_lambda_.29} parent=0 // loop_footer_branch
    %9 = sbr.rel target = $region3
  $region8: #{_lambda_.29} parent=0 // loop_exit
    _

// kernel: _lambda_.30
$region0: #{_lambda_.30}
  #allocation0 [shape = 'u32[]', space=smem, size = 0x4, offset = 0x4, fixed_abs, tag = 'smem constant byte address 0x4 - core index']
  #allocation1 [shape = 'u32[144,128]{1,0:T(1,128)}', space=vmem, size = 0x12000, scoped, tag = 'internal scratch']
  #allocation2 [shape = 'f32[8,128]{1,0:T(8,128)}', space=vmem, size = 0x1000, scoped, tag = 'scratch operand']
  %s0 = inlined_call_operand.vmem [shape: bf16[9,8,128], index: 0, kind: input, shape index: {}]
  %s1 = inlined_call_operand.vmem [shape: bf16[9,128,128], index: 1, kind: input, shape index: {}]
  %s2 = inlined_call_operand.vmem [shape: f32[1,128], index: 2, kind: input, shape index: {}]
  %s3 = inlined_call_operand.vmem [shape: f32[8,128], index: 3, kind: output, shape index: {}]
  %s4 = sld [smem:[#allocation0]]
  $region53: #{_lambda_.30} parent=0
    _
  %s6 = ssub.s32 1, %s4
  %s7 = scalar_select 0, %s6, %s4
  loop: start=0, step=1, limit=11
  $region2: #{_lambda_.30} parent=0 // loop_pre_header
    _
  $region3: #{_lambda_.30} parent=0 // loop_header
    %s9 = sphi 0, %s13
    %p10 = scmp.ge.s32.totalorder %s9, 11
    %s16 = sphi 0, %s35
    %s17 = sphi 0, %s31
    %s18 = sphi 0, %s27
    %s19 = sphi 0, %s16
    %s20 = sphi 0, %s17
    %s21 = sphi 0, %s18
    %s22 = sphi 0, %s19
    %s23 = sphi 0, %s20
    %s24 = sphi 0, %s21
    %s40 = sphi 0, %s42
    %s43 = sphi 0, %s40
    %s44 = sphi 0, %s43
    %s60 = sphi 0, %s44
    %s68 = sphi 0, %s70
    %s71 = sphi 0, %s68
    %s72 = sphi 0, %s71
    %s88 = sphi 0, %s72
    %s94 = sphi 0, %s96
    %s97 = sphi 0, %s94
    %s98 = sphi 0, %s97
    %s114 = sphi 0, %s98
    %s122 = sphi 0, %s124
    %s125 = sphi 0, %s122
    %s126 = sphi 0, %s125
    %s142 = sphi 0, %s126
  $region4: #{_lambda_.30} parent=0 // loop_header_branch
    %12 = sbr.rel (%p10) target = $region8
  $region5: #{_lambda_.30} parent=0 // loop_body
    %s14 = ssub.s32 %s9, 1
    %s15 = ssub.s32 %s9, 2
    %s25 = sadd.s32 1, %s18
    %p26 = scmp.ge.s32.totalorder %s25, 9
    %s27 = scalar_select %p26, 0, %s25
    %s28 = sadd.s32 1, %s17
    %s29 = scalar_select %p26, %s28, %s17
    %p30 = scmp.ge.s32.totalorder %s29, 1
    %s31 = scalar_select %p30, 0, %s29
    %s32 = sadd.s32 1, %s16
    %s33 = scalar_select %p30, %s32, %s16
    %p34 = scmp.ge.s32.totalorder %s33, 1
    %s35 = scalar_select %p34, 0, %s33
    %s36 = ssub.s32 %s18, %s27
    %s37 = ssub.s32 %s16, %s35
    %s38 = sor.u32 %s36, %s37
    %p39 = scmp.eq.s32.totalorder %s38, 0
    %s41 = sadd.s32 %s40, 1
    %s42 = scalar_select %p39, %s40, %s41
    %p45 = pneg %p39
    %p46 = scmp.eq.s32.totalorder %s9, 8
    %p47 = por %p45, %p46
    %p48 = scmp.ne.s32.totalorder %s40, %s43
    %p49 = scmp.eq.s32.totalorder %s9, 0
    %p50 = por %p48, %p49
    %p51 = scmp.ne.s32.totalorder %s40, %s43
    %p52 = scmp.eq.s32.totalorder %s14, 8
    %p53 = por %p51, %p52
    %p54 = scmp.ne.s32.totalorder %s43, %s44
    %p55 = scmp.eq.s32.totalorder %s14, 0
    %p56 = por %p54, %p55
    %p57 = scmp.ne.s32.totalorder %s43, %s44
    %p58 = scmp.eq.s32.totalorder %s15, 8
    %p59 = por %p57, %p58
    %p61 = scmp.ne.s32.totalorder %s44, %s60
    %p62 = scmp.eq.s32.totalorder %s15, 0
    %p63 = por %p61, %p62
    %s64 = ssub.s32 %s18, %s27
    %s65 = ssub.s32 %s17, %s31
    %s66 = sor.u32 %s64, %s65
    %p67 = scmp.eq.s32.totalorder %s66, 0
    %s69 = sadd.s32 %s68, 1
    %s70 = scalar_select %p67, %s68, %s69
    %p73 = pneg %p67
    %p74 = scmp.eq.s32.totalorder %s9, 8
    %p75 = por %p73, %p74
    %p76 = scmp.ne.s32.totalorder %s68, %s71
    %p77 = scmp.eq.s32.totalorder %s9, 0
    %p78 = por %p76, %p77
    %p79 = scmp.ne.s32.totalorder %s68, %s71
    %p80 = scmp.eq.s32.totalorder %s14, 8
    %p81 = por %p79, %p80
    %p82 = scmp.ne.s32.totalorder %s71, %s72
    %p83 = scmp.eq.s32.totalorder %s14, 0
    %p84 = por %p82, %p83
    %p85 = scmp.ne.s32.totalorder %s71, %s72
    %p86 = scmp.eq.s32.totalorder %s15, 8
    %p87 = por %p85, %p86
    %p89 = scmp.ne.s32.totalorder %s72, %s88
    %p90 = scmp.eq.s32.totalorder %s15, 0
    %p91 = por %p89, %p90
    %s92 = ssub.s32 %s17, %s31
    %p93 = scmp.eq.s32.totalorder %s92, 0
    %s95 = sadd.s32 %s94, 1
    %s96 = scalar_select %p93, %s94, %s95
    %p99 = pneg %p93
    %p100 = scmp.eq.s32.totalorder %s9, 8
    %p101 = por %p99, %p100
    %p102 = scmp.ne.s32.totalorder %s94, %s97
    %p103 = scmp.eq.s32.totalorder %s9, 0
    %p104 = por %p102, %p103
    %p105 = scmp.ne.s32.totalorder %s94, %s97
    %p106 = scmp.eq.s32.totalorder %s14, 8
    %p107 = por %p105, %p106
    %p108 = scmp.ne.s32.totalorder %s97, %s98
    %p109 = scmp.eq.s32.totalorder %s14, 0
    %p110 = por %p108, %p109
    %p111 = scmp.ne.s32.totalorder %s97, %s98
    %p112 = scmp.eq.s32.totalorder %s15, 8
    %p113 = por %p111, %p112
    %p115 = scmp.ne.s32.totalorder %s98, %s114
    %p116 = scmp.eq.s32.totalorder %s15, 0
    %p117 = por %p115, %p116
    %s118 = ssub.s32 %s16, %s35
    %s119 = ssub.s32 %s17, %s31
    %s120 = sor.u32 %s118, %s119
    %p121 = scmp.eq.s32.totalorder %s120, 0
    %s123 = sadd.s32 %s122, 1
    %s124 = scalar_select %p121, %s122, %s123
    %p127 = pneg %p121
    %p128 = scmp.eq.s32.totalorder %s9, 8
    %p129 = por %p127, %p128
    %p130 = scmp.ne.s32.totalorder %s122, %s125
    %p131 = scmp.eq.s32.totalorder %s9, 0
    %p132 = por %p130, %p131
    %p133 = scmp.ne.s32.totalorder %s122, %s125
    %p134 = scmp.eq.s32.totalorder %s14, 8
    %p135 = por %p133, %p134
    %p136 = scmp.ne.s32.totalorder %s125, %s126
    %p137 = scmp.eq.s32.totalorder %s14, 0
    %p138 = por %p136, %p137
    %p139 = scmp.ne.s32.totalorder %s125, %s126
    %p140 = scmp.eq.s32.totalorder %s15, 8
    %p141 = por %p139, %p140
    %p143 = scmp.ne.s32.totalorder %s126, %s142
    %p144 = scmp.eq.s32.totalorder %s15, 0
    %p145 = por %p143, %p144
    %p146 = scmp.le.s32.totalorder 1, %s9
    %p147 = scmp.lt.s32.totalorder %s9, 10
    %p148 = pnand %p146, %p147
    %p149 = pneg %p148
    // Predicated region
    $region9: #{_lambda_.30} parent=5 // pred_check
      _
    $region10: #{_lambda_.30} parent=5 // pred_check_branch
      %151 = sbr.rel (%p148) target = $region12
    $region11: #{_lambda_.30} parent=5 // pred_region
      %s152 = ssub.s32 %s9, 1
      // Predicated region
      $region13: #{_lambda_.30} parent=11 // pred_check
        %p153 = pneg %p110
      $region14: #{_lambda_.30} parent=11 // pred_check_branch
        %155 = sbr.rel (%p153) target = $region16
      $region15: #{_lambda_.30} parent=11 // pred_region
        %p156 = scmp.lt.s32.totalorder %s20, 0
        %s157 = scalar_select %p156, %s20, 0
        %s158 = scalar_lea.vmem %s2, %s157
      $region16: #{_lambda_.30} parent=11 // pred_fallthru
        _
    $region12: #{_lambda_.30} parent=5 // pred_fallthru
      _
    %p159 = scmp.lt.s32.totalorder %s9, 9
    // Predicated region
    $region17: #{_lambda_.30} parent=5 // pred_check
      %p160 = pneg %p159
    $region18: #{_lambda_.30} parent=5 // pred_check_branch
      %162 = sbr.rel (%p160) target = $region20
    $region19: #{_lambda_.30} parent=5 // pred_region
      // Predicated region
      $region21: #{_lambda_.30} parent=19 // pred_check
        %p163 = pneg %p50
      $region22: #{_lambda_.30} parent=19 // pred_check_branch
        %165 = sbr.rel (%p163) target = $region24
      $region23: #{_lambda_.30} parent=19 // pred_region
        %p166 = scmp.lt.s32.totalorder %s18, 8
        %s167 = scalar_select %p166, %s18, 8
        %p168 = scmp.lt.s32.totalorder %s16, 0
        %s169 = scalar_select %p168, %s16, 0
        %s170 = sadd.s32 %s169, %s167
        %s171 = smul.addr %s170, 4
        %s172 = scalar_lea.vmem %s0, %s171
      $region24: #{_lambda_.30} parent=19 // pred_fallthru
        _
      // Predicated region
      $region25: #{_lambda_.30} parent=19 // pred_check
        %p173 = pneg %p78
      $region26: #{_lambda_.30} parent=19 // pred_check_branch
        %175 = sbr.rel (%p173) target = $region28
      $region27: #{_lambda_.30} parent=19 // pred_region
        %p176 = scmp.lt.s32.totalorder %s18, 8
        %s177 = scalar_select %p176, %s18, 8
        %p178 = scmp.lt.s32.totalorder %s17, 0
        %s179 = scalar_select %p178, %s17, 0
        %s180 = smul.addr %s177, 16
        %s181 = sadd.s32 %s179, %s180
        %s182 = smul.addr %s181, 4
        %s183 = scalar_lea.vmem %s1, %s182
      $region28: #{_lambda_.30} parent=19 // pred_fallthru
        _
    $region20: #{_lambda_.30} parent=5 // pred_fallthru
      _
    %p184 = scmp.le.s32.totalorder 1, %s9
    %p185 = scmp.lt.s32.totalorder %s9, 10
    %p186 = pnand %p184, %p185
    %p187 = pneg %p186
    // Predicated region
    $region29: #{_lambda_.30} parent=5 // pred_check
      _
    $region30: #{_lambda_.30} parent=5 // pred_check_branch
      %189 = sbr.rel (%p186) target = $region32
    $region31: #{_lambda_.30} parent=5 // pred_region
      %s190 = ssub.s32 %s9, 1
      %p191 = scmp.lt.s32.totalorder %s21, 8
      %s192 = scalar_select %p191, %s21, 8
      %p193 = scmp.lt.s32.totalorder %s19, 0
      %s194 = scalar_select %p193, %s19, 0
      %s195 = sadd.s32 %s194, %s192
      %s196 = smul.addr %s195, 4
      %s197 = scalar_lea.vmem %s0, %s196
      %p198 = pneg %p56
      %p199 = pneg %p53
      %p200 = scmp.lt.s32.totalorder %s21, 8
      %s201 = scalar_select %p200, %s21, 8
      %p202 = scmp.lt.s32.totalorder %s20, 0
      %s203 = scalar_select %p202, %s20, 0
      %s204 = smul.addr %s201, 16
      %s205 = sadd.s32 %s203, %s204
      %s206 = smul.addr %s205, 4
      %s207 = scalar_lea.vmem %s1, %s206
      %p208 = pneg %p84
      %p209 = pneg %p81
      %p210 = scmp.lt.s32.totalorder %s20, 0
      %s211 = scalar_select %p210, %s20, 0
      %s212 = scalar_lea.vmem %s2, %s211
      %p213 = pneg %p110
      %p214 = pneg %p107
      %p215 = pneg %p138
      %p216 = pneg %p135
      %p217 = scmp.lt.s32.totalorder %s19, 0
      %s218 = scalar_select %p217, %s19, 0
      %p219 = scmp.lt.s32.totalorder %s20, 0
      %s220 = scalar_select %p219, %s20, 0
      %s221 = sadd.s32 %s220, %s218
      %s222 = smul.addr %s221, 8
      %s223 = scalar_lea.vmem %s3, %s222
      %p224 = scmp.lt.s32.totalorder %s21, 8
      %s225 = scalar_select %p224, %s21, 8
      %p226 = scmp.lt.s32.totalorder %s19, 0
      %s227 = scalar_select %p226, %s19, 0
      %s228 = sadd.s32 %s227, %s225
      %s229 = smul.addr %s228, 4
      %s230 = scalar_lea.vmem %s0, %s229
      %p231 = scmp.lt.s32.totalorder %s21, 8
      %s232 = scalar_select %p231, %s21, 8
      %p233 = scmp.lt.s32.totalorder %s20, 0
      %s234 = scalar_select %p233, %s20, 0
      %s235 = smul.addr %s232, 16
      %s236 = sadd.s32 %s234, %s235
      %s237 = smul.addr %s236, 4
      %s238 = scalar_lea.vmem %s1, %s237
      %p239 = scmp.lt.s32.totalorder %s20, 0
      %s240 = scalar_select %p239, %s20, 0
      %s241 = scalar_lea.vmem %s2, %s240
      %p242 = scmp.lt.s32.totalorder %s19, 0
      %s243 = scalar_select %p242, %s19, 0
      %p244 = scmp.lt.s32.totalorder %s20, 0
      %s245 = scalar_select %p244, %s20, 0
      %s246 = sadd.s32 %s245, %s243
      %s247 = smul.addr %s246, 8
      %s248 = scalar_lea.vmem %s3, %s247
      %p250 = scmp.eq.s32.totalorder %s21, 0
      // Predicated region
      $region33: #{_lambda_.30} parent=31 // pred_check
        %p251 = pneg %p250
      $region34: #{_lambda_.30} parent=31 // pred_check_branch
        %253 = sbr.rel (%p251) target = $region36
      $region35: #{_lambda_.30} parent=31 // pred_region
        %254 = vst [vmem:[#allocation2] sm:$0xff] 0.0
      $region36: #{_lambda_.30} parent=31 // pred_fallthru
        _
      %v255 = vld [vmem:[#allocation2] sm:$0xff]
      %v256 = vld [vmem:[%s230] sm:$0xf]
      %v257 = vld [vmem:[%s238] sm:$0xf]
      %v258 = vld [vmem:[%s238 + $0x4] sm:$0xf]
      %v259 = vld [vmem:[%s238 + $0x8] sm:$0xf]
      %v260 = vld [vmem:[%s238 + $0xc] sm:$0xf]
      %v261 = vld [vmem:[%s238 + $0x10] sm:$0xf]
      %v262 = vld [vmem:[%s238 + $0x14] sm:$0xf]
      %v263 = vld [vmem:[%s238 + $0x18] sm:$0xf]
      %v264 = vld [vmem:[%s238 + $0x1c] sm:$0xf]
      %v265 = vld [vmem:[%s238 + $0x20] sm:$0xf]
      %v266 = vld [vmem:[%s238 + $0x24] sm:$0xf]
      %v267 = vld [vmem:[%s238 + $0x28] sm:$0xf]
      %v268 = vld [vmem:[%s238 + $0x2c] sm:$0xf]
      %v269 = vld [vmem:[%s238 + $0x30] sm:$0xf]
      %v270 = vld [vmem:[%s238 + $0x34] sm:$0xf]
      %v271 = vld [vmem:[%s238 + $0x38] sm:$0xf]
      %v272 = vld [vmem:[%s238 + $0x3c] sm:$0xf]
      %v289 = vunpack.c.l.b16 %v257
      %v290 = vunpack.c.l.b16 %v258
      %v291 = vunpack.c.l.b16 %v259
      %v292 = vunpack.c.l.b16 %v260
      %v293 = vunpack.c.l.b16 %v261
      %v294 = vunpack.c.l.b16 %v262
      %v295 = vunpack.c.l.b16 %v263
      %v296 = vunpack.c.l.b16 %v264
      %v297 = vunpack.c.l.b16 %v265
      %v298 = vunpack.c.l.b16 %v266
      %v299 = vunpack.c.l.b16 %v267
      %v300 = vunpack.c.l.b16 %v268
      %v301 = vunpack.c.l.b16 %v269
      %v302 = vunpack.c.l.b16 %v270
      %v303 = vunpack.c.l.b16 %v271
      %v304 = vunpack.c.l.b16 %v272
      %v305 = vpack.c.b16 %v290, %v289
      %v306 = vpack.c.b16 %v292, %v291
      %v307 = vpack.c.b16 %v294, %v293
      %v308 = vpack.c.b16 %v296, %v295
      %v309 = vpack.c.b16 %v298, %v297
      %v310 = vpack.c.b16 %v300, %v299
      %v311 = vpack.c.b16 %v302, %v301
      %v312 = vpack.c.b16 %v304, %v303
      %321 = vmatprep.subr.bf16.mxu0 0
      %322 = vmatpush1.bf16.msra.mxu0 %v305
      %323 = vmatprep.subr.bf16.mxu0 0
      %324 = vmatpush1.bf16.msra.mxu0 %v306
      %325 = vmatprep.subr.bf16.mxu0 0
      %326 = vmatpush1.bf16.msra.mxu0 %v307
      %327 = vmatprep.subr.bf16.mxu0 0
      %328 = vmatpush1.bf16.msra.mxu0 %v308
      %329 = vmatprep.subr.bf16.mxu0 0
      %330 = vmatpush1.bf16.msra.mxu0 %v309
      %331 = vmatprep.subr.bf16.mxu0 0
      %332 = vmatpush1.bf16.msra.mxu0 %v310
      %333 = vmatprep.subr.bf16.mxu0 0
      %334 = vmatpush1.bf16.msra.mxu0 %v311
      %335 = vmatprep.subr.bf16.mxu0 0
      %336 = vmatpush1.bf16.msra.mxu0 %v312
      %337 = vmatprep.subr.bf16.mxu0 0
      %338 = vmatpush1.bf16.msra.mxu0 0
      %339 = vmatprep.subr.bf16.mxu0 0
      %340 = vmatpush1.bf16.msra.mxu0 0
      %341 = vmatprep.subr.bf16.mxu0 0
      %342 = vmatpush1.bf16.msra.mxu0 0
      %343 = vmatprep.subr.bf16.mxu0 0
      %344 = vmatpush1.bf16.msra.mxu0 0
      %345 = vmatprep.subr.bf16.mxu0 0
      %346 = vmatpush1.bf16.msra.mxu0 0
      %347 = vmatprep.subr.bf16.mxu0 0
      %348 = vmatpush1.bf16.msra.mxu0 0
      %349 = vmatprep.subr.bf16.mxu0 0
      %350 = vmatpush1.bf16.msra.mxu0 0
      %351 = vmatprep.subr.bf16.mxu0 0
      %352 = vmatpush1.bf16.msra.mxu0 0
      %353 = vmatprep.mubr.bf16.mxu0 0
      %354 = vmatmul.mubr.bf16.gmra.mrb[0].mxu0 %v256
      %v355 = vpop.f32.mrb[0].mxu0
      %v356 = vadd.f32 0.0, %v355
      %v357 = vpop.f32.mrb[0].mxu0
      %v358 = vpop.f32.mrb[0].mxu0
      %v359 = vpop.f32.mrb[0].mxu0
      %360 = vdwg.mxu0
      %v361 = vadd.f32 %v255, %v356
      %362 = vst [vmem:[#allocation2] sm:$0xff] %v361
      %p363 = scmp.eq.s32.totalorder %s21, 8
      // Predicated region
      $region37: #{_lambda_.30} parent=31 // pred_check
        %p364 = pneg %p363
      $region38: #{_lambda_.30} parent=31 // pred_check_branch
        %366 = sbr.rel (%p364) target = $region40
      $region39: #{_lambda_.30} parent=31 // pred_region
        %v367 = vld [vmem:[#allocation2] sm:$0xff]
        %v368 = vld [vmem:[%s241] sm:$0x1]
        %v370 = vlaneseq
        %v371 = vshrl.u32 %v370, 7
        %v372 = vsub.s32 0, %v371
        %v373 = vrot.slane %v368, %v372
        %v375 = vadd.f32 %v367, %v373
        %v376 = vmax.f32 %v375, 0.0
        %377 = vst [vmem:[%s248] sm:$0xff] %v376
      $region40: #{_lambda_.30} parent=31 // pred_fallthru
        _
      %p378 = scmp.lt.s32.totalorder %s19, 0
      %s379 = scalar_select %p378, %s19, 0
      %p380 = scmp.lt.s32.totalorder %s20, 0
      %s381 = scalar_select %p380, %s20, 0
      %s382 = sadd.s32 %s381, %s379
      %s383 = smul.addr %s382, 8
      %s384 = scalar_lea.vmem %s3, %s383
      // Predicated region
      $region41: #{_lambda_.30} parent=31 // pred_check
        %p385 = pneg %p135
      $region42: #{_lambda_.30} parent=31 // pred_check_branch
        %387 = sbr.rel (%p385) target = $region44
      $region43: #{_lambda_.30} parent=31 // pred_region
        _
      $region44: #{_lambda_.30} parent=31 // pred_fallthru
        _
      // Predicated region
      $region45: #{_lambda_.30} parent=31 // pred_check
        %p388 = pneg %p135
      $region46: #{_lambda_.30} parent=31 // pred_check_branch
        %390 = sbr.rel (%p388) target = $region48
      $region47: #{_lambda_.30} parent=31 // pred_region
        %p391 = scmp.lt.s32.totalorder %s19, 0
        %s392 = scalar_select %p391, %s19, 0
        %p393 = scmp.lt.s32.totalorder %s20, 0
        %s394 = scalar_select %p393, %s20, 0
        %s395 = sadd.s32 %s394, %s392
        %s396 = smul.addr %s395, 8
        %s397 = scalar_lea.vmem %s3, %s396
      $region48: #{_lambda_.30} parent=31 // pred_fallthru
        _
    $region32: #{_lambda_.30} parent=5 // pred_fallthru
      _
    %p398 = scmp.le.s32.totalorder 2, %s9
    // Predicated region
    $region49: #{_lambda_.30} parent=5 // pred_check
      %p399 = pneg %p398
    $region50: #{_lambda_.30} parent=5 // pred_check_branch
      %401 = sbr.rel (%p399) target = $region52
    $region51: #{_lambda_.30} parent=5 // pred_region
      %s402 = ssub.s32 %s9, 2
    $region52: #{_lambda_.30} parent=5 // pred_fallthru
      _
  $region6: #{_lambda_.30} parent=0 // loop_footer
    %s13 = sadd.s32 1, %s9
  $region7: #{_lambda_.30} parent=0 // loop_footer_branch
    %8 = sbr.rel target = $region3
  $region8: #{_lambda_.30} parent=0 // loop_exit
    _

// kernel: _lambda_.33
$region0: #{_lambda_.33}
  #allocation0 [shape = 'u32[]', space=smem, size = 0x4, offset = 0x4, fixed_abs, tag = 'smem constant byte address 0x4 - core index']
  #allocation1 [shape = 'u32[144,128]{1,0:T(1,128)}', space=vmem, size = 0x12000, scoped, tag = 'internal scratch']
  #allocation2 [shape = 'f32[8,256]{1,0:T(8,128)}', space=vmem, size = 0x2000, scoped, tag = 'scratch operand']
  %s0 = inlined_call_operand.vmem [shape: bf16[9,8,128], index: 0, kind: input, shape index: {}]
  %s1 = inlined_call_operand.vmem [shape: bf16[9,128,256], index: 1, kind: input, shape index: {}]
  %s2 = inlined_call_operand.vmem [shape: f32[1,256], index: 2, kind: input, shape index: {}]
  %s3 = inlined_call_operand.vmem [shape: f32[8,256], index: 3, kind: output, shape index: {}]
  %s4 = sld [smem:[#allocation0]]
  $region53: #{_lambda_.33} parent=0
    _
  %s6 = ssub.s32 1, %s4
  %s7 = scalar_select 0, %s6, %s4
  loop: start=0, step=1, limit=11
  $region2: #{_lambda_.33} parent=0 // loop_pre_header
    _
  $region3: #{_lambda_.33} parent=0 // loop_header
    %s9 = sphi 0, %s13
    %p10 = scmp.ge.s32.totalorder %s9, 11
    %s16 = sphi 0, %s35
    %s17 = sphi 0, %s31
    %s18 = sphi 0, %s27
    %s19 = sphi 0, %s16
    %s20 = sphi 0, %s17
    %s21 = sphi 0, %s18
    %s22 = sphi 0, %s19
    %s23 = sphi 0, %s20
    %s24 = sphi 0, %s21
    %s40 = sphi 0, %s42
    %s43 = sphi 0, %s40
    %s44 = sphi 0, %s43
    %s60 = sphi 0, %s44
    %s68 = sphi 0, %s70
    %s71 = sphi 0, %s68
    %s72 = sphi 0, %s71
    %s88 = sphi 0, %s72
    %s94 = sphi 0, %s96
    %s97 = sphi 0, %s94
    %s98 = sphi 0, %s97
    %s114 = sphi 0, %s98
    %s122 = sphi 0, %s124
    %s125 = sphi 0, %s122
    %s126 = sphi 0, %s125
    %s142 = sphi 0, %s126
  $region4: #{_lambda_.33} parent=0 // loop_header_branch
    %12 = sbr.rel (%p10) target = $region8
  $region5: #{_lambda_.33} parent=0 // loop_body
    %s14 = ssub.s32 %s9, 1
    %s15 = ssub.s32 %s9, 2
    %s25 = sadd.s32 1, %s18
    %p26 = scmp.ge.s32.totalorder %s25, 9
    %s27 = scalar_select %p26, 0, %s25
    %s28 = sadd.s32 1, %s17
    %s29 = scalar_select %p26, %s28, %s17
    %p30 = scmp.ge.s32.totalorder %s29, 1
    %s31 = scalar_select %p30, 0, %s29
    %s32 = sadd.s32 1, %s16
    %s33 = scalar_select %p30, %s32, %s16
    %p34 = scmp.ge.s32.totalorder %s33, 1
    %s35 = scalar_select %p34, 0, %s33
    %s36 = ssub.s32 %s18, %s27
    %s37 = ssub.s32 %s16, %s35
    %s38 = sor.u32 %s36, %s37
    %p39 = scmp.eq.s32.totalorder %s38, 0
    %s41 = sadd.s32 %s40, 1
    %s42 = scalar_select %p39, %s40, %s41
    %p45 = pneg %p39
    %p46 = scmp.eq.s32.totalorder %s9, 8
    %p47 = por %p45, %p46
    %p48 = scmp.ne.s32.totalorder %s40, %s43
    %p49 = scmp.eq.s32.totalorder %s9, 0
    %p50 = por %p48, %p49
    %p51 = scmp.ne.s32.totalorder %s40, %s43
    %p52 = scmp.eq.s32.totalorder %s14, 8
    %p53 = por %p51, %p52
    %p54 = scmp.ne.s32.totalorder %s43, %s44
    %p55 = scmp.eq.s32.totalorder %s14, 0
    %p56 = por %p54, %p55
    %p57 = scmp.ne.s32.totalorder %s43, %s44
    %p58 = scmp.eq.s32.totalorder %s15, 8
    %p59 = por %p57, %p58
    %p61 = scmp.ne.s32.totalorder %s44, %s60
    %p62 = scmp.eq.s32.totalorder %s15, 0
    %p63 = por %p61, %p62
    %s64 = ssub.s32 %s18, %s27
    %s65 = ssub.s32 %s17, %s31
    %s66 = sor.u32 %s64, %s65
    %p67 = scmp.eq.s32.totalorder %s66, 0
    %s69 = sadd.s32 %s68, 1
    %s70 = scalar_select %p67, %s68, %s69
    %p73 = pneg %p67
    %p74 = scmp.eq.s32.totalorder %s9, 8
    %p75 = por %p73, %p74
    %p76 = scmp.ne.s32.totalorder %s68, %s71
    %p77 = scmp.eq.s32.totalorder %s9, 0
    %p78 = por %p76, %p77
    %p79 = scmp.ne.s32.totalorder %s68, %s71
    %p80 = scmp.eq.s32.totalorder %s14, 8
    %p81 = por %p79, %p80
    %p82 = scmp.ne.s32.totalorder %s71, %s72
    %p83 = scmp.eq.s32.totalorder %s14, 0
    %p84 = por %p82, %p83
    %p85 = scmp.ne.s32.totalorder %s71, %s72
    %p86 = scmp.eq.s32.totalorder %s15, 8
    %p87 = por %p85, %p86
    %p89 = scmp.ne.s32.totalorder %s72, %s88
    %p90 = scmp.eq.s32.totalorder %s15, 0
    %p91 = por %p89, %p90
    %s92 = ssub.s32 %s17, %s31
    %p93 = scmp.eq.s32.totalorder %s92, 0
    %s95 = sadd.s32 %s94, 1
    %s96 = scalar_select %p93, %s94, %s95
    %p99 = pneg %p93
    %p100 = scmp.eq.s32.totalorder %s9, 8
    %p101 = por %p99, %p100
    %p102 = scmp.ne.s32.totalorder %s94, %s97
    %p103 = scmp.eq.s32.totalorder %s9, 0
    %p104 = por %p102, %p103
    %p105 = scmp.ne.s32.totalorder %s94, %s97
    %p106 = scmp.eq.s32.totalorder %s14, 8
    %p107 = por %p105, %p106
    %p108 = scmp.ne.s32.totalorder %s97, %s98
    %p109 = scmp.eq.s32.totalorder %s14, 0
    %p110 = por %p108, %p109
    %p111 = scmp.ne.s32.totalorder %s97, %s98
    %p112 = scmp.eq.s32.totalorder %s15, 8
    %p113 = por %p111, %p112
    %p115 = scmp.ne.s32.totalorder %s98, %s114
    %p116 = scmp.eq.s32.totalorder %s15, 0
    %p117 = por %p115, %p116
    %s118 = ssub.s32 %s16, %s35
    %s119 = ssub.s32 %s17, %s31
    %s120 = sor.u32 %s118, %s119
    %p121 = scmp.eq.s32.totalorder %s120, 0
    %s123 = sadd.s32 %s122, 1
    %s124 = scalar_select %p121, %s122, %s123
    %p127 = pneg %p121
    %p128 = scmp.eq.s32.totalorder %s9, 8
    %p129 = por %p127, %p128
    %p130 = scmp.ne.s32.totalorder %s122, %s125
    %p131 = scmp.eq.s32.totalorder %s9, 0
    %p132 = por %p130, %p131
    %p133 = scmp.ne.s32.totalorder %s122, %s125
    %p134 = scmp.eq.s32.totalorder %s14, 8
    %p135 = por %p133, %p134
    %p136 = scmp.ne.s32.totalorder %s125, %s126
    %p137 = scmp.eq.s32.totalorder %s14, 0
    %p138 = por %p136, %p137
    %p139 = scmp.ne.s32.totalorder %s125, %s126
    %p140 = scmp.eq.s32.totalorder %s15, 8
    %p141 = por %p139, %p140
    %p143 = scmp.ne.s32.totalorder %s126, %s142
    %p144 = scmp.eq.s32.totalorder %s15, 0
    %p145 = por %p143, %p144
    %p146 = scmp.le.s32.totalorder 1, %s9
    %p147 = scmp.lt.s32.totalorder %s9, 10
    %p148 = pnand %p146, %p147
    %p149 = pneg %p148
    // Predicated region
    $region9: #{_lambda_.33} parent=5 // pred_check
      _
    $region10: #{_lambda_.33} parent=5 // pred_check_branch
      %151 = sbr.rel (%p148) target = $region12
    $region11: #{_lambda_.33} parent=5 // pred_region
      %s152 = ssub.s32 %s9, 1
      // Predicated region
      $region13: #{_lambda_.33} parent=11 // pred_check
        %p153 = pneg %p110
      $region14: #{_lambda_.33} parent=11 // pred_check_branch
        %155 = sbr.rel (%p153) target = $region16
      $region15: #{_lambda_.33} parent=11 // pred_region
        %s156 = smul.u32 2, %s20
        %p157 = scmp.lt.s32.totalorder %s156, 1
        %s158 = scalar_select %p157, %s156, 1
        %s159 = scalar_lea.vmem %s2, %s158
        %s160 = smul.u32 2, %s20
      $region16: #{_lambda_.33} parent=11 // pred_fallthru
        _
    $region12: #{_lambda_.33} parent=5 // pred_fallthru
      _
    %p161 = scmp.lt.s32.totalorder %s9, 9
    // Predicated region
    $region17: #{_lambda_.33} parent=5 // pred_check
      %p162 = pneg %p161
    $region18: #{_lambda_.33} parent=5 // pred_check_branch
      %164 = sbr.rel (%p162) target = $region20
    $region19: #{_lambda_.33} parent=5 // pred_region
      // Predicated region
      $region21: #{_lambda_.33} parent=19 // pred_check
        %p165 = pneg %p50
      $region22: #{_lambda_.33} parent=19 // pred_check_branch
        %167 = sbr.rel (%p165) target = $region24
      $region23: #{_lambda_.33} parent=19 // pred_region
        %p168 = scmp.lt.s32.totalorder %s18, 8
        %s169 = scalar_select %p168, %s18, 8
        %p170 = scmp.lt.s32.totalorder %s16, 0
        %s171 = scalar_select %p170, %s16, 0
        %s172 = sadd.s32 %s171, %s169
        %s173 = smul.addr %s172, 4
        %s174 = scalar_lea.vmem %s0, %s173
      $region24: #{_lambda_.33} parent=19 // pred_fallthru
        _
      // Predicated region
      $region25: #{_lambda_.33} parent=19 // pred_check
        %p175 = pneg %p78
      $region26: #{_lambda_.33} parent=19 // pred_check_branch
        %177 = sbr.rel (%p175) target = $region28
      $region27: #{_lambda_.33} parent=19 // pred_region
        %s178 = smul.u32 2, %s17
        %p179 = scmp.lt.s32.totalorder %s18, 8
        %s180 = scalar_select %p179, %s18, 8
        %p181 = scmp.lt.s32.totalorder %s178, 1
        %s182 = scalar_select %p181, %s178, 1
        %s183 = smul.addr %s180, 32
        %s184 = sadd.s32 %s182, %s183
        %s185 = smul.addr %s184, 4
        %s186 = scalar_lea.vmem %s1, %s185
        %s187 = smul.u32 2, %s17
      $region28: #{_lambda_.33} parent=19 // pred_fallthru
        _
    $region20: #{_lambda_.33} parent=5 // pred_fallthru
      _
    %p188 = scmp.le.s32.totalorder 1, %s9
    %p189 = scmp.lt.s32.totalorder %s9, 10
    %p190 = pnand %p188, %p189
    %p191 = pneg %p190
    // Predicated region
    $region29: #{_lambda_.33} parent=5 // pred_check
      _
    $region30: #{_lambda_.33} parent=5 // pred_check_branch
      %193 = sbr.rel (%p190) target = $region32
    $region31: #{_lambda_.33} parent=5 // pred_region
      %s194 = ssub.s32 %s9, 1
      %p195 = scmp.lt.s32.totalorder %s21, 8
      %s196 = scalar_select %p195, %s21, 8
      %p197 = scmp.lt.s32.totalorder %s19, 0
      %s198 = scalar_select %p197, %s19, 0
      %s199 = sadd.s32 %s198, %s196
      %s200 = smul.addr %s199, 4
      %s201 = scalar_lea.vmem %s0, %s200
      %p202 = pneg %p56
      %p203 = pneg %p53
      %s204 = smul.u32 2, %s20
      %p205 = scmp.lt.s32.totalorder %s21, 8
      %s206 = scalar_select %p205, %s21, 8
      %p207 = scmp.lt.s32.totalorder %s204, 1
      %s208 = scalar_select %p207, %s204, 1
      %s209 = smul.addr %s206, 32
      %s210 = sadd.s32 %s208, %s209
      %s211 = smul.addr %s210, 4
      %s212 = scalar_lea.vmem %s1, %s211
      %p213 = pneg %p84
      %p214 = pneg %p81
      %s215 = smul.u32 2, %s20
      %p216 = scmp.lt.s32.totalorder %s215, 1
      %s217 = scalar_select %p216, %s215, 1
      %s218 = scalar_lea.vmem %s2, %s217
      %p219 = pneg %p110
      %p220 = pneg %p107
      %p221 = pneg %p138
      %p222 = pneg %p135
      %s223 = smul.u32 2, %s20
      %p224 = scmp.lt.s32.totalorder %s19, 0
      %s225 = scalar_select %p224, %s19, 0
      %p226 = scmp.lt.s32.totalorder %s223, 1
      %s227 = scalar_select %p226, %s223, 1
      %s228 = smul.addr %s225, 2
      %s229 = sadd.s32 %s227, %s228
      %s230 = smul.addr %s229, 8
      %s231 = scalar_lea.vmem %s3, %s230
      %p232 = scmp.lt.s32.totalorder %s21, 8
      %s233 = scalar_select %p232, %s21, 8
      %p234 = scmp.lt.s32.totalorder %s19, 0
      %s235 = scalar_select %p234, %s19, 0
      %s236 = sadd.s32 %s235, %s233
      %s237 = smul.addr %s236, 4
      %s238 = scalar_lea.vmem %s0, %s237
      %s239 = smul.u32 2, %s20
      %p240 = scmp.lt.s32.totalorder %s21, 8
      %s241 = scalar_select %p240, %s21, 8
      %p242 = scmp.lt.s32.totalorder %s239, 1
      %s243 = scalar_select %p242, %s239, 1
      %s244 = smul.addr %s241, 32
      %s245 = sadd.s32 %s243, %s244
      %s246 = smul.addr %s245, 4
      %s247 = scalar_lea.vmem %s1, %s246
      %s248 = smul.u32 2, %s20
      %s249 = smul.u32 2, %s20
      %p250 = scmp.lt.s32.totalorder %s249, 1
      %s251 = scalar_select %p250, %s249, 1
      %s252 = scalar_lea.vmem %s2, %s251
      %s253 = smul.u32 2, %s20
      %s254 = smul.u32 2, %s20
      %p255 = scmp.lt.s32.totalorder %s19, 0
      %s256 = scalar_select %p255, %s19, 0
      %p257 = scmp.lt.s32.totalorder %s254, 1
      %s258 = scalar_select %p257, %s254, 1
      %s259 = smul.addr %s256, 2
      %s260 = sadd.s32 %s258, %s259
      %s261 = smul.addr %s260, 8
      %s262 = scalar_lea.vmem %s3, %s261
      %s263 = smul.u32 2, %s20
      %p265 = scmp.eq.s32.totalorder %s21, 0
      // Predicated region
      $region33: #{_lambda_.33} parent=31 // pred_check
        %p266 = pneg %p265
      $region34: #{_lambda_.33} parent=31 // pred_check_branch
        %268 = sbr.rel (%p266) target = $region36
      $region35: #{_lambda_.33} parent=31 // pred_region
        %269 = vst [vmem:[#allocation2] sm:$0xff] 0.0
        %270 = vst [vmem:[#allocation2 + $0x8] sm:$0xff] 0.0
      $region36: #{_lambda_.33} parent=31 // pred_fallthru
        _
      %v271 = vld [vmem:[#allocation2] sm:$0xff]
      %v272 = vld [vmem:[#allocation2 + $0x8] sm:$0xff]
      %v273 = vld [vmem:[%s238] sm:$0xf]
      %v274 = vld [vmem:[%s247] sm:$0xff]
      %v275 = vld [vmem:[%s247 + $0x8] sm:$0xff]
      %v276 = vld [vmem:[%s247 + $0x10] sm:$0xff]
      %v277 = vld [vmem:[%s247 + $0x18] sm:$0xff]
      %v278 = vld [vmem:[%s247 + $0x20] sm:$0xff]
      %v279 = vld [vmem:[%s247 + $0x28] sm:$0xff]
      %v280 = vld [vmem:[%s247 + $0x30] sm:$0xff]
      %v281 = vld [vmem:[%s247 + $0x38] sm:$0xff]
      %v282 = vld [vmem:[%s247 + $0x40] sm:$0xff]
      %v283 = vld [vmem:[%s247 + $0x48] sm:$0xff]
      %v284 = vld [vmem:[%s247 + $0x50] sm:$0xff]
      %v285 = vld [vmem:[%s247 + $0x58] sm:$0xff]
      %v286 = vld [vmem:[%s247 + $0x60] sm:$0xff]
      %v287 = vld [vmem:[%s247 + $0x68] sm:$0xff]
      %v288 = vld [vmem:[%s247 + $0x70] sm:$0xff]
      %v289 = vld [vmem:[%s247 + $0x78] sm:$0xff]
      %v306 = vunpack.c.l.b16 %v274
      %v307 = vunpack.c.h.b16 %v274
      %v308 = vunpack.c.l.b16 %v275
      %v309 = vunpack.c.h.b16 %v275
      %v310 = vunpack.c.l.b16 %v276
      %v311 = vunpack.c.h.b16 %v276
      %v312 = vunpack.c.l.b16 %v277
      %v313 = vunpack.c.h.b16 %v277
      %v314 = vunpack.c.l.b16 %v278
      %v315 = vunpack.c.h.b16 %v278
      %v316 = vunpack.c.l.b16 %v279
      %v317 = vunpack.c.h.b16 %v279
      %v318 = vunpack.c.l.b16 %v280
      %v319 = vunpack.c.h.b16 %v280
      %v320 = vunpack.c.l.b16 %v281
      %v321 = vunpack.c.h.b16 %v281
      %v322 = vunpack.c.l.b16 %v282
      %v323 = vunpack.c.h.b16 %v282
      %v324 = vunpack.c.l.b16 %v283
      %v325 = vunpack.c.h.b16 %v283
      %v326 = vunpack.c.l.b16 %v284
      %v327 = vunpack.c.h.b16 %v284
      %v328 = vunpack.c.l.b16 %v285
      %v329 = vunpack.c.h.b16 %v285
      %v330 = vunpack.c.l.b16 %v286
      %v331 = vunpack.c.h.b16 %v286
      %v332 = vunpack.c.l.b16 %v287
      %v333 = vunpack.c.h.b16 %v287
      %v334 = vunpack.c.l.b16 %v288
      %v335 = vunpack.c.h.b16 %v288
      %v336 = vunpack.c.l.b16 %v289
      %v337 = vunpack.c.h.b16 %v289
      %v338 = vpack.c.b16 %v308, %v306
      %v339 = vpack.c.b16 %v309, %v307
      %v340 = vpack.c.b16 %v312, %v310
      %v341 = vpack.c.b16 %v313, %v311
      %v342 = vpack.c.b16 %v316, %v314
      %v343 = vpack.c.b16 %v317, %v315
      %v344 = vpack.c.b16 %v320, %v318
      %v345 = vpack.c.b16 %v321, %v319
      %v346 = vpack.c.b16 %v324, %v322
      %v347 = vpack.c.b16 %v325, %v323
      %v348 = vpack.c.b16 %v328, %v326
      %v349 = vpack.c.b16 %v329, %v327
      %v350 = vpack.c.b16 %v332, %v330
      %v351 = vpack.c.b16 %v333, %v331
      %v352 = vpack.c.b16 %v336, %v334
      %v353 = vpack.c.b16 %v337, %v335
      %370 = vmatprep.subr.bf16.mxu0 %v339
      %371 = vmatpush1.bf16.msra.mxu0 %v338
      %372 = vmatprep.subr.bf16.mxu0 %v341
      %373 = vmatpush1.bf16.msra.mxu0 %v340
      %374 = vmatprep.subr.bf16.mxu0 %v343
      %375 = vmatpush1.bf16.msra.mxu0 %v342
      %376 = vmatprep.subr.bf16.mxu0 %v345
      %377 = vmatpush1.bf16.msra.mxu0 %v344
      %378 = vmatprep.subr.bf16.mxu0 %v347
      %379 = vmatpush1.bf16.msra.mxu0 %v346
      %380 = vmatprep.subr.bf16.mxu0 %v349
      %381 = vmatpush1.bf16.msra.mxu0 %v348
      %382 = vmatprep.subr.bf16.mxu0 %v351
      %383 = vmatpush1.bf16.msra.mxu0 %v350
      %384 = vmatprep.subr.bf16.mxu0 %v353
      %385 = vmatpush1.bf16.msra.mxu0 %v352
      %386 = vmatprep.subr.bf16.mxu0 0
      %387 = vmatpush1.bf16.msra.mxu0 0
      %388 = vmatprep.subr.bf16.mxu0 0
      %389 = vmatpush1.bf16.msra.mxu0 0
      %390 = vmatprep.subr.bf16.mxu0 0
      %391 = vmatpush1.bf16.msra.mxu0 0
      %392 = vmatprep.subr.bf16.mxu0 0
      %393 = vmatpush1.bf16.msra.mxu0 0
      %394 = vmatprep.subr.bf16.mxu0 0
      %395 = vmatpush1.bf16.msra.mxu0 0
      %396 = vmatprep.subr.bf16.mxu0 0
      %397 = vmatpush1.bf16.msra.mxu0 0
      %398 = vmatprep.subr.bf16.mxu0 0
      %399 = vmatpush1.bf16.msra.mxu0 0
      %400 = vmatprep.subr.bf16.mxu0 0
      %401 = vmatpush1.bf16.msra.mxu0 0
      %402 = vmatprep.mubr.bf16.mxu0 0
      %403 = vmatmul.mubr.bf16.gmra.mrb[0].mxu0 %v273
      %v404 = vpop.f32.mrb[0].mxu0
      %v405 = vadd.f32 0.0, %v404
      %v406 = vpop.f32.mrb[0].mxu0
      %v407 = vadd.f32 0.0, %v406
      %v408 = vpop.f32.mrb[0].mxu0
      %v409 = vpop.f32.mrb[0].mxu0
      %410 = vdwg.mxu0
      %v411 = vadd.f32 %v271, %v405
      %v412 = vadd.f32 %v272, %v407
      %413 = vst [vmem:[#allocation2] sm:$0xff] %v411
      %414 = vst [vmem:[#allocation2 + $0x8] sm:$0xff] %v412
      %p415 = scmp.eq.s32.totalorder %s21, 8
      // Predicated region
      $region37: #{_lambda_.33} parent=31 // pred_check
        %p416 = pneg %p415
      $region38: #{_lambda_.33} parent=31 // pred_check_branch
        %418 = sbr.rel (%p416) target = $region40
      $region39: #{_lambda_.33} parent=31 // pred_region
        %v419 = vld [vmem:[#allocation2] sm:$0xff]
        %v420 = vld [vmem:[#allocation2 + $0x8] sm:$0xff]
        %v421 = vld [vmem:[%s252] sm:$0x3]
        %v423 = vlaneseq
        %v424 = vshrl.u32 %v423, 7
        %v425 = vsub.s32 0, %v424
        %v426 = vrot.slane %v421, %v425
        %v427 = vlaneseq
        %v428 = vshrl.u32 %v427, 7
        %v429 = vsub.s32 1, %v428
        %v430 = vrot.slane %v421, %v429
        %v433 = vadd.f32 %v419, %v426
        %v434 = vadd.f32 %v420, %v430
        %v435 = vmax.f32 %v433, 0.0
        %v436 = vmax.f32 %v434, 0.0
        %437 = vst [vmem:[%s262] sm:$0xff] %v435
        %438 = vst [vmem:[%s262 + $0x8] sm:$0xff] %v436
      $region40: #{_lambda_.33} parent=31 // pred_fallthru
        _
      %s439 = smul.u32 2, %s20
      %p440 = scmp.lt.s32.totalorder %s19, 0
      %s441 = scalar_select %p440, %s19, 0
      %p442 = scmp.lt.s32.totalorder %s439, 1
      %s443 = scalar_select %p442, %s439, 1
      %s444 = smul.addr %s441, 2
      %s445 = sadd.s32 %s443, %s444
      %s446 = smul.addr %s445, 8
      %s447 = scalar_lea.vmem %s3, %s446
      // Predicated region
      $region41: #{_lambda_.33} parent=31 // pred_check
        %p448 = pneg %p135
      $region42: #{_lambda_.33} parent=31 // pred_check_branch
        %450 = sbr.rel (%p448) target = $region44
      $region43: #{_lambda_.33} parent=31 // pred_region
        %s451 = smul.u32 2, %s20
      $region44: #{_lambda_.33} parent=31 // pred_fallthru
        _
      // Predicated region
      $region45: #{_lambda_.33} parent=31 // pred_check
        %p452 = pneg %p135
      $region46: #{_lambda_.33} parent=31 // pred_check_branch
        %454 = sbr.rel (%p452) target = $region48
      $region47: #{_lambda_.33} parent=31 // pred_region
        %s455 = smul.u32 2, %s20
        %p456 = scmp.lt.s32.totalorder %s19, 0
        %s457 = scalar_select %p456, %s19, 0
        %p458 = scmp.lt.s32.totalorder %s455, 1
        %s459 = scalar_select %p458, %s455, 1
        %s460 = smul.addr %s457, 2
        %s461 = sadd.s32 %s459, %s460
        %s462 = smul.addr %s461, 8
        %s463 = scalar_lea.vmem %s3, %s462
      $region48: #{_lambda_.33} parent=31 // pred_fallthru
        _
    $region32: #{_lambda_.33} parent=5 // pred_fallthru
      _
    %p464 = scmp.le.s32.totalorder 2, %s9
    // Predicated region
    $region49: #{_lambda_.33} parent=5 // pred_check
      %p465 = pneg %p464
    $region50: #{_lambda_.33} parent=5 // pred_check_branch
      %467 = sbr.rel (%p465) target = $region52
    $region51: #{_lambda_.33} parent=5 // pred_region
      %s468 = ssub.s32 %s9, 2
    $region52: #{_lambda_.33} parent=5 // pred_fallthru
      _
  $region6: #{_lambda_.33} parent=0 // loop_footer
    %s13 = sadd.s32 1, %s9
  $region7: #{_lambda_.33} parent=0 // loop_footer_branch
    %8 = sbr.rel target = $region3
  $region8: #{_lambda_.33} parent=0 // loop_exit
    _

// kernel: _lambda_.32
$region0: #{_lambda_.32}
  #allocation0 [shape = 'u32[]', space=smem, size = 0x4, offset = 0x4, fixed_abs, tag = 'smem constant byte address 0x4 - core index']
  #allocation1 [shape = 'u32[144,128]{1,0:T(1,128)}', space=vmem, size = 0x12000, scoped, tag = 'internal scratch']
  #allocation2 [shape = 'f32[8,256]{1,0:T(8,128)}', space=vmem, size = 0x2000, scoped, tag = 'scratch operand']
  %s0 = inlined_call_operand.vmem [shape: bf16[1,8,128], index: 0, kind: input, shape index: {}]
  %s1 = inlined_call_operand.vmem [shape: bf16[1,128,256], index: 1, kind: input, shape index: {}]
  %s2 = inlined_call_operand.vmem [shape: f32[1,256], index: 2, kind: input, shape index: {}]
  %s3 = inlined_call_operand.vmem [shape: f32[8,256], index: 3, kind: output, shape index: {}]
  %s4 = sld [smem:[#allocation0]]
  $region30: #{_lambda_.32} parent=0
    _
  %s6 = ssub.s32 1, %s4
  %s7 = scalar_select 0, %s6, %s4
  // Predicated region
  $region2: #{_lambda_.32} parent=0 // pred_check
    _
  $region3: #{_lambda_.32} parent=0 // pred_check_branch
    %9 = sbr.rel (0) target = $region5
  $region4: #{_lambda_.32} parent=0 // pred_region
    _
  $region5: #{_lambda_.32} parent=0 // pred_fallthru
    _
  // Predicated region
  $region6: #{_lambda_.32} parent=0 // pred_check
    _
  $region7: #{_lambda_.32} parent=0 // pred_check_branch
    %11 = sbr.rel (0) target = $region9
  $region8: #{_lambda_.32} parent=0 // pred_region
    _
  $region9: #{_lambda_.32} parent=0 // pred_fallthru
    _
  // Predicated region
  $region10: #{_lambda_.32} parent=0 // pred_check
    _
  $region11: #{_lambda_.32} parent=0 // pred_check_branch
    %13 = sbr.rel (0) target = $region13
  $region12: #{_lambda_.32} parent=0 // pred_region
    _
  $region13: #{_lambda_.32} parent=0 // pred_fallthru
    _
  %p15 = scmp.eq.s32.totalorder 0, 0
  // Predicated region
  $region14: #{_lambda_.32} parent=0 // pred_check
    %p16 = pneg %p15
  $region15: #{_lambda_.32} parent=0 // pred_check_branch
    %18 = sbr.rel (%p16) target = $region17
  $region16: #{_lambda_.32} parent=0 // pred_region
    %19 = vst [vmem:[#allocation2] sm:$0xff] 0.0
    %20 = vst [vmem:[#allocation2 + $0x8] sm:$0xff] 0.0
  $region17: #{_lambda_.32} parent=0 // pred_fallthru
    _
  %v21 = vld [vmem:[#allocation2] sm:$0xff]
  %v22 = vld [vmem:[#allocation2 + $0x8] sm:$0xff]
  %v23 = vld [vmem:[%s0] sm:$0xf]
  %v24 = vld [vmem:[%s1] sm:$0xff]
  %v25 = vld [vmem:[%s1 + $0x8] sm:$0xff]
  %v26 = vld [vmem:[%s1 + $0x10] sm:$0xff]
  %v27 = vld [vmem:[%s1 + $0x18] sm:$0xff]
  %v28 = vld [vmem:[%s1 + $0x20] sm:$0xff]
  %v29 = vld [vmem:[%s1 + $0x28] sm:$0xff]
  %v30 = vld [vmem:[%s1 + $0x30] sm:$0xff]
  %v31 = vld [vmem:[%s1 + $0x38] sm:$0xff]
  %v32 = vld [vmem:[%s1 + $0x40] sm:$0xff]
  %v33 = vld [vmem:[%s1 + $0x48] sm:$0xff]
  %v34 = vld [vmem:[%s1 + $0x50] sm:$0xff]
  %v35 = vld [vmem:[%s1 + $0x58] sm:$0xff]
  %v36 = vld [vmem:[%s1 + $0x60] sm:$0xff]
  %v37 = vld [vmem:[%s1 + $0x68] sm:$0xff]
  %v38 = vld [vmem:[%s1 + $0x70] sm:$0xff]
  %v39 = vld [vmem:[%s1 + $0x78] sm:$0xff]
  %v56 = vunpack.c.l.b16 %v24
  %v57 = vunpack.c.h.b16 %v24
  %v58 = vunpack.c.l.b16 %v25
  %v59 = vunpack.c.h.b16 %v25
  %v60 = vunpack.c.l.b16 %v26
  %v61 = vunpack.c.h.b16 %v26
  %v62 = vunpack.c.l.b16 %v27
  %v63 = vunpack.c.h.b16 %v27
  %v64 = vunpack.c.l.b16 %v28
  %v65 = vunpack.c.h.b16 %v28
  %v66 = vunpack.c.l.b16 %v29
  %v67 = vunpack.c.h.b16 %v29
  %v68 = vunpack.c.l.b16 %v30
  %v69 = vunpack.c.h.b16 %v30
  %v70 = vunpack.c.l.b16 %v31
  %v71 = vunpack.c.h.b16 %v31
  %v72 = vunpack.c.l.b16 %v32
  %v73 = vunpack.c.h.b16 %v32
  %v74 = vunpack.c.l.b16 %v33
  %v75 = vunpack.c.h.b16 %v33
  %v76 = vunpack.c.l.b16 %v34
  %v77 = vunpack.c.h.b16 %v34
  %v78 = vunpack.c.l.b16 %v35
  %v79 = vunpack.c.h.b16 %v35
  %v80 = vunpack.c.l.b16 %v36
  %v81 = vunpack.c.h.b16 %v36
  %v82 = vunpack.c.l.b16 %v37
  %v83 = vunpack.c.h.b16 %v37
  %v84 = vunpack.c.l.b16 %v38
  %v85 = vunpack.c.h.b16 %v38
  %v86 = vunpack.c.l.b16 %v39
  %v87 = vunpack.c.h.b16 %v39
  %v88 = vpack.c.b16 %v58, %v56
  %v89 = vpack.c.b16 %v59, %v57
  %v90 = vpack.c.b16 %v62, %v60
  %v91 = vpack.c.b16 %v63, %v61
  %v92 = vpack.c.b16 %v66, %v64
  %v93 = vpack.c.b16 %v67, %v65
  %v94 = vpack.c.b16 %v70, %v68
  %v95 = vpack.c.b16 %v71, %v69
  %v96 = vpack.c.b16 %v74, %v72
  %v97 = vpack.c.b16 %v75, %v73
  %v98 = vpack.c.b16 %v78, %v76
  %v99 = vpack.c.b16 %v79, %v77
  %v100 = vpack.c.b16 %v82, %v80
  %v101 = vpack.c.b16 %v83, %v81
  %v102 = vpack.c.b16 %v86, %v84
  %v103 = vpack.c.b16 %v87, %v85
  %120 = vmatprep.subr.bf16.mxu0 %v89
  %121 = vmatpush1.bf16.msra.mxu0 %v88
  %122 = vmatprep.subr.bf16.mxu0 %v91
  %123 = vmatpush1.bf16.msra.mxu0 %v90
  %124 = vmatprep.subr.bf16.mxu0 %v93
  %125 = vmatpush1.bf16.msra.mxu0 %v92
  %126 = vmatprep.subr.bf16.mxu0 %v95
  %127 = vmatpush1.bf16.msra.mxu0 %v94
  %128 = vmatprep.subr.bf16.mxu0 %v97
  %129 = vmatpush1.bf16.msra.mxu0 %v96
  %130 = vmatprep.subr.bf16.mxu0 %v99
  %131 = vmatpush1.bf16.msra.mxu0 %v98
  %132 = vmatprep.subr.bf16.mxu0 %v101
  %133 = vmatpush1.bf16.msra.mxu0 %v100
  %134 = vmatprep.subr.bf16.mxu0 %v103
  %135 = vmatpush1.bf16.msra.mxu0 %v102
  %136 = vmatprep.subr.bf16.mxu0 0
  %137 = vmatpush1.bf16.msra.mxu0 0
  %138 = vmatprep.subr.bf16.mxu0 0
  %139 = vmatpush1.bf16.msra.mxu0 0
  %140 = vmatprep.subr.bf16.mxu0 0
  %141 = vmatpush1.bf16.msra.mxu0 0
  %142 = vmatprep.subr.bf16.mxu0 0
  %143 = vmatpush1.bf16.msra.mxu0 0
  %144 = vmatprep.subr.bf16.mxu0 0
  %145 = vmatpush1.bf16.msra.mxu0 0
  %146 = vmatprep.subr.bf16.mxu0 0
  %147 = vmatpush1.bf16.msra.mxu0 0
  %148 = vmatprep.subr.bf16.mxu0 0
  %149 = vmatpush1.bf16.msra.mxu0 0
  %150 = vmatprep.subr.bf16.mxu0 0
  %151 = vmatpush1.bf16.msra.mxu0 0
  %152 = vmatprep.mubr.bf16.mxu0 0
  %153 = vmatmul.mubr.bf16.gmra.mrb[0].mxu0 %v23
  %v154 = vpop.f32.mrb[0].mxu0
  %v155 = vadd.f32 0.0, %v154
  %v156 = vpop.f32.mrb[0].mxu0
  %v157 = vadd.f32 0.0, %v156
  %v158 = vpop.f32.mrb[0].mxu0
  %v159 = vpop.f32.mrb[0].mxu0
  %160 = vdwg.mxu0
  %v161 = vadd.f32 %v21, %v155
  %v162 = vadd.f32 %v22, %v157
  %163 = vst [vmem:[#allocation2] sm:$0xff] %v161
  %164 = vst [vmem:[#allocation2 + $0x8] sm:$0xff] %v162
  // Predicated region
  $region18: #{_lambda_.32} parent=0 // pred_check
    %p165 = pneg %p15
  $region19: #{_lambda_.32} parent=0 // pred_check_branch
    %167 = sbr.rel (%p165) target = $region21
  $region20: #{_lambda_.32} parent=0 // pred_region
    %v168 = vld [vmem:[#allocation2] sm:$0xff]
    %v169 = vld [vmem:[#allocation2 + $0x8] sm:$0xff]
    %v170 = vld [vmem:[%s2] sm:$0x3]
    %v172 = vlaneseq
    %v173 = vshrl.u32 %v172, 7
    %v174 = vsub.s32 0, %v173
    %v175 = vrot.slane %v170, %v174
    %v176 = vlaneseq
    %v177 = vshrl.u32 %v176, 7
    %v178 = vsub.s32 1, %v177
    %v179 = vrot.slane %v170, %v178
    %v182 = vadd.f32 %v168, %v175
    %v183 = vadd.f32 %v169, %v179
    %184 = vst [vmem:[%s3] sm:$0xff] %v182
    %185 = vst [vmem:[%s3 + $0x8] sm:$0xff] %v183
  $region21: #{_lambda_.32} parent=0 // pred_fallthru
    _
  // Predicated region
  $region22: #{_lambda_.32} parent=0 // pred_check
    _
  $region23: #{_lambda_.32} parent=0 // pred_check_branch
    %187 = sbr.rel (0) target = $region25
  $region24: #{_lambda_.32} parent=0 // pred_region
    _
  $region25: #{_lambda_.32} parent=0 // pred_fallthru
    _
  // Predicated region
  $region26: #{_lambda_.32} parent=0 // pred_check
    _
  $region27: #{_lambda_.32} parent=0 // pred_check_branch
    %189 = sbr.rel (0) target = $region29
  $region28: #{_lambda_.32} parent=0 // pred_region
    _
  $region29: #{_lambda_.32} parent=0 // pred_fallthru
    _

// kernel: _lambda_.34
$region0: #{_lambda_.34}
  #allocation0 [shape = 'u32[]', space=smem, size = 0x4, offset = 0x4, fixed_abs, tag = 'smem constant byte address 0x4 - core index']
  #allocation1 [shape = 'u32[144,128]{1,0:T(1,128)}', space=vmem, size = 0x12000, scoped, tag = 'internal scratch']
  #allocation2 [shape = 'f32[8,256]{1,0:T(8,128)}', space=vmem, size = 0x2000, scoped, tag = 'scratch operand']
  %s0 = inlined_call_operand.vmem [shape: bf16[9,8,256], index: 0, kind: input, shape index: {}]
  %s1 = inlined_call_operand.vmem [shape: bf16[9,256,256], index: 1, kind: input, shape index: {}]
  %s2 = inlined_call_operand.vmem [shape: f32[1,256], index: 2, kind: input, shape index: {}]
  %s3 = inlined_call_operand.vmem [shape: f32[8,256], index: 3, kind: input, shape index: {}]
  %s4 = inlined_call_operand.vmem [shape: f32[8,256], index: 4, kind: output, shape index: {}]
  %s5 = sld [smem:[#allocation0]]
  $region57: #{_lambda_.34} parent=0
    _
  %s7 = ssub.s32 1, %s5
  %s8 = scalar_select 0, %s7, %s5
  loop: start=0, step=1, limit=11
  $region2: #{_lambda_.34} parent=0 // loop_pre_header
    _
  $region3: #{_lambda_.34} parent=0 // loop_header
    %s10 = sphi 0, %s14
    %p11 = scmp.ge.s32.totalorder %s10, 11
    %s17 = sphi 0, %s36
    %s18 = sphi 0, %s32
    %s19 = sphi 0, %s28
    %s20 = sphi 0, %s17
    %s21 = sphi 0, %s18
    %s22 = sphi 0, %s19
    %s23 = sphi 0, %s20
    %s24 = sphi 0, %s21
    %s25 = sphi 0, %s22
    %s41 = sphi 0, %s43
    %s44 = sphi 0, %s41
    %s45 = sphi 0, %s44
    %s61 = sphi 0, %s45
    %s69 = sphi 0, %s71
    %s72 = sphi 0, %s69
    %s73 = sphi 0, %s72
    %s89 = sphi 0, %s73
    %s95 = sphi 0, %s97
    %s98 = sphi 0, %s95
    %s99 = sphi 0, %s98
    %s115 = sphi 0, %s99
    %s123 = sphi 0, %s125
    %s126 = sphi 0, %s123
    %s127 = sphi 0, %s126
    %s143 = sphi 0, %s127
    %s151 = sphi 0, %s153
    %s154 = sphi 0, %s151
    %s155 = sphi 0, %s154
    %s171 = sphi 0, %s155
  $region4: #{_lambda_.34} parent=0 // loop_header_branch
    %13 = sbr.rel (%p11) target = $region8
  $region5: #{_lambda_.34} parent=0 // loop_body
    %s15 = ssub.s32 %s10, 1
    %s16 = ssub.s32 %s10, 2
    %s26 = sadd.s32 1, %s19
    %p27 = scmp.ge.s32.totalorder %s26, 9
    %s28 = scalar_select %p27, 0, %s26
    %s29 = sadd.s32 1, %s18
    %s30 = scalar_select %p27, %s29, %s18
    %p31 = scmp.ge.s32.totalorder %s30, 1
    %s32 = scalar_select %p31, 0, %s30
    %s33 = sadd.s32 1, %s17
    %s34 = scalar_select %p31, %s33, %s17
    %p35 = scmp.ge.s32.totalorder %s34, 1
    %s36 = scalar_select %p35, 0, %s34
    %s37 = ssub.s32 %s19, %s28
    %s38 = ssub.s32 %s17, %s36
    %s39 = sor.u32 %s37, %s38
    %p40 = scmp.eq.s32.totalorder %s39, 0
    %s42 = sadd.s32 %s41, 1
    %s43 = scalar_select %p40, %s41, %s42
    %p46 = pneg %p40
    %p47 = scmp.eq.s32.totalorder %s10, 8
    %p48 = por %p46, %p47
    %p49 = scmp.ne.s32.totalorder %s41, %s44
    %p50 = scmp.eq.s32.totalorder %s10, 0
    %p51 = por %p49, %p50
    %p52 = scmp.ne.s32.totalorder %s41, %s44
    %p53 = scmp.eq.s32.totalorder %s15, 8
    %p54 = por %p52, %p53
    %p55 = scmp.ne.s32.totalorder %s44, %s45
    %p56 = scmp.eq.s32.totalorder %s15, 0
    %p57 = por %p55, %p56
    %p58 = scmp.ne.s32.totalorder %s44, %s45
    %p59 = scmp.eq.s32.totalorder %s16, 8
    %p60 = por %p58, %p59
    %p62 = scmp.ne.s32.totalorder %s45, %s61
    %p63 = scmp.eq.s32.totalorder %s16, 0
    %p64 = por %p62, %p63
    %s65 = ssub.s32 %s19, %s28
    %s66 = ssub.s32 %s18, %s32
    %s67 = sor.u32 %s65, %s66
    %p68 = scmp.eq.s32.totalorder %s67, 0
    %s70 = sadd.s32 %s69, 1
    %s71 = scalar_select %p68, %s69, %s70
    %p74 = pneg %p68
    %p75 = scmp.eq.s32.totalorder %s10, 8
    %p76 = por %p74, %p75
    %p77 = scmp.ne.s32.totalorder %s69, %s72
    %p78 = scmp.eq.s32.totalorder %s10, 0
    %p79 = por %p77, %p78
    %p80 = scmp.ne.s32.totalorder %s69, %s72
    %p81 = scmp.eq.s32.totalorder %s15, 8
    %p82 = por %p80, %p81
    %p83 = scmp.ne.s32.totalorder %s72, %s73
    %p84 = scmp.eq.s32.totalorder %s15, 0
    %p85 = por %p83, %p84
    %p86 = scmp.ne.s32.totalorder %s72, %s73
    %p87 = scmp.eq.s32.totalorder %s16, 8
    %p88 = por %p86, %p87
    %p90 = scmp.ne.s32.totalorder %s73, %s89
    %p91 = scmp.eq.s32.totalorder %s16, 0
    %p92 = por %p90, %p91
    %s93 = ssub.s32 %s18, %s32
    %p94 = scmp.eq.s32.totalorder %s93, 0
    %s96 = sadd.s32 %s95, 1
    %s97 = scalar_select %p94, %s95, %s96
    %p100 = pneg %p94
    %p101 = scmp.eq.s32.totalorder %s10, 8
    %p102 = por %p100, %p101
    %p103 = scmp.ne.s32.totalorder %s95, %s98
    %p104 = scmp.eq.s32.totalorder %s10, 0
    %p105 = por %p103, %p104
    %p106 = scmp.ne.s32.totalorder %s95, %s98
    %p107 = scmp.eq.s32.totalorder %s15, 8
    %p108 = por %p106, %p107
    %p109 = scmp.ne.s32.totalorder %s98, %s99
    %p110 = scmp.eq.s32.totalorder %s15, 0
    %p111 = por %p109, %p110
    %p112 = scmp.ne.s32.totalorder %s98, %s99
    %p113 = scmp.eq.s32.totalorder %s16, 8
    %p114 = por %p112, %p113
    %p116 = scmp.ne.s32.totalorder %s99, %s115
    %p117 = scmp.eq.s32.totalorder %s16, 0
    %p118 = por %p116, %p117
    %s119 = ssub.s32 %s17, %s36
    %s120 = ssub.s32 %s18, %s32
    %s121 = sor.u32 %s119, %s120
    %p122 = scmp.eq.s32.totalorder %s121, 0
    %s124 = sadd.s32 %s123, 1
    %s125 = scalar_select %p122, %s123, %s124
    %p128 = pneg %p122
    %p129 = scmp.eq.s32.totalorder %s10, 8
    %p130 = por %p128, %p129
    %p131 = scmp.ne.s32.totalorder %s123, %s126
    %p132 = scmp.eq.s32.totalorder %s10, 0
    %p133 = por %p131, %p132
    %p134 = scmp.ne.s32.totalorder %s123, %s126
    %p135 = scmp.eq.s32.totalorder %s15, 8
    %p136 = por %p134, %p135
    %p137 = scmp.ne.s32.totalorder %s126, %s127
    %p138 = scmp.eq.s32.totalorder %s15, 0
    %p139 = por %p137, %p138
    %p140 = scmp.ne.s32.totalorder %s126, %s127
    %p141 = scmp.eq.s32.totalorder %s16, 8
    %p142 = por %p140, %p141
    %p144 = scmp.ne.s32.totalorder %s127, %s143
    %p145 = scmp.eq.s32.totalorder %s16, 0
    %p146 = por %p144, %p145
    %s147 = ssub.s32 %s17, %s36
    %s148 = ssub.s32 %s18, %s32
    %s149 = sor.u32 %s147, %s148
    %p150 = scmp.eq.s32.totalorder %s149, 0
    %s152 = sadd.s32 %s151, 1
    %s153 = scalar_select %p150, %s151, %s152
    %p156 = pneg %p150
    %p157 = scmp.eq.s32.totalorder %s10, 8
    %p158 = por %p156, %p157
    %p159 = scmp.ne.s32.totalorder %s151, %s154
    %p160 = scmp.eq.s32.totalorder %s10, 0
    %p161 = por %p159, %p160
    %p162 = scmp.ne.s32.totalorder %s151, %s154
    %p163 = scmp.eq.s32.totalorder %s15, 8
    %p164 = por %p162, %p163
    %p165 = scmp.ne.s32.totalorder %s154, %s155
    %p166 = scmp.eq.s32.totalorder %s15, 0
    %p167 = por %p165, %p166
    %p168 = scmp.ne.s32.totalorder %s154, %s155
    %p169 = scmp.eq.s32.totalorder %s16, 8
    %p170 = por %p168, %p169
    %p172 = scmp.ne.s32.totalorder %s155, %s171
    %p173 = scmp.eq.s32.totalorder %s16, 0
    %p174 = por %p172, %p173
    %p175 = scmp.le.s32.totalorder 1, %s10
    %p176 = scmp.lt.s32.totalorder %s10, 10
    %p177 = pnand %p175, %p176
    %p178 = pneg %p177
    // Predicated region
    $region9: #{_lambda_.34} parent=5 // pred_check
      _
    $region10: #{_lambda_.34} parent=5 // pred_check_branch
      %180 = sbr.rel (%p177) target = $region12
    $region11: #{_lambda_.34} parent=5 // pred_region
      %s181 = ssub.s32 %s10, 1
      // Predicated region
      $region13: #{_lambda_.34} parent=11 // pred_check
        %p182 = pneg %p111
      $region14: #{_lambda_.34} parent=11 // pred_check_branch
        %184 = sbr.rel (%p182) target = $region16
      $region15: #{_lambda_.34} parent=11 // pred_region
        %s185 = smul.u32 2, %s21
        %p186 = scmp.lt.s32.totalorder %s185, 1
        %s187 = scalar_select %p186, %s185, 1
        %s188 = scalar_lea.vmem %s2, %s187
        %s189 = smul.u32 2, %s21
      $region16: #{_lambda_.34} parent=11 // pred_fallthru
        _
      // Predicated region
      $region17: #{_lambda_.34} parent=11 // pred_check
        %p190 = pneg %p139
      $region18: #{_lambda_.34} parent=11 // pred_check_branch
        %192 = sbr.rel (%p190) target = $region20
      $region19: #{_lambda_.34} parent=11 // pred_region
        %s193 = smul.u32 2, %s21
        %p194 = scmp.lt.s32.totalorder %s20, 0
        %s195 = scalar_select %p194, %s20, 0
        %p196 = scmp.lt.s32.totalorder %s193, 1
        %s197 = scalar_select %p196, %s193, 1
        %s198 = smul.addr %s195, 2
        %s199 = sadd.s32 %s197, %s198
        %s200 = smul.addr %s199, 8
        %s201 = scalar_lea.vmem %s3, %s200
        %s202 = smul.u32 2, %s21
      $region20: #{_lambda_.34} parent=11 // pred_fallthru
        _
    $region12: #{_lambda_.34} parent=5 // pred_fallthru
      _
    %p203 = scmp.lt.s32.totalorder %s10, 9
    // Predicated region
    $region21: #{_lambda_.34} parent=5 // pred_check
      %p204 = pneg %p203
    $region22: #{_lambda_.34} parent=5 // pred_check_branch
      %206 = sbr.rel (%p204) target = $region24
    $region23: #{_lambda_.34} parent=5 // pred_region
      // Predicated region
      $region25: #{_lambda_.34} parent=23 // pred_check
        %p207 = pneg %p51
      $region26: #{_lambda_.34} parent=23 // pred_check_branch
        %209 = sbr.rel (%p207) target = $region28
      $region27: #{_lambda_.34} parent=23 // pred_region
        %p210 = scmp.lt.s32.totalorder %s19, 8
        %s211 = scalar_select %p210, %s19, 8
        %p212 = scmp.lt.s32.totalorder %s17, 0
        %s213 = scalar_select %p212, %s17, 0
        %s214 = smul.addr %s213, 2
        %s215 = smul.addr %s211, 2
        %s216 = sadd.s32 %s214, %s215
        %s217 = smul.addr %s216, 4
        %s218 = scalar_lea.vmem %s0, %s217
      $region28: #{_lambda_.34} parent=23 // pred_fallthru
        _
      // Predicated region
      $region29: #{_lambda_.34} parent=23 // pred_check
        %p219 = pneg %p79
      $region30: #{_lambda_.34} parent=23 // pred_check_branch
        %221 = sbr.rel (%p219) target = $region32
      $region31: #{_lambda_.34} parent=23 // pred_region
        %s222 = smul.u32 2, %s18
        %p223 = scmp.lt.s32.totalorder %s19, 8
        %s224 = scalar_select %p223, %s19, 8
        %p225 = scmp.lt.s32.totalorder %s222, 1
        %s226 = scalar_select %p225, %s222, 1
        %s227 = smul.addr %s224, 64
        %s228 = sadd.s32 %s226, %s227
        %s229 = smul.addr %s228, 4
        %s230 = scalar_lea.vmem %s1, %s229
        %s231 = smul.u32 2, %s18
      $region32: #{_lambda_.34} parent=23 // pred_fallthru
        _
    $region24: #{_lambda_.34} parent=5 // pred_fallthru
      _
    %p232 = scmp.le.s32.totalorder 1, %s10
    %p233 = scmp.lt.s32.totalorder %s10, 10
    %p234 = pnand %p232, %p233
    %p235 = pneg %p234
    // Predicated region
    $region33: #{_lambda_.34} parent=5 // pred_check
      _
    $region34: #{_lambda_.34} parent=5 // pred_check_branch
      %237 = sbr.rel (%p234) target = $region36
    $region35: #{_lambda_.34} parent=5 // pred_region
      %s238 = ssub.s32 %s10, 1
      %p239 = scmp.lt.s32.totalorder %s22, 8
      %s240 = scalar_select %p239, %s22, 8
      %p241 = scmp.lt.s32.totalorder %s20, 0
      %s242 = scalar_select %p241, %s20, 0
      %s243 = smul.addr %s242, 2
      %s244 = smul.addr %s240, 2
      %s245 = sadd.s32 %s243, %s244
      %s246 = smul.addr %s245, 4
      %s247 = scalar_lea.vmem %s0, %s246
      %p248 = pneg %p57
      %p249 = pneg %p54
      %s250 = smul.u32 2, %s21
      %p251 = scmp.lt.s32.totalorder %s22, 8
      %s252 = scalar_select %p251, %s22, 8
      %p253 = scmp.lt.s32.totalorder %s250, 1
      %s254 = scalar_select %p253, %s250, 1
      %s255 = smul.addr %s252, 64
      %s256 = sadd.s32 %s254, %s255
      %s257 = smul.addr %s256, 4
      %s258 = scalar_lea.vmem %s1, %s257
      %p259 = pneg %p85
      %p260 = pneg %p82
      %s261 = smul.u32 2, %s21
      %p262 = scmp.lt.s32.totalorder %s261, 1
      %s263 = scalar_select %p262, %s261, 1
      %s264 = scalar_lea.vmem %s2, %s263
      %p265 = pneg %p111
      %p266 = pneg %p108
      %s267 = smul.u32 2, %s21
      %p268 = scmp.lt.s32.totalorder %s20, 0
      %s269 = scalar_select %p268, %s20, 0
      %p270 = scmp.lt.s32.totalorder %s267, 1
      %s271 = scalar_select %p270, %s267, 1
      %s272 = smul.addr %s269, 2
      %s273 = sadd.s32 %s271, %s272
      %s274 = smul.addr %s273, 8
      %s275 = scalar_lea.vmem %s3, %s274
      %p276 = pneg %p139
      %p277 = pneg %p136
      %p278 = pneg %p167
      %p279 = pneg %p164
      %s280 = smul.u32 2, %s21
      %p281 = scmp.lt.s32.totalorder %s20, 0
      %s282 = scalar_select %p281, %s20, 0
      %p283 = scmp.lt.s32.totalorder %s280, 1
      %s284 = scalar_select %p283, %s280, 1
      %s285 = smul.addr %s282, 2
      %s286 = sadd.s32 %s284, %s285
      %s287 = smul.addr %s286, 8
      %s288 = scalar_lea.vmem %s4, %s287
      %p289 = scmp.lt.s32.totalorder %s22, 8
      %s290 = scalar_select %p289, %s22, 8
      %p291 = scmp.lt.s32.totalorder %s20, 0
      %s292 = scalar_select %p291, %s20, 0
      %s293 = smul.addr %s292, 2
      %s294 = smul.addr %s290, 2
      %s295 = sadd.s32 %s293, %s294
      %s296 = smul.addr %s295, 4
      %s297 = scalar_lea.vmem %s0, %s296
      %s298 = smul.u32 2, %s21
      %p299 = scmp.lt.s32.totalorder %s22, 8
      %s300 = scalar_select %p299, %s22, 8
      %p301 = scmp.lt.s32.totalorder %s298, 1
      %s302 = scalar_select %p301, %s298, 1
      %s303 = smul.addr %s300, 64
      %s304 = sadd.s32 %s302, %s303
      %s305 = smul.addr %s304, 4
      %s306 = scalar_lea.vmem %s1, %s305
      %s307 = smul.u32 2, %s21
      %s308 = smul.u32 2, %s21
      %p309 = scmp.lt.s32.totalorder %s308, 1
      %s310 = scalar_select %p309, %s308, 1
      %s311 = scalar_lea.vmem %s2, %s310
      %s312 = smul.u32 2, %s21
      %s313 = smul.u32 2, %s21
      %p314 = scmp.lt.s32.totalorder %s20, 0
      %s315 = scalar_select %p314, %s20, 0
      %p316 = scmp.lt.s32.totalorder %s313, 1
      %s317 = scalar_select %p316, %s313, 1
      %s318 = smul.addr %s315, 2
      %s319 = sadd.s32 %s317, %s318
      %s320 = smul.addr %s319, 8
      %s321 = scalar_lea.vmem %s3, %s320
      %s322 = smul.u32 2, %s21
      %s323 = smul.u32 2, %s21
      %p324 = scmp.lt.s32.totalorder %s20, 0
      %s325 = scalar_select %p324, %s20, 0
      %p326 = scmp.lt.s32.totalorder %s323, 1
      %s327 = scalar_select %p326, %s323, 1
      %s328 = smul.addr %s325, 2
      %s329 = sadd.s32 %s327, %s328
      %s330 = smul.addr %s329, 8
      %s331 = scalar_lea.vmem %s4, %s330
      %s332 = smul.u32 2, %s21
      %p333 = scmp.eq.s32.totalorder %s22, 0
      // Predicated region
      $region37: #{_lambda_.34} parent=35 // pred_check
        %p334 = pneg %p333
      $region38: #{_lambda_.34} parent=35 // pred_check_branch
        %336 = sbr.rel (%p334) target = $region40
      $region39: #{_lambda_.34} parent=35 // pred_region
        %337 = vst [vmem:[#allocation2] sm:$0xff] 0.0
        %338 = vst [vmem:[#allocation2 + $0x8] sm:$0xff] 0.0
      $region40: #{_lambda_.34} parent=35 // pred_fallthru
        _
      %v339 = vld [vmem:[#allocation2] sm:$0xff]
      %v340 = vld [vmem:[#allocation2 + $0x8] sm:$0xff]
      %v341 = vld [vmem:[%s297] sm:$0xff]
      %v342 = vld [vmem:[%s306] sm:$0xff]
      %v343 = vld [vmem:[%s306 + $0x8] sm:$0xff]
      %v344 = vld [vmem:[%s306 + $0x10] sm:$0xff]
      %v345 = vld [vmem:[%s306 + $0x18] sm:$0xff]
      %v346 = vld [vmem:[%s306 + $0x20] sm:$0xff]
      %v347 = vld [vmem:[%s306 + $0x28] sm:$0xff]
      %v348 = vld [vmem:[%s306 + $0x30] sm:$0xff]
      %v349 = vld [vmem:[%s306 + $0x38] sm:$0xff]
      %v350 = vld [vmem:[%s306 + $0x40] sm:$0xff]
      %v351 = vld [vmem:[%s306 + $0x48] sm:$0xff]
      %v352 = vld [vmem:[%s306 + $0x50] sm:$0xff]
      %v353 = vld [vmem:[%s306 + $0x58] sm:$0xff]
      %v354 = vld [vmem:[%s306 + $0x60] sm:$0xff]
      %v355 = vld [vmem:[%s306 + $0x68] sm:$0xff]
      %v356 = vld [vmem:[%s306 + $0x70] sm:$0xff]
      %v357 = vld [vmem:[%s306 + $0x78] sm:$0xff]
      %v358 = vld [vmem:[%s306 + $0x80] sm:$0xff]
      %v359 = vld [vmem:[%s306 + $0x88] sm:$0xff]
      %v360 = vld [vmem:[%s306 + $0x90] sm:$0xff]
      %v361 = vld [vmem:[%s306 + $0x98] sm:$0xff]
      %v362 = vld [vmem:[%s306 + $0xa0] sm:$0xff]
      %v363 = vld [vmem:[%s306 + $0xa8] sm:$0xff]
      %v364 = vld [vmem:[%s306 + $0xb0] sm:$0xff]
      %v365 = vld [vmem:[%s306 + $0xb8] sm:$0xff]
      %v366 = vld [vmem:[%s306 + $0xc0] sm:$0xff]
      %v367 = vld [vmem:[%s306 + $0xc8] sm:$0xff]
      %v368 = vld [vmem:[%s306 + $0xd0] sm:$0xff]
      %v369 = vld [vmem:[%s306 + $0xd8] sm:$0xff]
      %v370 = vld [vmem:[%s306 + $0xe0] sm:$0xff]
      %v371 = vld [vmem:[%s306 + $0xe8] sm:$0xff]
      %v372 = vld [vmem:[%s306 + $0xf0] sm:$0xff]
      %v373 = vld [vmem:[%s306 + $0xf8] sm:$0xff]
      %v375 = vunpack.c.l.b16 %v341
      %v376 = vunpack.c.h.b16 %v341
      %v377 = vpack.c.b16 %v375, %v375
      %v378 = vpack.c.b16 %v376, %v376
      %v413 = vunpack.c.l.b16 %v342
      %v414 = vunpack.c.h.b16 %v342
      %v415 = vunpack.c.l.b16 %v343
      %v416 = vunpack.c.h.b16 %v343
      %v417 = vunpack.c.l.b16 %v344
      %v418 = vunpack.c.h.b16 %v344
      %v419 = vunpack.c.l.b16 %v345
      %v420 = vunpack.c.h.b16 %v345
      %v421 = vunpack.c.l.b16 %v346
      %v422 = vunpack.c.h.b16 %v346
      %v423 = vunpack.c.l.b16 %v347
      %v424 = vunpack.c.h.b16 %v347
      %v425 = vunpack.c.l.b16 %v348
      %v426 = vunpack.c.h.b16 %v348
      %v427 = vunpack.c.l.b16 %v349
      %v428 = vunpack.c.h.b16 %v349
      %v429 = vunpack.c.l.b16 %v350
      %v430 = vunpack.c.h.b16 %v350
      %v431 = vunpack.c.l.b16 %v351
      %v432 = vunpack.c.h.b16 %v351
      %v433 = vunpack.c.l.b16 %v352
      %v434 = vunpack.c.h.b16 %v352
      %v435 = vunpack.c.l.b16 %v353
      %v436 = vunpack.c.h.b16 %v353
      %v437 = vunpack.c.l.b16 %v354
      %v438 = vunpack.c.h.b16 %v354
      %v439 = vunpack.c.l.b16 %v355
      %v440 = vunpack.c.h.b16 %v355
      %v441 = vunpack.c.l.b16 %v356
      %v442 = vunpack.c.h.b16 %v356
      %v443 = vunpack.c.l.b16 %v357
      %v444 = vunpack.c.h.b16 %v357
      %v445 = vunpack.c.l.b16 %v358
      %v446 = vunpack.c.h.b16 %v358
      %v447 = vunpack.c.l.b16 %v359
      %v448 = vunpack.c.h.b16 %v359
      %v449 = vunpack.c.l.b16 %v360
      %v450 = vunpack.c.h.b16 %v360
      %v451 = vunpack.c.l.b16 %v361
      %v452 = vunpack.c.h.b16 %v361
      %v453 = vunpack.c.l.b16 %v362
      %v454 = vunpack.c.h.b16 %v362
      %v455 = vunpack.c.l.b16 %v363
      %v456 = vunpack.c.h.b16 %v363
      %v457 = vunpack.c.l.b16 %v364
      %v458 = vunpack.c.h.b16 %v364
      %v459 = vunpack.c.l.b16 %v365
      %v460 = vunpack.c.h.b16 %v365
      %v461 = vunpack.c.l.b16 %v366
      %v462 = vunpack.c.h.b16 %v366
      %v463 = vunpack.c.l.b16 %v367
      %v464 = vunpack.c.h.b16 %v367
      %v465 = vunpack.c.l.b16 %v368
      %v466 = vunpack.c.h.b16 %v368
      %v467 = vunpack.c.l.b16 %v369
      %v468 = vunpack.c.h.b16 %v369
      %v469 = vunpack.c.l.b16 %v370
      %v470 = vunpack.c.h.b16 %v370
      %v471 = vunpack.c.l.b16 %v371
      %v472 = vunpack.c.h.b16 %v371
      %v473 = vunpack.c.l.b16 %v372
      %v474 = vunpack.c.h.b16 %v372
      %v475 = vunpack.c.l.b16 %v373
      %v476 = vunpack.c.h.b16 %v373
      %v477 = vpack.c.b16 %v415, %v413
      %v478 = vpack.c.b16 %v416, %v414
      %v479 = vpack.c.b16 %v419, %v417
      %v480 = vpack.c.b16 %v420, %v418
      %v481 = vpack.c.b16 %v423, %v421
      %v482 = vpack.c.b16 %v424, %v422
      %v483 = vpack.c.b16 %v427, %v425
      %v484 = vpack.c.b16 %v428, %v426
      %v485 = vpack.c.b16 %v431, %v429
      %v486 = vpack.c.b16 %v432, %v430
      %v487 = vpack.c.b16 %v435, %v433
      %v488 = vpack.c.b16 %v436, %v434
      %v489 = vpack.c.b16 %v439, %v437
      %v490 = vpack.c.b16 %v440, %v438
      %v491 = vpack.c.b16 %v443, %v441
      %v492 = vpack.c.b16 %v444, %v442
      %v493 = vpack.c.b16 %v447, %v445
      %v494 = vpack.c.b16 %v448, %v446
      %v495 = vpack.c.b16 %v451, %v449
      %v496 = vpack.c.b16 %v452, %v450
      %v497 = vpack.c.b16 %v455, %v453
      %v498 = vpack.c.b16 %v456, %v454
      %v499 = vpack.c.b16 %v459, %v457
      %v500 = vpack.c.b16 %v460, %v458
      %v501 = vpack.c.b16 %v463, %v461
      %v502 = vpack.c.b16 %v464, %v462
      %v503 = vpack.c.b16 %v467, %v465
      %v504 = vpack.c.b16 %v468, %v466
      %v505 = vpack.c.b16 %v471, %v469
      %v506 = vpack.c.b16 %v472, %v470
      %v507 = vpack.c.b16 %v475, %v473
      %v508 = vpack.c.b16 %v476, %v474
      %541 = vmatprep.subr.bf16.mxu0 %v478
      %542 = vmatpush1.bf16.msra.mxu0 %v477
      %543 = vmatprep.subr.bf16.mxu0 %v480
      %544 = vmatpush1.bf16.msra.mxu0 %v479
      %545 = vmatprep.subr.bf16.mxu0 %v482
      %546 = vmatpush1.bf16.msra.mxu0 %v481
      %547 = vmatprep.subr.bf16.mxu0 %v484
      %548 = vmatpush1.bf16.msra.mxu0 %v483
      %549 = vmatprep.subr.bf16.mxu0 %v486
      %550 = vmatpush1.bf16.msra.mxu0 %v485
      %551 = vmatprep.subr.bf16.mxu0 %v488
      %552 = vmatpush1.bf16.msra.mxu0 %v487
      %553 = vmatprep.subr.bf16.mxu0 %v490
      %554 = vmatpush1.bf16.msra.mxu0 %v489
      %555 = vmatprep.subr.bf16.mxu0 %v492
      %556 = vmatpush1.bf16.msra.mxu0 %v491
      %557 = vmatprep.subr.bf16.mxu0 %v494
      %558 = vmatpush1.bf16.msra.mxu0 %v493
      %559 = vmatprep.subr.bf16.mxu0 %v496
      %560 = vmatpush1.bf16.msra.mxu0 %v495
      %561 = vmatprep.subr.bf16.mxu0 %v498
      %562 = vmatpush1.bf16.msra.mxu0 %v497
      %563 = vmatprep.subr.bf16.mxu0 %v500
      %564 = vmatpush1.bf16.msra.mxu0 %v499
      %565 = vmatprep.subr.bf16.mxu0 %v502
      %566 = vmatpush1.bf16.msra.mxu0 %v501
      %567 = vmatprep.subr.bf16.mxu0 %v504
      %568 = vmatpush1.bf16.msra.mxu0 %v503
      %569 = vmatprep.subr.bf16.mxu0 %v506
      %570 = vmatpush1.bf16.msra.mxu0 %v505
      %571 = vmatprep.subr.bf16.mxu0 %v508
      %572 = vmatpush1.bf16.msra.mxu0 %v507
      %573 = vmatprep.mubr.bf16.mxu0 %v378
      %574 = vmatmul.mubr.bf16.gmra.mrb[0].mxu0 %v377
      %v575 = vpop.f32.mrb[0].mxu0
      %v576 = vadd.f32 0.0, %v575
      %v577 = vpop.f32.mrb[0].mxu0
      %v578 = vadd.f32 0.0, %v577
      %v579 = vpop.f32.mrb[0].mxu0
      %v580 = vpop.f32.mrb[0].mxu0
      %581 = vdwg.mxu0
      %v582 = vadd.f32 %v339, %v576
      %v583 = vadd.f32 %v340, %v578
      %584 = vst [vmem:[#allocation2] sm:$0xff] %v582
      %585 = vst [vmem:[#allocation2 + $0x8] sm:$0xff] %v583
      %p586 = scmp.eq.s32.totalorder %s22, 8
      // Predicated region
      $region41: #{_lambda_.34} parent=35 // pred_check
        %p587 = pneg %p586
      $region42: #{_lambda_.34} parent=35 // pred_check_branch
        %589 = sbr.rel (%p587) target = $region44
      $region43: #{_lambda_.34} parent=35 // pred_region
        %v590 = vld [vmem:[#allocation2] sm:$0xff]
        %v591 = vld [vmem:[#allocation2 + $0x8] sm:$0xff]
        %v592 = vld [vmem:[%s311] sm:$0x3]
        %v594 = vlaneseq
        %v595 = vshrl.u32 %v594, 7
        %v596 = vsub.s32 0, %v595
        %v597 = vrot.slane %v592, %v596
        %v598 = vlaneseq
        %v599 = vshrl.u32 %v598, 7
        %v600 = vsub.s32 1, %v599
        %v601 = vrot.slane %v592, %v600
        %v604 = vadd.f32 %v590, %v597
        %v605 = vadd.f32 %v591, %v601
        %v606 = vld [vmem:[%s321] sm:$0xff]
        %v607 = vld [vmem:[%s321 + $0x8] sm:$0xff]
        %v608 = vadd.f32 %v604, %v606
        %v609 = vadd.f32 %v605, %v607
        %v610 = vmax.f32 %v608, 0.0
        %v611 = vmax.f32 %v609, 0.0
        %612 = vst [vmem:[%s331] sm:$0xff] %v610
        %613 = vst [vmem:[%s331 + $0x8] sm:$0xff] %v611
      $region44: #{_lambda_.34} parent=35 // pred_fallthru
        _
      %s614 = smul.u32 2, %s21
      %p615 = scmp.lt.s32.totalorder %s20, 0
      %s616 = scalar_select %p615, %s20, 0
      %p617 = scmp.lt.s32.totalorder %s614, 1
      %s618 = scalar_select %p617, %s614, 1
      %s619 = smul.addr %s616, 2
      %s620 = sadd.s32 %s618, %s619
      %s621 = smul.addr %s620, 8
      %s622 = scalar_lea.vmem %s4, %s621
      // Predicated region
      $region45: #{_lambda_.34} parent=35 // pred_check
        %p623 = pneg %p164
      $region46: #{_lambda_.34} parent=35 // pred_check_branch
        %625 = sbr.rel (%p623) target = $region48
      $region47: #{_lambda_.34} parent=35 // pred_region
        %s626 = smul.u32 2, %s21
      $region48: #{_lambda_.34} parent=35 // pred_fallthru
        _
      // Predicated region
      $region49: #{_lambda_.34} parent=35 // pred_check
        %p627 = pneg %p164
      $region50: #{_lambda_.34} parent=35 // pred_check_branch
        %629 = sbr.rel (%p627) target = $region52
      $region51: #{_lambda_.34} parent=35 // pred_region
        %s630 = smul.u32 2, %s21
        %p631 = scmp.lt.s32.totalorder %s20, 0
        %s632 = scalar_select %p631, %s20, 0
        %p633 = scmp.lt.s32.totalorder %s630, 1
        %s634 = scalar_select %p633, %s630, 1
        %s635 = smul.addr %s632, 2
        %s636 = sadd.s32 %s634, %s635
        %s637 = smul.addr %s636, 8
        %s638 = scalar_lea.vmem %s4, %s637
      $region52: #{_lambda_.34} parent=35 // pred_fallthru
        _
    $region36: #{_lambda_.34} parent=5 // pred_fallthru
      _
    %p639 = scmp.le.s32.totalorder 2, %s10
    // Predicated region
    $region53: #{_lambda_.34} parent=5 // pred_check
      %p640 = pneg %p639
    $region54: #{_lambda_.34} parent=5 // pred_check_branch
      %642 = sbr.rel (%p640) target = $region56
    $region55: #{_lambda_.34} parent=5 // pred_region
      %s643 = ssub.s32 %s10, 2
    $region56: #{_lambda_.34} parent=5 // pred_fallthru
      _
  $region6: #{_lambda_.34} parent=0 // loop_footer
    %s14 = sadd.s32 1, %s10
  $region7: #{_lambda_.34} parent=0 // loop_footer_branch
    %9 = sbr.rel target = $region3
  $region8: #{_lambda_.34} parent=0 // loop_exit
    _

// kernel: _lambda_.35
$region0: #{_lambda_.35}
  #allocation0 [shape = 'u32[]', space=smem, size = 0x4, offset = 0x4, fixed_abs, tag = 'smem constant byte address 0x4 - core index']
  #allocation1 [shape = 'u32[144,128]{1,0:T(1,128)}', space=vmem, size = 0x12000, scoped, tag = 'internal scratch']
  #allocation2 [shape = 'f32[8,256]{1,0:T(8,128)}', space=vmem, size = 0x2000, scoped, tag = 'scratch operand']
  %s0 = inlined_call_operand.vmem [shape: bf16[9,8,256], index: 0, kind: input, shape index: {}]
  %s1 = inlined_call_operand.vmem [shape: bf16[9,256,256], index: 1, kind: input, shape index: {}]
  %s2 = inlined_call_operand.vmem [shape: f32[1,256], index: 2, kind: input, shape index: {}]
  %s3 = inlined_call_operand.vmem [shape: f32[8,256], index: 3, kind: output, shape index: {}]
  %s4 = sld [smem:[#allocation0]]
  $region53: #{_lambda_.35} parent=0
    _
  %s6 = ssub.s32 1, %s4
  %s7 = scalar_select 0, %s6, %s4
  loop: start=0, step=1, limit=11
  $region2: #{_lambda_.35} parent=0 // loop_pre_header
    _
  $region3: #{_lambda_.35} parent=0 // loop_header
    %s9 = sphi 0, %s13
    %p10 = scmp.ge.s32.totalorder %s9, 11
    %s16 = sphi 0, %s35
    %s17 = sphi 0, %s31
    %s18 = sphi 0, %s27
    %s19 = sphi 0, %s16
    %s20 = sphi 0, %s17
    %s21 = sphi 0, %s18
    %s22 = sphi 0, %s19
    %s23 = sphi 0, %s20
    %s24 = sphi 0, %s21
    %s40 = sphi 0, %s42
    %s43 = sphi 0, %s40
    %s44 = sphi 0, %s43
    %s60 = sphi 0, %s44
    %s68 = sphi 0, %s70
    %s71 = sphi 0, %s68
    %s72 = sphi 0, %s71
    %s88 = sphi 0, %s72
    %s94 = sphi 0, %s96
    %s97 = sphi 0, %s94
    %s98 = sphi 0, %s97
    %s114 = sphi 0, %s98
    %s122 = sphi 0, %s124
    %s125 = sphi 0, %s122
    %s126 = sphi 0, %s125
    %s142 = sphi 0, %s126
  $region4: #{_lambda_.35} parent=0 // loop_header_branch
    %12 = sbr.rel (%p10) target = $region8
  $region5: #{_lambda_.35} parent=0 // loop_body
    %s14 = ssub.s32 %s9, 1
    %s15 = ssub.s32 %s9, 2
    %s25 = sadd.s32 1, %s18
    %p26 = scmp.ge.s32.totalorder %s25, 9
    %s27 = scalar_select %p26, 0, %s25
    %s28 = sadd.s32 1, %s17
    %s29 = scalar_select %p26, %s28, %s17
    %p30 = scmp.ge.s32.totalorder %s29, 1
    %s31 = scalar_select %p30, 0, %s29
    %s32 = sadd.s32 1, %s16
    %s33 = scalar_select %p30, %s32, %s16
    %p34 = scmp.ge.s32.totalorder %s33, 1
    %s35 = scalar_select %p34, 0, %s33
    %s36 = ssub.s32 %s18, %s27
    %s37 = ssub.s32 %s16, %s35
    %s38 = sor.u32 %s36, %s37
    %p39 = scmp.eq.s32.totalorder %s38, 0
    %s41 = sadd.s32 %s40, 1
    %s42 = scalar_select %p39, %s40, %s41
    %p45 = pneg %p39
    %p46 = scmp.eq.s32.totalorder %s9, 8
    %p47 = por %p45, %p46
    %p48 = scmp.ne.s32.totalorder %s40, %s43
    %p49 = scmp.eq.s32.totalorder %s9, 0
    %p50 = por %p48, %p49
    %p51 = scmp.ne.s32.totalorder %s40, %s43
    %p52 = scmp.eq.s32.totalorder %s14, 8
    %p53 = por %p51, %p52
    %p54 = scmp.ne.s32.totalorder %s43, %s44
    %p55 = scmp.eq.s32.totalorder %s14, 0
    %p56 = por %p54, %p55
    %p57 = scmp.ne.s32.totalorder %s43, %s44
    %p58 = scmp.eq.s32.totalorder %s15, 8
    %p59 = por %p57, %p58
    %p61 = scmp.ne.s32.totalorder %s44, %s60
    %p62 = scmp.eq.s32.totalorder %s15, 0
    %p63 = por %p61, %p62
    %s64 = ssub.s32 %s18, %s27
    %s65 = ssub.s32 %s17, %s31
    %s66 = sor.u32 %s64, %s65
    %p67 = scmp.eq.s32.totalorder %s66, 0
    %s69 = sadd.s32 %s68, 1
    %s70 = scalar_select %p67, %s68, %s69
    %p73 = pneg %p67
    %p74 = scmp.eq.s32.totalorder %s9, 8
    %p75 = por %p73, %p74
    %p76 = scmp.ne.s32.totalorder %s68, %s71
    %p77 = scmp.eq.s32.totalorder %s9, 0
    %p78 = por %p76, %p77
    %p79 = scmp.ne.s32.totalorder %s68, %s71
    %p80 = scmp.eq.s32.totalorder %s14, 8
    %p81 = por %p79, %p80
    %p82 = scmp.ne.s32.totalorder %s71, %s72
    %p83 = scmp.eq.s32.totalorder %s14, 0
    %p84 = por %p82, %p83
    %p85 = scmp.ne.s32.totalorder %s71, %s72
    %p86 = scmp.eq.s32.totalorder %s15, 8
    %p87 = por %p85, %p86
    %p89 = scmp.ne.s32.totalorder %s72, %s88
    %p90 = scmp.eq.s32.totalorder %s15, 0
    %p91 = por %p89, %p90
    %s92 = ssub.s32 %s17, %s31
    %p93 = scmp.eq.s32.totalorder %s92, 0
    %s95 = sadd.s32 %s94, 1
    %s96 = scalar_select %p93, %s94, %s95
    %p99 = pneg %p93
    %p100 = scmp.eq.s32.totalorder %s9, 8
    %p101 = por %p99, %p100
    %p102 = scmp.ne.s32.totalorder %s94, %s97
    %p103 = scmp.eq.s32.totalorder %s9, 0
    %p104 = por %p102, %p103
    %p105 = scmp.ne.s32.totalorder %s94, %s97
    %p106 = scmp.eq.s32.totalorder %s14, 8
    %p107 = por %p105, %p106
    %p108 = scmp.ne.s32.totalorder %s97, %s98
    %p109 = scmp.eq.s32.totalorder %s14, 0
    %p110 = por %p108, %p109
    %p111 = scmp.ne.s32.totalorder %s97, %s98
    %p112 = scmp.eq.s32.totalorder %s15, 8
    %p113 = por %p111, %p112
    %p115 = scmp.ne.s32.totalorder %s98, %s114
    %p116 = scmp.eq.s32.totalorder %s15, 0
    %p117 = por %p115, %p116
    %s118 = ssub.s32 %s16, %s35
    %s119 = ssub.s32 %s17, %s31
    %s120 = sor.u32 %s118, %s119
    %p121 = scmp.eq.s32.totalorder %s120, 0
    %s123 = sadd.s32 %s122, 1
    %s124 = scalar_select %p121, %s122, %s123
    %p127 = pneg %p121
    %p128 = scmp.eq.s32.totalorder %s9, 8
    %p129 = por %p127, %p128
    %p130 = scmp.ne.s32.totalorder %s122, %s125
    %p131 = scmp.eq.s32.totalorder %s9, 0
    %p132 = por %p130, %p131
    %p133 = scmp.ne.s32.totalorder %s122, %s125
    %p134 = scmp.eq.s32.totalorder %s14, 8
    %p135 = por %p133, %p134
    %p136 = scmp.ne.s32.totalorder %s125, %s126
    %p137 = scmp.eq.s32.totalorder %s14, 0
    %p138 = por %p136, %p137
    %p139 = scmp.ne.s32.totalorder %s125, %s126
    %p140 = scmp.eq.s32.totalorder %s15, 8
    %p141 = por %p139, %p140
    %p143 = scmp.ne.s32.totalorder %s126, %s142
    %p144 = scmp.eq.s32.totalorder %s15, 0
    %p145 = por %p143, %p144
    %p146 = scmp.le.s32.totalorder 1, %s9
    %p147 = scmp.lt.s32.totalorder %s9, 10
    %p148 = pnand %p146, %p147
    %p149 = pneg %p148
    // Predicated region
    $region9: #{_lambda_.35} parent=5 // pred_check
      _
    $region10: #{_lambda_.35} parent=5 // pred_check_branch
      %151 = sbr.rel (%p148) target = $region12
    $region11: #{_lambda_.35} parent=5 // pred_region
      %s152 = ssub.s32 %s9, 1
      // Predicated region
      $region13: #{_lambda_.35} parent=11 // pred_check
        %p153 = pneg %p110
      $region14: #{_lambda_.35} parent=11 // pred_check_branch
        %155 = sbr.rel (%p153) target = $region16
      $region15: #{_lambda_.35} parent=11 // pred_region
        %s156 = smul.u32 2, %s20
        %p157 = scmp.lt.s32.totalorder %s156, 1
        %s158 = scalar_select %p157, %s156, 1
        %s159 = scalar_lea.vmem %s2, %s158
        %s160 = smul.u32 2, %s20
      $region16: #{_lambda_.35} parent=11 // pred_fallthru
        _
    $region12: #{_lambda_.35} parent=5 // pred_fallthru
      _
    %p161 = scmp.lt.s32.totalorder %s9, 9
    // Predicated region
    $region17: #{_lambda_.35} parent=5 // pred_check
      %p162 = pneg %p161
    $region18: #{_lambda_.35} parent=5 // pred_check_branch
      %164 = sbr.rel (%p162) target = $region20
    $region19: #{_lambda_.35} parent=5 // pred_region
      // Predicated region
      $region21: #{_lambda_.35} parent=19 // pred_check
        %p165 = pneg %p50
      $region22: #{_lambda_.35} parent=19 // pred_check_branch
        %167 = sbr.rel (%p165) target = $region24
      $region23: #{_lambda_.35} parent=19 // pred_region
        %p168 = scmp.lt.s32.totalorder %s18, 8
        %s169 = scalar_select %p168, %s18, 8
        %p170 = scmp.lt.s32.totalorder %s16, 0
        %s171 = scalar_select %p170, %s16, 0
        %s172 = smul.addr %s171, 2
        %s173 = smul.addr %s169, 2
        %s174 = sadd.s32 %s172, %s173
        %s175 = smul.addr %s174, 4
        %s176 = scalar_lea.vmem %s0, %s175
      $region24: #{_lambda_.35} parent=19 // pred_fallthru
        _
      // Predicated region
      $region25: #{_lambda_.35} parent=19 // pred_check
        %p177 = pneg %p78
      $region26: #{_lambda_.35} parent=19 // pred_check_branch
        %179 = sbr.rel (%p177) target = $region28
      $region27: #{_lambda_.35} parent=19 // pred_region
        %s180 = smul.u32 2, %s17
        %p181 = scmp.lt.s32.totalorder %s18, 8
        %s182 = scalar_select %p181, %s18, 8
        %p183 = scmp.lt.s32.totalorder %s180, 1
        %s184 = scalar_select %p183, %s180, 1
        %s185 = smul.addr %s182, 64
        %s186 = sadd.s32 %s184, %s185
        %s187 = smul.addr %s186, 4
        %s188 = scalar_lea.vmem %s1, %s187
        %s189 = smul.u32 2, %s17
      $region28: #{_lambda_.35} parent=19 // pred_fallthru
        _
    $region20: #{_lambda_.35} parent=5 // pred_fallthru
      _
    %p190 = scmp.le.s32.totalorder 1, %s9
    %p191 = scmp.lt.s32.totalorder %s9, 10
    %p192 = pnand %p190, %p191
    %p193 = pneg %p192
    // Predicated region
    $region29: #{_lambda_.35} parent=5 // pred_check
      _
    $region30: #{_lambda_.35} parent=5 // pred_check_branch
      %195 = sbr.rel (%p192) target = $region32
    $region31: #{_lambda_.35} parent=5 // pred_region
      %s196 = ssub.s32 %s9, 1
      %p197 = scmp.lt.s32.totalorder %s21, 8
      %s198 = scalar_select %p197, %s21, 8
      %p199 = scmp.lt.s32.totalorder %s19, 0
      %s200 = scalar_select %p199, %s19, 0
      %s201 = smul.addr %s200, 2
      %s202 = smul.addr %s198, 2
      %s203 = sadd.s32 %s201, %s202
      %s204 = smul.addr %s203, 4
      %s205 = scalar_lea.vmem %s0, %s204
      %p206 = pneg %p56
      %p207 = pneg %p53
      %s208 = smul.u32 2, %s20
      %p209 = scmp.lt.s32.totalorder %s21, 8
      %s210 = scalar_select %p209, %s21, 8
      %p211 = scmp.lt.s32.totalorder %s208, 1
      %s212 = scalar_select %p211, %s208, 1
      %s213 = smul.addr %s210, 64
      %s214 = sadd.s32 %s212, %s213
      %s215 = smul.addr %s214, 4
      %s216 = scalar_lea.vmem %s1, %s215
      %p217 = pneg %p84
      %p218 = pneg %p81
      %s219 = smul.u32 2, %s20
      %p220 = scmp.lt.s32.totalorder %s219, 1
      %s221 = scalar_select %p220, %s219, 1
      %s222 = scalar_lea.vmem %s2, %s221
      %p223 = pneg %p110
      %p224 = pneg %p107
      %p225 = pneg %p138
      %p226 = pneg %p135
      %s227 = smul.u32 2, %s20
      %p228 = scmp.lt.s32.totalorder %s19, 0
      %s229 = scalar_select %p228, %s19, 0
      %p230 = scmp.lt.s32.totalorder %s227, 1
      %s231 = scalar_select %p230, %s227, 1
      %s232 = smul.addr %s229, 2
      %s233 = sadd.s32 %s231, %s232
      %s234 = smul.addr %s233, 8
      %s235 = scalar_lea.vmem %s3, %s234
      %p236 = scmp.lt.s32.totalorder %s21, 8
      %s237 = scalar_select %p236, %s21, 8
      %p238 = scmp.lt.s32.totalorder %s19, 0
      %s239 = scalar_select %p238, %s19, 0
      %s240 = smul.addr %s239, 2
      %s241 = smul.addr %s237, 2
      %s242 = sadd.s32 %s240, %s241
      %s243 = smul.addr %s242, 4
      %s244 = scalar_lea.vmem %s0, %s243
      %s245 = smul.u32 2, %s20
      %p246 = scmp.lt.s32.totalorder %s21, 8
      %s247 = scalar_select %p246, %s21, 8
      %p248 = scmp.lt.s32.totalorder %s245, 1
      %s249 = scalar_select %p248, %s245, 1
      %s250 = smul.addr %s247, 64
      %s251 = sadd.s32 %s249, %s250
      %s252 = smul.addr %s251, 4
      %s253 = scalar_lea.vmem %s1, %s252
      %s254 = smul.u32 2, %s20
      %s255 = smul.u32 2, %s20
      %p256 = scmp.lt.s32.totalorder %s255, 1
      %s257 = scalar_select %p256, %s255, 1
      %s258 = scalar_lea.vmem %s2, %s257
      %s259 = smul.u32 2, %s20
      %s260 = smul.u32 2, %s20
      %p261 = scmp.lt.s32.totalorder %s19, 0
      %s262 = scalar_select %p261, %s19, 0
      %p263 = scmp.lt.s32.totalorder %s260, 1
      %s264 = scalar_select %p263, %s260, 1
      %s265 = smul.addr %s262, 2
      %s266 = sadd.s32 %s264, %s265
      %s267 = smul.addr %s266, 8
      %s268 = scalar_lea.vmem %s3, %s267
      %s269 = smul.u32 2, %s20
      %p270 = scmp.eq.s32.totalorder %s21, 0
      // Predicated region
      $region33: #{_lambda_.35} parent=31 // pred_check
        %p271 = pneg %p270
      $region34: #{_lambda_.35} parent=31 // pred_check_branch
        %273 = sbr.rel (%p271) target = $region36
      $region35: #{_lambda_.35} parent=31 // pred_region
        %274 = vst [vmem:[#allocation2] sm:$0xff] 0.0
        %275 = vst [vmem:[#allocation2 + $0x8] sm:$0xff] 0.0
      $region36: #{_lambda_.35} parent=31 // pred_fallthru
        _
      %v276 = vld [vmem:[#allocation2] sm:$0xff]
      %v277 = vld [vmem:[#allocation2 + $0x8] sm:$0xff]
      %v278 = vld [vmem:[%s244] sm:$0xff]
      %v279 = vld [vmem:[%s253] sm:$0xff]
      %v280 = vld [vmem:[%s253 + $0x8] sm:$0xff]
      %v281 = vld [vmem:[%s253 + $0x10] sm:$0xff]
      %v282 = vld [vmem:[%s253 + $0x18] sm:$0xff]
      %v283 = vld [vmem:[%s253 + $0x20] sm:$0xff]
      %v284 = vld [vmem:[%s253 + $0x28] sm:$0xff]
      %v285 = vld [vmem:[%s253 + $0x30] sm:$0xff]
      %v286 = vld [vmem:[%s253 + $0x38] sm:$0xff]
      %v287 = vld [vmem:[%s253 + $0x40] sm:$0xff]
      %v288 = vld [vmem:[%s253 + $0x48] sm:$0xff]
      %v289 = vld [vmem:[%s253 + $0x50] sm:$0xff]
      %v290 = vld [vmem:[%s253 + $0x58] sm:$0xff]
      %v291 = vld [vmem:[%s253 + $0x60] sm:$0xff]
      %v292 = vld [vmem:[%s253 + $0x68] sm:$0xff]
      %v293 = vld [vmem:[%s253 + $0x70] sm:$0xff]
      %v294 = vld [vmem:[%s253 + $0x78] sm:$0xff]
      %v295 = vld [vmem:[%s253 + $0x80] sm:$0xff]
      %v296 = vld [vmem:[%s253 + $0x88] sm:$0xff]
      %v297 = vld [vmem:[%s253 + $0x90] sm:$0xff]
      %v298 = vld [vmem:[%s253 + $0x98] sm:$0xff]
      %v299 = vld [vmem:[%s253 + $0xa0] sm:$0xff]
      %v300 = vld [vmem:[%s253 + $0xa8] sm:$0xff]
      %v301 = vld [vmem:[%s253 + $0xb0] sm:$0xff]
      %v302 = vld [vmem:[%s253 + $0xb8] sm:$0xff]
      %v303 = vld [vmem:[%s253 + $0xc0] sm:$0xff]
      %v304 = vld [vmem:[%s253 + $0xc8] sm:$0xff]
      %v305 = vld [vmem:[%s253 + $0xd0] sm:$0xff]
      %v306 = vld [vmem:[%s253 + $0xd8] sm:$0xff]
      %v307 = vld [vmem:[%s253 + $0xe0] sm:$0xff]
      %v308 = vld [vmem:[%s253 + $0xe8] sm:$0xff]
      %v309 = vld [vmem:[%s253 + $0xf0] sm:$0xff]
      %v310 = vld [vmem:[%s253 + $0xf8] sm:$0xff]
      %v312 = vunpack.c.l.b16 %v278
      %v313 = vunpack.c.h.b16 %v278
      %v314 = vpack.c.b16 %v312, %v312
      %v315 = vpack.c.b16 %v313, %v313
      %v350 = vunpack.c.l.b16 %v279
      %v351 = vunpack.c.h.b16 %v279
      %v352 = vunpack.c.l.b16 %v280
      %v353 = vunpack.c.h.b16 %v280
      %v354 = vunpack.c.l.b16 %v281
      %v355 = vunpack.c.h.b16 %v281
      %v356 = vunpack.c.l.b16 %v282
      %v357 = vunpack.c.h.b16 %v282
      %v358 = vunpack.c.l.b16 %v283
      %v359 = vunpack.c.h.b16 %v283
      %v360 = vunpack.c.l.b16 %v284
      %v361 = vunpack.c.h.b16 %v284
      %v362 = vunpack.c.l.b16 %v285
      %v363 = vunpack.c.h.b16 %v285
      %v364 = vunpack.c.l.b16 %v286
      %v365 = vunpack.c.h.b16 %v286
      %v366 = vunpack.c.l.b16 %v287
      %v367 = vunpack.c.h.b16 %v287
      %v368 = vunpack.c.l.b16 %v288
      %v369 = vunpack.c.h.b16 %v288
      %v370 = vunpack.c.l.b16 %v289
      %v371 = vunpack.c.h.b16 %v289
      %v372 = vunpack.c.l.b16 %v290
      %v373 = vunpack.c.h.b16 %v290
      %v374 = vunpack.c.l.b16 %v291
      %v375 = vunpack.c.h.b16 %v291
      %v376 = vunpack.c.l.b16 %v292
      %v377 = vunpack.c.h.b16 %v292
      %v378 = vunpack.c.l.b16 %v293
      %v379 = vunpack.c.h.b16 %v293
      %v380 = vunpack.c.l.b16 %v294
      %v381 = vunpack.c.h.b16 %v294
      %v382 = vunpack.c.l.b16 %v295
      %v383 = vunpack.c.h.b16 %v295
      %v384 = vunpack.c.l.b16 %v296
      %v385 = vunpack.c.h.b16 %v296
      %v386 = vunpack.c.l.b16 %v297
      %v387 = vunpack.c.h.b16 %v297
      %v388 = vunpack.c.l.b16 %v298
      %v389 = vunpack.c.h.b16 %v298
      %v390 = vunpack.c.l.b16 %v299
      %v391 = vunpack.c.h.b16 %v299
      %v392 = vunpack.c.l.b16 %v300
      %v393 = vunpack.c.h.b16 %v300
      %v394 = vunpack.c.l.b16 %v301
      %v395 = vunpack.c.h.b16 %v301
      %v396 = vunpack.c.l.b16 %v302
      %v397 = vunpack.c.h.b16 %v302
      %v398 = vunpack.c.l.b16 %v303
      %v399 = vunpack.c.h.b16 %v303
      %v400 = vunpack.c.l.b16 %v304
      %v401 = vunpack.c.h.b16 %v304
      %v402 = vunpack.c.l.b16 %v305
      %v403 = vunpack.c.h.b16 %v305
      %v404 = vunpack.c.l.b16 %v306
      %v405 = vunpack.c.h.b16 %v306
      %v406 = vunpack.c.l.b16 %v307
      %v407 = vunpack.c.h.b16 %v307
      %v408 = vunpack.c.l.b16 %v308
      %v409 = vunpack.c.h.b16 %v308
      %v410 = vunpack.c.l.b16 %v309
      %v411 = vunpack.c.h.b16 %v309
      %v412 = vunpack.c.l.b16 %v310
      %v413 = vunpack.c.h.b16 %v310
      %v414 = vpack.c.b16 %v352, %v350
      %v415 = vpack.c.b16 %v353, %v351
      %v416 = vpack.c.b16 %v356, %v354
      %v417 = vpack.c.b16 %v357, %v355
      %v418 = vpack.c.b16 %v360, %v358
      %v419 = vpack.c.b16 %v361, %v359
      %v420 = vpack.c.b16 %v364, %v362
      %v421 = vpack.c.b16 %v365, %v363
      %v422 = vpack.c.b16 %v368, %v366
      %v423 = vpack.c.b16 %v369, %v367
      %v424 = vpack.c.b16 %v372, %v370
      %v425 = vpack.c.b16 %v373, %v371
      %v426 = vpack.c.b16 %v376, %v374
      %v427 = vpack.c.b16 %v377, %v375
      %v428 = vpack.c.b16 %v380, %v378
      %v429 = vpack.c.b16 %v381, %v379
      %v430 = vpack.c.b16 %v384, %v382
      %v431 = vpack.c.b16 %v385, %v383
      %v432 = vpack.c.b16 %v388, %v386
      %v433 = vpack.c.b16 %v389, %v387
      %v434 = vpack.c.b16 %v392, %v390
      %v435 = vpack.c.b16 %v393, %v391
      %v436 = vpack.c.b16 %v396, %v394
      %v437 = vpack.c.b16 %v397, %v395
      %v438 = vpack.c.b16 %v400, %v398
      %v439 = vpack.c.b16 %v401, %v399
      %v440 = vpack.c.b16 %v404, %v402
      %v441 = vpack.c.b16 %v405, %v403
      %v442 = vpack.c.b16 %v408, %v406
      %v443 = vpack.c.b16 %v409, %v407
      %v444 = vpack.c.b16 %v412, %v410
      %v445 = vpack.c.b16 %v413, %v411
      %478 = vmatprep.subr.bf16.mxu0 %v415
      %479 = vmatpush1.bf16.msra.mxu0 %v414
      %480 = vmatprep.subr.bf16.mxu0 %v417
      %481 = vmatpush1.bf16.msra.mxu0 %v416
      %482 = vmatprep.subr.bf16.mxu0 %v419
      %483 = vmatpush1.bf16.msra.mxu0 %v418
      %484 = vmatprep.subr.bf16.mxu0 %v421
      %485 = vmatpush1.bf16.msra.mxu0 %v420
      %486 = vmatprep.subr.bf16.mxu0 %v423
      %487 = vmatpush1.bf16.msra.mxu0 %v422
      %488 = vmatprep.subr.bf16.mxu0 %v425
      %489 = vmatpush1.bf16.msra.mxu0 %v424
      %490 = vmatprep.subr.bf16.mxu0 %v427
      %491 = vmatpush1.bf16.msra.mxu0 %v426
      %492 = vmatprep.subr.bf16.mxu0 %v429
      %493 = vmatpush1.bf16.msra.mxu0 %v428
      %494 = vmatprep.subr.bf16.mxu0 %v431
      %495 = vmatpush1.bf16.msra.mxu0 %v430
      %496 = vmatprep.subr.bf16.mxu0 %v433
      %497 = vmatpush1.bf16.msra.mxu0 %v432
      %498 = vmatprep.subr.bf16.mxu0 %v435
      %499 = vmatpush1.bf16.msra.mxu0 %v434
      %500 = vmatprep.subr.bf16.mxu0 %v437
      %501 = vmatpush1.bf16.msra.mxu0 %v436
      %502 = vmatprep.subr.bf16.mxu0 %v439
      %503 = vmatpush1.bf16.msra.mxu0 %v438
      %504 = vmatprep.subr.bf16.mxu0 %v441
      %505 = vmatpush1.bf16.msra.mxu0 %v440
      %506 = vmatprep.subr.bf16.mxu0 %v443
      %507 = vmatpush1.bf16.msra.mxu0 %v442
      %508 = vmatprep.subr.bf16.mxu0 %v445
      %509 = vmatpush1.bf16.msra.mxu0 %v444
      %510 = vmatprep.mubr.bf16.mxu0 %v315
      %511 = vmatmul.mubr.bf16.gmra.mrb[0].mxu0 %v314
      %v512 = vpop.f32.mrb[0].mxu0
      %v513 = vadd.f32 0.0, %v512
      %v514 = vpop.f32.mrb[0].mxu0
      %v515 = vadd.f32 0.0, %v514
      %v516 = vpop.f32.mrb[0].mxu0
      %v517 = vpop.f32.mrb[0].mxu0
      %518 = vdwg.mxu0
      %v519 = vadd.f32 %v276, %v513
      %v520 = vadd.f32 %v277, %v515
      %521 = vst [vmem:[#allocation2] sm:$0xff] %v519
      %522 = vst [vmem:[#allocation2 + $0x8] sm:$0xff] %v520
      %p523 = scmp.eq.s32.totalorder %s21, 8
      // Predicated region
      $region37: #{_lambda_.35} parent=31 // pred_check
        %p524 = pneg %p523
      $region38: #{_lambda_.35} parent=31 // pred_check_branch
        %526 = sbr.rel (%p524) target = $region40
      $region39: #{_lambda_.35} parent=31 // pred_region
        %v527 = vld [vmem:[#allocation2] sm:$0xff]
        %v528 = vld [vmem:[#allocation2 + $0x8] sm:$0xff]
        %v529 = vld [vmem:[%s258] sm:$0x3]
        %v531 = vlaneseq
        %v532 = vshrl.u32 %v531, 7
        %v533 = vsub.s32 0, %v532
        %v534 = vrot.slane %v529, %v533
        %v535 = vlaneseq
        %v536 = vshrl.u32 %v535, 7
        %v537 = vsub.s32 1, %v536
        %v538 = vrot.slane %v529, %v537
        %v541 = vadd.f32 %v527, %v534
        %v542 = vadd.f32 %v528, %v538
        %v543 = vmax.f32 %v541, 0.0
        %v544 = vmax.f32 %v542, 0.0
        %545 = vst [vmem:[%s268] sm:$0xff] %v543
        %546 = vst [vmem:[%s268 + $0x8] sm:$0xff] %v544
      $region40: #{_lambda_.35} parent=31 // pred_fallthru
        _
      %s547 = smul.u32 2, %s20
      %p548 = scmp.lt.s32.totalorder %s19, 0
      %s549 = scalar_select %p548, %s19, 0
      %p550 = scmp.lt.s32.totalorder %s547, 1
      %s551 = scalar_select %p550, %s547, 1
      %s552 = smul.addr %s549, 2
      %s553 = sadd.s32 %s551, %s552
      %s554 = smul.addr %s553, 8
      %s555 = scalar_lea.vmem %s3, %s554
      // Predicated region
      $region41: #{_lambda_.35} parent=31 // pred_check
        %p556 = pneg %p135
      $region42: #{_lambda_.35} parent=31 // pred_check_branch
        %558 = sbr.rel (%p556) target = $region44
      $region43: #{_lambda_.35} parent=31 // pred_region
        %s559 = smul.u32 2, %s20
      $region44: #{_lambda_.35} parent=31 // pred_fallthru
        _
      // Predicated region
      $region45: #{_lambda_.35} parent=31 // pred_check
        %p560 = pneg %p135
      $region46: #{_lambda_.35} parent=31 // pred_check_branch
        %562 = sbr.rel (%p560) target = $region48
      $region47: #{_lambda_.35} parent=31 // pred_region
        %s563 = smul.u32 2, %s20
        %p564 = scmp.lt.s32.totalorder %s19, 0
        %s565 = scalar_select %p564, %s19, 0
        %p566 = scmp.lt.s32.totalorder %s563, 1
        %s567 = scalar_select %p566, %s563, 1
        %s568 = smul.addr %s565, 2
        %s569 = sadd.s32 %s567, %s568
        %s570 = smul.addr %s569, 8
        %s571 = scalar_lea.vmem %s3, %s570
      $region48: #{_lambda_.35} parent=31 // pred_fallthru
        _
    $region32: #{_lambda_.35} parent=5 // pred_fallthru
      _
    %p572 = scmp.le.s32.totalorder 2, %s9
    // Predicated region
    $region49: #{_lambda_.35} parent=5 // pred_check
      %p573 = pneg %p572
    $region50: #{_lambda_.35} parent=5 // pred_check_branch
      %575 = sbr.rel (%p573) target = $region52
    $region51: #{_lambda_.35} parent=5 // pred_region
      %s576 = ssub.s32 %s9, 2
    $region52: #{_lambda_.35} parent=5 // pred_fallthru
      _
  $region6: #{_lambda_.35} parent=0 // loop_footer
    %s13 = sadd.s32 1, %s9
  $region7: #{_lambda_.35} parent=0 // loop_footer_branch
    %8 = sbr.rel target = $region3
  $region8: #{_lambda_.35} parent=0 // loop_exit
    _

// kernel: _lambda_.38
$region0: #{_lambda_.38}
  #allocation0 [shape = 'u32[]', space=smem, size = 0x4, offset = 0x4, fixed_abs, tag = 'smem constant byte address 0x4 - core index']
  #allocation1 [shape = 'u32[144,128]{1,0:T(1,128)}', space=vmem, size = 0x12000, scoped, tag = 'internal scratch']
  #allocation2 [shape = 'f32[8,256]{1,0:T(8,128)}', space=vmem, size = 0x2000, scoped, tag = 'scratch operand']
  %s0 = inlined_call_operand.vmem [shape: bf16[9,8,256], index: 0, kind: input, shape index: {}]
  %s1 = inlined_call_operand.vmem [shape: bf16[9,256,512], index: 1, kind: input, shape index: {}]
  %s2 = inlined_call_operand.vmem [shape: f32[1,512], index: 2, kind: input, shape index: {}]
  %s3 = inlined_call_operand.vmem [shape: f32[8,512], index: 3, kind: output, shape index: {}]
  %s4 = sld [smem:[#allocation0]]
  $region91: #{_lambda_.38} parent=0
    _
  %s6 = ssub.s32 1, %s4
  %s7 = scalar_select 0, %s6, %s4
  $region1: #{_lambda_.38} parent=0
    #allocation3 [shape = 'u8[262144]{0}', space=vmem, size = 0x40000, scoped, tag = 'input window, operand 1']
    loop: start=0, step=1, limit=20
    $region2: #{_lambda_.38} parent=1 // loop_pre_header
      _
    $region3: #{_lambda_.38} parent=1 // loop_header
      %s9 = sphi 0, %s13
      %p10 = scmp.ge.s32.totalorder %s9, 20
      %s16 = sphi 0, %s35
      %s17 = sphi 0, %s31
      %s18 = sphi 0, %s27
      %s19 = sphi 0, %s16
      %s20 = sphi 0, %s17
      %s21 = sphi 0, %s18
      %s22 = sphi 0, %s19
      %s23 = sphi 0, %s20
      %s24 = sphi 0, %s21
      %s40 = sphi 0, %s42
      %s43 = sphi 0, %s40
      %s44 = sphi 0, %s43
      %s60 = sphi 0, %s44
      %s68 = sphi 0, %s70
      %s71 = sphi 0, %s68
      %s72 = sphi 0, %s71
      %s88 = sphi 0, %s72
      %s94 = sphi 0, %s96
      %s97 = sphi 0, %s94
      %s98 = sphi 0, %s97
      %s114 = sphi 0, %s98
      %s122 = sphi 0, %s124
      %s125 = sphi 0, %s122
      %s126 = sphi 0, %s125
      %s142 = sphi 0, %s126
    $region4: #{_lambda_.38} parent=1 // loop_header_branch
      %12 = sbr.rel (%p10) target = $region8
    $region5: #{_lambda_.38} parent=1 // loop_body
      %s14 = ssub.s32 %s9, 1
      %s15 = ssub.s32 %s9, 2
      %s25 = sadd.s32 1, %s18
      %p26 = scmp.ge.s32.totalorder %s25, 9
      %s27 = scalar_select %p26, 0, %s25
      %s28 = sadd.s32 1, %s17
      %s29 = scalar_select %p26, %s28, %s17
      %p30 = scmp.ge.s32.totalorder %s29, 2
      %s31 = scalar_select %p30, 0, %s29
      %s32 = sadd.s32 1, %s16
      %s33 = scalar_select %p30, %s32, %s16
      %p34 = scmp.ge.s32.totalorder %s33, 1
      %s35 = scalar_select %p34, 0, %s33
      %s36 = ssub.s32 %s18, %s27
      %s37 = ssub.s32 %s16, %s35
      %s38 = sor.u32 %s36, %s37
      %p39 = scmp.eq.s32.totalorder %s38, 0
      %s41 = sadd.s32 %s40, 1
      %s42 = scalar_select %p39, %s40, %s41
      %p45 = pneg %p39
      %p46 = scmp.eq.s32.totalorder %s9, 17
      %p47 = por %p45, %p46
      %p48 = scmp.ne.s32.totalorder %s40, %s43
      %p49 = scmp.eq.s32.totalorder %s9, 0
      %p50 = por %p48, %p49
      %p51 = scmp.ne.s32.totalorder %s40, %s43
      %p52 = scmp.eq.s32.totalorder %s14, 17
      %p53 = por %p51, %p52
      %p54 = scmp.ne.s32.totalorder %s43, %s44
      %p55 = scmp.eq.s32.totalorder %s14, 0
      %p56 = por %p54, %p55
      %p57 = scmp.ne.s32.totalorder %s43, %s44
      %p58 = scmp.eq.s32.totalorder %s15, 17
      %p59 = por %p57, %p58
      %p61 = scmp.ne.s32.totalorder %s44, %s60
      %p62 = scmp.eq.s32.totalorder %s15, 0
      %p63 = por %p61, %p62
      %s64 = ssub.s32 %s18, %s27
      %s65 = ssub.s32 %s17, %s31
      %s66 = sor.u32 %s64, %s65
      %p67 = scmp.eq.s32.totalorder %s66, 0
      %s69 = sadd.s32 %s68, 1
      %s70 = scalar_select %p67, %s68, %s69
      %p73 = pneg %p67
      %p74 = scmp.eq.s32.totalorder %s9, 17
      %p75 = por %p73, %p74
      %p76 = scmp.ne.s32.totalorder %s68, %s71
      %p77 = scmp.eq.s32.totalorder %s9, 0
      %p78 = por %p76, %p77
      %p79 = scmp.ne.s32.totalorder %s68, %s71
      %p80 = scmp.eq.s32.totalorder %s14, 17
      %p81 = por %p79, %p80
      %p82 = scmp.ne.s32.totalorder %s71, %s72
      %p83 = scmp.eq.s32.totalorder %s14, 0
      %p84 = por %p82, %p83
      %p85 = scmp.ne.s32.totalorder %s71, %s72
      %p86 = scmp.eq.s32.totalorder %s15, 17
      %p87 = por %p85, %p86
      %p89 = scmp.ne.s32.totalorder %s72, %s88
      %p90 = scmp.eq.s32.totalorder %s15, 0
      %p91 = por %p89, %p90
      %s92 = ssub.s32 %s17, %s31
      %p93 = scmp.eq.s32.totalorder %s92, 0
      %s95 = sadd.s32 %s94, 1
      %s96 = scalar_select %p93, %s94, %s95
      %p99 = pneg %p93
      %p100 = scmp.eq.s32.totalorder %s9, 17
      %p101 = por %p99, %p100
      %p102 = scmp.ne.s32.totalorder %s94, %s97
      %p103 = scmp.eq.s32.totalorder %s9, 0
      %p104 = por %p102, %p103
      %p105 = scmp.ne.s32.totalorder %s94, %s97
      %p106 = scmp.eq.s32.totalorder %s14, 17
      %p107 = por %p105, %p106
      %p108 = scmp.ne.s32.totalorder %s97, %s98
      %p109 = scmp.eq.s32.totalorder %s14, 0
      %p110 = por %p108, %p109
      %p111 = scmp.ne.s32.totalorder %s97, %s98
      %p112 = scmp.eq.s32.totalorder %s15, 17
      %p113 = por %p111, %p112
      %p115 = scmp.ne.s32.totalorder %s98, %s114
      %p116 = scmp.eq.s32.totalorder %s15, 0
      %p117 = por %p115, %p116
      %s118 = ssub.s32 %s16, %s35
      %s119 = ssub.s32 %s17, %s31
      %s120 = sor.u32 %s118, %s119
      %p121 = scmp.eq.s32.totalorder %s120, 0
      %s123 = sadd.s32 %s122, 1
      %s124 = scalar_select %p121, %s122, %s123
      %p127 = pneg %p121
      %p128 = scmp.eq.s32.totalorder %s9, 17
      %p129 = por %p127, %p128
      %p130 = scmp.ne.s32.totalorder %s122, %s125
      %p131 = scmp.eq.s32.totalorder %s9, 0
      %p132 = por %p130, %p131
      %p133 = scmp.ne.s32.totalorder %s122, %s125
      %p134 = scmp.eq.s32.totalorder %s14, 17
      %p135 = por %p133, %p134
      %p136 = scmp.ne.s32.totalorder %s125, %s126
      %p137 = scmp.eq.s32.totalorder %s14, 0
      %p138 = por %p136, %p137
      %p139 = scmp.ne.s32.totalorder %s125, %s126
      %p140 = scmp.eq.s32.totalorder %s15, 17
      %p141 = por %p139, %p140
      %p143 = scmp.ne.s32.totalorder %s126, %s142
      %p144 = scmp.eq.s32.totalorder %s15, 0
      %p145 = por %p143, %p144
      %p146 = scmp.le.s32.totalorder 1, %s9
      %p147 = scmp.lt.s32.totalorder %s9, 19
      %p148 = pnand %p146, %p147
      %p149 = pneg %p148
      // Predicated region
      $region9: #{_lambda_.38} parent=5 // pred_check
        _
      $region10: #{_lambda_.38} parent=5 // pred_check_branch
        %151 = sbr.rel (%p148) target = $region12
      $region11: #{_lambda_.38} parent=5 // pred_region
        %s152 = ssub.s32 %s9, 1
      $region12: #{_lambda_.38} parent=5 // pred_fallthru
        _
      %p153 = scmp.lt.s32.totalorder %s9, 18
      // Predicated region
      $region13: #{_lambda_.38} parent=5 // pred_check
        %p154 = pneg %p153
      $region14: #{_lambda_.38} parent=5 // pred_check_branch
        %156 = sbr.rel (%p154) target = $region16
      $region15: #{_lambda_.38} parent=5 // pred_region
        // Predicated region
        $region17: #{_lambda_.38} parent=15 // pred_check
          %p157 = pneg %p50
        $region18: #{_lambda_.38} parent=15 // pred_check_branch
          %159 = sbr.rel (%p157) target = $region20
        $region19: #{_lambda_.38} parent=15 // pred_region
          %p160 = scmp.lt.s32.totalorder %s18, 8
          %s161 = scalar_select %p160, %s18, 8
          %p162 = scmp.lt.s32.totalorder %s16, 0
          %s163 = scalar_select %p162, %s16, 0
          %s164 = smul.addr %s163, 2
          %s165 = smul.addr %s161, 2
          %s166 = sadd.s32 %s164, %s165
          %s167 = smul.addr %s166, 4
          %s168 = scalar_lea.vmem %s0, %s167
        $region20: #{_lambda_.38} parent=15 // pred_fallthru
          _
        // Predicated region
        $region21: #{_lambda_.38} parent=15 // pred_check
          %p169 = pneg %p78
        $region22: #{_lambda_.38} parent=15 // pred_check_branch
          %171 = sbr.rel (%p169) target = $region24
        $region23: #{_lambda_.38} parent=15 // pred_region
          %s172 = sand.u32 %s68, 1
          %s173 = sand.u32 %s68, 1
          %s174 = smul.addr %s173, 256
          %s175 = scalar_lea.vmem [#allocation3], %s174
          %s176 = smul.u32 2, %s17
          %s177 = smul.addr %s18, 128
          %s178 = sadd.s32 %s176, %s177
          %s179 = smul.addr %s178, 4
          %s180 = scalar_lea.vmem %s1, %s179
          // Predicated region
          $region25: #{_lambda_.38} parent=23 // pred_check
            _
          $region26: #{_lambda_.38} parent=23 // pred_check_branch
            %182 = sbr.rel (0) target = $region28
          $region27: #{_lambda_.38} parent=23 // pred_region
            // Predicated region
            $region29: #{_lambda_.38} parent=27 // pred_check
              _
            $region30: #{_lambda_.38} parent=27 // pred_check_branch
              %184 = sbr.rel (0) target = $region32
            $region31: #{_lambda_.38} parent=27 // pred_region
              // Predicated region
              $region44: #{_lambda_.38} parent=31 // pred_check
                _
              $region45: #{_lambda_.38} parent=31 // pred_check_branch
                %261 = sbr.rel (0) target = $region47
              $region46: #{_lambda_.38} parent=31 // pred_region
                loop: start=0, step=1, limit=1
                $region48: #{_lambda_.38} parent=46 // loop_pre_header
                  _
                $region49: #{_lambda_.38} parent=46 // loop_header
                  %s263 = sphi 0, %s267
                  %p264 = scmp.ge.s32.totalorder %s263, 1
                  %s268 = sphi %s180, %s180
                  %s269 = sphi %s175, %s175
                $region50: #{_lambda_.38} parent=46 // loop_header_branch
                  %266 = sbr.rel (%p264) target = $region54
                $region51: #{_lambda_.38} parent=46 // loop_body
                  %v270 = vld [vmem:[%s268] sm:$0xff]
                  %271 = vst [vmem:[%s269] sm:$0xff] %v270
                  %v272 = vld [vmem:[%s268 + $0x10] sm:$0xff]
                  %273 = vst [vmem:[%s269 + $0x8] sm:$0xff] %v272
                  %v274 = vld [vmem:[%s268 + $0x20] sm:$0xff]
                  %275 = vst [vmem:[%s269 + $0x10] sm:$0xff] %v274
                  %v276 = vld [vmem:[%s268 + $0x30] sm:$0xff]
                  %277 = vst [vmem:[%s269 + $0x18] sm:$0xff] %v276
                  %v278 = vld [vmem:[%s268 + $0x40] sm:$0xff]
                  %279 = vst [vmem:[%s269 + $0x20] sm:$0xff] %v278
                  %v280 = vld [vmem:[%s268 + $0x50] sm:$0xff]
                  %281 = vst [vmem:[%s269 + $0x28] sm:$0xff] %v280
                  %v282 = vld [vmem:[%s268 + $0x60] sm:$0xff]
                  %283 = vst [vmem:[%s269 + $0x30] sm:$0xff] %v282
                  %v284 = vld [vmem:[%s268 + $0x70] sm:$0xff]
                  %285 = vst [vmem:[%s269 + $0x38] sm:$0xff] %v284
                  %v286 = vld [vmem:[%s268 + $0x80] sm:$0xff]
                  %287 = vst [vmem:[%s269 + $0x40] sm:$0xff] %v286
                  %v288 = vld [vmem:[%s268 + $0x90] sm:$0xff]
                  %289 = vst [vmem:[%s269 + $0x48] sm:$0xff] %v288
                  %v290 = vld [vmem:[%s268 + $0xa0] sm:$0xff]
                  %291 = vst [vmem:[%s269 + $0x50] sm:$0xff] %v290
                  %v292 = vld [vmem:[%s268 + $0xb0] sm:$0xff]
                  %293 = vst [vmem:[%s269 + $0x58] sm:$0xff] %v292
                  %v294 = vld [vmem:[%s268 + $0xc0] sm:$0xff]
                  %295 = vst [vmem:[%s269 + $0x60] sm:$0xff] %v294
                  %v296 = vld [vmem:[%s268 + $0xd0] sm:$0xff]
                  %297 = vst [vmem:[%s269 + $0x68] sm:$0xff] %v296
                  %v298 = vld [vmem:[%s268 + $0xe0] sm:$0xff]
                  %299 = vst [vmem:[%s269 + $0x70] sm:$0xff] %v298
                  %v300 = vld [vmem:[%s268 + $0xf0] sm:$0xff]
                  %301 = vst [vmem:[%s269 + $0x78] sm:$0xff] %v300
                  %v302 = vld [vmem:[%s268 + $0x100] sm:$0xff]
                  %303 = vst [vmem:[%s269 + $0x80] sm:$0xff] %v302
                  %v304 = vld [vmem:[%s268 + $0x110] sm:$0xff]
                  %305 = vst [vmem:[%s269 + $0x88] sm:$0xff] %v304
                  %v306 = vld [vmem:[%s268 + $0x120] sm:$0xff]
                  %307 = vst [vmem:[%s269 + $0x90] sm:$0xff] %v306
                  %v308 = vld [vmem:[%s268 + $0x130] sm:$0xff]
                  %309 = vst [vmem:[%s269 + $0x98] sm:$0xff] %v308
                  %v310 = vld [vmem:[%s268 + $0x140] sm:$0xff]
                  %311 = vst [vmem:[%s269 + $0xa0] sm:$0xff] %v310
                  %v312 = vld [vmem:[%s268 + $0x150] sm:$0xff]
                  %313 = vst [vmem:[%s269 + $0xa8] sm:$0xff] %v312
                  %v314 = vld [vmem:[%s268 + $0x160] sm:$0xff]
                  %315 = vst [vmem:[%s269 + $0xb0] sm:$0xff] %v314
                  %v316 = vld [vmem:[%s268 + $0x170] sm:$0xff]
                  %317 = vst [vmem:[%s269 + $0xb8] sm:$0xff] %v316
                  %v318 = vld [vmem:[%s268 + $0x180] sm:$0xff]
                  %319 = vst [vmem:[%s269 + $0xc0] sm:$0xff] %v318
                  %v320 = vld [vmem:[%s268 + $0x190] sm:$0xff]
                  %321 = vst [vmem:[%s269 + $0xc8] sm:$0xff] %v320
                  %v322 = vld [vmem:[%s268 + $0x1a0] sm:$0xff]
                  %323 = vst [vmem:[%s269 + $0xd0] sm:$0xff] %v322
                  %v324 = vld [vmem:[%s268 + $0x1b0] sm:$0xff]
                  %325 = vst [vmem:[%s269 + $0xd8] sm:$0xff] %v324
                  %v326 = vld [vmem:[%s268 + $0x1c0] sm:$0xff]
                  %327 = vst [vmem:[%s269 + $0xe0] sm:$0xff] %v326
                  %v328 = vld [vmem:[%s268 + $0x1d0] sm:$0xff]
                  %329 = vst [vmem:[%s269 + $0xe8] sm:$0xff] %v328
                  %v330 = vld [vmem:[%s268 + $0x1e0] sm:$0xff]
                  %331 = vst [vmem:[%s269 + $0xf0] sm:$0xff] %v330
                  %v332 = vld [vmem:[%s268 + $0x1f0] sm:$0xff]
                  %333 = vst [vmem:[%s269 + $0xf8] sm:$0xff] %v332
                $region52: #{_lambda_.38} parent=46 // loop_footer
                  %s267 = sadd.s32 1, %s263
                $region53: #{_lambda_.38} parent=46 // loop_footer_branch
                  %262 = sbr.rel target = $region49
                $region54: #{_lambda_.38} parent=46 // loop_exit
                  _
              $region47: #{_lambda_.38} parent=31 // pred_fallthru
                _
              // Predicated region
              $region55: #{_lambda_.38} parent=31 // pred_check
                _
              $region56: #{_lambda_.38} parent=31 // pred_check_branch
                %335 = sbr.rel target = $region58
              $region57: #{_lambda_.38} parent=31 // pred_region
                _
              $region58: #{_lambda_.38} parent=31 // pred_fallthru
                _
            $region32: #{_lambda_.38} parent=27 // pred_fallthru
              _
            // Predicated region
            $region33: #{_lambda_.38} parent=27 // pred_check
              _
            $region34: #{_lambda_.38} parent=27 // pred_check_branch
              %186 = sbr.rel target = $region36
            $region35: #{_lambda_.38} parent=27 // pred_region
              loop: start=0, step=1, limit=1
              $region37: #{_lambda_.38} parent=35 // loop_pre_header
                _
              $region38: #{_lambda_.38} parent=35 // loop_header
                %s189 = sphi 0, %s193
                %p190 = scmp.ge.s32.totalorder %s189, 1
                %s194 = sphi %s180, %s180
                %s195 = sphi %s175, %s175
              $region39: #{_lambda_.38} parent=35 // loop_header_branch
                %192 = sbr.rel (%p190) target = $region43
              $region40: #{_lambda_.38} parent=35 // loop_body
                %v196 = vld [vmem:[%s194] sm:$0xff]
                %197 = vst [vmem:[%s195] sm:$0xff] %v196
                %v198 = vld [vmem:[%s194 + $0x10] sm:$0xff]
                %199 = vst [vmem:[%s195 + $0x8] sm:$0xff] %v198
                %v200 = vld [vmem:[%s194 + $0x20] sm:$0xff]
                %201 = vst [vmem:[%s195 + $0x10] sm:$0xff] %v200
                %v202 = vld [vmem:[%s194 + $0x30] sm:$0xff]
                %203 = vst [vmem:[%s195 + $0x18] sm:$0xff] %v202
                %v204 = vld [vmem:[%s194 + $0x40] sm:$0xff]
                %205 = vst [vmem:[%s195 + $0x20] sm:$0xff] %v204
                %v206 = vld [vmem:[%s194 + $0x50] sm:$0xff]
                %207 = vst [vmem:[%s195 + $0x28] sm:$0xff] %v206
                %v208 = vld [vmem:[%s194 + $0x60] sm:$0xff]
                %209 = vst [vmem:[%s195 + $0x30] sm:$0xff] %v208
                %v210 = vld [vmem:[%s194 + $0x70] sm:$0xff]
                %211 = vst [vmem:[%s195 + $0x38] sm:$0xff] %v210
                %v212 = vld [vmem:[%s194 + $0x80] sm:$0xff]
                %213 = vst [vmem:[%s195 + $0x40] sm:$0xff] %v212
                %v214 = vld [vmem:[%s194 + $0x90] sm:$0xff]
                %215 = vst [vmem:[%s195 + $0x48] sm:$0xff] %v214
                %v216 = vld [vmem:[%s194 + $0xa0] sm:$0xff]
                %217 = vst [vmem:[%s195 + $0x50] sm:$0xff] %v216
                %v218 = vld [vmem:[%s194 + $0xb0] sm:$0xff]
                %219 = vst [vmem:[%s195 + $0x58] sm:$0xff] %v218
                %v220 = vld [vmem:[%s194 + $0xc0] sm:$0xff]
                %221 = vst [vmem:[%s195 + $0x60] sm:$0xff] %v220
                %v222 = vld [vmem:[%s194 + $0xd0] sm:$0xff]
                %223 = vst [vmem:[%s195 + $0x68] sm:$0xff] %v222
                %v224 = vld [vmem:[%s194 + $0xe0] sm:$0xff]
                %225 = vst [vmem:[%s195 + $0x70] sm:$0xff] %v224
                %v226 = vld [vmem:[%s194 + $0xf0] sm:$0xff]
                %227 = vst [vmem:[%s195 + $0x78] sm:$0xff] %v226
                %v228 = vld [vmem:[%s194 + $0x100] sm:$0xff]
                %229 = vst [vmem:[%s195 + $0x80] sm:$0xff] %v228
                %v230 = vld [vmem:[%s194 + $0x110] sm:$0xff]
                %231 = vst [vmem:[%s195 + $0x88] sm:$0xff] %v230
                %v232 = vld [vmem:[%s194 + $0x120] sm:$0xff]
                %233 = vst [vmem:[%s195 + $0x90] sm:$0xff] %v232
                %v234 = vld [vmem:[%s194 + $0x130] sm:$0xff]
                %235 = vst [vmem:[%s195 + $0x98] sm:$0xff] %v234
                %v236 = vld [vmem:[%s194 + $0x140] sm:$0xff]
                %237 = vst [vmem:[%s195 + $0xa0] sm:$0xff] %v236
                %v238 = vld [vmem:[%s194 + $0x150] sm:$0xff]
                %239 = vst [vmem:[%s195 + $0xa8] sm:$0xff] %v238
                %v240 = vld [vmem:[%s194 + $0x160] sm:$0xff]
                %241 = vst [vmem:[%s195 + $0xb0] sm:$0xff] %v240
                %v242 = vld [vmem:[%s194 + $0x170] sm:$0xff]
                %243 = vst [vmem:[%s195 + $0xb8] sm:$0xff] %v242
                %v244 = vld [vmem:[%s194 + $0x180] sm:$0xff]
                %245 = vst [vmem:[%s195 + $0xc0] sm:$0xff] %v244
                %v246 = vld [vmem:[%s194 + $0x190] sm:$0xff]
                %247 = vst [vmem:[%s195 + $0xc8] sm:$0xff] %v246
                %v248 = vld [vmem:[%s194 + $0x1a0] sm:$0xff]
                %249 = vst [vmem:[%s195 + $0xd0] sm:$0xff] %v248
                %v250 = vld [vmem:[%s194 + $0x1b0] sm:$0xff]
                %251 = vst [vmem:[%s195 + $0xd8] sm:$0xff] %v250
                %v252 = vld [vmem:[%s194 + $0x1c0] sm:$0xff]
                %253 = vst [vmem:[%s195 + $0xe0] sm:$0xff] %v252
                %v254 = vld [vmem:[%s194 + $0x1d0] sm:$0xff]
                %255 = vst [vmem:[%s195 + $0xe8] sm:$0xff] %v254
                %v256 = vld [vmem:[%s194 + $0x1e0] sm:$0xff]
                %257 = vst [vmem:[%s195 + $0xf0] sm:$0xff] %v256
                %v258 = vld [vmem:[%s194 + $0x1f0] sm:$0xff]
                %259 = vst [vmem:[%s195 + $0xf8] sm:$0xff] %v258
              $region41: #{_lambda_.38} parent=35 // loop_footer
                %s193 = sadd.s32 1, %s189
              $region42: #{_lambda_.38} parent=35 // loop_footer_branch
                %188 = sbr.rel target = $region38
              $region43: #{_lambda_.38} parent=35 // loop_exit
                _
            $region36: #{_lambda_.38} parent=27 // pred_fallthru
              _
          $region28: #{_lambda_.38} parent=23 // pred_fallthru
            _
          %336 = vnop
        $region24: #{_lambda_.38} parent=15 // pred_fallthru
          _
        // Predicated region
        $region59: #{_lambda_.38} parent=15 // pred_check
          %p337 = pneg %p104
        $region60: #{_lambda_.38} parent=15 // pred_check_branch
          %339 = sbr.rel (%p337) target = $region62
        $region61: #{_lambda_.38} parent=15 // pred_region
          %s340 = smul.u32 2, %s17
          %p341 = scmp.lt.s32.totalorder %s340, 3
          %s342 = scalar_select %p341, %s340, 3
          %s343 = scalar_lea.vmem %s2, %s342
          %s344 = smul.u32 2, %s17
        $region62: #{_lambda_.38} parent=15 // pred_fallthru
          _
      $region16: #{_lambda_.38} parent=5 // pred_fallthru
        _
      %p345 = scmp.le.s32.totalorder 1, %s9
      %p346 = scmp.lt.s32.totalorder %s9, 19
      %p347 = pnand %p345, %p346
      %p348 = pneg %p347
      // Predicated region
      $region63: #{_lambda_.38} parent=5 // pred_check
        _
      $region64: #{_lambda_.38} parent=5 // pred_check_branch
        %350 = sbr.rel (%p347) target = $region66
      $region65: #{_lambda_.38} parent=5 // pred_region
        %s351 = ssub.s32 %s9, 1
        %s352 = sand.u32 %s71, 1
        %s353 = sand.u32 %s71, 1
        %s354 = smul.addr %s353, 256
        %s355 = scalar_lea.vmem [#allocation3], %s354
        // Predicated region
        $region67: #{_lambda_.38} parent=65 // pred_check
          %p356 = pneg %p84
        $region68: #{_lambda_.38} parent=65 // pred_check_branch
          %358 = sbr.rel (%p356) target = $region70
        $region69: #{_lambda_.38} parent=65 // pred_region
          _
        $region70: #{_lambda_.38} parent=65 // pred_fallthru
          _
        %p359 = scmp.lt.s32.totalorder %s21, 8
        %s360 = scalar_select %p359, %s21, 8
        %p361 = scmp.lt.s32.totalorder %s19, 0
        %s362 = scalar_select %p361, %s19, 0
        %s363 = smul.addr %s362, 2
        %s364 = smul.addr %s360, 2
        %s365 = sadd.s32 %s363, %s364
        %s366 = smul.addr %s365, 4
        %s367 = scalar_lea.vmem %s0, %s366
        %p368 = pneg %p56
        %p369 = pneg %p53
        %s370 = sand.u32 %s71, 1
        %s371 = sand.u32 %s71, 1
        %s372 = smul.addr %s371, 256
        %s373 = scalar_lea.vmem [#allocation3], %s372
        %p374 = pneg %p84
        %p375 = pneg %p81
        %s376 = smul.u32 2, %s20
        %p377 = scmp.lt.s32.totalorder %s376, 3
        %s378 = scalar_select %p377, %s376, 3
        %s379 = scalar_lea.vmem %s2, %s378
        %p380 = pneg %p110
        %p381 = pneg %p107
        %p382 = pneg %p138
        %p383 = pneg %p135
        %s384 = smul.u32 2, %s20
        %p385 = scmp.lt.s32.totalorder %s19, 0
        %s386 = scalar_select %p385, %s19, 0
        %p387 = scmp.lt.s32.totalorder %s384, 3
        %s388 = scalar_select %p387, %s384, 3
        %s389 = smul.addr %s386, 4
        %s390 = sadd.s32 %s388, %s389
        %s391 = smul.addr %s390, 8
        %s392 = scalar_lea.vmem %s3, %s391
        %p393 = scmp.lt.s32.totalorder %s21, 8
        %s394 = scalar_select %p393, %s21, 8
        %p395 = scmp.lt.s32.totalorder %s19, 0
        %s396 = scalar_select %p395, %s19, 0
        %s397 = smul.addr %s396, 2
        %s398 = smul.addr %s394, 2
        %s399 = sadd.s32 %s397, %s398
        %s400 = smul.addr %s399, 4
        %s401 = scalar_lea.vmem %s0, %s400
        %s402 = smul.u32 2, %s20
        %s403 = smul.u32 2, %s20
        %p404 = scmp.lt.s32.totalorder %s403, 3
        %s405 = scalar_select %p404, %s403, 3
        %s406 = scalar_lea.vmem %s2, %s405
        %s407 = smul.u32 2, %s20
        %s408 = smul.u32 2, %s20
        %p409 = scmp.lt.s32.totalorder %s19, 0
        %s410 = scalar_select %p409, %s19, 0
        %p411 = scmp.lt.s32.totalorder %s408, 3
        %s412 = scalar_select %p411, %s408, 3
        %s413 = smul.addr %s410, 4
        %s414 = sadd.s32 %s412, %s413
        %s415 = smul.addr %s414, 8
        %s416 = scalar_lea.vmem %s3, %s415
        %s417 = smul.u32 2, %s20
        %p418 = scmp.eq.s32.totalorder %s21, 0
        // Predicated region
        $region71: #{_lambda_.38} parent=65 // pred_check
          %p419 = pneg %p418
        $region72: #{_lambda_.38} parent=65 // pred_check_branch
          %421 = sbr.rel (%p419) target = $region74
        $region73: #{_lambda_.38} parent=65 // pred_region
          %422 = vst [vmem:[#allocation2] sm:$0xff] 0.0
          %423 = vst [vmem:[#allocation2 + $0x8] sm:$0xff] 0.0
        $region74: #{_lambda_.38} parent=65 // pred_fallthru
          _
        %v424 = vld [vmem:[#allocation2] sm:$0xff]
        %v425 = vld [vmem:[#allocation2 + $0x8] sm:$0xff]
        %v426 = vld [vmem:[%s401] sm:$0xff]
        %v427 = vld [vmem:[%s355] sm:$0xff]
        %v428 = vld [vmem:[%s355 + $0x8] sm:$0xff]
        %v429 = vld [vmem:[%s355 + $0x10] sm:$0xff]
        %v430 = vld [vmem:[%s355 + $0x18] sm:$0xff]
        %v431 = vld [vmem:[%s355 + $0x20] sm:$0xff]
        %v432 = vld [vmem:[%s355 + $0x28] sm:$0xff]
        %v433 = vld [vmem:[%s355 + $0x30] sm:$0xff]
        %v434 = vld [vmem:[%s355 + $0x38] sm:$0xff]
        %v435 = vld [vmem:[%s355 + $0x40] sm:$0xff]
        %v436 = vld [vmem:[%s355 + $0x48] sm:$0xff]
        %v437 = vld [vmem:[%s355 + $0x50] sm:$0xff]
        %v438 = vld [vmem:[%s355 + $0x58] sm:$0xff]
        %v439 = vld [vmem:[%s355 + $0x60] sm:$0xff]
        %v440 = vld [vmem:[%s355 + $0x68] sm:$0xff]
        %v441 = vld [vmem:[%s355 + $0x70] sm:$0xff]
        %v442 = vld [vmem:[%s355 + $0x78] sm:$0xff]
        %v443 = vld [vmem:[%s355 + $0x80] sm:$0xff]
        %v444 = vld [vmem:[%s355 + $0x88] sm:$0xff]
        %v445 = vld [vmem:[%s355 + $0x90] sm:$0xff]
        %v446 = vld [vmem:[%s355 + $0x98] sm:$0xff]
        %v447 = vld [vmem:[%s355 + $0xa0] sm:$0xff]
        %v448 = vld [vmem:[%s355 + $0xa8] sm:$0xff]
        %v449 = vld [vmem:[%s355 + $0xb0] sm:$0xff]
        %v450 = vld [vmem:[%s355 + $0xb8] sm:$0xff]
        %v451 = vld [vmem:[%s355 + $0xc0] sm:$0xff]
        %v452 = vld [vmem:[%s355 + $0xc8] sm:$0xff]
        %v453 = vld [vmem:[%s355 + $0xd0] sm:$0xff]
        %v454 = vld [vmem:[%s355 + $0xd8] sm:$0xff]
        %v455 = vld [vmem:[%s355 + $0xe0] sm:$0xff]
        %v456 = vld [vmem:[%s355 + $0xe8] sm:$0xff]
        %v457 = vld [vmem:[%s355 + $0xf0] sm:$0xff]
        %v458 = vld [vmem:[%s355 + $0xf8] sm:$0xff]
        %v460 = vunpack.c.l.b16 %v426
        %v461 = vunpack.c.h.b16 %v426
        %v462 = vpack.c.b16 %v460, %v460
        %v463 = vpack.c.b16 %v461, %v461
        %v498 = vunpack.c.l.b16 %v427
        %v499 = vunpack.c.h.b16 %v427
        %v500 = vunpack.c.l.b16 %v428
        %v501 = vunpack.c.h.b16 %v428
        %v502 = vunpack.c.l.b16 %v429
        %v503 = vunpack.c.h.b16 %v429
        %v504 = vunpack.c.l.b16 %v430
        %v505 = vunpack.c.h.b16 %v430
        %v506 = vunpack.c.l.b16 %v431
        %v507 = vunpack.c.h.b16 %v431
        %v508 = vunpack.c.l.b16 %v432
        %v509 = vunpack.c.h.b16 %v432
        %v510 = vunpack.c.l.b16 %v433
        %v511 = vunpack.c.h.b16 %v433
        %v512 = vunpack.c.l.b16 %v434
        %v513 = vunpack.c.h.b16 %v434
        %v514 = vunpack.c.l.b16 %v435
        %v515 = vunpack.c.h.b16 %v435
        %v516 = vunpack.c.l.b16 %v436
        %v517 = vunpack.c.h.b16 %v436
        %v518 = vunpack.c.l.b16 %v437
        %v519 = vunpack.c.h.b16 %v437
        %v520 = vunpack.c.l.b16 %v438
        %v521 = vunpack.c.h.b16 %v438
        %v522 = vunpack.c.l.b16 %v439
        %v523 = vunpack.c.h.b16 %v439
        %v524 = vunpack.c.l.b16 %v440
        %v525 = vunpack.c.h.b16 %v440
        %v526 = vunpack.c.l.b16 %v441
        %v527 = vunpack.c.h.b16 %v441
        %v528 = vunpack.c.l.b16 %v442
        %v529 = vunpack.c.h.b16 %v442
        %v530 = vunpack.c.l.b16 %v443
        %v531 = vunpack.c.h.b16 %v443
        %v532 = vunpack.c.l.b16 %v444
        %v533 = vunpack.c.h.b16 %v444
        %v534 = vunpack.c.l.b16 %v445
        %v535 = vunpack.c.h.b16 %v445
        %v536 = vunpack.c.l.b16 %v446
        %v537 = vunpack.c.h.b16 %v446
        %v538 = vunpack.c.l.b16 %v447
        %v539 = vunpack.c.h.b16 %v447
        %v540 = vunpack.c.l.b16 %v448
        %v541 = vunpack.c.h.b16 %v448
        %v542 = vunpack.c.l.b16 %v449
        %v543 = vunpack.c.h.b16 %v449
        %v544 = vunpack.c.l.b16 %v450
        %v545 = vunpack.c.h.b16 %v450
        %v546 = vunpack.c.l.b16 %v451
        %v547 = vunpack.c.h.b16 %v451
        %v548 = vunpack.c.l.b16 %v452
        %v549 = vunpack.c.h.b16 %v452
        %v550 = vunpack.c.l.b16 %v453
        %v551 = vunpack.c.h.b16 %v453
        %v552 = vunpack.c.l.b16 %v454
        %v553 = vunpack.c.h.b16 %v454
        %v554 = vunpack.c.l.b16 %v455
        %v555 = vunpack.c.h.b16 %v455
        %v556 = vunpack.c.l.b16 %v456
        %v557 = vunpack.c.h.b16 %v456
        %v558 = vunpack.c.l.b16 %v457
        %v559 = vunpack.c.h.b16 %v457
        %v560 = vunpack.c.l.b16 %v458
        %v561 = vunpack.c.h.b16 %v458
        %v562 = vpack.c.b16 %v500, %v498
        %v563 = vpack.c.b16 %v501, %v499
        %v564 = vpack.c.b16 %v504, %v502
        %v565 = vpack.c.b16 %v505, %v503
        %v566 = vpack.c.b16 %v508, %v506
        %v567 = vpack.c.b16 %v509, %v507
        %v568 = vpack.c.b16 %v512, %v510
        %v569 = vpack.c.b16 %v513, %v511
        %v570 = vpack.c.b16 %v516, %v514
        %v571 = vpack.c.b16 %v517, %v515
        %v572 = vpack.c.b16 %v520, %v518
        %v573 = vpack.c.b16 %v521, %v519
        %v574 = vpack.c.b16 %v524, %v522
        %v575 = vpack.c.b16 %v525, %v523
        %v576 = vpack.c.b16 %v528, %v526
        %v577 = vpack.c.b16 %v529, %v527
        %v578 = vpack.c.b16 %v532, %v530
        %v579 = vpack.c.b16 %v533, %v531
        %v580 = vpack.c.b16 %v536, %v534
        %v581 = vpack.c.b16 %v537, %v535
        %v582 = vpack.c.b16 %v540, %v538
        %v583 = vpack.c.b16 %v541, %v539
        %v584 = vpack.c.b16 %v544, %v542
        %v585 = vpack.c.b16 %v545, %v543
        %v586 = vpack.c.b16 %v548, %v546
        %v587 = vpack.c.b16 %v549, %v547
        %v588 = vpack.c.b16 %v552, %v550
        %v589 = vpack.c.b16 %v553, %v551
        %v590 = vpack.c.b16 %v556, %v554
        %v591 = vpack.c.b16 %v557, %v555
        %v592 = vpack.c.b16 %v560, %v558
        %v593 = vpack.c.b16 %v561, %v559
        %626 = vmatprep.subr.bf16.mxu0 %v563
        %627 = vmatpush1.bf16.msra.mxu0 %v562
        %628 = vmatprep.subr.bf16.mxu0 %v565
        %629 = vmatpush1.bf16.msra.mxu0 %v564
        %630 = vmatprep.subr.bf16.mxu0 %v567
        %631 = vmatpush1.bf16.msra.mxu0 %v566
        %632 = vmatprep.subr.bf16.mxu0 %v569
        %633 = vmatpush1.bf16.msra.mxu0 %v568
        %634 = vmatprep.subr.bf16.mxu0 %v571
        %635 = vmatpush1.bf16.msra.mxu0 %v570
        %636 = vmatprep.subr.bf16.mxu0 %v573
        %637 = vmatpush1.bf16.msra.mxu0 %v572
        %638 = vmatprep.subr.bf16.mxu0 %v575
        %639 = vmatpush1.bf16.msra.mxu0 %v574
        %640 = vmatprep.subr.bf16.mxu0 %v577
        %641 = vmatpush1.bf16.msra.mxu0 %v576
        %642 = vmatprep.subr.bf16.mxu0 %v579
        %643 = vmatpush1.bf16.msra.mxu0 %v578
        %644 = vmatprep.subr.bf16.mxu0 %v581
        %645 = vmatpush1.bf16.msra.mxu0 %v580
        %646 = vmatprep.subr.bf16.mxu0 %v583
        %647 = vmatpush1.bf16.msra.mxu0 %v582
        %648 = vmatprep.subr.bf16.mxu0 %v585
        %649 = vmatpush1.bf16.msra.mxu0 %v584
        %650 = vmatprep.subr.bf16.mxu0 %v587
        %651 = vmatpush1.bf16.msra.mxu0 %v586
        %652 = vmatprep.subr.bf16.mxu0 %v589
        %653 = vmatpush1.bf16.msra.mxu0 %v588
        %654 = vmatprep.subr.bf16.mxu0 %v591
        %655 = vmatpush1.bf16.msra.mxu0 %v590
        %656 = vmatprep.subr.bf16.mxu0 %v593
        %657 = vmatpush1.bf16.msra.mxu0 %v592
        %658 = vmatprep.mubr.bf16.mxu0 %v463
        %659 = vmatmul.mubr.bf16.gmra.mrb[0].mxu0 %v462
        %v660 = vpop.f32.mrb[0].mxu0
        %v661 = vadd.f32 0.0, %v660
        %v662 = vpop.f32.mrb[0].mxu0
        %v663 = vadd.f32 0.0, %v662
        %v664 = vpop.f32.mrb[0].mxu0
        %v665 = vpop.f32.mrb[0].mxu0
        %666 = vdwg.mxu0
        %v667 = vadd.f32 %v424, %v661
        %v668 = vadd.f32 %v425, %v663
        %669 = vst [vmem:[#allocation2] sm:$0xff] %v667
        %670 = vst [vmem:[#allocation2 + $0x8] sm:$0xff] %v668
        %p671 = scmp.eq.s32.totalorder %s21, 8
        // Predicated region
        $region75: #{_lambda_.38} parent=65 // pred_check
          %p672 = pneg %p671
        $region76: #{_lambda_.38} parent=65 // pred_check_branch
          %674 = sbr.rel (%p672) target = $region78
        $region77: #{_lambda_.38} parent=65 // pred_region
          %v675 = vld [vmem:[#allocation2] sm:$0xff]
          %v676 = vld [vmem:[#allocation2 + $0x8] sm:$0xff]
          %v677 = vld [vmem:[%s406] sm:$0x3]
          %v679 = vlaneseq
          %v680 = vshrl.u32 %v679, 7
          %v681 = vsub.s32 0, %v680
          %v682 = vrot.slane %v677, %v681
          %v683 = vlaneseq
          %v684 = vshrl.u32 %v683, 7
          %v685 = vsub.s32 1, %v684
          %v686 = vrot.slane %v677, %v685
          %v689 = vadd.f32 %v675, %v682
          %v690 = vadd.f32 %v676, %v686
          %v691 = vmax.f32 %v689, 0.0
          %v692 = vmax.f32 %v690, 0.0
          %693 = vst [vmem:[%s416] sm:$0xff] %v691
          %694 = vst [vmem:[%s416 + $0x8] sm:$0xff] %v692
        $region78: #{_lambda_.38} parent=65 // pred_fallthru
          _
        %s695 = smul.u32 2, %s20
        %p696 = scmp.lt.s32.totalorder %s19, 0
        %s697 = scalar_select %p696, %s19, 0
        %p698 = scmp.lt.s32.totalorder %s695, 3
        %s699 = scalar_select %p698, %s695, 3
        %s700 = smul.addr %s697, 4
        %s701 = sadd.s32 %s699, %s700
        %s702 = smul.addr %s701, 8
        %s703 = scalar_lea.vmem %s3, %s702
        // Predicated region
        $region79: #{_lambda_.38} parent=65 // pred_check
          %p704 = pneg %p135
        $region80: #{_lambda_.38} parent=65 // pred_check_branch
          %706 = sbr.rel (%p704) target = $region82
        $region81: #{_lambda_.38} parent=65 // pred_region
          %s707 = smul.u32 2, %s20
        $region82: #{_lambda_.38} parent=65 // pred_fallthru
          _
      $region66: #{_lambda_.38} parent=5 // pred_fallthru
        _
      %p708 = scmp.le.s32.totalorder 2, %s9
      // Predicated region
      $region83: #{_lambda_.38} parent=5 // pred_check
        %p709 = pneg %p708
      $region84: #{_lambda_.38} parent=5 // pred_check_branch
        %711 = sbr.rel (%p709) target = $region86
      $region85: #{_lambda_.38} parent=5 // pred_region
        %s712 = ssub.s32 %s9, 2
        // Predicated region
        $region87: #{_lambda_.38} parent=85 // pred_check
          %p713 = pneg %p141
        $region88: #{_lambda_.38} parent=85 // pred_check_branch
          %715 = sbr.rel (%p713) target = $region90
        $region89: #{_lambda_.38} parent=85 // pred_region
          %s716 = smul.u32 2, %s23
          %p717 = scmp.lt.s32.totalorder %s22, 0
          %s718 = scalar_select %p717, %s22, 0
          %p719 = scmp.lt.s32.totalorder %s716, 3
          %s720 = scalar_select %p719, %s716, 3
          %s721 = smul.addr %s718, 4
          %s722 = sadd.s32 %s720, %s721
          %s723 = smul.addr %s722, 8
          %s724 = scalar_lea.vmem %s3, %s723
        $region90: #{_lambda_.38} parent=85 // pred_fallthru
          _
      $region86: #{_lambda_.38} parent=5 // pred_fallthru
        _
    $region6: #{_lambda_.38} parent=1 // loop_footer
      %s13 = sadd.s32 1, %s9
    $region7: #{_lambda_.38} parent=1 // loop_footer_branch
      %8 = sbr.rel target = $region3
    $region8: #{_lambda_.38} parent=1 // loop_exit
      _

// kernel: _lambda_.37
$region0: #{_lambda_.37}
  #allocation0 [shape = 'u32[]', space=smem, size = 0x4, offset = 0x4, fixed_abs, tag = 'smem constant byte address 0x4 - core index']
  #allocation1 [shape = 'u32[144,128]{1,0:T(1,128)}', space=vmem, size = 0x12000, scoped, tag = 'internal scratch']
  #allocation2 [shape = 'f32[8,256]{1,0:T(8,128)}', space=vmem, size = 0x2000, scoped, tag = 'scratch operand']
  %s0 = inlined_call_operand.vmem [shape: bf16[1,8,256], index: 0, kind: input, shape index: {}]
  %s1 = inlined_call_operand.vmem [shape: bf16[1,256,512], index: 1, kind: input, shape index: {}]
  %s2 = inlined_call_operand.vmem [shape: f32[1,512], index: 2, kind: input, shape index: {}]
  %s3 = inlined_call_operand.vmem [shape: f32[8,512], index: 3, kind: output, shape index: {}]
  %s4 = sld [smem:[#allocation0]]
  $region91: #{_lambda_.37} parent=0
    _
  %s6 = ssub.s32 1, %s4
  %s7 = scalar_select 0, %s6, %s4
  $region1: #{_lambda_.37} parent=0
    #allocation3 [shape = 'u8[262144]{0}', space=vmem, size = 0x40000, scoped, tag = 'input window, operand 1']
    loop: start=0, step=1, limit=4
    $region2: #{_lambda_.37} parent=1 // loop_pre_header
      _
    $region3: #{_lambda_.37} parent=1 // loop_header
      %s9 = sphi 0, %s13
      %p10 = scmp.ge.s32.totalorder %s9, 4
      %s16 = sphi 0, %s35
      %s17 = sphi 0, %s31
      %s18 = sphi 0, %s27
      %s19 = sphi 0, %s16
      %s20 = sphi 0, %s17
      %s21 = sphi 0, %s18
      %s22 = sphi 0, %s19
      %s23 = sphi 0, %s20
      %s24 = sphi 0, %s21
      %s40 = sphi 0, %s42
      %s43 = sphi 0, %s40
      %s44 = sphi 0, %s43
      %s60 = sphi 0, %s44
      %s68 = sphi 0, %s70
      %s71 = sphi 0, %s68
      %s72 = sphi 0, %s71
      %s88 = sphi 0, %s72
      %s94 = sphi 0, %s96
      %s97 = sphi 0, %s94
      %s98 = sphi 0, %s97
      %s114 = sphi 0, %s98
      %s122 = sphi 0, %s124
      %s125 = sphi 0, %s122
      %s126 = sphi 0, %s125
      %s142 = sphi 0, %s126
    $region4: #{_lambda_.37} parent=1 // loop_header_branch
      %12 = sbr.rel (%p10) target = $region8
    $region5: #{_lambda_.37} parent=1 // loop_body
      %s14 = ssub.s32 %s9, 1
      %s15 = ssub.s32 %s9, 2
      %s25 = sadd.s32 1, %s18
      %p26 = scmp.ge.s32.totalorder %s25, 1
      %s27 = scalar_select %p26, 0, %s25
      %s28 = sadd.s32 1, %s17
      %s29 = scalar_select %p26, %s28, %s17
      %p30 = scmp.ge.s32.totalorder %s29, 2
      %s31 = scalar_select %p30, 0, %s29
      %s32 = sadd.s32 1, %s16
      %s33 = scalar_select %p30, %s32, %s16
      %p34 = scmp.ge.s32.totalorder %s33, 1
      %s35 = scalar_select %p34, 0, %s33
      %s36 = ssub.s32 %s18, %s27
      %s37 = ssub.s32 %s16, %s35
      %s38 = sor.u32 %s36, %s37
      %p39 = scmp.eq.s32.totalorder %s38, 0
      %s41 = sadd.s32 %s40, 1
      %s42 = scalar_select %p39, %s40, %s41
      %p45 = pneg %p39
      %p46 = scmp.eq.s32.totalorder %s9, 1
      %p47 = por %p45, %p46
      %p48 = scmp.ne.s32.totalorder %s40, %s43
      %p49 = scmp.eq.s32.totalorder %s9, 0
      %p50 = por %p48, %p49
      %p51 = scmp.ne.s32.totalorder %s40, %s43
      %p52 = scmp.eq.s32.totalorder %s14, 1
      %p53 = por %p51, %p52
      %p54 = scmp.ne.s32.totalorder %s43, %s44
      %p55 = scmp.eq.s32.totalorder %s14, 0
      %p56 = por %p54, %p55
      %p57 = scmp.ne.s32.totalorder %s43, %s44
      %p58 = scmp.eq.s32.totalorder %s15, 1
      %p59 = por %p57, %p58
      %p61 = scmp.ne.s32.totalorder %s44, %s60
      %p62 = scmp.eq.s32.totalorder %s15, 0
      %p63 = por %p61, %p62
      %s64 = ssub.s32 %s18, %s27
      %s65 = ssub.s32 %s17, %s31
      %s66 = sor.u32 %s64, %s65
      %p67 = scmp.eq.s32.totalorder %s66, 0
      %s69 = sadd.s32 %s68, 1
      %s70 = scalar_select %p67, %s68, %s69
      %p73 = pneg %p67
      %p74 = scmp.eq.s32.totalorder %s9, 1
      %p75 = por %p73, %p74
      %p76 = scmp.ne.s32.totalorder %s68, %s71
      %p77 = scmp.eq.s32.totalorder %s9, 0
      %p78 = por %p76, %p77
      %p79 = scmp.ne.s32.totalorder %s68, %s71
      %p80 = scmp.eq.s32.totalorder %s14, 1
      %p81 = por %p79, %p80
      %p82 = scmp.ne.s32.totalorder %s71, %s72
      %p83 = scmp.eq.s32.totalorder %s14, 0
      %p84 = por %p82, %p83
      %p85 = scmp.ne.s32.totalorder %s71, %s72
      %p86 = scmp.eq.s32.totalorder %s15, 1
      %p87 = por %p85, %p86
      %p89 = scmp.ne.s32.totalorder %s72, %s88
      %p90 = scmp.eq.s32.totalorder %s15, 0
      %p91 = por %p89, %p90
      %s92 = ssub.s32 %s17, %s31
      %p93 = scmp.eq.s32.totalorder %s92, 0
      %s95 = sadd.s32 %s94, 1
      %s96 = scalar_select %p93, %s94, %s95
      %p99 = pneg %p93
      %p100 = scmp.eq.s32.totalorder %s9, 1
      %p101 = por %p99, %p100
      %p102 = scmp.ne.s32.totalorder %s94, %s97
      %p103 = scmp.eq.s32.totalorder %s9, 0
      %p104 = por %p102, %p103
      %p105 = scmp.ne.s32.totalorder %s94, %s97
      %p106 = scmp.eq.s32.totalorder %s14, 1
      %p107 = por %p105, %p106
      %p108 = scmp.ne.s32.totalorder %s97, %s98
      %p109 = scmp.eq.s32.totalorder %s14, 0
      %p110 = por %p108, %p109
      %p111 = scmp.ne.s32.totalorder %s97, %s98
      %p112 = scmp.eq.s32.totalorder %s15, 1
      %p113 = por %p111, %p112
      %p115 = scmp.ne.s32.totalorder %s98, %s114
      %p116 = scmp.eq.s32.totalorder %s15, 0
      %p117 = por %p115, %p116
      %s118 = ssub.s32 %s16, %s35
      %s119 = ssub.s32 %s17, %s31
      %s120 = sor.u32 %s118, %s119
      %p121 = scmp.eq.s32.totalorder %s120, 0
      %s123 = sadd.s32 %s122, 1
      %s124 = scalar_select %p121, %s122, %s123
      %p127 = pneg %p121
      %p128 = scmp.eq.s32.totalorder %s9, 1
      %p129 = por %p127, %p128
      %p130 = scmp.ne.s32.totalorder %s122, %s125
      %p131 = scmp.eq.s32.totalorder %s9, 0
      %p132 = por %p130, %p131
      %p133 = scmp.ne.s32.totalorder %s122, %s125
      %p134 = scmp.eq.s32.totalorder %s14, 1
      %p135 = por %p133, %p134
      %p136 = scmp.ne.s32.totalorder %s125, %s126
      %p137 = scmp.eq.s32.totalorder %s14, 0
      %p138 = por %p136, %p137
      %p139 = scmp.ne.s32.totalorder %s125, %s126
      %p140 = scmp.eq.s32.totalorder %s15, 1
      %p141 = por %p139, %p140
      %p143 = scmp.ne.s32.totalorder %s126, %s142
      %p144 = scmp.eq.s32.totalorder %s15, 0
      %p145 = por %p143, %p144
      %p146 = scmp.le.s32.totalorder 1, %s9
      %p147 = scmp.lt.s32.totalorder %s9, 3
      %p148 = pnand %p146, %p147
      %p149 = pneg %p148
      // Predicated region
      $region9: #{_lambda_.37} parent=5 // pred_check
        _
      $region10: #{_lambda_.37} parent=5 // pred_check_branch
        %151 = sbr.rel (%p148) target = $region12
      $region11: #{_lambda_.37} parent=5 // pred_region
        %s152 = ssub.s32 %s9, 1
        // Predicated region
        $region13: #{_lambda_.37} parent=11 // pred_check
          %p153 = pneg %p56
        $region14: #{_lambda_.37} parent=11 // pred_check_branch
          %155 = sbr.rel (%p153) target = $region16
        $region15: #{_lambda_.37} parent=11 // pred_region
          %p156 = scmp.lt.s32.totalorder %s21, 0
          %s157 = scalar_select %p156, %s21, 0
          %p158 = scmp.lt.s32.totalorder %s19, 0
          %s159 = scalar_select %p158, %s19, 0
          %s160 = smul.addr %s159, 2
          %s161 = smul.addr %s157, 2
          %s162 = sadd.s32 %s160, %s161
          %s163 = smul.addr %s162, 4
          %s164 = scalar_lea.vmem %s0, %s163
        $region16: #{_lambda_.37} parent=11 // pred_fallthru
          _
      $region12: #{_lambda_.37} parent=5 // pred_fallthru
        _
      %p165 = scmp.lt.s32.totalorder %s9, 2
      // Predicated region
      $region17: #{_lambda_.37} parent=5 // pred_check
        %p166 = pneg %p165
      $region18: #{_lambda_.37} parent=5 // pred_check_branch
        %168 = sbr.rel (%p166) target = $region20
      $region19: #{_lambda_.37} parent=5 // pred_region
        // Predicated region
        $region21: #{_lambda_.37} parent=19 // pred_check
          %p169 = pneg %p78
        $region22: #{_lambda_.37} parent=19 // pred_check_branch
          %171 = sbr.rel (%p169) target = $region24
        $region23: #{_lambda_.37} parent=19 // pred_region
          %s172 = sand.u32 %s68, 1
          %s173 = sand.u32 %s68, 1
          %s174 = smul.addr %s173, 256
          %s175 = scalar_lea.vmem [#allocation3], %s174
          %s176 = smul.u32 2, %s17
          %s177 = smul.addr %s18, 128
          %s178 = sadd.s32 %s176, %s177
          %s179 = smul.addr %s178, 4
          %s180 = scalar_lea.vmem %s1, %s179
          // Predicated region
          $region25: #{_lambda_.37} parent=23 // pred_check
            _
          $region26: #{_lambda_.37} parent=23 // pred_check_branch
            %182 = sbr.rel (0) target = $region28
          $region27: #{_lambda_.37} parent=23 // pred_region
            // Predicated region
            $region29: #{_lambda_.37} parent=27 // pred_check
              _
            $region30: #{_lambda_.37} parent=27 // pred_check_branch
              %184 = sbr.rel (0) target = $region32
            $region31: #{_lambda_.37} parent=27 // pred_region
              // Predicated region
              $region44: #{_lambda_.37} parent=31 // pred_check
                _
              $region45: #{_lambda_.37} parent=31 // pred_check_branch
                %261 = sbr.rel (0) target = $region47
              $region46: #{_lambda_.37} parent=31 // pred_region
                loop: start=0, step=1, limit=1
                $region48: #{_lambda_.37} parent=46 // loop_pre_header
                  _
                $region49: #{_lambda_.37} parent=46 // loop_header
                  %s263 = sphi 0, %s267
                  %p264 = scmp.ge.s32.totalorder %s263, 1
                  %s268 = sphi %s180, %s180
                  %s269 = sphi %s175, %s175
                $region50: #{_lambda_.37} parent=46 // loop_header_branch
                  %266 = sbr.rel (%p264) target = $region54
                $region51: #{_lambda_.37} parent=46 // loop_body
                  %v270 = vld [vmem:[%s268] sm:$0xff]
                  %271 = vst [vmem:[%s269] sm:$0xff] %v270
                  %v272 = vld [vmem:[%s268 + $0x10] sm:$0xff]
                  %273 = vst [vmem:[%s269 + $0x8] sm:$0xff] %v272
                  %v274 = vld [vmem:[%s268 + $0x20] sm:$0xff]
                  %275 = vst [vmem:[%s269 + $0x10] sm:$0xff] %v274
                  %v276 = vld [vmem:[%s268 + $0x30] sm:$0xff]
                  %277 = vst [vmem:[%s269 + $0x18] sm:$0xff] %v276
                  %v278 = vld [vmem:[%s268 + $0x40] sm:$0xff]
                  %279 = vst [vmem:[%s269 + $0x20] sm:$0xff] %v278
                  %v280 = vld [vmem:[%s268 + $0x50] sm:$0xff]
                  %281 = vst [vmem:[%s269 + $0x28] sm:$0xff] %v280
                  %v282 = vld [vmem:[%s268 + $0x60] sm:$0xff]
                  %283 = vst [vmem:[%s269 + $0x30] sm:$0xff] %v282
                  %v284 = vld [vmem:[%s268 + $0x70] sm:$0xff]
                  %285 = vst [vmem:[%s269 + $0x38] sm:$0xff] %v284
                  %v286 = vld [vmem:[%s268 + $0x80] sm:$0xff]
                  %287 = vst [vmem:[%s269 + $0x40] sm:$0xff] %v286
                  %v288 = vld [vmem:[%s268 + $0x90] sm:$0xff]
                  %289 = vst [vmem:[%s269 + $0x48] sm:$0xff] %v288
                  %v290 = vld [vmem:[%s268 + $0xa0] sm:$0xff]
                  %291 = vst [vmem:[%s269 + $0x50] sm:$0xff] %v290
                  %v292 = vld [vmem:[%s268 + $0xb0] sm:$0xff]
                  %293 = vst [vmem:[%s269 + $0x58] sm:$0xff] %v292
                  %v294 = vld [vmem:[%s268 + $0xc0] sm:$0xff]
                  %295 = vst [vmem:[%s269 + $0x60] sm:$0xff] %v294
                  %v296 = vld [vmem:[%s268 + $0xd0] sm:$0xff]
                  %297 = vst [vmem:[%s269 + $0x68] sm:$0xff] %v296
                  %v298 = vld [vmem:[%s268 + $0xe0] sm:$0xff]
                  %299 = vst [vmem:[%s269 + $0x70] sm:$0xff] %v298
                  %v300 = vld [vmem:[%s268 + $0xf0] sm:$0xff]
                  %301 = vst [vmem:[%s269 + $0x78] sm:$0xff] %v300
                  %v302 = vld [vmem:[%s268 + $0x100] sm:$0xff]
                  %303 = vst [vmem:[%s269 + $0x80] sm:$0xff] %v302
                  %v304 = vld [vmem:[%s268 + $0x110] sm:$0xff]
                  %305 = vst [vmem:[%s269 + $0x88] sm:$0xff] %v304
                  %v306 = vld [vmem:[%s268 + $0x120] sm:$0xff]
                  %307 = vst [vmem:[%s269 + $0x90] sm:$0xff] %v306
                  %v308 = vld [vmem:[%s268 + $0x130] sm:$0xff]
                  %309 = vst [vmem:[%s269 + $0x98] sm:$0xff] %v308
                  %v310 = vld [vmem:[%s268 + $0x140] sm:$0xff]
                  %311 = vst [vmem:[%s269 + $0xa0] sm:$0xff] %v310
                  %v312 = vld [vmem:[%s268 + $0x150] sm:$0xff]
                  %313 = vst [vmem:[%s269 + $0xa8] sm:$0xff] %v312
                  %v314 = vld [vmem:[%s268 + $0x160] sm:$0xff]
                  %315 = vst [vmem:[%s269 + $0xb0] sm:$0xff] %v314
                  %v316 = vld [vmem:[%s268 + $0x170] sm:$0xff]
                  %317 = vst [vmem:[%s269 + $0xb8] sm:$0xff] %v316
                  %v318 = vld [vmem:[%s268 + $0x180] sm:$0xff]
                  %319 = vst [vmem:[%s269 + $0xc0] sm:$0xff] %v318
                  %v320 = vld [vmem:[%s268 + $0x190] sm:$0xff]
                  %321 = vst [vmem:[%s269 + $0xc8] sm:$0xff] %v320
                  %v322 = vld [vmem:[%s268 + $0x1a0] sm:$0xff]
                  %323 = vst [vmem:[%s269 + $0xd0] sm:$0xff] %v322
                  %v324 = vld [vmem:[%s268 + $0x1b0] sm:$0xff]
                  %325 = vst [vmem:[%s269 + $0xd8] sm:$0xff] %v324
                  %v326 = vld [vmem:[%s268 + $0x1c0] sm:$0xff]
                  %327 = vst [vmem:[%s269 + $0xe0] sm:$0xff] %v326
                  %v328 = vld [vmem:[%s268 + $0x1d0] sm:$0xff]
                  %329 = vst [vmem:[%s269 + $0xe8] sm:$0xff] %v328
                  %v330 = vld [vmem:[%s268 + $0x1e0] sm:$0xff]
                  %331 = vst [vmem:[%s269 + $0xf0] sm:$0xff] %v330
                  %v332 = vld [vmem:[%s268 + $0x1f0] sm:$0xff]
                  %333 = vst [vmem:[%s269 + $0xf8] sm:$0xff] %v332
                $region52: #{_lambda_.37} parent=46 // loop_footer
                  %s267 = sadd.s32 1, %s263
                $region53: #{_lambda_.37} parent=46 // loop_footer_branch
                  %262 = sbr.rel target = $region49
                $region54: #{_lambda_.37} parent=46 // loop_exit
                  _
              $region47: #{_lambda_.37} parent=31 // pred_fallthru
                _
              // Predicated region
              $region55: #{_lambda_.37} parent=31 // pred_check
                _
              $region56: #{_lambda_.37} parent=31 // pred_check_branch
                %335 = sbr.rel target = $region58
              $region57: #{_lambda_.37} parent=31 // pred_region
                _
              $region58: #{_lambda_.37} parent=31 // pred_fallthru
                _
            $region32: #{_lambda_.37} parent=27 // pred_fallthru
              _
            // Predicated region
            $region33: #{_lambda_.37} parent=27 // pred_check
              _
            $region34: #{_lambda_.37} parent=27 // pred_check_branch
              %186 = sbr.rel target = $region36
            $region35: #{_lambda_.37} parent=27 // pred_region
              loop: start=0, step=1, limit=1
              $region37: #{_lambda_.37} parent=35 // loop_pre_header
                _
              $region38: #{_lambda_.37} parent=35 // loop_header
                %s189 = sphi 0, %s193
                %p190 = scmp.ge.s32.totalorder %s189, 1
                %s194 = sphi %s180, %s180
                %s195 = sphi %s175, %s175
              $region39: #{_lambda_.37} parent=35 // loop_header_branch
                %192 = sbr.rel (%p190) target = $region43
              $region40: #{_lambda_.37} parent=35 // loop_body
                %v196 = vld [vmem:[%s194] sm:$0xff]
                %197 = vst [vmem:[%s195] sm:$0xff] %v196
                %v198 = vld [vmem:[%s194 + $0x10] sm:$0xff]
                %199 = vst [vmem:[%s195 + $0x8] sm:$0xff] %v198
                %v200 = vld [vmem:[%s194 + $0x20] sm:$0xff]
                %201 = vst [vmem:[%s195 + $0x10] sm:$0xff] %v200
                %v202 = vld [vmem:[%s194 + $0x30] sm:$0xff]
                %203 = vst [vmem:[%s195 + $0x18] sm:$0xff] %v202
                %v204 = vld [vmem:[%s194 + $0x40] sm:$0xff]
                %205 = vst [vmem:[%s195 + $0x20] sm:$0xff] %v204
                %v206 = vld [vmem:[%s194 + $0x50] sm:$0xff]
                %207 = vst [vmem:[%s195 + $0x28] sm:$0xff] %v206
                %v208 = vld [vmem:[%s194 + $0x60] sm:$0xff]
                %209 = vst [vmem:[%s195 + $0x30] sm:$0xff] %v208
                %v210 = vld [vmem:[%s194 + $0x70] sm:$0xff]
                %211 = vst [vmem:[%s195 + $0x38] sm:$0xff] %v210
                %v212 = vld [vmem:[%s194 + $0x80] sm:$0xff]
                %213 = vst [vmem:[%s195 + $0x40] sm:$0xff] %v212
                %v214 = vld [vmem:[%s194 + $0x90] sm:$0xff]
                %215 = vst [vmem:[%s195 + $0x48] sm:$0xff] %v214
                %v216 = vld [vmem:[%s194 + $0xa0] sm:$0xff]
                %217 = vst [vmem:[%s195 + $0x50] sm:$0xff] %v216
                %v218 = vld [vmem:[%s194 + $0xb0] sm:$0xff]
                %219 = vst [vmem:[%s195 + $0x58] sm:$0xff] %v218
                %v220 = vld [vmem:[%s194 + $0xc0] sm:$0xff]
                %221 = vst [vmem:[%s195 + $0x60] sm:$0xff] %v220
                %v222 = vld [vmem:[%s194 + $0xd0] sm:$0xff]
                %223 = vst [vmem:[%s195 + $0x68] sm:$0xff] %v222
                %v224 = vld [vmem:[%s194 + $0xe0] sm:$0xff]
                %225 = vst [vmem:[%s195 + $0x70] sm:$0xff] %v224
                %v226 = vld [vmem:[%s194 + $0xf0] sm:$0xff]
                %227 = vst [vmem:[%s195 + $0x78] sm:$0xff] %v226
                %v228 = vld [vmem:[%s194 + $0x100] sm:$0xff]
                %229 = vst [vmem:[%s195 + $0x80] sm:$0xff] %v228
                %v230 = vld [vmem:[%s194 + $0x110] sm:$0xff]
                %231 = vst [vmem:[%s195 + $0x88] sm:$0xff] %v230
                %v232 = vld [vmem:[%s194 + $0x120] sm:$0xff]
                %233 = vst [vmem:[%s195 + $0x90] sm:$0xff] %v232
                %v234 = vld [vmem:[%s194 + $0x130] sm:$0xff]
                %235 = vst [vmem:[%s195 + $0x98] sm:$0xff] %v234
                %v236 = vld [vmem:[%s194 + $0x140] sm:$0xff]
                %237 = vst [vmem:[%s195 + $0xa0] sm:$0xff] %v236
                %v238 = vld [vmem:[%s194 + $0x150] sm:$0xff]
                %239 = vst [vmem:[%s195 + $0xa8] sm:$0xff] %v238
                %v240 = vld [vmem:[%s194 + $0x160] sm:$0xff]
                %241 = vst [vmem:[%s195 + $0xb0] sm:$0xff] %v240
                %v242 = vld [vmem:[%s194 + $0x170] sm:$0xff]
                %243 = vst [vmem:[%s195 + $0xb8] sm:$0xff] %v242
                %v244 = vld [vmem:[%s194 + $0x180] sm:$0xff]
                %245 = vst [vmem:[%s195 + $0xc0] sm:$0xff] %v244
                %v246 = vld [vmem:[%s194 + $0x190] sm:$0xff]
                %247 = vst [vmem:[%s195 + $0xc8] sm:$0xff] %v246
                %v248 = vld [vmem:[%s194 + $0x1a0] sm:$0xff]
                %249 = vst [vmem:[%s195 + $0xd0] sm:$0xff] %v248
                %v250 = vld [vmem:[%s194 + $0x1b0] sm:$0xff]
                %251 = vst [vmem:[%s195 + $0xd8] sm:$0xff] %v250
                %v252 = vld [vmem:[%s194 + $0x1c0] sm:$0xff]
                %253 = vst [vmem:[%s195 + $0xe0] sm:$0xff] %v252
                %v254 = vld [vmem:[%s194 + $0x1d0] sm:$0xff]
                %255 = vst [vmem:[%s195 + $0xe8] sm:$0xff] %v254
                %v256 = vld [vmem:[%s194 + $0x1e0] sm:$0xff]
                %257 = vst [vmem:[%s195 + $0xf0] sm:$0xff] %v256
                %v258 = vld [vmem:[%s194 + $0x1f0] sm:$0xff]
                %259 = vst [vmem:[%s195 + $0xf8] sm:$0xff] %v258
              $region41: #{_lambda_.37} parent=35 // loop_footer
                %s193 = sadd.s32 1, %s189
              $region42: #{_lambda_.37} parent=35 // loop_footer_branch
                %188 = sbr.rel target = $region38
              $region43: #{_lambda_.37} parent=35 // loop_exit
                _
            $region36: #{_lambda_.37} parent=27 // pred_fallthru
              _
          $region28: #{_lambda_.37} parent=23 // pred_fallthru
            _
          %336 = vnop
        $region24: #{_lambda_.37} parent=19 // pred_fallthru
          _
        // Predicated region
        $region59: #{_lambda_.37} parent=19 // pred_check
          %p337 = pneg %p104
        $region60: #{_lambda_.37} parent=19 // pred_check_branch
          %339 = sbr.rel (%p337) target = $region62
        $region61: #{_lambda_.37} parent=19 // pred_region
          %s340 = smul.u32 2, %s17
          %p341 = scmp.lt.s32.totalorder %s340, 3
          %s342 = scalar_select %p341, %s340, 3
          %s343 = scalar_lea.vmem %s2, %s342
          %s344 = smul.u32 2, %s17
        $region62: #{_lambda_.37} parent=19 // pred_fallthru
          _
      $region20: #{_lambda_.37} parent=5 // pred_fallthru
        _
      %p345 = scmp.le.s32.totalorder 1, %s9
      %p346 = scmp.lt.s32.totalorder %s9, 3
      %p347 = pnand %p345, %p346
      %p348 = pneg %p347
      // Predicated region
      $region63: #{_lambda_.37} parent=5 // pred_check
        _
      $region64: #{_lambda_.37} parent=5 // pred_check_branch
        %350 = sbr.rel (%p347) target = $region66
      $region65: #{_lambda_.37} parent=5 // pred_region
        %s351 = ssub.s32 %s9, 1
        %s352 = sand.u32 %s71, 1
        %s353 = sand.u32 %s71, 1
        %s354 = smul.addr %s353, 256
        %s355 = scalar_lea.vmem [#allocation3], %s354
        // Predicated region
        $region67: #{_lambda_.37} parent=65 // pred_check
          %p356 = pneg %p84
        $region68: #{_lambda_.37} parent=65 // pred_check_branch
          %358 = sbr.rel (%p356) target = $region70
        $region69: #{_lambda_.37} parent=65 // pred_region
          _
        $region70: #{_lambda_.37} parent=65 // pred_fallthru
          _
        %p359 = scmp.lt.s32.totalorder %s21, 0
        %s360 = scalar_select %p359, %s21, 0
        %p361 = scmp.lt.s32.totalorder %s19, 0
        %s362 = scalar_select %p361, %s19, 0
        %s363 = smul.addr %s362, 2
        %s364 = smul.addr %s360, 2
        %s365 = sadd.s32 %s363, %s364
        %s366 = smul.addr %s365, 4
        %s367 = scalar_lea.vmem %s0, %s366
        %p368 = pneg %p56
        %p369 = pneg %p53
        %s370 = sand.u32 %s71, 1
        %s371 = sand.u32 %s71, 1
        %s372 = smul.addr %s371, 256
        %s373 = scalar_lea.vmem [#allocation3], %s372
        %p374 = pneg %p84
        %p375 = pneg %p81
        %s376 = smul.u32 2, %s20
        %p377 = scmp.lt.s32.totalorder %s376, 3
        %s378 = scalar_select %p377, %s376, 3
        %s379 = scalar_lea.vmem %s2, %s378
        %p380 = pneg %p110
        %p381 = pneg %p107
        %p382 = pneg %p138
        %p383 = pneg %p135
        %s384 = smul.u32 2, %s20
        %p385 = scmp.lt.s32.totalorder %s19, 0
        %s386 = scalar_select %p385, %s19, 0
        %p387 = scmp.lt.s32.totalorder %s384, 3
        %s388 = scalar_select %p387, %s384, 3
        %s389 = smul.addr %s386, 4
        %s390 = sadd.s32 %s388, %s389
        %s391 = smul.addr %s390, 8
        %s392 = scalar_lea.vmem %s3, %s391
        %p393 = scmp.lt.s32.totalorder %s21, 0
        %s394 = scalar_select %p393, %s21, 0
        %p395 = scmp.lt.s32.totalorder %s19, 0
        %s396 = scalar_select %p395, %s19, 0
        %s397 = smul.addr %s396, 2
        %s398 = smul.addr %s394, 2
        %s399 = sadd.s32 %s397, %s398
        %s400 = smul.addr %s399, 4
        %s401 = scalar_lea.vmem %s0, %s400
        %s402 = smul.u32 2, %s20
        %s403 = smul.u32 2, %s20
        %p404 = scmp.lt.s32.totalorder %s403, 3
        %s405 = scalar_select %p404, %s403, 3
        %s406 = scalar_lea.vmem %s2, %s405
        %s407 = smul.u32 2, %s20
        %s408 = smul.u32 2, %s20
        %p409 = scmp.lt.s32.totalorder %s19, 0
        %s410 = scalar_select %p409, %s19, 0
        %p411 = scmp.lt.s32.totalorder %s408, 3
        %s412 = scalar_select %p411, %s408, 3
        %s413 = smul.addr %s410, 4
        %s414 = sadd.s32 %s412, %s413
        %s415 = smul.addr %s414, 8
        %s416 = scalar_lea.vmem %s3, %s415
        %s417 = smul.u32 2, %s20
        %p418 = scmp.eq.s32.totalorder %s21, 0
        // Predicated region
        $region71: #{_lambda_.37} parent=65 // pred_check
          %p419 = pneg %p418
        $region72: #{_lambda_.37} parent=65 // pred_check_branch
          %421 = sbr.rel (%p419) target = $region74
        $region73: #{_lambda_.37} parent=65 // pred_region
          %422 = vst [vmem:[#allocation2] sm:$0xff] 0.0
          %423 = vst [vmem:[#allocation2 + $0x8] sm:$0xff] 0.0
        $region74: #{_lambda_.37} parent=65 // pred_fallthru
          _
        %v424 = vld [vmem:[#allocation2] sm:$0xff]
        %v425 = vld [vmem:[#allocation2 + $0x8] sm:$0xff]
        %v426 = vld [vmem:[%s401] sm:$0xff]
        %v427 = vld [vmem:[%s355] sm:$0xff]
        %v428 = vld [vmem:[%s355 + $0x8] sm:$0xff]
        %v429 = vld [vmem:[%s355 + $0x10] sm:$0xff]
        %v430 = vld [vmem:[%s355 + $0x18] sm:$0xff]
        %v431 = vld [vmem:[%s355 + $0x20] sm:$0xff]
        %v432 = vld [vmem:[%s355 + $0x28] sm:$0xff]
        %v433 = vld [vmem:[%s355 + $0x30] sm:$0xff]
        %v434 = vld [vmem:[%s355 + $0x38] sm:$0xff]
        %v435 = vld [vmem:[%s355 + $0x40] sm:$0xff]
        %v436 = vld [vmem:[%s355 + $0x48] sm:$0xff]
        %v437 = vld [vmem:[%s355 + $0x50] sm:$0xff]
        %v438 = vld [vmem:[%s355 + $0x58] sm:$0xff]
        %v439 = vld [vmem:[%s355 + $0x60] sm:$0xff]
        %v440 = vld [vmem:[%s355 + $0x68] sm:$0xff]
        %v441 = vld [vmem:[%s355 + $0x70] sm:$0xff]
        %v442 = vld [vmem:[%s355 + $0x78] sm:$0xff]
        %v443 = vld [vmem:[%s355 + $0x80] sm:$0xff]
        %v444 = vld [vmem:[%s355 + $0x88] sm:$0xff]
        %v445 = vld [vmem:[%s355 + $0x90] sm:$0xff]
        %v446 = vld [vmem:[%s355 + $0x98] sm:$0xff]
        %v447 = vld [vmem:[%s355 + $0xa0] sm:$0xff]
        %v448 = vld [vmem:[%s355 + $0xa8] sm:$0xff]
        %v449 = vld [vmem:[%s355 + $0xb0] sm:$0xff]
        %v450 = vld [vmem:[%s355 + $0xb8] sm:$0xff]
        %v451 = vld [vmem:[%s355 + $0xc0] sm:$0xff]
        %v452 = vld [vmem:[%s355 + $0xc8] sm:$0xff]
        %v453 = vld [vmem:[%s355 + $0xd0] sm:$0xff]
        %v454 = vld [vmem:[%s355 + $0xd8] sm:$0xff]
        %v455 = vld [vmem:[%s355 + $0xe0] sm:$0xff]
        %v456 = vld [vmem:[%s355 + $0xe8] sm:$0xff]
        %v457 = vld [vmem:[%s355 + $0xf0] sm:$0xff]
        %v458 = vld [vmem:[%s355 + $0xf8] sm:$0xff]
        %v460 = vunpack.c.l.b16 %v426
        %v461 = vunpack.c.h.b16 %v426
        %v462 = vpack.c.b16 %v460, %v460
        %v463 = vpack.c.b16 %v461, %v461
        %v498 = vunpack.c.l.b16 %v427
        %v499 = vunpack.c.h.b16 %v427
        %v500 = vunpack.c.l.b16 %v428
        %v501 = vunpack.c.h.b16 %v428
        %v502 = vunpack.c.l.b16 %v429
        %v503 = vunpack.c.h.b16 %v429
        %v504 = vunpack.c.l.b16 %v430
        %v505 = vunpack.c.h.b16 %v430
        %v506 = vunpack.c.l.b16 %v431
        %v507 = vunpack.c.h.b16 %v431
        %v508 = vunpack.c.l.b16 %v432
        %v509 = vunpack.c.h.b16 %v432
        %v510 = vunpack.c.l.b16 %v433
        %v511 = vunpack.c.h.b16 %v433
        %v512 = vunpack.c.l.b16 %v434
        %v513 = vunpack.c.h.b16 %v434
        %v514 = vunpack.c.l.b16 %v435
        %v515 = vunpack.c.h.b16 %v435
        %v516 = vunpack.c.l.b16 %v436
        %v517 = vunpack.c.h.b16 %v436
        %v518 = vunpack.c.l.b16 %v437
        %v519 = vunpack.c.h.b16 %v437
        %v520 = vunpack.c.l.b16 %v438
        %v521 = vunpack.c.h.b16 %v438
        %v522 = vunpack.c.l.b16 %v439
        %v523 = vunpack.c.h.b16 %v439
        %v524 = vunpack.c.l.b16 %v440
        %v525 = vunpack.c.h.b16 %v440
        %v526 = vunpack.c.l.b16 %v441
        %v527 = vunpack.c.h.b16 %v441
        %v528 = vunpack.c.l.b16 %v442
        %v529 = vunpack.c.h.b16 %v442
        %v530 = vunpack.c.l.b16 %v443
        %v531 = vunpack.c.h.b16 %v443
        %v532 = vunpack.c.l.b16 %v444
        %v533 = vunpack.c.h.b16 %v444
        %v534 = vunpack.c.l.b16 %v445
        %v535 = vunpack.c.h.b16 %v445
        %v536 = vunpack.c.l.b16 %v446
        %v537 = vunpack.c.h.b16 %v446
        %v538 = vunpack.c.l.b16 %v447
        %v539 = vunpack.c.h.b16 %v447
        %v540 = vunpack.c.l.b16 %v448
        %v541 = vunpack.c.h.b16 %v448
        %v542 = vunpack.c.l.b16 %v449
        %v543 = vunpack.c.h.b16 %v449
        %v544 = vunpack.c.l.b16 %v450
        %v545 = vunpack.c.h.b16 %v450
        %v546 = vunpack.c.l.b16 %v451
        %v547 = vunpack.c.h.b16 %v451
        %v548 = vunpack.c.l.b16 %v452
        %v549 = vunpack.c.h.b16 %v452
        %v550 = vunpack.c.l.b16 %v453
        %v551 = vunpack.c.h.b16 %v453
        %v552 = vunpack.c.l.b16 %v454
        %v553 = vunpack.c.h.b16 %v454
        %v554 = vunpack.c.l.b16 %v455
        %v555 = vunpack.c.h.b16 %v455
        %v556 = vunpack.c.l.b16 %v456
        %v557 = vunpack.c.h.b16 %v456
        %v558 = vunpack.c.l.b16 %v457
        %v559 = vunpack.c.h.b16 %v457
        %v560 = vunpack.c.l.b16 %v458
        %v561 = vunpack.c.h.b16 %v458
        %v562 = vpack.c.b16 %v500, %v498
        %v563 = vpack.c.b16 %v501, %v499
        %v564 = vpack.c.b16 %v504, %v502
        %v565 = vpack.c.b16 %v505, %v503
        %v566 = vpack.c.b16 %v508, %v506
        %v567 = vpack.c.b16 %v509, %v507
        %v568 = vpack.c.b16 %v512, %v510
        %v569 = vpack.c.b16 %v513, %v511
        %v570 = vpack.c.b16 %v516, %v514
        %v571 = vpack.c.b16 %v517, %v515
        %v572 = vpack.c.b16 %v520, %v518
        %v573 = vpack.c.b16 %v521, %v519
        %v574 = vpack.c.b16 %v524, %v522
        %v575 = vpack.c.b16 %v525, %v523
        %v576 = vpack.c.b16 %v528, %v526
        %v577 = vpack.c.b16 %v529, %v527
        %v578 = vpack.c.b16 %v532, %v530
        %v579 = vpack.c.b16 %v533, %v531
        %v580 = vpack.c.b16 %v536, %v534
        %v581 = vpack.c.b16 %v537, %v535
        %v582 = vpack.c.b16 %v540, %v538
        %v583 = vpack.c.b16 %v541, %v539
        %v584 = vpack.c.b16 %v544, %v542
        %v585 = vpack.c.b16 %v545, %v543
        %v586 = vpack.c.b16 %v548, %v546
        %v587 = vpack.c.b16 %v549, %v547
        %v588 = vpack.c.b16 %v552, %v550
        %v589 = vpack.c.b16 %v553, %v551
        %v590 = vpack.c.b16 %v556, %v554
        %v591 = vpack.c.b16 %v557, %v555
        %v592 = vpack.c.b16 %v560, %v558
        %v593 = vpack.c.b16 %v561, %v559
        %626 = vmatprep.subr.bf16.mxu0 %v563
        %627 = vmatpush1.bf16.msra.mxu0 %v562
        %628 = vmatprep.subr.bf16.mxu0 %v565
        %629 = vmatpush1.bf16.msra.mxu0 %v564
        %630 = vmatprep.subr.bf16.mxu0 %v567
        %631 = vmatpush1.bf16.msra.mxu0 %v566
        %632 = vmatprep.subr.bf16.mxu0 %v569
        %633 = vmatpush1.bf16.msra.mxu0 %v568
        %634 = vmatprep.subr.bf16.mxu0 %v571
        %635 = vmatpush1.bf16.msra.mxu0 %v570
        %636 = vmatprep.subr.bf16.mxu0 %v573
        %637 = vmatpush1.bf16.msra.mxu0 %v572
        %638 = vmatprep.subr.bf16.mxu0 %v575
        %639 = vmatpush1.bf16.msra.mxu0 %v574
        %640 = vmatprep.subr.bf16.mxu0 %v577
        %641 = vmatpush1.bf16.msra.mxu0 %v576
        %642 = vmatprep.subr.bf16.mxu0 %v579
        %643 = vmatpush1.bf16.msra.mxu0 %v578
        %644 = vmatprep.subr.bf16.mxu0 %v581
        %645 = vmatpush1.bf16.msra.mxu0 %v580
        %646 = vmatprep.subr.bf16.mxu0 %v583
        %647 = vmatpush1.bf16.msra.mxu0 %v582
        %648 = vmatprep.subr.bf16.mxu0 %v585
        %649 = vmatpush1.bf16.msra.mxu0 %v584
        %650 = vmatprep.subr.bf16.mxu0 %v587
        %651 = vmatpush1.bf16.msra.mxu0 %v586
        %652 = vmatprep.subr.bf16.mxu0 %v589
        %653 = vmatpush1.bf16.msra.mxu0 %v588
        %654 = vmatprep.subr.bf16.mxu0 %v591
        %655 = vmatpush1.bf16.msra.mxu0 %v590
        %656 = vmatprep.subr.bf16.mxu0 %v593
        %657 = vmatpush1.bf16.msra.mxu0 %v592
        %658 = vmatprep.mubr.bf16.mxu0 %v463
        %659 = vmatmul.mubr.bf16.gmra.mrb[0].mxu0 %v462
        %v660 = vpop.f32.mrb[0].mxu0
        %v661 = vadd.f32 0.0, %v660
        %v662 = vpop.f32.mrb[0].mxu0
        %v663 = vadd.f32 0.0, %v662
        %v664 = vpop.f32.mrb[0].mxu0
        %v665 = vpop.f32.mrb[0].mxu0
        %666 = vdwg.mxu0
        %v667 = vadd.f32 %v424, %v661
        %v668 = vadd.f32 %v425, %v663
        %669 = vst [vmem:[#allocation2] sm:$0xff] %v667
        %670 = vst [vmem:[#allocation2 + $0x8] sm:$0xff] %v668
        // Predicated region
        $region75: #{_lambda_.37} parent=65 // pred_check
          %p671 = pneg %p418
        $region76: #{_lambda_.37} parent=65 // pred_check_branch
          %673 = sbr.rel (%p671) target = $region78
        $region77: #{_lambda_.37} parent=65 // pred_region
          %v674 = vld [vmem:[#allocation2] sm:$0xff]
          %v675 = vld [vmem:[#allocation2 + $0x8] sm:$0xff]
          %v676 = vld [vmem:[%s406] sm:$0x3]
          %v678 = vlaneseq
          %v679 = vshrl.u32 %v678, 7
          %v680 = vsub.s32 0, %v679
          %v681 = vrot.slane %v676, %v680
          %v682 = vlaneseq
          %v683 = vshrl.u32 %v682, 7
          %v684 = vsub.s32 1, %v683
          %v685 = vrot.slane %v676, %v684
          %v688 = vadd.f32 %v674, %v681
          %v689 = vadd.f32 %v675, %v685
          %690 = vst [vmem:[%s416] sm:$0xff] %v688
          %691 = vst [vmem:[%s416 + $0x8] sm:$0xff] %v689
        $region78: #{_lambda_.37} parent=65 // pred_fallthru
          _
        %s692 = smul.u32 2, %s20
        %p693 = scmp.lt.s32.totalorder %s19, 0
        %s694 = scalar_select %p693, %s19, 0
        %p695 = scmp.lt.s32.totalorder %s692, 3
        %s696 = scalar_select %p695, %s692, 3
        %s697 = smul.addr %s694, 4
        %s698 = sadd.s32 %s696, %s697
        %s699 = smul.addr %s698, 8
        %s700 = scalar_lea.vmem %s3, %s699
        // Predicated region
        $region79: #{_lambda_.37} parent=65 // pred_check
          %p701 = pneg %p135
        $region80: #{_lambda_.37} parent=65 // pred_check_branch
          %703 = sbr.rel (%p701) target = $region82
        $region81: #{_lambda_.37} parent=65 // pred_region
          %s704 = smul.u32 2, %s20
        $region82: #{_lambda_.37} parent=65 // pred_fallthru
          _
      $region66: #{_lambda_.37} parent=5 // pred_fallthru
        _
      %p705 = scmp.le.s32.totalorder 2, %s9
      // Predicated region
      $region83: #{_lambda_.37} parent=5 // pred_check
        %p706 = pneg %p705
      $region84: #{_lambda_.37} parent=5 // pred_check_branch
        %708 = sbr.rel (%p706) target = $region86
      $region85: #{_lambda_.37} parent=5 // pred_region
        %s709 = ssub.s32 %s9, 2
        // Predicated region
        $region87: #{_lambda_.37} parent=85 // pred_check
          %p710 = pneg %p141
        $region88: #{_lambda_.37} parent=85 // pred_check_branch
          %712 = sbr.rel (%p710) target = $region90
        $region89: #{_lambda_.37} parent=85 // pred_region
          %s713 = smul.u32 2, %s23
          %p714 = scmp.lt.s32.totalorder %s22, 0
          %s715 = scalar_select %p714, %s22, 0
          %p716 = scmp.lt.s32.totalorder %s713, 3
          %s717 = scalar_select %p716, %s713, 3
          %s718 = smul.addr %s715, 4
          %s719 = sadd.s32 %s717, %s718
          %s720 = smul.addr %s719, 8
          %s721 = scalar_lea.vmem %s3, %s720
        $region90: #{_lambda_.37} parent=85 // pred_fallthru
          _
      $region86: #{_lambda_.37} parent=5 // pred_fallthru
        _
    $region6: #{_lambda_.37} parent=1 // loop_footer
      %s13 = sadd.s32 1, %s9
    $region7: #{_lambda_.37} parent=1 // loop_footer_branch
      %8 = sbr.rel target = $region3
    $region8: #{_lambda_.37} parent=1 // loop_exit
      _

// kernel: _lambda_.39
$region0: #{_lambda_.39}
  #allocation0 [shape = 'u32[]', space=smem, size = 0x4, offset = 0x4, fixed_abs, tag = 'smem constant byte address 0x4 - core index']
  #allocation1 [shape = 'u32[144,128]{1,0:T(1,128)}', space=vmem, size = 0x12000, scoped, tag = 'internal scratch']
  #allocation2 [shape = 'f32[8,256]{1,0:T(8,128)}', space=vmem, size = 0x2000, scoped, tag = 'scratch operand']
  %s0 = inlined_call_operand.vmem [shape: bf16[9,8,512], index: 0, kind: input, shape index: {}]
  %s1 = inlined_call_operand.vmem [shape: bf16[9,512,512], index: 1, kind: input, shape index: {}]
  %s2 = inlined_call_operand.vmem [shape: f32[1,512], index: 2, kind: input, shape index: {}]
  %s3 = inlined_call_operand.vmem [shape: f32[8,512], index: 3, kind: input, shape index: {}]
  %s4 = inlined_call_operand.vmem [shape: f32[8,512], index: 4, kind: output, shape index: {}]
  %s5 = sld [smem:[#allocation0]]
  $region95: #{_lambda_.39} parent=0
    _
  %s7 = ssub.s32 1, %s5
  %s8 = scalar_select 0, %s7, %s5
  $region1: #{_lambda_.39} parent=0
    #allocation3 [shape = 'u8[524288]{0}', space=vmem, size = 0x80000, scoped, tag = 'input window, operand 1']
    loop: start=0, step=1, limit=20
    $region2: #{_lambda_.39} parent=1 // loop_pre_header
      _
    $region3: #{_lambda_.39} parent=1 // loop_header
      %s10 = sphi 0, %s14
      %p11 = scmp.ge.s32.totalorder %s10, 20
      %s17 = sphi 0, %s36
      %s18 = sphi 0, %s32
      %s19 = sphi 0, %s28
      %s20 = sphi 0, %s17
      %s21 = sphi 0, %s18
      %s22 = sphi 0, %s19
      %s23 = sphi 0, %s20
      %s24 = sphi 0, %s21
      %s25 = sphi 0, %s22
      %s41 = sphi 0, %s43
      %s44 = sphi 0, %s41
      %s45 = sphi 0, %s44
      %s61 = sphi 0, %s45
      %s69 = sphi 0, %s71
      %s72 = sphi 0, %s69
      %s73 = sphi 0, %s72
      %s89 = sphi 0, %s73
      %s95 = sphi 0, %s97
      %s98 = sphi 0, %s95
      %s99 = sphi 0, %s98
      %s115 = sphi 0, %s99
      %s123 = sphi 0, %s125
      %s126 = sphi 0, %s123
      %s127 = sphi 0, %s126
      %s143 = sphi 0, %s127
      %s151 = sphi 0, %s153
      %s154 = sphi 0, %s151
      %s155 = sphi 0, %s154
      %s171 = sphi 0, %s155
    $region4: #{_lambda_.39} parent=1 // loop_header_branch
      %13 = sbr.rel (%p11) target = $region8
    $region5: #{_lambda_.39} parent=1 // loop_body
      %s15 = ssub.s32 %s10, 1
      %s16 = ssub.s32 %s10, 2
      %s26 = sadd.s32 1, %s19
      %p27 = scmp.ge.s32.totalorder %s26, 9
      %s28 = scalar_select %p27, 0, %s26
      %s29 = sadd.s32 1, %s18
      %s30 = scalar_select %p27, %s29, %s18
      %p31 = scmp.ge.s32.totalorder %s30, 2
      %s32 = scalar_select %p31, 0, %s30
      %s33 = sadd.s32 1, %s17
      %s34 = scalar_select %p31, %s33, %s17
      %p35 = scmp.ge.s32.totalorder %s34, 1
      %s36 = scalar_select %p35, 0, %s34
      %s37 = ssub.s32 %s19, %s28
      %s38 = ssub.s32 %s17, %s36
      %s39 = sor.u32 %s37, %s38
      %p40 = scmp.eq.s32.totalorder %s39, 0
      %s42 = sadd.s32 %s41, 1
      %s43 = scalar_select %p40, %s41, %s42
      %p46 = pneg %p40
      %p47 = scmp.eq.s32.totalorder %s10, 17
      %p48 = por %p46, %p47
      %p49 = scmp.ne.s32.totalorder %s41, %s44
      %p50 = scmp.eq.s32.totalorder %s10, 0
      %p51 = por %p49, %p50
      %p52 = scmp.ne.s32.totalorder %s41, %s44
      %p53 = scmp.eq.s32.totalorder %s15, 17
      %p54 = por %p52, %p53
      %p55 = scmp.ne.s32.totalorder %s44, %s45
      %p56 = scmp.eq.s32.totalorder %s15, 0
      %p57 = por %p55, %p56
      %p58 = scmp.ne.s32.totalorder %s44, %s45
      %p59 = scmp.eq.s32.totalorder %s16, 17
      %p60 = por %p58, %p59
      %p62 = scmp.ne.s32.totalorder %s45, %s61
      %p63 = scmp.eq.s32.totalorder %s16, 0
      %p64 = por %p62, %p63
      %s65 = ssub.s32 %s19, %s28
      %s66 = ssub.s32 %s18, %s32
      %s67 = sor.u32 %s65, %s66
      %p68 = scmp.eq.s32.totalorder %s67, 0
      %s70 = sadd.s32 %s69, 1
      %s71 = scalar_select %p68, %s69, %s70
      %p74 = pneg %p68
      %p75 = scmp.eq.s32.totalorder %s10, 17
      %p76 = por %p74, %p75
      %p77 = scmp.ne.s32.totalorder %s69, %s72
      %p78 = scmp.eq.s32.totalorder %s10, 0
      %p79 = por %p77, %p78
      %p80 = scmp.ne.s32.totalorder %s69, %s72
      %p81 = scmp.eq.s32.totalorder %s15, 17
      %p82 = por %p80, %p81
      %p83 = scmp.ne.s32.totalorder %s72, %s73
      %p84 = scmp.eq.s32.totalorder %s15, 0
      %p85 = por %p83, %p84
      %p86 = scmp.ne.s32.totalorder %s72, %s73
      %p87 = scmp.eq.s32.totalorder %s16, 17
      %p88 = por %p86, %p87
      %p90 = scmp.ne.s32.totalorder %s73, %s89
      %p91 = scmp.eq.s32.totalorder %s16, 0
      %p92 = por %p90, %p91
      %s93 = ssub.s32 %s18, %s32
      %p94 = scmp.eq.s32.totalorder %s93, 0
      %s96 = sadd.s32 %s95, 1
      %s97 = scalar_select %p94, %s95, %s96
      %p100 = pneg %p94
      %p101 = scmp.eq.s32.totalorder %s10, 17
      %p102 = por %p100, %p101
      %p103 = scmp.ne.s32.totalorder %s95, %s98
      %p104 = scmp.eq.s32.totalorder %s10, 0
      %p105 = por %p103, %p104
      %p106 = scmp.ne.s32.totalorder %s95, %s98
      %p107 = scmp.eq.s32.totalorder %s15, 17
      %p108 = por %p106, %p107
      %p109 = scmp.ne.s32.totalorder %s98, %s99
      %p110 = scmp.eq.s32.totalorder %s15, 0
      %p111 = por %p109, %p110
      %p112 = scmp.ne.s32.totalorder %s98, %s99
      %p113 = scmp.eq.s32.totalorder %s16, 17
      %p114 = por %p112, %p113
      %p116 = scmp.ne.s32.totalorder %s99, %s115
      %p117 = scmp.eq.s32.totalorder %s16, 0
      %p118 = por %p116, %p117
      %s119 = ssub.s32 %s17, %s36
      %s120 = ssub.s32 %s18, %s32
      %s121 = sor.u32 %s119, %s120
      %p122 = scmp.eq.s32.totalorder %s121, 0
      %s124 = sadd.s32 %s123, 1
      %s125 = scalar_select %p122, %s123, %s124
      %p128 = pneg %p122
      %p129 = scmp.eq.s32.totalorder %s10, 17
      %p130 = por %p128, %p129
      %p131 = scmp.ne.s32.totalorder %s123, %s126
      %p132 = scmp.eq.s32.totalorder %s10, 0
      %p133 = por %p131, %p132
      %p134 = scmp.ne.s32.totalorder %s123, %s126
      %p135 = scmp.eq.s32.totalorder %s15, 17
      %p136 = por %p134, %p135
      %p137 = scmp.ne.s32.totalorder %s126, %s127
      %p138 = scmp.eq.s32.totalorder %s15, 0
      %p139 = por %p137, %p138
      %p140 = scmp.ne.s32.totalorder %s126, %s127
      %p141 = scmp.eq.s32.totalorder %s16, 17
      %p142 = por %p140, %p141
      %p144 = scmp.ne.s32.totalorder %s127, %s143
      %p145 = scmp.eq.s32.totalorder %s16, 0
      %p146 = por %p144, %p145
      %s147 = ssub.s32 %s17, %s36
      %s148 = ssub.s32 %s18, %s32
      %s149 = sor.u32 %s147, %s148
      %p150 = scmp.eq.s32.totalorder %s149, 0
      %s152 = sadd.s32 %s151, 1
      %s153 = scalar_select %p150, %s151, %s152
      %p156 = pneg %p150
      %p157 = scmp.eq.s32.totalorder %s10, 17
      %p158 = por %p156, %p157
      %p159 = scmp.ne.s32.totalorder %s151, %s154
      %p160 = scmp.eq.s32.totalorder %s10, 0
      %p161 = por %p159, %p160
      %p162 = scmp.ne.s32.totalorder %s151, %s154
      %p163 = scmp.eq.s32.totalorder %s15, 17
      %p164 = por %p162, %p163
      %p165 = scmp.ne.s32.totalorder %s154, %s155
      %p166 = scmp.eq.s32.totalorder %s15, 0
      %p167 = por %p165, %p166
      %p168 = scmp.ne.s32.totalorder %s154, %s155
      %p169 = scmp.eq.s32.totalorder %s16, 17
      %p170 = por %p168, %p169
      %p172 = scmp.ne.s32.totalorder %s155, %s171
      %p173 = scmp.eq.s32.totalorder %s16, 0
      %p174 = por %p172, %p173
      %p175 = scmp.le.s32.totalorder 1, %s10
      %p176 = scmp.lt.s32.totalorder %s10, 19
      %p177 = pnand %p175, %p176
      %p178 = pneg %p177
      // Predicated region
      $region9: #{_lambda_.39} parent=5 // pred_check
        _
      $region10: #{_lambda_.39} parent=5 // pred_check_branch
        %180 = sbr.rel (%p177) target = $region12
      $region11: #{_lambda_.39} parent=5 // pred_region
        %s181 = ssub.s32 %s10, 1
      $region12: #{_lambda_.39} parent=5 // pred_fallthru
        _
      %p182 = scmp.lt.s32.totalorder %s10, 18
      // Predicated region
      $region13: #{_lambda_.39} parent=5 // pred_check
        %p183 = pneg %p182
      $region14: #{_lambda_.39} parent=5 // pred_check_branch
        %185 = sbr.rel (%p183) target = $region16
      $region15: #{_lambda_.39} parent=5 // pred_region
        // Predicated region
        $region17: #{_lambda_.39} parent=15 // pred_check
          %p186 = pneg %p51
        $region18: #{_lambda_.39} parent=15 // pred_check_branch
          %188 = sbr.rel (%p186) target = $region20
        $region19: #{_lambda_.39} parent=15 // pred_region
          %p189 = scmp.lt.s32.totalorder %s19, 8
          %s190 = scalar_select %p189, %s19, 8
          %p191 = scmp.lt.s32.totalorder %s17, 0
          %s192 = scalar_select %p191, %s17, 0
          %s193 = smul.addr %s192, 4
          %s194 = smul.addr %s190, 4
          %s195 = sadd.s32 %s193, %s194
          %s196 = smul.addr %s195, 4
          %s197 = scalar_lea.vmem %s0, %s196
        $region20: #{_lambda_.39} parent=15 // pred_fallthru
          _
        // Predicated region
        $region21: #{_lambda_.39} parent=15 // pred_check
          %p198 = pneg %p79
        $region22: #{_lambda_.39} parent=15 // pred_check_branch
          %200 = sbr.rel (%p198) target = $region24
        $region23: #{_lambda_.39} parent=15 // pred_region
          %s201 = sand.u32 %s69, 1
          %s202 = sand.u32 %s69, 1
          %s203 = smul.addr %s202, 512
          %s204 = scalar_lea.vmem [#allocation3], %s203
          %s205 = smul.u32 2, %s18
          %s206 = smul.addr %s19, 256
          %s207 = sadd.s32 %s205, %s206
          %s208 = smul.addr %s207, 4
          %s209 = scalar_lea.vmem %s1, %s208
          // Predicated region
          $region25: #{_lambda_.39} parent=23 // pred_check
            _
          $region26: #{_lambda_.39} parent=23 // pred_check_branch
            %211 = sbr.rel (0) target = $region28
          $region27: #{_lambda_.39} parent=23 // pred_region
            // Predicated region
            $region29: #{_lambda_.39} parent=27 // pred_check
              _
            $region30: #{_lambda_.39} parent=27 // pred_check_branch
              %213 = sbr.rel (0) target = $region32
            $region31: #{_lambda_.39} parent=27 // pred_region
              // Predicated region
              $region44: #{_lambda_.39} parent=31 // pred_check
                _
              $region45: #{_lambda_.39} parent=31 // pred_check_branch
                %354 = sbr.rel (0) target = $region47
              $region46: #{_lambda_.39} parent=31 // pred_region
                loop: start=0, step=1, limit=1
                $region48: #{_lambda_.39} parent=46 // loop_pre_header
                  _
                $region49: #{_lambda_.39} parent=46 // loop_header
                  %s356 = sphi 0, %s360
                  %p357 = scmp.ge.s32.totalorder %s356, 1
                  %s361 = sphi %s209, %s209
                  %s362 = sphi %s204, %s204
                $region50: #{_lambda_.39} parent=46 // loop_header_branch
                  %359 = sbr.rel (%p357) target = $region54
                $region51: #{_lambda_.39} parent=46 // loop_body
                  %v363 = vld [vmem:[%s361] sm:$0xff]
                  %364 = vst [vmem:[%s362] sm:$0xff] %v363
                  %v365 = vld [vmem:[%s361 + $0x10] sm:$0xff]
                  %366 = vst [vmem:[%s362 + $0x8] sm:$0xff] %v365
                  %v367 = vld [vmem:[%s361 + $0x20] sm:$0xff]
                  %368 = vst [vmem:[%s362 + $0x10] sm:$0xff] %v367
                  %v369 = vld [vmem:[%s361 + $0x30] sm:$0xff]
                  %370 = vst [vmem:[%s362 + $0x18] sm:$0xff] %v369
                  %v371 = vld [vmem:[%s361 + $0x40] sm:$0xff]
                  %372 = vst [vmem:[%s362 + $0x20] sm:$0xff] %v371
                  %v373 = vld [vmem:[%s361 + $0x50] sm:$0xff]
                  %374 = vst [vmem:[%s362 + $0x28] sm:$0xff] %v373
                  %v375 = vld [vmem:[%s361 + $0x60] sm:$0xff]
                  %376 = vst [vmem:[%s362 + $0x30] sm:$0xff] %v375
                  %v377 = vld [vmem:[%s361 + $0x70] sm:$0xff]
                  %378 = vst [vmem:[%s362 + $0x38] sm:$0xff] %v377
                  %v379 = vld [vmem:[%s361 + $0x80] sm:$0xff]
                  %380 = vst [vmem:[%s362 + $0x40] sm:$0xff] %v379
                  %v381 = vld [vmem:[%s361 + $0x90] sm:$0xff]
                  %382 = vst [vmem:[%s362 + $0x48] sm:$0xff] %v381
                  %v383 = vld [vmem:[%s361 + $0xa0] sm:$0xff]
                  %384 = vst [vmem:[%s362 + $0x50] sm:$0xff] %v383
                  %v385 = vld [vmem:[%s361 + $0xb0] sm:$0xff]
                  %386 = vst [vmem:[%s362 + $0x58] sm:$0xff] %v385
                  %v387 = vld [vmem:[%s361 + $0xc0] sm:$0xff]
                  %388 = vst [vmem:[%s362 + $0x60] sm:$0xff] %v387
                  %v389 = vld [vmem:[%s361 + $0xd0] sm:$0xff]
                  %390 = vst [vmem:[%s362 + $0x68] sm:$0xff] %v389
                  %v391 = vld [vmem:[%s361 + $0xe0] sm:$0xff]
                  %392 = vst [vmem:[%s362 + $0x70] sm:$0xff] %v391
                  %v393 = vld [vmem:[%s361 + $0xf0] sm:$0xff]
                  %394 = vst [vmem:[%s362 + $0x78] sm:$0xff] %v393
                  %v395 = vld [vmem:[%s361 + $0x100] sm:$0xff]
                  %396 = vst [vmem:[%s362 + $0x80] sm:$0xff] %v395
                  %v397 = vld [vmem:[%s361 + $0x110] sm:$0xff]
                  %398 = vst [vmem:[%s362 + $0x88] sm:$0xff] %v397
                  %v399 = vld [vmem:[%s361 + $0x120] sm:$0xff]
                  %400 = vst [vmem:[%s362 + $0x90] sm:$0xff] %v399
                  %v401 = vld [vmem:[%s361 + $0x130] sm:$0xff]
                  %402 = vst [vmem:[%s362 + $0x98] sm:$0xff] %v401
                  %v403 = vld [vmem:[%s361 + $0x140] sm:$0xff]
                  %404 = vst [vmem:[%s362 + $0xa0] sm:$0xff] %v403
                  %v405 = vld [vmem:[%s361 + $0x150] sm:$0xff]
                  %406 = vst [vmem:[%s362 + $0xa8] sm:$0xff] %v405
                  %v407 = vld [vmem:[%s361 + $0x160] sm:$0xff]
                  %408 = vst [vmem:[%s362 + $0xb0] sm:$0xff] %v407
                  %v409 = vld [vmem:[%s361 + $0x170] sm:$0xff]
                  %410 = vst [vmem:[%s362 + $0xb8] sm:$0xff] %v409
                  %v411 = vld [vmem:[%s361 + $0x180] sm:$0xff]
                  %412 = vst [vmem:[%s362 + $0xc0] sm:$0xff] %v411
                  %v413 = vld [vmem:[%s361 + $0x190] sm:$0xff]
                  %414 = vst [vmem:[%s362 + $0xc8] sm:$0xff] %v413
                  %v415 = vld [vmem:[%s361 + $0x1a0] sm:$0xff]
                  %416 = vst [vmem:[%s362 + $0xd0] sm:$0xff] %v415
                  %v417 = vld [vmem:[%s361 + $0x1b0] sm:$0xff]
                  %418 = vst [vmem:[%s362 + $0xd8] sm:$0xff] %v417
                  %v419 = vld [vmem:[%s361 + $0x1c0] sm:$0xff]
                  %420 = vst [vmem:[%s362 + $0xe0] sm:$0xff] %v419
                  %v421 = vld [vmem:[%s361 + $0x1d0] sm:$0xff]
                  %422 = vst [vmem:[%s362 + $0xe8] sm:$0xff] %v421
                  %v423 = vld [vmem:[%s361 + $0x1e0] sm:$0xff]
                  %424 = vst [vmem:[%s362 + $0xf0] sm:$0xff] %v423
                  %v425 = vld [vmem:[%s361 + $0x1f0] sm:$0xff]
                  %426 = vst [vmem:[%s362 + $0xf8] sm:$0xff] %v425
                  %v427 = vld [vmem:[%s361 + $0x200] sm:$0xff]
                  %428 = vst [vmem:[%s362 + $0x100] sm:$0xff] %v427
                  %v429 = vld [vmem:[%s361 + $0x210] sm:$0xff]
                  %430 = vst [vmem:[%s362 + $0x108] sm:$0xff] %v429
                  %v431 = vld [vmem:[%s361 + $0x220] sm:$0xff]
                  %432 = vst [vmem:[%s362 + $0x110] sm:$0xff] %v431
                  %v433 = vld [vmem:[%s361 + $0x230] sm:$0xff]
                  %434 = vst [vmem:[%s362 + $0x118] sm:$0xff] %v433
                  %v435 = vld [vmem:[%s361 + $0x240] sm:$0xff]
                  %436 = vst [vmem:[%s362 + $0x120] sm:$0xff] %v435
                  %v437 = vld [vmem:[%s361 + $0x250] sm:$0xff]
                  %438 = vst [vmem:[%s362 + $0x128] sm:$0xff] %v437
                  %v439 = vld [vmem:[%s361 + $0x260] sm:$0xff]
                  %440 = vst [vmem:[%s362 + $0x130] sm:$0xff] %v439
                  %v441 = vld [vmem:[%s361 + $0x270] sm:$0xff]
                  %442 = vst [vmem:[%s362 + $0x138] sm:$0xff] %v441
                  %v443 = vld [vmem:[%s361 + $0x280] sm:$0xff]
                  %444 = vst [vmem:[%s362 + $0x140] sm:$0xff] %v443
                  %v445 = vld [vmem:[%s361 + $0x290] sm:$0xff]
                  %446 = vst [vmem:[%s362 + $0x148] sm:$0xff] %v445
                  %v447 = vld [vmem:[%s361 + $0x2a0] sm:$0xff]
                  %448 = vst [vmem:[%s362 + $0x150] sm:$0xff] %v447
                  %v449 = vld [vmem:[%s361 + $0x2b0] sm:$0xff]
                  %450 = vst [vmem:[%s362 + $0x158] sm:$0xff] %v449
                  %v451 = vld [vmem:[%s361 + $0x2c0] sm:$0xff]
                  %452 = vst [vmem:[%s362 + $0x160] sm:$0xff] %v451
                  %v453 = vld [vmem:[%s361 + $0x2d0] sm:$0xff]
                  %454 = vst [vmem:[%s362 + $0x168] sm:$0xff] %v453
                  %v455 = vld [vmem:[%s361 + $0x2e0] sm:$0xff]
                  %456 = vst [vmem:[%s362 + $0x170] sm:$0xff] %v455
                  %v457 = vld [vmem:[%s361 + $0x2f0] sm:$0xff]
                  %458 = vst [vmem:[%s362 + $0x178] sm:$0xff] %v457
                  %v459 = vld [vmem:[%s361 + $0x300] sm:$0xff]
                  %460 = vst [vmem:[%s362 + $0x180] sm:$0xff] %v459
                  %v461 = vld [vmem:[%s361 + $0x310] sm:$0xff]
                  %462 = vst [vmem:[%s362 + $0x188] sm:$0xff] %v461
                  %v463 = vld [vmem:[%s361 + $0x320] sm:$0xff]
                  %464 = vst [vmem:[%s362 + $0x190] sm:$0xff] %v463
                  %v465 = vld [vmem:[%s361 + $0x330] sm:$0xff]
                  %466 = vst [vmem:[%s362 + $0x198] sm:$0xff] %v465
                  %v467 = vld [vmem:[%s361 + $0x340] sm:$0xff]
                  %468 = vst [vmem:[%s362 + $0x1a0] sm:$0xff] %v467
                  %v469 = vld [vmem:[%s361 + $0x350] sm:$0xff]
                  %470 = vst [vmem:[%s362 + $0x1a8] sm:$0xff] %v469
                  %v471 = vld [vmem:[%s361 + $0x360] sm:$0xff]
                  %472 = vst [vmem:[%s362 + $0x1b0] sm:$0xff] %v471
                  %v473 = vld [vmem:[%s361 + $0x370] sm:$0xff]
                  %474 = vst [vmem:[%s362 + $0x1b8] sm:$0xff] %v473
                  %v475 = vld [vmem:[%s361 + $0x380] sm:$0xff]
                  %476 = vst [vmem:[%s362 + $0x1c0] sm:$0xff] %v475
                  %v477 = vld [vmem:[%s361 + $0x390] sm:$0xff]
                  %478 = vst [vmem:[%s362 + $0x1c8] sm:$0xff] %v477
                  %v479 = vld [vmem:[%s361 + $0x3a0] sm:$0xff]
                  %480 = vst [vmem:[%s362 + $0x1d0] sm:$0xff] %v479
                  %v481 = vld [vmem:[%s361 + $0x3b0] sm:$0xff]
                  %482 = vst [vmem:[%s362 + $0x1d8] sm:$0xff] %v481
                  %v483 = vld [vmem:[%s361 + $0x3c0] sm:$0xff]
                  %484 = vst [vmem:[%s362 + $0x1e0] sm:$0xff] %v483
                  %v485 = vld [vmem:[%s361 + $0x3d0] sm:$0xff]
                  %486 = vst [vmem:[%s362 + $0x1e8] sm:$0xff] %v485
                  %v487 = vld [vmem:[%s361 + $0x3e0] sm:$0xff]
                  %488 = vst [vmem:[%s362 + $0x1f0] sm:$0xff] %v487
                  %v489 = vld [vmem:[%s361 + $0x3f0] sm:$0xff]
                  %490 = vst [vmem:[%s362 + $0x1f8] sm:$0xff] %v489
                $region52: #{_lambda_.39} parent=46 // loop_footer
                  %s360 = sadd.s32 1, %s356
                $region53: #{_lambda_.39} parent=46 // loop_footer_branch
                  %355 = sbr.rel target = $region49
                $region54: #{_lambda_.39} parent=46 // loop_exit
                  _
              $region47: #{_lambda_.39} parent=31 // pred_fallthru
                _
              // Predicated region
              $region55: #{_lambda_.39} parent=31 // pred_check
                _
              $region56: #{_lambda_.39} parent=31 // pred_check_branch
                %492 = sbr.rel target = $region58
              $region57: #{_lambda_.39} parent=31 // pred_region
                _
              $region58: #{_lambda_.39} parent=31 // pred_fallthru
                _
            $region32: #{_lambda_.39} parent=27 // pred_fallthru
              _
            // Predicated region
            $region33: #{_lambda_.39} parent=27 // pred_check
              _
            $region34: #{_lambda_.39} parent=27 // pred_check_branch
              %215 = sbr.rel target = $region36
            $region35: #{_lambda_.39} parent=27 // pred_region
              loop: start=0, step=1, limit=1
              $region37: #{_lambda_.39} parent=35 // loop_pre_header
                _
              $region38: #{_lambda_.39} parent=35 // loop_header
                %s218 = sphi 0, %s222
                %p219 = scmp.ge.s32.totalorder %s218, 1
                %s223 = sphi %s209, %s209
                %s224 = sphi %s204, %s204
              $region39: #{_lambda_.39} parent=35 // loop_header_branch
                %221 = sbr.rel (%p219) target = $region43
              $region40: #{_lambda_.39} parent=35 // loop_body
                %v225 = vld [vmem:[%s223] sm:$0xff]
                %226 = vst [vmem:[%s224] sm:$0xff] %v225
                %v227 = vld [vmem:[%s223 + $0x10] sm:$0xff]
                %228 = vst [vmem:[%s224 + $0x8] sm:$0xff] %v227
                %v229 = vld [vmem:[%s223 + $0x20] sm:$0xff]
                %230 = vst [vmem:[%s224 + $0x10] sm:$0xff] %v229
                %v231 = vld [vmem:[%s223 + $0x30] sm:$0xff]
                %232 = vst [vmem:[%s224 + $0x18] sm:$0xff] %v231
                %v233 = vld [vmem:[%s223 + $0x40] sm:$0xff]
                %234 = vst [vmem:[%s224 + $0x20] sm:$0xff] %v233
                %v235 = vld [vmem:[%s223 + $0x50] sm:$0xff]
                %236 = vst [vmem:[%s224 + $0x28] sm:$0xff] %v235
                %v237 = vld [vmem:[%s223 + $0x60] sm:$0xff]
                %238 = vst [vmem:[%s224 + $0x30] sm:$0xff] %v237
                %v239 = vld [vmem:[%s223 + $0x70] sm:$0xff]
                %240 = vst [vmem:[%s224 + $0x38] sm:$0xff] %v239
                %v241 = vld [vmem:[%s223 + $0x80] sm:$0xff]
                %242 = vst [vmem:[%s224 + $0x40] sm:$0xff] %v241
                %v243 = vld [vmem:[%s223 + $0x90] sm:$0xff]
                %244 = vst [vmem:[%s224 + $0x48] sm:$0xff] %v243
                %v245 = vld [vmem:[%s223 + $0xa0] sm:$0xff]
                %246 = vst [vmem:[%s224 + $0x50] sm:$0xff] %v245
                %v247 = vld [vmem:[%s223 + $0xb0] sm:$0xff]
                %248 = vst [vmem:[%s224 + $0x58] sm:$0xff] %v247
                %v249 = vld [vmem:[%s223 + $0xc0] sm:$0xff]
                %250 = vst [vmem:[%s224 + $0x60] sm:$0xff] %v249
                %v251 = vld [vmem:[%s223 + $0xd0] sm:$0xff]
                %252 = vst [vmem:[%s224 + $0x68] sm:$0xff] %v251
                %v253 = vld [vmem:[%s223 + $0xe0] sm:$0xff]
                %254 = vst [vmem:[%s224 + $0x70] sm:$0xff] %v253
                %v255 = vld [vmem:[%s223 + $0xf0] sm:$0xff]
                %256 = vst [vmem:[%s224 + $0x78] sm:$0xff] %v255
                %v257 = vld [vmem:[%s223 + $0x100] sm:$0xff]
                %258 = vst [vmem:[%s224 + $0x80] sm:$0xff] %v257
                %v259 = vld [vmem:[%s223 + $0x110] sm:$0xff]
                %260 = vst [vmem:[%s224 + $0x88] sm:$0xff] %v259
                %v261 = vld [vmem:[%s223 + $0x120] sm:$0xff]
                %262 = vst [vmem:[%s224 + $0x90] sm:$0xff] %v261
                %v263 = vld [vmem:[%s223 + $0x130] sm:$0xff]
                %264 = vst [vmem:[%s224 + $0x98] sm:$0xff] %v263
                %v265 = vld [vmem:[%s223 + $0x140] sm:$0xff]
                %266 = vst [vmem:[%s224 + $0xa0] sm:$0xff] %v265
                %v267 = vld [vmem:[%s223 + $0x150] sm:$0xff]
                %268 = vst [vmem:[%s224 + $0xa8] sm:$0xff] %v267
                %v269 = vld [vmem:[%s223 + $0x160] sm:$0xff]
                %270 = vst [vmem:[%s224 + $0xb0] sm:$0xff] %v269
                %v271 = vld [vmem:[%s223 + $0x170] sm:$0xff]
                %272 = vst [vmem:[%s224 + $0xb8] sm:$0xff] %v271
                %v273 = vld [vmem:[%s223 + $0x180] sm:$0xff]
                %274 = vst [vmem:[%s224 + $0xc0] sm:$0xff] %v273
                %v275 = vld [vmem:[%s223 + $0x190] sm:$0xff]
                %276 = vst [vmem:[%s224 + $0xc8] sm:$0xff] %v275
                %v277 = vld [vmem:[%s223 + $0x1a0] sm:$0xff]
                %278 = vst [vmem:[%s224 + $0xd0] sm:$0xff] %v277
                %v279 = vld [vmem:[%s223 + $0x1b0] sm:$0xff]
                %280 = vst [vmem:[%s224 + $0xd8] sm:$0xff] %v279
                %v281 = vld [vmem:[%s223 + $0x1c0] sm:$0xff]
                %282 = vst [vmem:[%s224 + $0xe0] sm:$0xff] %v281
                %v283 = vld [vmem:[%s223 + $0x1d0] sm:$0xff]
                %284 = vst [vmem:[%s224 + $0xe8] sm:$0xff] %v283
                %v285 = vld [vmem:[%s223 + $0x1e0] sm:$0xff]
                %286 = vst [vmem:[%s224 + $0xf0] sm:$0xff] %v285
                %v287 = vld [vmem:[%s223 + $0x1f0] sm:$0xff]
                %288 = vst [vmem:[%s224 + $0xf8] sm:$0xff] %v287
                %v289 = vld [vmem:[%s223 + $0x200] sm:$0xff]
                %290 = vst [vmem:[%s224 + $0x100] sm:$0xff] %v289
                %v291 = vld [vmem:[%s223 + $0x210] sm:$0xff]
                %292 = vst [vmem:[%s224 + $0x108] sm:$0xff] %v291
                %v293 = vld [vmem:[%s223 + $0x220] sm:$0xff]
                %294 = vst [vmem:[%s224 + $0x110] sm:$0xff] %v293
                %v295 = vld [vmem:[%s223 + $0x230] sm:$0xff]
                %296 = vst [vmem:[%s224 + $0x118] sm:$0xff] %v295
                %v297 = vld [vmem:[%s223 + $0x240] sm:$0xff]
                %298 = vst [vmem:[%s224 + $0x120] sm:$0xff] %v297
                %v299 = vld [vmem:[%s223 + $0x250] sm:$0xff]
                %300 = vst [vmem:[%s224 + $0x128] sm:$0xff] %v299
                %v301 = vld [vmem:[%s223 + $0x260] sm:$0xff]
                %302 = vst [vmem:[%s224 + $0x130] sm:$0xff] %v301
                %v303 = vld [vmem:[%s223 + $0x270] sm:$0xff]
                %304 = vst [vmem:[%s224 + $0x138] sm:$0xff] %v303
                %v305 = vld [vmem:[%s223 + $0x280] sm:$0xff]
                %306 = vst [vmem:[%s224 + $0x140] sm:$0xff] %v305
                %v307 = vld [vmem:[%s223 + $0x290] sm:$0xff]
                %308 = vst [vmem:[%s224 + $0x148] sm:$0xff] %v307
                %v309 = vld [vmem:[%s223 + $0x2a0] sm:$0xff]
                %310 = vst [vmem:[%s224 + $0x150] sm:$0xff] %v309
                %v311 = vld [vmem:[%s223 + $0x2b0] sm:$0xff]
                %312 = vst [vmem:[%s224 + $0x158] sm:$0xff] %v311
                %v313 = vld [vmem:[%s223 + $0x2c0] sm:$0xff]
                %314 = vst [vmem:[%s224 + $0x160] sm:$0xff] %v313
                %v315 = vld [vmem:[%s223 + $0x2d0] sm:$0xff]
                %316 = vst [vmem:[%s224 + $0x168] sm:$0xff] %v315
                %v317 = vld [vmem:[%s223 + $0x2e0] sm:$0xff]
                %318 = vst [vmem:[%s224 + $0x170] sm:$0xff] %v317
                %v319 = vld [vmem:[%s223 + $0x2f0] sm:$0xff]
                %320 = vst [vmem:[%s224 + $0x178] sm:$0xff] %v319
                %v321 = vld [vmem:[%s223 + $0x300] sm:$0xff]
                %322 = vst [vmem:[%s224 + $0x180] sm:$0xff] %v321
                %v323 = vld [vmem:[%s223 + $0x310] sm:$0xff]
                %324 = vst [vmem:[%s224 + $0x188] sm:$0xff] %v323
                %v325 = vld [vmem:[%s223 + $0x320] sm:$0xff]
                %326 = vst [vmem:[%s224 + $0x190] sm:$0xff] %v325
                %v327 = vld [vmem:[%s223 + $0x330] sm:$0xff]
                %328 = vst [vmem:[%s224 + $0x198] sm:$0xff] %v327
                %v329 = vld [vmem:[%s223 + $0x340] sm:$0xff]
                %330 = vst [vmem:[%s224 + $0x1a0] sm:$0xff] %v329
                %v331 = vld [vmem:[%s223 + $0x350] sm:$0xff]
                %332 = vst [vmem:[%s224 + $0x1a8] sm:$0xff] %v331
                %v333 = vld [vmem:[%s223 + $0x360] sm:$0xff]
                %334 = vst [vmem:[%s224 + $0x1b0] sm:$0xff] %v333
                %v335 = vld [vmem:[%s223 + $0x370] sm:$0xff]
                %336 = vst [vmem:[%s224 + $0x1b8] sm:$0xff] %v335
                %v337 = vld [vmem:[%s223 + $0x380] sm:$0xff]
                %338 = vst [vmem:[%s224 + $0x1c0] sm:$0xff] %v337
                %v339 = vld [vmem:[%s223 + $0x390] sm:$0xff]
                %340 = vst [vmem:[%s224 + $0x1c8] sm:$0xff] %v339
                %v341 = vld [vmem:[%s223 + $0x3a0] sm:$0xff]
                %342 = vst [vmem:[%s224 + $0x1d0] sm:$0xff] %v341
                %v343 = vld [vmem:[%s223 + $0x3b0] sm:$0xff]
                %344 = vst [vmem:[%s224 + $0x1d8] sm:$0xff] %v343
                %v345 = vld [vmem:[%s223 + $0x3c0] sm:$0xff]
                %346 = vst [vmem:[%s224 + $0x1e0] sm:$0xff] %v345
                %v347 = vld [vmem:[%s223 + $0x3d0] sm:$0xff]
                %348 = vst [vmem:[%s224 + $0x1e8] sm:$0xff] %v347
                %v349 = vld [vmem:[%s223 + $0x3e0] sm:$0xff]
                %350 = vst [vmem:[%s224 + $0x1f0] sm:$0xff] %v349
                %v351 = vld [vmem:[%s223 + $0x3f0] sm:$0xff]
                %352 = vst [vmem:[%s224 + $0x1f8] sm:$0xff] %v351
              $region41: #{_lambda_.39} parent=35 // loop_footer
                %s222 = sadd.s32 1, %s218
              $region42: #{_lambda_.39} parent=35 // loop_footer_branch
                %217 = sbr.rel target = $region38
              $region43: #{_lambda_.39} parent=35 // loop_exit
                _
            $region36: #{_lambda_.39} parent=27 // pred_fallthru
              _
          $region28: #{_lambda_.39} parent=23 // pred_fallthru
            _
          %493 = vnop
        $region24: #{_lambda_.39} parent=15 // pred_fallthru
          _
        // Predicated region
        $region59: #{_lambda_.39} parent=15 // pred_check
          %p494 = pneg %p105
        $region60: #{_lambda_.39} parent=15 // pred_check_branch
          %496 = sbr.rel (%p494) target = $region62
        $region61: #{_lambda_.39} parent=15 // pred_region
          %s497 = smul.u32 2, %s18
          %p498 = scmp.lt.s32.totalorder %s497, 3
          %s499 = scalar_select %p498, %s497, 3
          %s500 = scalar_lea.vmem %s2, %s499
          %s501 = smul.u32 2, %s18
        $region62: #{_lambda_.39} parent=15 // pred_fallthru
          _
        // Predicated region
        $region63: #{_lambda_.39} parent=15 // pred_check
          %p502 = pneg %p133
        $region64: #{_lambda_.39} parent=15 // pred_check_branch
          %504 = sbr.rel (%p502) target = $region66
        $region65: #{_lambda_.39} parent=15 // pred_region
          %s505 = smul.u32 2, %s18
          %p506 = scmp.lt.s32.totalorder %s17, 0
          %s507 = scalar_select %p506, %s17, 0
          %p508 = scmp.lt.s32.totalorder %s505, 3
          %s509 = scalar_select %p508, %s505, 3
          %s510 = smul.addr %s507, 4
          %s511 = sadd.s32 %s509, %s510
          %s512 = smul.addr %s511, 8
          %s513 = scalar_lea.vmem %s3, %s512
          %s514 = smul.u32 2, %s18
        $region66: #{_lambda_.39} parent=15 // pred_fallthru
          _
      $region16: #{_lambda_.39} parent=5 // pred_fallthru
        _
      %p515 = scmp.le.s32.totalorder 1, %s10
      %p516 = scmp.lt.s32.totalorder %s10, 19
      %p517 = pnand %p515, %p516
      %p518 = pneg %p517
      // Predicated region
      $region67: #{_lambda_.39} parent=5 // pred_check
        _
      $region68: #{_lambda_.39} parent=5 // pred_check_branch
        %520 = sbr.rel (%p517) target = $region70
      $region69: #{_lambda_.39} parent=5 // pred_region
        %s521 = ssub.s32 %s10, 1
        %s522 = sand.u32 %s72, 1
        %s523 = sand.u32 %s72, 1
        %s524 = smul.addr %s523, 512
        %s525 = scalar_lea.vmem [#allocation3], %s524
        // Predicated region
        $region71: #{_lambda_.39} parent=69 // pred_check
          %p526 = pneg %p85
        $region72: #{_lambda_.39} parent=69 // pred_check_branch
          %528 = sbr.rel (%p526) target = $region74
        $region73: #{_lambda_.39} parent=69 // pred_region
          _
        $region74: #{_lambda_.39} parent=69 // pred_fallthru
          _
        %p529 = scmp.lt.s32.totalorder %s22, 8
        %s530 = scalar_select %p529, %s22, 8
        %p531 = scmp.lt.s32.totalorder %s20, 0
        %s532 = scalar_select %p531, %s20, 0
        %s533 = smul.addr %s532, 4
        %s534 = smul.addr %s530, 4
        %s535 = sadd.s32 %s533, %s534
        %s536 = smul.addr %s535, 4
        %s537 = scalar_lea.vmem %s0, %s536
        %p538 = pneg %p57
        %p539 = pneg %p54
        %s540 = sand.u32 %s72, 1
        %s541 = sand.u32 %s72, 1
        %s542 = smul.addr %s541, 512
        %s543 = scalar_lea.vmem [#allocation3], %s542
        %p544 = pneg %p85
        %p545 = pneg %p82
        %s546 = smul.u32 2, %s21
        %p547 = scmp.lt.s32.totalorder %s546, 3
        %s548 = scalar_select %p547, %s546, 3
        %s549 = scalar_lea.vmem %s2, %s548
        %p550 = pneg %p111
        %p551 = pneg %p108
        %s552 = smul.u32 2, %s21
        %p553 = scmp.lt.s32.totalorder %s20, 0
        %s554 = scalar_select %p553, %s20, 0
        %p555 = scmp.lt.s32.totalorder %s552, 3
        %s556 = scalar_select %p555, %s552, 3
        %s557 = smul.addr %s554, 4
        %s558 = sadd.s32 %s556, %s557
        %s559 = smul.addr %s558, 8
        %s560 = scalar_lea.vmem %s3, %s559
        %p561 = pneg %p139
        %p562 = pneg %p136
        %p563 = pneg %p167
        %p564 = pneg %p164
        %s565 = smul.u32 2, %s21
        %p566 = scmp.lt.s32.totalorder %s20, 0
        %s567 = scalar_select %p566, %s20, 0
        %p568 = scmp.lt.s32.totalorder %s565, 3
        %s569 = scalar_select %p568, %s565, 3
        %s570 = smul.addr %s567, 4
        %s571 = sadd.s32 %s569, %s570
        %s572 = smul.addr %s571, 8
        %s573 = scalar_lea.vmem %s4, %s572
        %p574 = scmp.lt.s32.totalorder %s22, 8
        %s575 = scalar_select %p574, %s22, 8
        %p576 = scmp.lt.s32.totalorder %s20, 0
        %s577 = scalar_select %p576, %s20, 0
        %s578 = smul.addr %s577, 4
        %s579 = smul.addr %s575, 4
        %s580 = sadd.s32 %s578, %s579
        %s581 = smul.addr %s580, 4
        %s582 = scalar_lea.vmem %s0, %s581
        %s583 = smul.u32 2, %s21
        %s584 = smul.u32 2, %s21
        %p585 = scmp.lt.s32.totalorder %s584, 3
        %s586 = scalar_select %p585, %s584, 3
        %s587 = scalar_lea.vmem %s2, %s586
        %s588 = smul.u32 2, %s21
        %s589 = smul.u32 2, %s21
        %p590 = scmp.lt.s32.totalorder %s20, 0
        %s591 = scalar_select %p590, %s20, 0
        %p592 = scmp.lt.s32.totalorder %s589, 3
        %s593 = scalar_select %p592, %s589, 3
        %s594 = smul.addr %s591, 4
        %s595 = sadd.s32 %s593, %s594
        %s596 = smul.addr %s595, 8
        %s597 = scalar_lea.vmem %s3, %s596
        %s598 = smul.u32 2, %s21
        %s599 = smul.u32 2, %s21
        %p600 = scmp.lt.s32.totalorder %s20, 0
        %s601 = scalar_select %p600, %s20, 0
        %p602 = scmp.lt.s32.totalorder %s599, 3
        %s603 = scalar_select %p602, %s599, 3
        %s604 = smul.addr %s601, 4
        %s605 = sadd.s32 %s603, %s604
        %s606 = smul.addr %s605, 8
        %s607 = scalar_lea.vmem %s4, %s606
        %s608 = smul.u32 2, %s21
        %p609 = scmp.eq.s32.totalorder %s22, 0
        // Predicated region
        $region75: #{_lambda_.39} parent=69 // pred_check
          %p610 = pneg %p609
        $region76: #{_lambda_.39} parent=69 // pred_check_branch
          %612 = sbr.rel (%p610) target = $region78
        $region77: #{_lambda_.39} parent=69 // pred_region
          %613 = vst [vmem:[#allocation2] sm:$0xff] 0.0
          %614 = vst [vmem:[#allocation2 + $0x8] sm:$0xff] 0.0
        $region78: #{_lambda_.39} parent=69 // pred_fallthru
          _
        %v615 = vld [vmem:[#allocation2] sm:$0xff]
        %v616 = vld [vmem:[#allocation2 + $0x8] sm:$0xff]
        %v617 = vld [vmem:[%s582] sm:$0xff]
        %v618 = vld [vmem:[%s582 + $0x8] sm:$0xff]
        %v619 = vld [vmem:[%s525] sm:$0xff]
        %v620 = vld [vmem:[%s525 + $0x8] sm:$0xff]
        %v621 = vld [vmem:[%s525 + $0x10] sm:$0xff]
        %v622 = vld [vmem:[%s525 + $0x18] sm:$0xff]
        %v623 = vld [vmem:[%s525 + $0x20] sm:$0xff]
        %v624 = vld [vmem:[%s525 + $0x28] sm:$0xff]
        %v625 = vld [vmem:[%s525 + $0x30] sm:$0xff]
        %v626 = vld [vmem:[%s525 + $0x38] sm:$0xff]
        %v627 = vld [vmem:[%s525 + $0x40] sm:$0xff]
        %v628 = vld [vmem:[%s525 + $0x48] sm:$0xff]
        %v629 = vld [vmem:[%s525 + $0x50] sm:$0xff]
        %v630 = vld [vmem:[%s525 + $0x58] sm:$0xff]
        %v631 = vld [vmem:[%s525 + $0x60] sm:$0xff]
        %v632 = vld [vmem:[%s525 + $0x68] sm:$0xff]
        %v633 = vld [vmem:[%s525 + $0x70] sm:$0xff]
        %v634 = vld [vmem:[%s525 + $0x78] sm:$0xff]
        %v635 = vld [vmem:[%s525 + $0x80] sm:$0xff]
        %v636 = vld [vmem:[%s525 + $0x88] sm:$0xff]
        %v637 = vld [vmem:[%s525 + $0x90] sm:$0xff]
        %v638 = vld [vmem:[%s525 + $0x98] sm:$0xff]
        %v639 = vld [vmem:[%s525 + $0xa0] sm:$0xff]
        %v640 = vld [vmem:[%s525 + $0xa8] sm:$0xff]
        %v641 = vld [vmem:[%s525 + $0xb0] sm:$0xff]
        %v642 = vld [vmem:[%s525 + $0xb8] sm:$0xff]
        %v643 = vld [vmem:[%s525 + $0xc0] sm:$0xff]
        %v644 = vld [vmem:[%s525 + $0xc8] sm:$0xff]
        %v645 = vld [vmem:[%s525 + $0xd0] sm:$0xff]
        %v646 = vld [vmem:[%s525 + $0xd8] sm:$0xff]
        %v647 = vld [vmem:[%s525 + $0xe0] sm:$0xff]
        %v648 = vld [vmem:[%s525 + $0xe8] sm:$0xff]
        %v649 = vld [vmem:[%s525 + $0xf0] sm:$0xff]
        %v650 = vld [vmem:[%s525 + $0xf8] sm:$0xff]
        %v651 = vld [vmem:[%s525 + $0x100] sm:$0xff]
        %v652 = vld [vmem:[%s525 + $0x108] sm:$0xff]
        %v653 = vld [vmem:[%s525 + $0x110] sm:$0xff]
        %v654 = vld [vmem:[%s525 + $0x118] sm:$0xff]
        %v655 = vld [vmem:[%s525 + $0x120] sm:$0xff]
        %v656 = vld [vmem:[%s525 + $0x128] sm:$0xff]
        %v657 = vld [vmem:[%s525 + $0x130] sm:$0xff]
        %v658 = vld [vmem:[%s525 + $0x138] sm:$0xff]
        %v659 = vld [vmem:[%s525 + $0x140] sm:$0xff]
        %v660 = vld [vmem:[%s525 + $0x148] sm:$0xff]
        %v661 = vld [vmem:[%s525 + $0x150] sm:$0xff]
        %v662 = vld [vmem:[%s525 + $0x158] sm:$0xff]
        %v663 = vld [vmem:[%s525 + $0x160] sm:$0xff]
        %v664 = vld [vmem:[%s525 + $0x168] sm:$0xff]
        %v665 = vld [vmem:[%s525 + $0x170] sm:$0xff]
        %v666 = vld [vmem:[%s525 + $0x178] sm:$0xff]
        %v667 = vld [vmem:[%s525 + $0x180] sm:$0xff]
        %v668 = vld [vmem:[%s525 + $0x188] sm:$0xff]
        %v669 = vld [vmem:[%s525 + $0x190] sm:$0xff]
        %v670 = vld [vmem:[%s525 + $0x198] sm:$0xff]
        %v671 = vld [vmem:[%s525 + $0x1a0] sm:$0xff]
        %v672 = vld [vmem:[%s525 + $0x1a8] sm:$0xff]
        %v673 = vld [vmem:[%s525 + $0x1b0] sm:$0xff]
        %v674 = vld [vmem:[%s525 + $0x1b8] sm:$0xff]
        %v675 = vld [vmem:[%s525 + $0x1c0] sm:$0xff]
        %v676 = vld [vmem:[%s525 + $0x1c8] sm:$0xff]
        %v677 = vld [vmem:[%s525 + $0x1d0] sm:$0xff]
        %v678 = vld [vmem:[%s525 + $0x1d8] sm:$0xff]
        %v679 = vld [vmem:[%s525 + $0x1e0] sm:$0xff]
        %v680 = vld [vmem:[%s525 + $0x1e8] sm:$0xff]
        %v681 = vld [vmem:[%s525 + $0x1f0] sm:$0xff]
        %v682 = vld [vmem:[%s525 + $0x1f8] sm:$0xff]
        %v685 = vunpack.c.l.b16 %v617
        %v686 = vunpack.c.h.b16 %v617
        %v687 = vunpack.c.l.b16 %v618
        %v688 = vunpack.c.h.b16 %v618
        %v689 = vpack.c.b16 %v685, %v685
        %v690 = vpack.c.b16 %v686, %v686
        %v691 = vpack.c.b16 %v687, %v687
        %v692 = vpack.c.b16 %v688, %v688
        %v761 = vunpack.c.l.b16 %v619
        %v762 = vunpack.c.h.b16 %v619
        %v763 = vunpack.c.l.b16 %v620
        %v764 = vunpack.c.h.b16 %v620
        %v765 = vunpack.c.l.b16 %v621
        %v766 = vunpack.c.h.b16 %v621
        %v767 = vunpack.c.l.b16 %v622
        %v768 = vunpack.c.h.b16 %v622
        %v769 = vunpack.c.l.b16 %v623
        %v770 = vunpack.c.h.b16 %v623
        %v771 = vunpack.c.l.b16 %v624
        %v772 = vunpack.c.h.b16 %v624
        %v773 = vunpack.c.l.b16 %v625
        %v774 = vunpack.c.h.b16 %v625
        %v775 = vunpack.c.l.b16 %v626
        %v776 = vunpack.c.h.b16 %v626
        %v777 = vunpack.c.l.b16 %v627
        %v778 = vunpack.c.h.b16 %v627
        %v779 = vunpack.c.l.b16 %v628
        %v780 = vunpack.c.h.b16 %v628
        %v781 = vunpack.c.l.b16 %v629
        %v782 = vunpack.c.h.b16 %v629
        %v783 = vunpack.c.l.b16 %v630
        %v784 = vunpack.c.h.b16 %v630
        %v785 = vunpack.c.l.b16 %v631
        %v786 = vunpack.c.h.b16 %v631
        %v787 = vunpack.c.l.b16 %v632
        %v788 = vunpack.c.h.b16 %v632
        %v789 = vunpack.c.l.b16 %v633
        %v790 = vunpack.c.h.b16 %v633
        %v791 = vunpack.c.l.b16 %v634
        %v792 = vunpack.c.h.b16 %v634
        %v793 = vunpack.c.l.b16 %v635
        %v794 = vunpack.c.h.b16 %v635
        %v795 = vunpack.c.l.b16 %v636
        %v796 = vunpack.c.h.b16 %v636
        %v797 = vunpack.c.l.b16 %v637
        %v798 = vunpack.c.h.b16 %v637
        %v799 = vunpack.c.l.b16 %v638
        %v800 = vunpack.c.h.b16 %v638
        %v801 = vunpack.c.l.b16 %v639
        %v802 = vunpack.c.h.b16 %v639
        %v803 = vunpack.c.l.b16 %v640
        %v804 = vunpack.c.h.b16 %v640
        %v805 = vunpack.c.l.b16 %v641
        %v806 = vunpack.c.h.b16 %v641
        %v807 = vunpack.c.l.b16 %v642
        %v808 = vunpack.c.h.b16 %v642
        %v809 = vunpack.c.l.b16 %v643
        %v810 = vunpack.c.h.b16 %v643
        %v811 = vunpack.c.l.b16 %v644
        %v812 = vunpack.c.h.b16 %v644
        %v813 = vunpack.c.l.b16 %v645
        %v814 = vunpack.c.h.b16 %v645
        %v815 = vunpack.c.l.b16 %v646
        %v816 = vunpack.c.h.b16 %v646
        %v817 = vunpack.c.l.b16 %v647
        %v818 = vunpack.c.h.b16 %v647
        %v819 = vunpack.c.l.b16 %v648
        %v820 = vunpack.c.h.b16 %v648
        %v821 = vunpack.c.l.b16 %v649
        %v822 = vunpack.c.h.b16 %v649
        %v823 = vunpack.c.l.b16 %v650
        %v824 = vunpack.c.h.b16 %v650
        %v825 = vunpack.c.l.b16 %v651
        %v826 = vunpack.c.h.b16 %v651
        %v827 = vunpack.c.l.b16 %v652
        %v828 = vunpack.c.h.b16 %v652
        %v829 = vunpack.c.l.b16 %v653
        %v830 = vunpack.c.h.b16 %v653
        %v831 = vunpack.c.l.b16 %v654
        %v832 = vunpack.c.h.b16 %v654
        %v833 = vunpack.c.l.b16 %v655
        %v834 = vunpack.c.h.b16 %v655
        %v835 = vunpack.c.l.b16 %v656
        %v836 = vunpack.c.h.b16 %v656
        %v837 = vunpack.c.l.b16 %v657
        %v838 = vunpack.c.h.b16 %v657
        %v839 = vunpack.c.l.b16 %v658
        %v840 = vunpack.c.h.b16 %v658
        %v841 = vunpack.c.l.b16 %v659
        %v842 = vunpack.c.h.b16 %v659
        %v843 = vunpack.c.l.b16 %v660
        %v844 = vunpack.c.h.b16 %v660
        %v845 = vunpack.c.l.b16 %v661
        %v846 = vunpack.c.h.b16 %v661
        %v847 = vunpack.c.l.b16 %v662
        %v848 = vunpack.c.h.b16 %v662
        %v849 = vunpack.c.l.b16 %v663
        %v850 = vunpack.c.h.b16 %v663
        %v851 = vunpack.c.l.b16 %v664
        %v852 = vunpack.c.h.b16 %v664
        %v853 = vunpack.c.l.b16 %v665
        %v854 = vunpack.c.h.b16 %v665
        %v855 = vunpack.c.l.b16 %v666
        %v856 = vunpack.c.h.b16 %v666
        %v857 = vunpack.c.l.b16 %v667
        %v858 = vunpack.c.h.b16 %v667
        %v859 = vunpack.c.l.b16 %v668
        %v860 = vunpack.c.h.b16 %v668
        %v861 = vunpack.c.l.b16 %v669
        %v862 = vunpack.c.h.b16 %v669
        %v863 = vunpack.c.l.b16 %v670
        %v864 = vunpack.c.h.b16 %v670
        %v865 = vunpack.c.l.b16 %v671
        %v866 = vunpack.c.h.b16 %v671
        %v867 = vunpack.c.l.b16 %v672
        %v868 = vunpack.c.h.b16 %v672
        %v869 = vunpack.c.l.b16 %v673
        %v870 = vunpack.c.h.b16 %v673
        %v871 = vunpack.c.l.b16 %v674
        %v872 = vunpack.c.h.b16 %v674
        %v873 = vunpack.c.l.b16 %v675
        %v874 = vunpack.c.h.b16 %v675
        %v875 = vunpack.c.l.b16 %v676
        %v876 = vunpack.c.h.b16 %v676
        %v877 = vunpack.c.l.b16 %v677
        %v878 = vunpack.c.h.b16 %v677
        %v879 = vunpack.c.l.b16 %v678
        %v880 = vunpack.c.h.b16 %v678
        %v881 = vunpack.c.l.b16 %v679
        %v882 = vunpack.c.h.b16 %v679
        %v883 = vunpack.c.l.b16 %v680
        %v884 = vunpack.c.h.b16 %v680
        %v885 = vunpack.c.l.b16 %v681
        %v886 = vunpack.c.h.b16 %v681
        %v887 = vunpack.c.l.b16 %v682
        %v888 = vunpack.c.h.b16 %v682
        %v889 = vpack.c.b16 %v763, %v761
        %v890 = vpack.c.b16 %v764, %v762
        %v891 = vpack.c.b16 %v767, %v765
        %v892 = vpack.c.b16 %v768, %v766
        %v893 = vpack.c.b16 %v771, %v769
        %v894 = vpack.c.b16 %v772, %v770
        %v895 = vpack.c.b16 %v775, %v773
        %v896 = vpack.c.b16 %v776, %v774
        %v897 = vpack.c.b16 %v779, %v777
        %v898 = vpack.c.b16 %v780, %v778
        %v899 = vpack.c.b16 %v783, %v781
        %v900 = vpack.c.b16 %v784, %v782
        %v901 = vpack.c.b16 %v787, %v785
        %v902 = vpack.c.b16 %v788, %v786
        %v903 = vpack.c.b16 %v791, %v789
        %v904 = vpack.c.b16 %v792, %v790
        %v905 = vpack.c.b16 %v795, %v793
        %v906 = vpack.c.b16 %v796, %v794
        %v907 = vpack.c.b16 %v799, %v797
        %v908 = vpack.c.b16 %v800, %v798
        %v909 = vpack.c.b16 %v803, %v801
        %v910 = vpack.c.b16 %v804, %v802
        %v911 = vpack.c.b16 %v807, %v805
        %v912 = vpack.c.b16 %v808, %v806
        %v913 = vpack.c.b16 %v811, %v809
        %v914 = vpack.c.b16 %v812, %v810
        %v915 = vpack.c.b16 %v815, %v813
        %v916 = vpack.c.b16 %v816, %v814
        %v917 = vpack.c.b16 %v819, %v817
        %v918 = vpack.c.b16 %v820, %v818
        %v919 = vpack.c.b16 %v823, %v821
        %v920 = vpack.c.b16 %v824, %v822
        %v921 = vpack.c.b16 %v827, %v825
        %v922 = vpack.c.b16 %v828, %v826
        %v923 = vpack.c.b16 %v831, %v829
        %v924 = vpack.c.b16 %v832, %v830
        %v925 = vpack.c.b16 %v835, %v833
        %v926 = vpack.c.b16 %v836, %v834
        %v927 = vpack.c.b16 %v839, %v837
        %v928 = vpack.c.b16 %v840, %v838
        %v929 = vpack.c.b16 %v843, %v841
        %v930 = vpack.c.b16 %v844, %v842
        %v931 = vpack.c.b16 %v847, %v845
        %v932 = vpack.c.b16 %v848, %v846
        %v933 = vpack.c.b16 %v851, %v849
        %v934 = vpack.c.b16 %v852, %v850
        %v935 = vpack.c.b16 %v855, %v853
        %v936 = vpack.c.b16 %v856, %v854
        %v937 = vpack.c.b16 %v859, %v857
        %v938 = vpack.c.b16 %v860, %v858
        %v939 = vpack.c.b16 %v863, %v861
        %v940 = vpack.c.b16 %v864, %v862
        %v941 = vpack.c.b16 %v867, %v865
        %v942 = vpack.c.b16 %v868, %v866
        %v943 = vpack.c.b16 %v871, %v869
        %v944 = vpack.c.b16 %v872, %v870
        %v945 = vpack.c.b16 %v875, %v873
        %v946 = vpack.c.b16 %v876, %v874
        %v947 = vpack.c.b16 %v879, %v877
        %v948 = vpack.c.b16 %v880, %v878
        %v949 = vpack.c.b16 %v883, %v881
        %v950 = vpack.c.b16 %v884, %v882
        %v951 = vpack.c.b16 %v887, %v885
        %v952 = vpack.c.b16 %v888, %v886
        %1017 = vmatprep.subr.bf16.mxu0 %v890
        %1018 = vmatpush1.bf16.msra.mxu0 %v889
        %1019 = vmatprep.subr.bf16.mxu0 %v892
        %1020 = vmatpush1.bf16.msra.mxu0 %v891
        %1021 = vmatprep.subr.bf16.mxu0 %v894
        %1022 = vmatpush1.bf16.msra.mxu0 %v893
        %1023 = vmatprep.subr.bf16.mxu0 %v896
        %1024 = vmatpush1.bf16.msra.mxu0 %v895
        %1025 = vmatprep.subr.bf16.mxu0 %v898
        %1026 = vmatpush1.bf16.msra.mxu0 %v897
        %1027 = vmatprep.subr.bf16.mxu0 %v900
        %1028 = vmatpush1.bf16.msra.mxu0 %v899
        %1029 = vmatprep.subr.bf16.mxu0 %v902
        %1030 = vmatpush1.bf16.msra.mxu0 %v901
        %1031 = vmatprep.subr.bf16.mxu0 %v904
        %1032 = vmatpush1.bf16.msra.mxu0 %v903
        %1033 = vmatprep.subr.bf16.mxu0 %v906
        %1034 = vmatpush1.bf16.msra.mxu0 %v905
        %1035 = vmatprep.subr.bf16.mxu0 %v908
        %1036 = vmatpush1.bf16.msra.mxu0 %v907
        %1037 = vmatprep.subr.bf16.mxu0 %v910
        %1038 = vmatpush1.bf16.msra.mxu0 %v909
        %1039 = vmatprep.subr.bf16.mxu0 %v912
        %1040 = vmatpush1.bf16.msra.mxu0 %v911
        %1041 = vmatprep.subr.bf16.mxu0 %v914
        %1042 = vmatpush1.bf16.msra.mxu0 %v913
        %1043 = vmatprep.subr.bf16.mxu0 %v916
        %1044 = vmatpush1.bf16.msra.mxu0 %v915
        %1045 = vmatprep.subr.bf16.mxu0 %v918
        %1046 = vmatpush1.bf16.msra.mxu0 %v917
        %1047 = vmatprep.subr.bf16.mxu0 %v920
        %1048 = vmatpush1.bf16.msra.mxu0 %v919
        %1049 = vmatprep.mubr.bf16.mxu0 %v690
        %1050 = vmatmul.mubr.bf16.gmra.mrb[0].mxu0 %v689
        %v1051 = vpop.f32.mrb[0].mxu0
        %v1052 = vadd.f32 0.0, %v1051
        %v1053 = vpop.f32.mrb[0].mxu0
        %v1054 = vadd.f32 0.0, %v1053
        %v1055 = vpop.f32.mrb[0].mxu0
        %v1056 = vpop.f32.mrb[0].mxu0
        %1057 = vdwg.mxu0
        %1058 = vmatprep.subr.bf16.mxu0 %v922
        %1059 = vmatpush1.bf16.msra.mxu0 %v921
        %1060 = vmatprep.subr.bf16.mxu0 %v924
        %1061 = vmatpush1.bf16.msra.mxu0 %v923
        %1062 = vmatprep.subr.bf16.mxu0 %v926
        %1063 = vmatpush1.bf16.msra.mxu0 %v925
        %1064 = vmatprep.subr.bf16.mxu0 %v928
        %1065 = vmatpush1.bf16.msra.mxu0 %v927
        %1066 = vmatprep.subr.bf16.mxu0 %v930
        %1067 = vmatpush1.bf16.msra.mxu0 %v929
        %1068 = vmatprep.subr.bf16.mxu0 %v932
        %1069 = vmatpush1.bf16.msra.mxu0 %v931
        %1070 = vmatprep.subr.bf16.mxu0 %v934
        %1071 = vmatpush1.bf16.msra.mxu0 %v933
        %1072 = vmatprep.subr.bf16.mxu0 %v936
        %1073 = vmatpush1.bf16.msra.mxu0 %v935
        %1074 = vmatprep.subr.bf16.mxu0 %v938
        %1075 = vmatpush1.bf16.msra.mxu0 %v937
        %1076 = vmatprep.subr.bf16.mxu0 %v940
        %1077 = vmatpush1.bf16.msra.mxu0 %v939
        %1078 = vmatprep.subr.bf16.mxu0 %v942
        %1079 = vmatpush1.bf16.msra.mxu0 %v941
        %1080 = vmatprep.subr.bf16.mxu0 %v944
        %1081 = vmatpush1.bf16.msra.mxu0 %v943
        %1082 = vmatprep.subr.bf16.mxu0 %v946
        %1083 = vmatpush1.bf16.msra.mxu0 %v945
        %1084 = vmatprep.subr.bf16.mxu0 %v948
        %1085 = vmatpush1.bf16.msra.mxu0 %v947
        %1086 = vmatprep.subr.bf16.mxu0 %v950
        %1087 = vmatpush1.bf16.msra.mxu0 %v949
        %1088 = vmatprep.subr.bf16.mxu0 %v952
        %1089 = vmatpush1.bf16.msra.mxu0 %v951
        %1090 = vmatprep.mubr.bf16.mxu0 %v692
        %1091 = vmatmul.mubr.bf16.gmra.mrb[0].mxu0 %v691
        %v1092 = vpop.f32.mrb[0].mxu0
        %v1093 = vadd.f32 %v1052, %v1092
        %v1094 = vpop.f32.mrb[0].mxu0
        %v1095 = vadd.f32 %v1054, %v1094
        %v1096 = vpop.f32.mrb[0].mxu0
        %v1097 = vpop.f32.mrb[0].mxu0
        %1098 = vdwg.mxu0
        %v1099 = vadd.f32 %v615, %v1093
        %v1100 = vadd.f32 %v616, %v1095
        %1101 = vst [vmem:[#allocation2] sm:$0xff] %v1099
        %1102 = vst [vmem:[#allocation2 + $0x8] sm:$0xff] %v1100
        %p1103 = scmp.eq.s32.totalorder %s22, 8
        // Predicated region
        $region79: #{_lambda_.39} parent=69 // pred_check
          %p1104 = pneg %p1103
        $region80: #{_lambda_.39} parent=69 // pred_check_branch
          %1106 = sbr.rel (%p1104) target = $region82
        $region81: #{_lambda_.39} parent=69 // pred_region
          %v1107 = vld [vmem:[#allocation2] sm:$0xff]
          %v1108 = vld [vmem:[#allocation2 + $0x8] sm:$0xff]
          %v1109 = vld [vmem:[%s587] sm:$0x3]
          %v1111 = vlaneseq
          %v1112 = vshrl.u32 %v1111, 7
          %v1113 = vsub.s32 0, %v1112
          %v1114 = vrot.slane %v1109, %v1113
          %v1115 = vlaneseq
          %v1116 = vshrl.u32 %v1115, 7
          %v1117 = vsub.s32 1, %v1116
          %v1118 = vrot.slane %v1109, %v1117
          %v1121 = vadd.f32 %v1107, %v1114
          %v1122 = vadd.f32 %v1108, %v1118
          %v1123 = vld [vmem:[%s597] sm:$0xff]
          %v1124 = vld [vmem:[%s597 + $0x8] sm:$0xff]
          %v1125 = vadd.f32 %v1121, %v1123
          %v1126 = vadd.f32 %v1122, %v1124
          %v1127 = vmax.f32 %v1125, 0.0
          %v1128 = vmax.f32 %v1126, 0.0
          %1129 = vst [vmem:[%s607] sm:$0xff] %v1127
          %1130 = vst [vmem:[%s607 + $0x8] sm:$0xff] %v1128
        $region82: #{_lambda_.39} parent=69 // pred_fallthru
          _
        %s1131 = smul.u32 2, %s21
        %p1132 = scmp.lt.s32.totalorder %s20, 0
        %s1133 = scalar_select %p1132, %s20, 0
        %p1134 = scmp.lt.s32.totalorder %s1131, 3
        %s1135 = scalar_select %p1134, %s1131, 3
        %s1136 = smul.addr %s1133, 4
        %s1137 = sadd.s32 %s1135, %s1136
        %s1138 = smul.addr %s1137, 8
        %s1139 = scalar_lea.vmem %s4, %s1138
        // Predicated region
        $region83: #{_lambda_.39} parent=69 // pred_check
          %p1140 = pneg %p164
        $region84: #{_lambda_.39} parent=69 // pred_check_branch
          %1142 = sbr.rel (%p1140) target = $region86
        $region85: #{_lambda_.39} parent=69 // pred_region
          %s1143 = smul.u32 2, %s21
        $region86: #{_lambda_.39} parent=69 // pred_fallthru
          _
      $region70: #{_lambda_.39} parent=5 // pred_fallthru
        _
      %p1144 = scmp.le.s32.totalorder 2, %s10
      // Predicated region
      $region87: #{_lambda_.39} parent=5 // pred_check
        %p1145 = pneg %p1144
      $region88: #{_lambda_.39} parent=5 // pred_check_branch
        %1147 = sbr.rel (%p1145) target = $region90
      $region89: #{_lambda_.39} parent=5 // pred_region
        %s1148 = ssub.s32 %s10, 2
        // Predicated region
        $region91: #{_lambda_.39} parent=89 // pred_check
          %p1149 = pneg %p170
        $region92: #{_lambda_.39} parent=89 // pred_check_branch
          %1151 = sbr.rel (%p1149) target = $region94
        $region93: #{_lambda_.39} parent=89 // pred_region
          %s1152 = smul.u32 2, %s24
          %p1153 = scmp.lt.s32.totalorder %s23, 0
          %s1154 = scalar_select %p1153, %s23, 0
          %p1155 = scmp.lt.s32.totalorder %s1152, 3
          %s1156 = scalar_select %p1155, %s1152, 3
          %s1157 = smul.addr %s1154, 4
          %s1158 = sadd.s32 %s1156, %s1157
          %s1159 = smul.addr %s1158, 8
          %s1160 = scalar_lea.vmem %s4, %s1159
        $region94: #{_lambda_.39} parent=89 // pred_fallthru
          _
      $region90: #{_lambda_.39} parent=5 // pred_fallthru
        _
    $region6: #{_lambda_.39} parent=1 // loop_footer
      %s14 = sadd.s32 1, %s10
    $region7: #{_lambda_.39} parent=1 // loop_footer_branch
      %9 = sbr.rel target = $region3
    $region8: #{_lambda_.39} parent=1 // loop_exit
      _

// kernel: _lambda_.40
$region0: #{_lambda_.40}
  #allocation0 [shape = 'u32[]', space=smem, size = 0x4, offset = 0x4, fixed_abs, tag = 'smem constant byte address 0x4 - core index']
  #allocation1 [shape = 'u32[144,128]{1,0:T(1,128)}', space=vmem, size = 0x12000, scoped, tag = 'internal scratch']
  #allocation2 [shape = 'f32[8,256]{1,0:T(8,128)}', space=vmem, size = 0x2000, scoped, tag = 'scratch operand']
  %s0 = inlined_call_operand.vmem [shape: bf16[9,8,512], index: 0, kind: input, shape index: {}]
  %s1 = inlined_call_operand.vmem [shape: bf16[9,512,512], index: 1, kind: input, shape index: {}]
  %s2 = inlined_call_operand.vmem [shape: f32[1,512], index: 2, kind: input, shape index: {}]
  %s3 = inlined_call_operand.vmem [shape: f32[8,512], index: 3, kind: output, shape index: {}]
  %s4 = sld [smem:[#allocation0]]
  $region91: #{_lambda_.40} parent=0
    _
  %s6 = ssub.s32 1, %s4
  %s7 = scalar_select 0, %s6, %s4
  $region1: #{_lambda_.40} parent=0
    #allocation3 [shape = 'u8[524288]{0}', space=vmem, size = 0x80000, scoped, tag = 'input window, operand 1']
    loop: start=0, step=1, limit=20
    $region2: #{_lambda_.40} parent=1 // loop_pre_header
      _
    $region3: #{_lambda_.40} parent=1 // loop_header
      %s9 = sphi 0, %s13
      %p10 = scmp.ge.s32.totalorder %s9, 20
      %s16 = sphi 0, %s35
      %s17 = sphi 0, %s31
      %s18 = sphi 0, %s27
      %s19 = sphi 0, %s16
      %s20 = sphi 0, %s17
      %s21 = sphi 0, %s18
      %s22 = sphi 0, %s19
      %s23 = sphi 0, %s20
      %s24 = sphi 0, %s21
      %s40 = sphi 0, %s42
      %s43 = sphi 0, %s40
      %s44 = sphi 0, %s43
      %s60 = sphi 0, %s44
      %s68 = sphi 0, %s70
      %s71 = sphi 0, %s68
      %s72 = sphi 0, %s71
      %s88 = sphi 0, %s72
      %s94 = sphi 0, %s96
      %s97 = sphi 0, %s94
      %s98 = sphi 0, %s97
      %s114 = sphi 0, %s98
      %s122 = sphi 0, %s124
      %s125 = sphi 0, %s122
      %s126 = sphi 0, %s125
      %s142 = sphi 0, %s126
    $region4: #{_lambda_.40} parent=1 // loop_header_branch
      %12 = sbr.rel (%p10) target = $region8
    $region5: #{_lambda_.40} parent=1 // loop_body
      %s14 = ssub.s32 %s9, 1
      %s15 = ssub.s32 %s9, 2
      %s25 = sadd.s32 1, %s18
      %p26 = scmp.ge.s32.totalorder %s25, 9
      %s27 = scalar_select %p26, 0, %s25
      %s28 = sadd.s32 1, %s17
      %s29 = scalar_select %p26, %s28, %s17
      %p30 = scmp.ge.s32.totalorder %s29, 2
      %s31 = scalar_select %p30, 0, %s29
      %s32 = sadd.s32 1, %s16
      %s33 = scalar_select %p30, %s32, %s16
      %p34 = scmp.ge.s32.totalorder %s33, 1
      %s35 = scalar_select %p34, 0, %s33
      %s36 = ssub.s32 %s18, %s27
      %s37 = ssub.s32 %s16, %s35
      %s38 = sor.u32 %s36, %s37
      %p39 = scmp.eq.s32.totalorder %s38, 0
      %s41 = sadd.s32 %s40, 1
      %s42 = scalar_select %p39, %s40, %s41
      %p45 = pneg %p39
      %p46 = scmp.eq.s32.totalorder %s9, 17
      %p47 = por %p45, %p46
      %p48 = scmp.ne.s32.totalorder %s40, %s43
      %p49 = scmp.eq.s32.totalorder %s9, 0
      %p50 = por %p48, %p49
      %p51 = scmp.ne.s32.totalorder %s40, %s43
      %p52 = scmp.eq.s32.totalorder %s14, 17
      %p53 = por %p51, %p52
      %p54 = scmp.ne.s32.totalorder %s43, %s44
      %p55 = scmp.eq.s32.totalorder %s14, 0
      %p56 = por %p54, %p55
      %p57 = scmp.ne.s32.totalorder %s43, %s44
      %p58 = scmp.eq.s32.totalorder %s15, 17
      %p59 = por %p57, %p58
      %p61 = scmp.ne.s32.totalorder %s44, %s60
      %p62 = scmp.eq.s32.totalorder %s15, 0
      %p63 = por %p61, %p62
      %s64 = ssub.s32 %s18, %s27
      %s65 = ssub.s32 %s17, %s31
      %s66 = sor.u32 %s64, %s65
      %p67 = scmp.eq.s32.totalorder %s66, 0
      %s69 = sadd.s32 %s68, 1
      %s70 = scalar_select %p67, %s68, %s69
      %p73 = pneg %p67
      %p74 = scmp.eq.s32.totalorder %s9, 17
      %p75 = por %p73, %p74
      %p76 = scmp.ne.s32.totalorder %s68, %s71
      %p77 = scmp.eq.s32.totalorder %s9, 0
      %p78 = por %p76, %p77
      %p79 = scmp.ne.s32.totalorder %s68, %s71
      %p80 = scmp.eq.s32.totalorder %s14, 17
      %p81 = por %p79, %p80
      %p82 = scmp.ne.s32.totalorder %s71, %s72
      %p83 = scmp.eq.s32.totalorder %s14, 0
      %p84 = por %p82, %p83
      %p85 = scmp.ne.s32.totalorder %s71, %s72
      %p86 = scmp.eq.s32.totalorder %s15, 17
      %p87 = por %p85, %p86
      %p89 = scmp.ne.s32.totalorder %s72, %s88
      %p90 = scmp.eq.s32.totalorder %s15, 0
      %p91 = por %p89, %p90
      %s92 = ssub.s32 %s17, %s31
      %p93 = scmp.eq.s32.totalorder %s92, 0
      %s95 = sadd.s32 %s94, 1
      %s96 = scalar_select %p93, %s94, %s95
      %p99 = pneg %p93
      %p100 = scmp.eq.s32.totalorder %s9, 17
      %p101 = por %p99, %p100
      %p102 = scmp.ne.s32.totalorder %s94, %s97
      %p103 = scmp.eq.s32.totalorder %s9, 0
      %p104 = por %p102, %p103
      %p105 = scmp.ne.s32.totalorder %s94, %s97
      %p106 = scmp.eq.s32.totalorder %s14, 17
      %p107 = por %p105, %p106
      %p108 = scmp.ne.s32.totalorder %s97, %s98
      %p109 = scmp.eq.s32.totalorder %s14, 0
      %p110 = por %p108, %p109
      %p111 = scmp.ne.s32.totalorder %s97, %s98
      %p112 = scmp.eq.s32.totalorder %s15, 17
      %p113 = por %p111, %p112
      %p115 = scmp.ne.s32.totalorder %s98, %s114
      %p116 = scmp.eq.s32.totalorder %s15, 0
      %p117 = por %p115, %p116
      %s118 = ssub.s32 %s16, %s35
      %s119 = ssub.s32 %s17, %s31
      %s120 = sor.u32 %s118, %s119
      %p121 = scmp.eq.s32.totalorder %s120, 0
      %s123 = sadd.s32 %s122, 1
      %s124 = scalar_select %p121, %s122, %s123
      %p127 = pneg %p121
      %p128 = scmp.eq.s32.totalorder %s9, 17
      %p129 = por %p127, %p128
      %p130 = scmp.ne.s32.totalorder %s122, %s125
      %p131 = scmp.eq.s32.totalorder %s9, 0
      %p132 = por %p130, %p131
      %p133 = scmp.ne.s32.totalorder %s122, %s125
      %p134 = scmp.eq.s32.totalorder %s14, 17
      %p135 = por %p133, %p134
      %p136 = scmp.ne.s32.totalorder %s125, %s126
      %p137 = scmp.eq.s32.totalorder %s14, 0
      %p138 = por %p136, %p137
      %p139 = scmp.ne.s32.totalorder %s125, %s126
      %p140 = scmp.eq.s32.totalorder %s15, 17
      %p141 = por %p139, %p140
      %p143 = scmp.ne.s32.totalorder %s126, %s142
      %p144 = scmp.eq.s32.totalorder %s15, 0
      %p145 = por %p143, %p144
      %p146 = scmp.le.s32.totalorder 1, %s9
      %p147 = scmp.lt.s32.totalorder %s9, 19
      %p148 = pnand %p146, %p147
      %p149 = pneg %p148
      // Predicated region
      $region9: #{_lambda_.40} parent=5 // pred_check
        _
      $region10: #{_lambda_.40} parent=5 // pred_check_branch
        %151 = sbr.rel (%p148) target = $region12
      $region11: #{_lambda_.40} parent=5 // pred_region
        %s152 = ssub.s32 %s9, 1
      $region12: #{_lambda_.40} parent=5 // pred_fallthru
        _
      %p153 = scmp.lt.s32.totalorder %s9, 18
      // Predicated region
      $region13: #{_lambda_.40} parent=5 // pred_check
        %p154 = pneg %p153
      $region14: #{_lambda_.40} parent=5 // pred_check_branch
        %156 = sbr.rel (%p154) target = $region16
      $region15: #{_lambda_.40} parent=5 // pred_region
        // Predicated region
        $region17: #{_lambda_.40} parent=15 // pred_check
          %p157 = pneg %p50
        $region18: #{_lambda_.40} parent=15 // pred_check_branch
          %159 = sbr.rel (%p157) target = $region20
        $region19: #{_lambda_.40} parent=15 // pred_region
          %p160 = scmp.lt.s32.totalorder %s18, 8
          %s161 = scalar_select %p160, %s18, 8
          %p162 = scmp.lt.s32.totalorder %s16, 0
          %s163 = scalar_select %p162, %s16, 0
          %s164 = smul.addr %s163, 4
          %s165 = smul.addr %s161, 4
          %s166 = sadd.s32 %s164, %s165
          %s167 = smul.addr %s166, 4
          %s168 = scalar_lea.vmem %s0, %s167
        $region20: #{_lambda_.40} parent=15 // pred_fallthru
          _
        // Predicated region
        $region21: #{_lambda_.40} parent=15 // pred_check
          %p169 = pneg %p78
        $region22: #{_lambda_.40} parent=15 // pred_check_branch
          %171 = sbr.rel (%p169) target = $region24
        $region23: #{_lambda_.40} parent=15 // pred_region
          %s172 = sand.u32 %s68, 1
          %s173 = sand.u32 %s68, 1
          %s174 = smul.addr %s173, 512
          %s175 = scalar_lea.vmem [#allocation3], %s174
          %s176 = smul.u32 2, %s17
          %s177 = smul.addr %s18, 256
          %s178 = sadd.s32 %s176, %s177
          %s179 = smul.addr %s178, 4
          %s180 = scalar_lea.vmem %s1, %s179
          // Predicated region
          $region25: #{_lambda_.40} parent=23 // pred_check
            _
          $region26: #{_lambda_.40} parent=23 // pred_check_branch
            %182 = sbr.rel (0) target = $region28
          $region27: #{_lambda_.40} parent=23 // pred_region
            // Predicated region
            $region29: #{_lambda_.40} parent=27 // pred_check
              _
            $region30: #{_lambda_.40} parent=27 // pred_check_branch
              %184 = sbr.rel (0) target = $region32
            $region31: #{_lambda_.40} parent=27 // pred_region
              // Predicated region
              $region44: #{_lambda_.40} parent=31 // pred_check
                _
              $region45: #{_lambda_.40} parent=31 // pred_check_branch
                %325 = sbr.rel (0) target = $region47
              $region46: #{_lambda_.40} parent=31 // pred_region
                loop: start=0, step=1, limit=1
                $region48: #{_lambda_.40} parent=46 // loop_pre_header
                  _
                $region49: #{_lambda_.40} parent=46 // loop_header
                  %s327 = sphi 0, %s331
                  %p328 = scmp.ge.s32.totalorder %s327, 1
                  %s332 = sphi %s180, %s180
                  %s333 = sphi %s175, %s175
                $region50: #{_lambda_.40} parent=46 // loop_header_branch
                  %330 = sbr.rel (%p328) target = $region54
                $region51: #{_lambda_.40} parent=46 // loop_body
                  %v334 = vld [vmem:[%s332] sm:$0xff]
                  %335 = vst [vmem:[%s333] sm:$0xff] %v334
                  %v336 = vld [vmem:[%s332 + $0x10] sm:$0xff]
                  %337 = vst [vmem:[%s333 + $0x8] sm:$0xff] %v336
                  %v338 = vld [vmem:[%s332 + $0x20] sm:$0xff]
                  %339 = vst [vmem:[%s333 + $0x10] sm:$0xff] %v338
                  %v340 = vld [vmem:[%s332 + $0x30] sm:$0xff]
                  %341 = vst [vmem:[%s333 + $0x18] sm:$0xff] %v340
                  %v342 = vld [vmem:[%s332 + $0x40] sm:$0xff]
                  %343 = vst [vmem:[%s333 + $0x20] sm:$0xff] %v342
                  %v344 = vld [vmem:[%s332 + $0x50] sm:$0xff]
                  %345 = vst [vmem:[%s333 + $0x28] sm:$0xff] %v344
                  %v346 = vld [vmem:[%s332 + $0x60] sm:$0xff]
                  %347 = vst [vmem:[%s333 + $0x30] sm:$0xff] %v346
                  %v348 = vld [vmem:[%s332 + $0x70] sm:$0xff]
                  %349 = vst [vmem:[%s333 + $0x38] sm:$0xff] %v348
                  %v350 = vld [vmem:[%s332 + $0x80] sm:$0xff]
                  %351 = vst [vmem:[%s333 + $0x40] sm:$0xff] %v350
                  %v352 = vld [vmem:[%s332 + $0x90] sm:$0xff]
                  %353 = vst [vmem:[%s333 + $0x48] sm:$0xff] %v352
                  %v354 = vld [vmem:[%s332 + $0xa0] sm:$0xff]
                  %355 = vst [vmem:[%s333 + $0x50] sm:$0xff] %v354
                  %v356 = vld [vmem:[%s332 + $0xb0] sm:$0xff]
                  %357 = vst [vmem:[%s333 + $0x58] sm:$0xff] %v356
                  %v358 = vld [vmem:[%s332 + $0xc0] sm:$0xff]
                  %359 = vst [vmem:[%s333 + $0x60] sm:$0xff] %v358
                  %v360 = vld [vmem:[%s332 + $0xd0] sm:$0xff]
                  %361 = vst [vmem:[%s333 + $0x68] sm:$0xff] %v360
                  %v362 = vld [vmem:[%s332 + $0xe0] sm:$0xff]
                  %363 = vst [vmem:[%s333 + $0x70] sm:$0xff] %v362
                  %v364 = vld [vmem:[%s332 + $0xf0] sm:$0xff]
                  %365 = vst [vmem:[%s333 + $0x78] sm:$0xff] %v364
                  %v366 = vld [vmem:[%s332 + $0x100] sm:$0xff]
                  %367 = vst [vmem:[%s333 + $0x80] sm:$0xff] %v366
                  %v368 = vld [vmem:[%s332 + $0x110] sm:$0xff]
                  %369 = vst [vmem:[%s333 + $0x88] sm:$0xff] %v368
                  %v370 = vld [vmem:[%s332 + $0x120] sm:$0xff]
                  %371 = vst [vmem:[%s333 + $0x90] sm:$0xff] %v370
                  %v372 = vld [vmem:[%s332 + $0x130] sm:$0xff]
                  %373 = vst [vmem:[%s333 + $0x98] sm:$0xff] %v372
                  %v374 = vld [vmem:[%s332 + $0x140] sm:$0xff]
                  %375 = vst [vmem:[%s333 + $0xa0] sm:$0xff] %v374
                  %v376 = vld [vmem:[%s332 + $0x150] sm:$0xff]
                  %377 = vst [vmem:[%s333 + $0xa8] sm:$0xff] %v376
                  %v378 = vld [vmem:[%s332 + $0x160] sm:$0xff]
                  %379 = vst [vmem:[%s333 + $0xb0] sm:$0xff] %v378
                  %v380 = vld [vmem:[%s332 + $0x170] sm:$0xff]
                  %381 = vst [vmem:[%s333 + $0xb8] sm:$0xff] %v380
                  %v382 = vld [vmem:[%s332 + $0x180] sm:$0xff]
                  %383 = vst [vmem:[%s333 + $0xc0] sm:$0xff] %v382
                  %v384 = vld [vmem:[%s332 + $0x190] sm:$0xff]
                  %385 = vst [vmem:[%s333 + $0xc8] sm:$0xff] %v384
                  %v386 = vld [vmem:[%s332 + $0x1a0] sm:$0xff]
                  %387 = vst [vmem:[%s333 + $0xd0] sm:$0xff] %v386
                  %v388 = vld [vmem:[%s332 + $0x1b0] sm:$0xff]
                  %389 = vst [vmem:[%s333 + $0xd8] sm:$0xff] %v388
                  %v390 = vld [vmem:[%s332 + $0x1c0] sm:$0xff]
                  %391 = vst [vmem:[%s333 + $0xe0] sm:$0xff] %v390
                  %v392 = vld [vmem:[%s332 + $0x1d0] sm:$0xff]
                  %393 = vst [vmem:[%s333 + $0xe8] sm:$0xff] %v392
                  %v394 = vld [vmem:[%s332 + $0x1e0] sm:$0xff]
                  %395 = vst [vmem:[%s333 + $0xf0] sm:$0xff] %v394
                  %v396 = vld [vmem:[%s332 + $0x1f0] sm:$0xff]
                  %397 = vst [vmem:[%s333 + $0xf8] sm:$0xff] %v396
                  %v398 = vld [vmem:[%s332 + $0x200] sm:$0xff]
                  %399 = vst [vmem:[%s333 + $0x100] sm:$0xff] %v398
                  %v400 = vld [vmem:[%s332 + $0x210] sm:$0xff]
                  %401 = vst [vmem:[%s333 + $0x108] sm:$0xff] %v400
                  %v402 = vld [vmem:[%s332 + $0x220] sm:$0xff]
                  %403 = vst [vmem:[%s333 + $0x110] sm:$0xff] %v402
                  %v404 = vld [vmem:[%s332 + $0x230] sm:$0xff]
                  %405 = vst [vmem:[%s333 + $0x118] sm:$0xff] %v404
                  %v406 = vld [vmem:[%s332 + $0x240] sm:$0xff]
                  %407 = vst [vmem:[%s333 + $0x120] sm:$0xff] %v406
                  %v408 = vld [vmem:[%s332 + $0x250] sm:$0xff]
                  %409 = vst [vmem:[%s333 + $0x128] sm:$0xff] %v408
                  %v410 = vld [vmem:[%s332 + $0x260] sm:$0xff]
                  %411 = vst [vmem:[%s333 + $0x130] sm:$0xff] %v410
                  %v412 = vld [vmem:[%s332 + $0x270] sm:$0xff]
                  %413 = vst [vmem:[%s333 + $0x138] sm:$0xff] %v412
                  %v414 = vld [vmem:[%s332 + $0x280] sm:$0xff]
                  %415 = vst [vmem:[%s333 + $0x140] sm:$0xff] %v414
                  %v416 = vld [vmem:[%s332 + $0x290] sm:$0xff]
                  %417 = vst [vmem:[%s333 + $0x148] sm:$0xff] %v416
                  %v418 = vld [vmem:[%s332 + $0x2a0] sm:$0xff]
                  %419 = vst [vmem:[%s333 + $0x150] sm:$0xff] %v418
                  %v420 = vld [vmem:[%s332 + $0x2b0] sm:$0xff]
                  %421 = vst [vmem:[%s333 + $0x158] sm:$0xff] %v420
                  %v422 = vld [vmem:[%s332 + $0x2c0] sm:$0xff]
                  %423 = vst [vmem:[%s333 + $0x160] sm:$0xff] %v422
                  %v424 = vld [vmem:[%s332 + $0x2d0] sm:$0xff]
                  %425 = vst [vmem:[%s333 + $0x168] sm:$0xff] %v424
                  %v426 = vld [vmem:[%s332 + $0x2e0] sm:$0xff]
                  %427 = vst [vmem:[%s333 + $0x170] sm:$0xff] %v426
                  %v428 = vld [vmem:[%s332 + $0x2f0] sm:$0xff]
                  %429 = vst [vmem:[%s333 + $0x178] sm:$0xff] %v428
                  %v430 = vld [vmem:[%s332 + $0x300] sm:$0xff]
                  %431 = vst [vmem:[%s333 + $0x180] sm:$0xff] %v430
                  %v432 = vld [vmem:[%s332 + $0x310] sm:$0xff]
                  %433 = vst [vmem:[%s333 + $0x188] sm:$0xff] %v432
                  %v434 = vld [vmem:[%s332 + $0x320] sm:$0xff]
                  %435 = vst [vmem:[%s333 + $0x190] sm:$0xff] %v434
                  %v436 = vld [vmem:[%s332 + $0x330] sm:$0xff]
                  %437 = vst [vmem:[%s333 + $0x198] sm:$0xff] %v436
                  %v438 = vld [vmem:[%s332 + $0x340] sm:$0xff]
                  %439 = vst [vmem:[%s333 + $0x1a0] sm:$0xff] %v438
                  %v440 = vld [vmem:[%s332 + $0x350] sm:$0xff]
                  %441 = vst [vmem:[%s333 + $0x1a8] sm:$0xff] %v440
                  %v442 = vld [vmem:[%s332 + $0x360] sm:$0xff]
                  %443 = vst [vmem:[%s333 + $0x1b0] sm:$0xff] %v442
                  %v444 = vld [vmem:[%s332 + $0x370] sm:$0xff]
                  %445 = vst [vmem:[%s333 + $0x1b8] sm:$0xff] %v444
                  %v446 = vld [vmem:[%s332 + $0x380] sm:$0xff]
                  %447 = vst [vmem:[%s333 + $0x1c0] sm:$0xff] %v446
                  %v448 = vld [vmem:[%s332 + $0x390] sm:$0xff]
                  %449 = vst [vmem:[%s333 + $0x1c8] sm:$0xff] %v448
                  %v450 = vld [vmem:[%s332 + $0x3a0] sm:$0xff]
                  %451 = vst [vmem:[%s333 + $0x1d0] sm:$0xff] %v450
                  %v452 = vld [vmem:[%s332 + $0x3b0] sm:$0xff]
                  %453 = vst [vmem:[%s333 + $0x1d8] sm:$0xff] %v452
                  %v454 = vld [vmem:[%s332 + $0x3c0] sm:$0xff]
                  %455 = vst [vmem:[%s333 + $0x1e0] sm:$0xff] %v454
                  %v456 = vld [vmem:[%s332 + $0x3d0] sm:$0xff]
                  %457 = vst [vmem:[%s333 + $0x1e8] sm:$0xff] %v456
                  %v458 = vld [vmem:[%s332 + $0x3e0] sm:$0xff]
                  %459 = vst [vmem:[%s333 + $0x1f0] sm:$0xff] %v458
                  %v460 = vld [vmem:[%s332 + $0x3f0] sm:$0xff]
                  %461 = vst [vmem:[%s333 + $0x1f8] sm:$0xff] %v460
                $region52: #{_lambda_.40} parent=46 // loop_footer
                  %s331 = sadd.s32 1, %s327
                $region53: #{_lambda_.40} parent=46 // loop_footer_branch
                  %326 = sbr.rel target = $region49
                $region54: #{_lambda_.40} parent=46 // loop_exit
                  _
              $region47: #{_lambda_.40} parent=31 // pred_fallthru
                _
              // Predicated region
              $region55: #{_lambda_.40} parent=31 // pred_check
                _
              $region56: #{_lambda_.40} parent=31 // pred_check_branch
                %463 = sbr.rel target = $region58
              $region57: #{_lambda_.40} parent=31 // pred_region
                _
              $region58: #{_lambda_.40} parent=31 // pred_fallthru
                _
            $region32: #{_lambda_.40} parent=27 // pred_fallthru
              _
            // Predicated region
            $region33: #{_lambda_.40} parent=27 // pred_check
              _
            $region34: #{_lambda_.40} parent=27 // pred_check_branch
              %186 = sbr.rel target = $region36
            $region35: #{_lambda_.40} parent=27 // pred_region
              loop: start=0, step=1, limit=1
              $region37: #{_lambda_.40} parent=35 // loop_pre_header
                _
              $region38: #{_lambda_.40} parent=35 // loop_header
                %s189 = sphi 0, %s193
                %p190 = scmp.ge.s32.totalorder %s189, 1
                %s194 = sphi %s180, %s180
                %s195 = sphi %s175, %s175
              $region39: #{_lambda_.40} parent=35 // loop_header_branch
                %192 = sbr.rel (%p190) target = $region43
              $region40: #{_lambda_.40} parent=35 // loop_body
                %v196 = vld [vmem:[%s194] sm:$0xff]
                %197 = vst [vmem:[%s195] sm:$0xff] %v196
                %v198 = vld [vmem:[%s194 + $0x10] sm:$0xff]
                %199 = vst [vmem:[%s195 + $0x8] sm:$0xff] %v198
                %v200 = vld [vmem:[%s194 + $0x20] sm:$0xff]
                %201 = vst [vmem:[%s195 + $0x10] sm:$0xff] %v200
                %v202 = vld [vmem:[%s194 + $0x30] sm:$0xff]
                %203 = vst [vmem:[%s195 + $0x18] sm:$0xff] %v202
                %v204 = vld [vmem:[%s194 + $0x40] sm:$0xff]
                %205 = vst [vmem:[%s195 + $0x20] sm:$0xff] %v204
                %v206 = vld [vmem:[%s194 + $0x50] sm:$0xff]
                %207 = vst [vmem:[%s195 + $0x28] sm:$0xff] %v206
                %v208 = vld [vmem:[%s194 + $0x60] sm:$0xff]
                %209 = vst [vmem:[%s195 + $0x30] sm:$0xff] %v208
                %v210 = vld [vmem:[%s194 + $0x70] sm:$0xff]
                %211 = vst [vmem:[%s195 + $0x38] sm:$0xff] %v210
                %v212 = vld [vmem:[%s194 + $0x80] sm:$0xff]
                %213 = vst [vmem:[%s195 + $0x40] sm:$0xff] %v212
                %v214 = vld [vmem:[%s194 + $0x90] sm:$0xff]
                %215 = vst [vmem:[%s195 + $0x48] sm:$0xff] %v214
                %v216 = vld [vmem:[%s194 + $0xa0] sm:$0xff]
                %217 = vst [vmem:[%s195 + $0x50] sm:$0xff] %v216
                %v218 = vld [vmem:[%s194 + $0xb0] sm:$0xff]
                %219 = vst [vmem:[%s195 + $0x58] sm:$0xff] %v218
                %v220 = vld [vmem:[%s194 + $0xc0] sm:$0xff]
                %221 = vst [vmem:[%s195 + $0x60] sm:$0xff] %v220
                %v222 = vld [vmem:[%s194 + $0xd0] sm:$0xff]
                %223 = vst [vmem:[%s195 + $0x68] sm:$0xff] %v222
                %v224 = vld [vmem:[%s194 + $0xe0] sm:$0xff]
                %225 = vst [vmem:[%s195 + $0x70] sm:$0xff] %v224
                %v226 = vld [vmem:[%s194 + $0xf0] sm:$0xff]
                %227 = vst [vmem:[%s195 + $0x78] sm:$0xff] %v226
                %v228 = vld [vmem:[%s194 + $0x100] sm:$0xff]
                %229 = vst [vmem:[%s195 + $0x80] sm:$0xff] %v228
                %v230 = vld [vmem:[%s194 + $0x110] sm:$0xff]
                %231 = vst [vmem:[%s195 + $0x88] sm:$0xff] %v230
                %v232 = vld [vmem:[%s194 + $0x120] sm:$0xff]
                %233 = vst [vmem:[%s195 + $0x90] sm:$0xff] %v232
                %v234 = vld [vmem:[%s194 + $0x130] sm:$0xff]
                %235 = vst [vmem:[%s195 + $0x98] sm:$0xff] %v234
                %v236 = vld [vmem:[%s194 + $0x140] sm:$0xff]
                %237 = vst [vmem:[%s195 + $0xa0] sm:$0xff] %v236
                %v238 = vld [vmem:[%s194 + $0x150] sm:$0xff]
                %239 = vst [vmem:[%s195 + $0xa8] sm:$0xff] %v238
                %v240 = vld [vmem:[%s194 + $0x160] sm:$0xff]
                %241 = vst [vmem:[%s195 + $0xb0] sm:$0xff] %v240
                %v242 = vld [vmem:[%s194 + $0x170] sm:$0xff]
                %243 = vst [vmem:[%s195 + $0xb8] sm:$0xff] %v242
                %v244 = vld [vmem:[%s194 + $0x180] sm:$0xff]
                %245 = vst [vmem:[%s195 + $0xc0] sm:$0xff] %v244
                %v246 = vld [vmem:[%s194 + $0x190] sm:$0xff]
                %247 = vst [vmem:[%s195 + $0xc8] sm:$0xff] %v246
                %v248 = vld [vmem:[%s194 + $0x1a0] sm:$0xff]
                %249 = vst [vmem:[%s195 + $0xd0] sm:$0xff] %v248
                %v250 = vld [vmem:[%s194 + $0x1b0] sm:$0xff]
                %251 = vst [vmem:[%s195 + $0xd8] sm:$0xff] %v250
                %v252 = vld [vmem:[%s194 + $0x1c0] sm:$0xff]
                %253 = vst [vmem:[%s195 + $0xe0] sm:$0xff] %v252
                %v254 = vld [vmem:[%s194 + $0x1d0] sm:$0xff]
                %255 = vst [vmem:[%s195 + $0xe8] sm:$0xff] %v254
                %v256 = vld [vmem:[%s194 + $0x1e0] sm:$0xff]
                %257 = vst [vmem:[%s195 + $0xf0] sm:$0xff] %v256
                %v258 = vld [vmem:[%s194 + $0x1f0] sm:$0xff]
                %259 = vst [vmem:[%s195 + $0xf8] sm:$0xff] %v258
                %v260 = vld [vmem:[%s194 + $0x200] sm:$0xff]
                %261 = vst [vmem:[%s195 + $0x100] sm:$0xff] %v260
                %v262 = vld [vmem:[%s194 + $0x210] sm:$0xff]
                %263 = vst [vmem:[%s195 + $0x108] sm:$0xff] %v262
                %v264 = vld [vmem:[%s194 + $0x220] sm:$0xff]
                %265 = vst [vmem:[%s195 + $0x110] sm:$0xff] %v264
                %v266 = vld [vmem:[%s194 + $0x230] sm:$0xff]
                %267 = vst [vmem:[%s195 + $0x118] sm:$0xff] %v266
                %v268 = vld [vmem:[%s194 + $0x240] sm:$0xff]
                %269 = vst [vmem:[%s195 + $0x120] sm:$0xff] %v268
                %v270 = vld [vmem:[%s194 + $0x250] sm:$0xff]
                %271 = vst [vmem:[%s195 + $0x128] sm:$0xff] %v270
                %v272 = vld [vmem:[%s194 + $0x260] sm:$0xff]
                %273 = vst [vmem:[%s195 + $0x130] sm:$0xff] %v272
                %v274 = vld [vmem:[%s194 + $0x270] sm:$0xff]
                %275 = vst [vmem:[%s195 + $0x138] sm:$0xff] %v274
                %v276 = vld [vmem:[%s194 + $0x280] sm:$0xff]
                %277 = vst [vmem:[%s195 + $0x140] sm:$0xff] %v276
                %v278 = vld [vmem:[%s194 + $0x290] sm:$0xff]
                %279 = vst [vmem:[%s195 + $0x148] sm:$0xff] %v278
                %v280 = vld [vmem:[%s194 + $0x2a0] sm:$0xff]
                %281 = vst [vmem:[%s195 + $0x150] sm:$0xff] %v280
                %v282 = vld [vmem:[%s194 + $0x2b0] sm:$0xff]
                %283 = vst [vmem:[%s195 + $0x158] sm:$0xff] %v282
                %v284 = vld [vmem:[%s194 + $0x2c0] sm:$0xff]
                %285 = vst [vmem:[%s195 + $0x160] sm:$0xff] %v284
                %v286 = vld [vmem:[%s194 + $0x2d0] sm:$0xff]
                %287 = vst [vmem:[%s195 + $0x168] sm:$0xff] %v286
                %v288 = vld [vmem:[%s194 + $0x2e0] sm:$0xff]
                %289 = vst [vmem:[%s195 + $0x170] sm:$0xff] %v288
                %v290 = vld [vmem:[%s194 + $0x2f0] sm:$0xff]
                %291 = vst [vmem:[%s195 + $0x178] sm:$0xff] %v290
                %v292 = vld [vmem:[%s194 + $0x300] sm:$0xff]
                %293 = vst [vmem:[%s195 + $0x180] sm:$0xff] %v292
                %v294 = vld [vmem:[%s194 + $0x310] sm:$0xff]
                %295 = vst [vmem:[%s195 + $0x188] sm:$0xff] %v294
                %v296 = vld [vmem:[%s194 + $0x320] sm:$0xff]
                %297 = vst [vmem:[%s195 + $0x190] sm:$0xff] %v296
                %v298 = vld [vmem:[%s194 + $0x330] sm:$0xff]
                %299 = vst [vmem:[%s195 + $0x198] sm:$0xff] %v298
                %v300 = vld [vmem:[%s194 + $0x340] sm:$0xff]
                %301 = vst [vmem:[%s195 + $0x1a0] sm:$0xff] %v300
                %v302 = vld [vmem:[%s194 + $0x350] sm:$0xff]
                %303 = vst [vmem:[%s195 + $0x1a8] sm:$0xff] %v302
                %v304 = vld [vmem:[%s194 + $0x360] sm:$0xff]
                %305 = vst [vmem:[%s195 + $0x1b0] sm:$0xff] %v304
                %v306 = vld [vmem:[%s194 + $0x370] sm:$0xff]
                %307 = vst [vmem:[%s195 + $0x1b8] sm:$0xff] %v306
                %v308 = vld [vmem:[%s194 + $0x380] sm:$0xff]
                %309 = vst [vmem:[%s195 + $0x1c0] sm:$0xff] %v308
                %v310 = vld [vmem:[%s194 + $0x390] sm:$0xff]
                %311 = vst [vmem:[%s195 + $0x1c8] sm:$0xff] %v310
                %v312 = vld [vmem:[%s194 + $0x3a0] sm:$0xff]
                %313 = vst [vmem:[%s195 + $0x1d0] sm:$0xff] %v312
                %v314 = vld [vmem:[%s194 + $0x3b0] sm:$0xff]
                %315 = vst [vmem:[%s195 + $0x1d8] sm:$0xff] %v314
                %v316 = vld [vmem:[%s194 + $0x3c0] sm:$0xff]
                %317 = vst [vmem:[%s195 + $0x1e0] sm:$0xff] %v316
                %v318 = vld [vmem:[%s194 + $0x3d0] sm:$0xff]
                %319 = vst [vmem:[%s195 + $0x1e8] sm:$0xff] %v318
                %v320 = vld [vmem:[%s194 + $0x3e0] sm:$0xff]
                %321 = vst [vmem:[%s195 + $0x1f0] sm:$0xff] %v320
                %v322 = vld [vmem:[%s194 + $0x3f0] sm:$0xff]
                %323 = vst [vmem:[%s195 + $0x1f8] sm:$0xff] %v322
              $region41: #{_lambda_.40} parent=35 // loop_footer
                %s193 = sadd.s32 1, %s189
              $region42: #{_lambda_.40} parent=35 // loop_footer_branch
                %188 = sbr.rel target = $region38
              $region43: #{_lambda_.40} parent=35 // loop_exit
                _
            $region36: #{_lambda_.40} parent=27 // pred_fallthru
              _
          $region28: #{_lambda_.40} parent=23 // pred_fallthru
            _
          %464 = vnop
        $region24: #{_lambda_.40} parent=15 // pred_fallthru
          _
        // Predicated region
        $region59: #{_lambda_.40} parent=15 // pred_check
          %p465 = pneg %p104
        $region60: #{_lambda_.40} parent=15 // pred_check_branch
          %467 = sbr.rel (%p465) target = $region62
        $region61: #{_lambda_.40} parent=15 // pred_region
          %s468 = smul.u32 2, %s17
          %p469 = scmp.lt.s32.totalorder %s468, 3
          %s470 = scalar_select %p469, %s468, 3
          %s471 = scalar_lea.vmem %s2, %s470
          %s472 = smul.u32 2, %s17
        $region62: #{_lambda_.40} parent=15 // pred_fallthru
          _
      $region16: #{_lambda_.40} parent=5 // pred_fallthru
        _
      %p473 = scmp.le.s32.totalorder 1, %s9
      %p474 = scmp.lt.s32.totalorder %s9, 19
      %p475 = pnand %p473, %p474
      %p476 = pneg %p475
      // Predicated region
      $region63: #{_lambda_.40} parent=5 // pred_check
        _
      $region64: #{_lambda_.40} parent=5 // pred_check_branch
        %478 = sbr.rel (%p475) target = $region66
      $region65: #{_lambda_.40} parent=5 // pred_region
        %s479 = ssub.s32 %s9, 1
        %s480 = sand.u32 %s71, 1
        %s481 = sand.u32 %s71, 1
        %s482 = smul.addr %s481, 512
        %s483 = scalar_lea.vmem [#allocation3], %s482
        // Predicated region
        $region67: #{_lambda_.40} parent=65 // pred_check
          %p484 = pneg %p84
        $region68: #{_lambda_.40} parent=65 // pred_check_branch
          %486 = sbr.rel (%p484) target = $region70
        $region69: #{_lambda_.40} parent=65 // pred_region
          _
        $region70: #{_lambda_.40} parent=65 // pred_fallthru
          _
        %p487 = scmp.lt.s32.totalorder %s21, 8
        %s488 = scalar_select %p487, %s21, 8
        %p489 = scmp.lt.s32.totalorder %s19, 0
        %s490 = scalar_select %p489, %s19, 0
        %s491 = smul.addr %s490, 4
        %s492 = smul.addr %s488, 4
        %s493 = sadd.s32 %s491, %s492
        %s494 = smul.addr %s493, 4
        %s495 = scalar_lea.vmem %s0, %s494
        %p496 = pneg %p56
        %p497 = pneg %p53
        %s498 = sand.u32 %s71, 1
        %s499 = sand.u32 %s71, 1
        %s500 = smul.addr %s499, 512
        %s501 = scalar_lea.vmem [#allocation3], %s500
        %p502 = pneg %p84
        %p503 = pneg %p81
        %s504 = smul.u32 2, %s20
        %p505 = scmp.lt.s32.totalorder %s504, 3
        %s506 = scalar_select %p505, %s504, 3
        %s507 = scalar_lea.vmem %s2, %s506
        %p508 = pneg %p110
        %p509 = pneg %p107
        %p510 = pneg %p138
        %p511 = pneg %p135
        %s512 = smul.u32 2, %s20
        %p513 = scmp.lt.s32.totalorder %s19, 0
        %s514 = scalar_select %p513, %s19, 0
        %p515 = scmp.lt.s32.totalorder %s512, 3
        %s516 = scalar_select %p515, %s512, 3
        %s517 = smul.addr %s514, 4
        %s518 = sadd.s32 %s516, %s517
        %s519 = smul.addr %s518, 8
        %s520 = scalar_lea.vmem %s3, %s519
        %p521 = scmp.lt.s32.totalorder %s21, 8
        %s522 = scalar_select %p521, %s21, 8
        %p523 = scmp.lt.s32.totalorder %s19, 0
        %s524 = scalar_select %p523, %s19, 0
        %s525 = smul.addr %s524, 4
        %s526 = smul.addr %s522, 4
        %s527 = sadd.s32 %s525, %s526
        %s528 = smul.addr %s527, 4
        %s529 = scalar_lea.vmem %s0, %s528
        %s530 = smul.u32 2, %s20
        %s531 = smul.u32 2, %s20
        %p532 = scmp.lt.s32.totalorder %s531, 3
        %s533 = scalar_select %p532, %s531, 3
        %s534 = scalar_lea.vmem %s2, %s533
        %s535 = smul.u32 2, %s20
        %s536 = smul.u32 2, %s20
        %p537 = scmp.lt.s32.totalorder %s19, 0
        %s538 = scalar_select %p537, %s19, 0
        %p539 = scmp.lt.s32.totalorder %s536, 3
        %s540 = scalar_select %p539, %s536, 3
        %s541 = smul.addr %s538, 4
        %s542 = sadd.s32 %s540, %s541
        %s543 = smul.addr %s542, 8
        %s544 = scalar_lea.vmem %s3, %s543
        %s545 = smul.u32 2, %s20
        %p546 = scmp.eq.s32.totalorder %s21, 0
        // Predicated region
        $region71: #{_lambda_.40} parent=65 // pred_check
          %p547 = pneg %p546
        $region72: #{_lambda_.40} parent=65 // pred_check_branch
          %549 = sbr.rel (%p547) target = $region74
        $region73: #{_lambda_.40} parent=65 // pred_region
          %550 = vst [vmem:[#allocation2] sm:$0xff] 0.0
          %551 = vst [vmem:[#allocation2 + $0x8] sm:$0xff] 0.0
        $region74: #{_lambda_.40} parent=65 // pred_fallthru
          _
        %v552 = vld [vmem:[#allocation2] sm:$0xff]
        %v553 = vld [vmem:[#allocation2 + $0x8] sm:$0xff]
        %v554 = vld [vmem:[%s529] sm:$0xff]
        %v555 = vld [vmem:[%s529 + $0x8] sm:$0xff]
        %v556 = vld [vmem:[%s483] sm:$0xff]
        %v557 = vld [vmem:[%s483 + $0x8] sm:$0xff]
        %v558 = vld [vmem:[%s483 + $0x10] sm:$0xff]
        %v559 = vld [vmem:[%s483 + $0x18] sm:$0xff]
        %v560 = vld [vmem:[%s483 + $0x20] sm:$0xff]
        %v561 = vld [vmem:[%s483 + $0x28] sm:$0xff]
        %v562 = vld [vmem:[%s483 + $0x30] sm:$0xff]
        %v563 = vld [vmem:[%s483 + $0x38] sm:$0xff]
        %v564 = vld [vmem:[%s483 + $0x40] sm:$0xff]
        %v565 = vld [vmem:[%s483 + $0x48] sm:$0xff]
        %v566 = vld [vmem:[%s483 + $0x50] sm:$0xff]
        %v567 = vld [vmem:[%s483 + $0x58] sm:$0xff]
        %v568 = vld [vmem:[%s483 + $0x60] sm:$0xff]
        %v569 = vld [vmem:[%s483 + $0x68] sm:$0xff]
        %v570 = vld [vmem:[%s483 + $0x70] sm:$0xff]
        %v571 = vld [vmem:[%s483 + $0x78] sm:$0xff]
        %v572 = vld [vmem:[%s483 + $0x80] sm:$0xff]
        %v573 = vld [vmem:[%s483 + $0x88] sm:$0xff]
        %v574 = vld [vmem:[%s483 + $0x90] sm:$0xff]
        %v575 = vld [vmem:[%s483 + $0x98] sm:$0xff]
        %v576 = vld [vmem:[%s483 + $0xa0] sm:$0xff]
        %v577 = vld [vmem:[%s483 + $0xa8] sm:$0xff]
        %v578 = vld [vmem:[%s483 + $0xb0] sm:$0xff]
        %v579 = vld [vmem:[%s483 + $0xb8] sm:$0xff]
        %v580 = vld [vmem:[%s483 + $0xc0] sm:$0xff]
        %v581 = vld [vmem:[%s483 + $0xc8] sm:$0xff]
        %v582 = vld [vmem:[%s483 + $0xd0] sm:$0xff]
        %v583 = vld [vmem:[%s483 + $0xd8] sm:$0xff]
        %v584 = vld [vmem:[%s483 + $0xe0] sm:$0xff]
        %v585 = vld [vmem:[%s483 + $0xe8] sm:$0xff]
        %v586 = vld [vmem:[%s483 + $0xf0] sm:$0xff]
        %v587 = vld [vmem:[%s483 + $0xf8] sm:$0xff]
        %v588 = vld [vmem:[%s483 + $0x100] sm:$0xff]
        %v589 = vld [vmem:[%s483 + $0x108] sm:$0xff]
        %v590 = vld [vmem:[%s483 + $0x110] sm:$0xff]
        %v591 = vld [vmem:[%s483 + $0x118] sm:$0xff]
        %v592 = vld [vmem:[%s483 + $0x120] sm:$0xff]
        %v593 = vld [vmem:[%s483 + $0x128] sm:$0xff]
        %v594 = vld [vmem:[%s483 + $0x130] sm:$0xff]
        %v595 = vld [vmem:[%s483 + $0x138] sm:$0xff]
        %v596 = vld [vmem:[%s483 + $0x140] sm:$0xff]
        %v597 = vld [vmem:[%s483 + $0x148] sm:$0xff]
        %v598 = vld [vmem:[%s483 + $0x150] sm:$0xff]
        %v599 = vld [vmem:[%s483 + $0x158] sm:$0xff]
        %v600 = vld [vmem:[%s483 + $0x160] sm:$0xff]
        %v601 = vld [vmem:[%s483 + $0x168] sm:$0xff]
        %v602 = vld [vmem:[%s483 + $0x170] sm:$0xff]
        %v603 = vld [vmem:[%s483 + $0x178] sm:$0xff]
        %v604 = vld [vmem:[%s483 + $0x180] sm:$0xff]
        %v605 = vld [vmem:[%s483 + $0x188] sm:$0xff]
        %v606 = vld [vmem:[%s483 + $0x190] sm:$0xff]
        %v607 = vld [vmem:[%s483 + $0x198] sm:$0xff]
        %v608 = vld [vmem:[%s483 + $0x1a0] sm:$0xff]
        %v609 = vld [vmem:[%s483 + $0x1a8] sm:$0xff]
        %v610 = vld [vmem:[%s483 + $0x1b0] sm:$0xff]
        %v611 = vld [vmem:[%s483 + $0x1b8] sm:$0xff]
        %v612 = vld [vmem:[%s483 + $0x1c0] sm:$0xff]
        %v613 = vld [vmem:[%s483 + $0x1c8] sm:$0xff]
        %v614 = vld [vmem:[%s483 + $0x1d0] sm:$0xff]
        %v615 = vld [vmem:[%s483 + $0x1d8] sm:$0xff]
        %v616 = vld [vmem:[%s483 + $0x1e0] sm:$0xff]
        %v617 = vld [vmem:[%s483 + $0x1e8] sm:$0xff]
        %v618 = vld [vmem:[%s483 + $0x1f0] sm:$0xff]
        %v619 = vld [vmem:[%s483 + $0x1f8] sm:$0xff]
        %v622 = vunpack.c.l.b16 %v554
        %v623 = vunpack.c.h.b16 %v554
        %v624 = vunpack.c.l.b16 %v555
        %v625 = vunpack.c.h.b16 %v555
        %v626 = vpack.c.b16 %v622, %v622
        %v627 = vpack.c.b16 %v623, %v623
        %v628 = vpack.c.b16 %v624, %v624
        %v629 = vpack.c.b16 %v625, %v625
        %v698 = vunpack.c.l.b16 %v556
        %v699 = vunpack.c.h.b16 %v556
        %v700 = vunpack.c.l.b16 %v557
        %v701 = vunpack.c.h.b16 %v557
        %v702 = vunpack.c.l.b16 %v558
        %v703 = vunpack.c.h.b16 %v558
        %v704 = vunpack.c.l.b16 %v559
        %v705 = vunpack.c.h.b16 %v559
        %v706 = vunpack.c.l.b16 %v560
        %v707 = vunpack.c.h.b16 %v560
        %v708 = vunpack.c.l.b16 %v561
        %v709 = vunpack.c.h.b16 %v561
        %v710 = vunpack.c.l.b16 %v562
        %v711 = vunpack.c.h.b16 %v562
        %v712 = vunpack.c.l.b16 %v563
        %v713 = vunpack.c.h.b16 %v563
        %v714 = vunpack.c.l.b16 %v564
        %v715 = vunpack.c.h.b16 %v564
        %v716 = vunpack.c.l.b16 %v565
        %v717 = vunpack.c.h.b16 %v565
        %v718 = vunpack.c.l.b16 %v566
        %v719 = vunpack.c.h.b16 %v566
        %v720 = vunpack.c.l.b16 %v567
        %v721 = vunpack.c.h.b16 %v567
        %v722 = vunpack.c.l.b16 %v568
        %v723 = vunpack.c.h.b16 %v568
        %v724 = vunpack.c.l.b16 %v569
        %v725 = vunpack.c.h.b16 %v569
        %v726 = vunpack.c.l.b16 %v570
        %v727 = vunpack.c.h.b16 %v570
        %v728 = vunpack.c.l.b16 %v571
        %v729 = vunpack.c.h.b16 %v571
        %v730 = vunpack.c.l.b16 %v572
        %v731 = vunpack.c.h.b16 %v572
        %v732 = vunpack.c.l.b16 %v573
        %v733 = vunpack.c.h.b16 %v573
        %v734 = vunpack.c.l.b16 %v574
        %v735 = vunpack.c.h.b16 %v574
        %v736 = vunpack.c.l.b16 %v575
        %v737 = vunpack.c.h.b16 %v575
        %v738 = vunpack.c.l.b16 %v576
        %v739 = vunpack.c.h.b16 %v576
        %v740 = vunpack.c.l.b16 %v577
        %v741 = vunpack.c.h.b16 %v577
        %v742 = vunpack.c.l.b16 %v578
        %v743 = vunpack.c.h.b16 %v578
        %v744 = vunpack.c.l.b16 %v579
        %v745 = vunpack.c.h.b16 %v579
        %v746 = vunpack.c.l.b16 %v580
        %v747 = vunpack.c.h.b16 %v580
        %v748 = vunpack.c.l.b16 %v581
        %v749 = vunpack.c.h.b16 %v581
        %v750 = vunpack.c.l.b16 %v582
        %v751 = vunpack.c.h.b16 %v582
        %v752 = vunpack.c.l.b16 %v583
        %v753 = vunpack.c.h.b16 %v583
        %v754 = vunpack.c.l.b16 %v584
        %v755 = vunpack.c.h.b16 %v584
        %v756 = vunpack.c.l.b16 %v585
        %v757 = vunpack.c.h.b16 %v585
        %v758 = vunpack.c.l.b16 %v586
        %v759 = vunpack.c.h.b16 %v586
        %v760 = vunpack.c.l.b16 %v587
        %v761 = vunpack.c.h.b16 %v587
        %v762 = vunpack.c.l.b16 %v588
        %v763 = vunpack.c.h.b16 %v588
        %v764 = vunpack.c.l.b16 %v589
        %v765 = vunpack.c.h.b16 %v589
        %v766 = vunpack.c.l.b16 %v590
        %v767 = vunpack.c.h.b16 %v590
        %v768 = vunpack.c.l.b16 %v591
        %v769 = vunpack.c.h.b16 %v591
        %v770 = vunpack.c.l.b16 %v592
        %v771 = vunpack.c.h.b16 %v592
        %v772 = vunpack.c.l.b16 %v593
        %v773 = vunpack.c.h.b16 %v593
        %v774 = vunpack.c.l.b16 %v594
        %v775 = vunpack.c.h.b16 %v594
        %v776 = vunpack.c.l.b16 %v595
        %v777 = vunpack.c.h.b16 %v595
        %v778 = vunpack.c.l.b16 %v596
        %v779 = vunpack.c.h.b16 %v596
        %v780 = vunpack.c.l.b16 %v597
        %v781 = vunpack.c.h.b16 %v597
        %v782 = vunpack.c.l.b16 %v598
        %v783 = vunpack.c.h.b16 %v598
        %v784 = vunpack.c.l.b16 %v599
        %v785 = vunpack.c.h.b16 %v599
        %v786 = vunpack.c.l.b16 %v600
        %v787 = vunpack.c.h.b16 %v600
        %v788 = vunpack.c.l.b16 %v601
        %v789 = vunpack.c.h.b16 %v601
        %v790 = vunpack.c.l.b16 %v602
        %v791 = vunpack.c.h.b16 %v602
        %v792 = vunpack.c.l.b16 %v603
        %v793 = vunpack.c.h.b16 %v603
        %v794 = vunpack.c.l.b16 %v604
        %v795 = vunpack.c.h.b16 %v604
        %v796 = vunpack.c.l.b16 %v605
        %v797 = vunpack.c.h.b16 %v605
        %v798 = vunpack.c.l.b16 %v606
        %v799 = vunpack.c.h.b16 %v606
        %v800 = vunpack.c.l.b16 %v607
        %v801 = vunpack.c.h.b16 %v607
        %v802 = vunpack.c.l.b16 %v608
        %v803 = vunpack.c.h.b16 %v608
        %v804 = vunpack.c.l.b16 %v609
        %v805 = vunpack.c.h.b16 %v609
        %v806 = vunpack.c.l.b16 %v610
        %v807 = vunpack.c.h.b16 %v610
        %v808 = vunpack.c.l.b16 %v611
        %v809 = vunpack.c.h.b16 %v611
        %v810 = vunpack.c.l.b16 %v612
        %v811 = vunpack.c.h.b16 %v612
        %v812 = vunpack.c.l.b16 %v613
        %v813 = vunpack.c.h.b16 %v613
        %v814 = vunpack.c.l.b16 %v614
        %v815 = vunpack.c.h.b16 %v614
        %v816 = vunpack.c.l.b16 %v615
        %v817 = vunpack.c.h.b16 %v615
        %v818 = vunpack.c.l.b16 %v616
        %v819 = vunpack.c.h.b16 %v616
        %v820 = vunpack.c.l.b16 %v617
        %v821 = vunpack.c.h.b16 %v617
        %v822 = vunpack.c.l.b16 %v618
        %v823 = vunpack.c.h.b16 %v618
        %v824 = vunpack.c.l.b16 %v619
        %v825 = vunpack.c.h.b16 %v619
        %v826 = vpack.c.b16 %v700, %v698
        %v827 = vpack.c.b16 %v701, %v699
        %v828 = vpack.c.b16 %v704, %v702
        %v829 = vpack.c.b16 %v705, %v703
        %v830 = vpack.c.b16 %v708, %v706
        %v831 = vpack.c.b16 %v709, %v707
        %v832 = vpack.c.b16 %v712, %v710
        %v833 = vpack.c.b16 %v713, %v711
        %v834 = vpack.c.b16 %v716, %v714
        %v835 = vpack.c.b16 %v717, %v715
        %v836 = vpack.c.b16 %v720, %v718
        %v837 = vpack.c.b16 %v721, %v719
        %v838 = vpack.c.b16 %v724, %v722
        %v839 = vpack.c.b16 %v725, %v723
        %v840 = vpack.c.b16 %v728, %v726
        %v841 = vpack.c.b16 %v729, %v727
        %v842 = vpack.c.b16 %v732, %v730
        %v843 = vpack.c.b16 %v733, %v731
        %v844 = vpack.c.b16 %v736, %v734
        %v845 = vpack.c.b16 %v737, %v735
        %v846 = vpack.c.b16 %v740, %v738
        %v847 = vpack.c.b16 %v741, %v739
        %v848 = vpack.c.b16 %v744, %v742
        %v849 = vpack.c.b16 %v745, %v743
        %v850 = vpack.c.b16 %v748, %v746
        %v851 = vpack.c.b16 %v749, %v747
        %v852 = vpack.c.b16 %v752, %v750
        %v853 = vpack.c.b16 %v753, %v751
        %v854 = vpack.c.b16 %v756, %v754
        %v855 = vpack.c.b16 %v757, %v755
        %v856 = vpack.c.b16 %v760, %v758
        %v857 = vpack.c.b16 %v761, %v759
        %v858 = vpack.c.b16 %v764, %v762
        %v859 = vpack.c.b16 %v765, %v763
        %v860 = vpack.c.b16 %v768, %v766
        %v861 = vpack.c.b16 %v769, %v767
        %v862 = vpack.c.b16 %v772, %v770
        %v863 = vpack.c.b16 %v773, %v771
        %v864 = vpack.c.b16 %v776, %v774
        %v865 = vpack.c.b16 %v777, %v775
        %v866 = vpack.c.b16 %v780, %v778
        %v867 = vpack.c.b16 %v781, %v779
        %v868 = vpack.c.b16 %v784, %v782
        %v869 = vpack.c.b16 %v785, %v783
        %v870 = vpack.c.b16 %v788, %v786
        %v871 = vpack.c.b16 %v789, %v787
        %v872 = vpack.c.b16 %v792, %v790
        %v873 = vpack.c.b16 %v793, %v791
        %v874 = vpack.c.b16 %v796, %v794
        %v875 = vpack.c.b16 %v797, %v795
        %v876 = vpack.c.b16 %v800, %v798
        %v877 = vpack.c.b16 %v801, %v799
        %v878 = vpack.c.b16 %v804, %v802
        %v879 = vpack.c.b16 %v805, %v803
        %v880 = vpack.c.b16 %v808, %v806
        %v881 = vpack.c.b16 %v809, %v807
        %v882 = vpack.c.b16 %v812, %v810
        %v883 = vpack.c.b16 %v813, %v811
        %v884 = vpack.c.b16 %v816, %v814
        %v885 = vpack.c.b16 %v817, %v815
        %v886 = vpack.c.b16 %v820, %v818
        %v887 = vpack.c.b16 %v821, %v819
        %v888 = vpack.c.b16 %v824, %v822
        %v889 = vpack.c.b16 %v825, %v823
        %954 = vmatprep.subr.bf16.mxu0 %v827
        %955 = vmatpush1.bf16.msra.mxu0 %v826
        %956 = vmatprep.subr.bf16.mxu0 %v829
        %957 = vmatpush1.bf16.msra.mxu0 %v828
        %958 = vmatprep.subr.bf16.mxu0 %v831
        %959 = vmatpush1.bf16.msra.mxu0 %v830
        %960 = vmatprep.subr.bf16.mxu0 %v833
        %961 = vmatpush1.bf16.msra.mxu0 %v832
        %962 = vmatprep.subr.bf16.mxu0 %v835
        %963 = vmatpush1.bf16.msra.mxu0 %v834
        %964 = vmatprep.subr.bf16.mxu0 %v837
        %965 = vmatpush1.bf16.msra.mxu0 %v836
        %966 = vmatprep.subr.bf16.mxu0 %v839
        %967 = vmatpush1.bf16.msra.mxu0 %v838
        %968 = vmatprep.subr.bf16.mxu0 %v841
        %969 = vmatpush1.bf16.msra.mxu0 %v840
        %970 = vmatprep.subr.bf16.mxu0 %v843
        %971 = vmatpush1.bf16.msra.mxu0 %v842
        %972 = vmatprep.subr.bf16.mxu0 %v845
        %973 = vmatpush1.bf16.msra.mxu0 %v844
        %974 = vmatprep.subr.bf16.mxu0 %v847
        %975 = vmatpush1.bf16.msra.mxu0 %v846
        %976 = vmatprep.subr.bf16.mxu0 %v849
        %977 = vmatpush1.bf16.msra.mxu0 %v848
        %978 = vmatprep.subr.bf16.mxu0 %v851
        %979 = vmatpush1.bf16.msra.mxu0 %v850
        %980 = vmatprep.subr.bf16.mxu0 %v853
        %981 = vmatpush1.bf16.msra.mxu0 %v852
        %982 = vmatprep.subr.bf16.mxu0 %v855
        %983 = vmatpush1.bf16.msra.mxu0 %v854
        %984 = vmatprep.subr.bf16.mxu0 %v857
        %985 = vmatpush1.bf16.msra.mxu0 %v856
        %986 = vmatprep.mubr.bf16.mxu0 %v627
        %987 = vmatmul.mubr.bf16.gmra.mrb[0].mxu0 %v626
        %v988 = vpop.f32.mrb[0].mxu0
        %v989 = vadd.f32 0.0, %v988
        %v990 = vpop.f32.mrb[0].mxu0
        %v991 = vadd.f32 0.0, %v990
        %v992 = vpop.f32.mrb[0].mxu0
        %v993 = vpop.f32.mrb[0].mxu0
        %994 = vdwg.mxu0
        %995 = vmatprep.subr.bf16.mxu0 %v859
        %996 = vmatpush1.bf16.msra.mxu0 %v858
        %997 = vmatprep.subr.bf16.mxu0 %v861
        %998 = vmatpush1.bf16.msra.mxu0 %v860
        %999 = vmatprep.subr.bf16.mxu0 %v863
        %1000 = vmatpush1.bf16.msra.mxu0 %v862
        %1001 = vmatprep.subr.bf16.mxu0 %v865
        %1002 = vmatpush1.bf16.msra.mxu0 %v864
        %1003 = vmatprep.subr.bf16.mxu0 %v867
        %1004 = vmatpush1.bf16.msra.mxu0 %v866
        %1005 = vmatprep.subr.bf16.mxu0 %v869
        %1006 = vmatpush1.bf16.msra.mxu0 %v868
        %1007 = vmatprep.subr.bf16.mxu0 %v871
        %1008 = vmatpush1.bf16.msra.mxu0 %v870
        %1009 = vmatprep.subr.bf16.mxu0 %v873
        %1010 = vmatpush1.bf16.msra.mxu0 %v872
        %1011 = vmatprep.subr.bf16.mxu0 %v875
        %1012 = vmatpush1.bf16.msra.mxu0 %v874
        %1013 = vmatprep.subr.bf16.mxu0 %v877
        %1014 = vmatpush1.bf16.msra.mxu0 %v876
        %1015 = vmatprep.subr.bf16.mxu0 %v879
        %1016 = vmatpush1.bf16.msra.mxu0 %v878
        %1017 = vmatprep.subr.bf16.mxu0 %v881
        %1018 = vmatpush1.bf16.msra.mxu0 %v880
        %1019 = vmatprep.subr.bf16.mxu0 %v883
        %1020 = vmatpush1.bf16.msra.mxu0 %v882
        %1021 = vmatprep.subr.bf16.mxu0 %v885
        %1022 = vmatpush1.bf16.msra.mxu0 %v884
        %1023 = vmatprep.subr.bf16.mxu0 %v887
        %1024 = vmatpush1.bf16.msra.mxu0 %v886
        %1025 = vmatprep.subr.bf16.mxu0 %v889
        %1026 = vmatpush1.bf16.msra.mxu0 %v888
        %1027 = vmatprep.mubr.bf16.mxu0 %v629
        %1028 = vmatmul.mubr.bf16.gmra.mrb[0].mxu0 %v628
        %v1029 = vpop.f32.mrb[0].mxu0
        %v1030 = vadd.f32 %v989, %v1029
        %v1031 = vpop.f32.mrb[0].mxu0
        %v1032 = vadd.f32 %v991, %v1031
        %v1033 = vpop.f32.mrb[0].mxu0
        %v1034 = vpop.f32.mrb[0].mxu0
        %1035 = vdwg.mxu0
        %v1036 = vadd.f32 %v552, %v1030
        %v1037 = vadd.f32 %v553, %v1032
        %1038 = vst [vmem:[#allocation2] sm:$0xff] %v1036
        %1039 = vst [vmem:[#allocation2 + $0x8] sm:$0xff] %v1037
        %p1040 = scmp.eq.s32.totalorder %s21, 8
        // Predicated region
        $region75: #{_lambda_.40} parent=65 // pred_check
          %p1041 = pneg %p1040
        $region76: #{_lambda_.40} parent=65 // pred_check_branch
          %1043 = sbr.rel (%p1041) target = $region78
        $region77: #{_lambda_.40} parent=65 // pred_region
          %v1044 = vld [vmem:[#allocation2] sm:$0xff]
          %v1045 = vld [vmem:[#allocation2 + $0x8] sm:$0xff]
          %v1046 = vld [vmem:[%s534] sm:$0x3]
          %v1048 = vlaneseq
          %v1049 = vshrl.u32 %v1048, 7
          %v1050 = vsub.s32 0, %v1049
          %v1051 = vrot.slane %v1046, %v1050
          %v1052 = vlaneseq
          %v1053 = vshrl.u32 %v1052, 7
          %v1054 = vsub.s32 1, %v1053
          %v1055 = vrot.slane %v1046, %v1054
          %v1058 = vadd.f32 %v1044, %v1051
          %v1059 = vadd.f32 %v1045, %v1055
          %v1060 = vmax.f32 %v1058, 0.0
          %v1061 = vmax.f32 %v1059, 0.0
          %1062 = vst [vmem:[%s544] sm:$0xff] %v1060
          %1063 = vst [vmem:[%s544 + $0x8] sm:$0xff] %v1061
        $region78: #{_lambda_.40} parent=65 // pred_fallthru
          _
        %s1064 = smul.u32 2, %s20
        %p1065 = scmp.lt.s32.totalorder %s19, 0
        %s1066 = scalar_select %p1065, %s19, 0
        %p1067 = scmp.lt.s32.totalorder %s1064, 3
        %s1068 = scalar_select %p1067, %s1064, 3
        %s1069 = smul.addr %s1066, 4
        %s1070 = sadd.s32 %s1068, %s1069
        %s1071 = smul.addr %s1070, 8
        %s1072 = scalar_lea.vmem %s3, %s1071
        // Predicated region
        $region79: #{_lambda_.40} parent=65 // pred_check
          %p1073 = pneg %p135
        $region80: #{_lambda_.40} parent=65 // pred_check_branch
          %1075 = sbr.rel (%p1073) target = $region82
        $region81: #{_lambda_.40} parent=65 // pred_region
          %s1076 = smul.u32 2, %s20
        $region82: #{_lambda_.40} parent=65 // pred_fallthru
          _
      $region66: #{_lambda_.40} parent=5 // pred_fallthru
        _
      %p1077 = scmp.le.s32.totalorder 2, %s9
      // Predicated region
      $region83: #{_lambda_.40} parent=5 // pred_check
        %p1078 = pneg %p1077
      $region84: #{_lambda_.40} parent=5 // pred_check_branch
        %1080 = sbr.rel (%p1078) target = $region86
      $region85: #{_lambda_.40} parent=5 // pred_region
        %s1081 = ssub.s32 %s9, 2
        // Predicated region
        $region87: #{_lambda_.40} parent=85 // pred_check
          %p1082 = pneg %p141
        $region88: #{_lambda_.40} parent=85 // pred_check_branch
          %1084 = sbr.rel (%p1082) target = $region90
        $region89: #{_lambda_.40} parent=85 // pred_region
          %s1085 = smul.u32 2, %s23
          %p1086 = scmp.lt.s32.totalorder %s22, 0
          %s1087 = scalar_select %p1086, %s22, 0
          %p1088 = scmp.lt.s32.totalorder %s1085, 3
          %s1089 = scalar_select %p1088, %s1085, 3
          %s1090 = smul.addr %s1087, 4
          %s1091 = sadd.s32 %s1089, %s1090
          %s1092 = smul.addr %s1091, 8
          %s1093 = scalar_lea.vmem %s3, %s1092
        $region90: #{_lambda_.40} parent=85 // pred_fallthru
          _
      $region86: #{_lambda_.40} parent=5 // pred_fallthru
        _
    $region6: #{_lambda_.40} parent=1 // loop_footer
      %s13 = sadd.s32 1, %s9
    $region7: #{_lambda_.40} parent=1 // loop_footer_branch
      %8 = sbr.rel target = $region3
    $region8: #{_lambda_.40} parent=1 // loop_exit
      _

</llo_original>
